<compile_context>
chip_gen: v7x
topology: tpu7x:2x2x1
jax: 0.10.0
libtpu: 0.0.40
codegen_flags: <defaults>
</compile_context>

<pallas_src>
import jax
import jax.numpy as jnp
from jax.experimental import pallas as pl
from jax.experimental.pallas import tpu as pltpu


def _nbytes(shape, dtype):
    n = 1
    for d in shape:
        n *= int(d)
    return n * jnp.dtype(dtype).itemsize


def _round_up(x, m):
    return ((x + m - 1) // m) * m


def _vmem_budget_bytes():
    """Physical VMEM minus ~25% headroom for Mosaic internal scratch / alignment."""
    cap = 64 << 20  # conservative default (v7x per-TC physical VMEM)
    try:
        cap = int(pltpu.get_tpu_info().vmem_capacity_bytes)
    except Exception:
        pass
    return max(32 << 20, (cap * 3) // 4)


# ---------------------------------------------------------------------------
# Tiled matmul + bias kernel (fc_out).  K (= hidden_dim) is kept un-tiled.
# ---------------------------------------------------------------------------
def matmul_bias_kernel(x_ref, w_ref, b_ref, y_ref):
    y_ref[...] = (
        jnp.dot(x_ref[...], w_ref[...], preferred_element_type=jnp.float32) + b_ref[...]
    ).astype(y_ref.dtype)


def _matmul_bias_tiled(x, w, b, vmem_budget):
    """y = x @ w + b, tiled over output rows/cols; pads to tile multiples and slices back."""
    M, K = x.shape
    N = w.shape[1]
    tm = 256 if M >= 256 else _round_up(M, 8)          # 256-multiples feed the v6e/v7x MXU
    tn = 256 if N >= 256 else _round_up(N, 128)        # lane-dense output tiles
    Mp, Np = _round_up(M, tm), _round_up(N, tn)
    if Mp != M:
        x = jnp.pad(x, ((0, Mp - M), (0, 0)))
    if Np != N:
        w = jnp.pad(w, ((0, 0), (0, Np - N)))
        b = jnp.pad(b, ((0, 0), (0, Np - N)))

    block_bytes = (_nbytes((tm, K), x.dtype) + _nbytes((K, tn), w.dtype)
                   + _nbytes((1, tn), b.dtype) + _nbytes((tm, tn), jnp.float32))
    vmem_limit = int(min(vmem_budget, max(32 << 20, 3 * block_bytes + (8 << 20))))

    y = pl.pallas_call(
        matmul_bias_kernel,
        out_shape=jax.ShapeDtypeStruct((Mp, Np), jnp.float32),
        grid=(Mp // tm, Np // tn),
        in_specs=[pl.BlockSpec((tm, K), lambda i, j: (i, 0)),
                  pl.BlockSpec((K, tn), lambda i, j: (0, j)),
                  pl.BlockSpec((1, tn), lambda i, j: (0, j))],
        out_specs=pl.BlockSpec((tm, tn), lambda i, j: (i, j)),
        compiler_params=pltpu.CompilerParams(
            dimension_semantics=("parallel", "parallel"),
            vmem_limit_bytes=vmem_limit),
        cost_estimate=pl.CostEstimate(
            flops=2 * Mp * K * Np, transcendentals=0,
            bytes_accessed=(Mp * K + K * Np + Mp * Np) * 4),
    )(x, w, b)
    return y[:M, :N]


# ---------------------------------------------------------------------------
# Recurrent decode kernel.  grid = (batch_tiles, T_tiles); carried state in VMEM scratch.
# ---------------------------------------------------------------------------
def decoder_recurrent_kernel(emb_ref, enc_ref, enc_att_ref, h0_ref, c0_ref,
                             w_x_ref, w_rec_ref, b_lstm_ref,
                             w_proj_a_ref, w_proj_h_ref, b_proj_ref,
                             o_ref, attn_ref,
                             h_sc, c_sc, prev_sc, xg_sc):
    ti = pl.program_id(1)
    tT, Bb, E = emb_ref.shape
    H = h0_ref.shape[1]
    S = enc_att_ref.shape[1]
    D = enc_ref.shape[2]

    # Re-init the carried recurrent state at the start of each batch tile's T sweep.
    @pl.when(ti == 0)
    def _():
        h_sc[...] = h0_ref[...]
        c_sc[...] = c0_ref[...]
        prev_sc[...] = jnp.zeros_like(prev_sc)

    # Fused per-tile input projection: one (tT*Bb, E) x (E, 4H) MXU matmul, LSTM biases folded.
    w_x = w_x_ref[...]
    xg = jnp.dot(emb_ref[...].reshape(tT * Bb, E).astype(w_x.dtype), w_x,
                 preferred_element_type=jnp.float32) + b_lstm_ref[...]
    xg_sc[...] = xg.reshape(tT, Bb, 4 * H)

    # Hoist all loop-invariant loads / broadcasts out of the step loop (no CSE in-loop).
    enc = enc_ref[...]              # (Bb, S, 2H)
    enc_att = enc_att_ref[...]      # (Bb, S, H)
    w_rec = w_rec_ref[...]          # (2H, 4H)  stacked [W_ih(prev); W_hh]
    w_proj_a = w_proj_a_ref[...]    # (2H, H)
    w_proj_h = w_proj_h_ref[...]    # (H, H)
    b_proj = jnp.broadcast_to(b_proj_ref[...], (Bb, H))

    def step(t, carry):
        h, c, prev = carry

        # LSTMCell: single stacked state matmul on [prev_out, hidden].
        hp = jnp.concatenate([prev, h], axis=1)                      # (Bb, 2H)
        gates = xg_sc[t] + jnp.dot(hp.astype(w_rec.dtype), w_rec,
                                   preferred_element_type=jnp.float32)   # (Bb, 4H)
        i_g = jax.nn.sigmoid(gates[:, 0:H])
        f_g = jax.nn.sigmoid(gates[:, H:2 * H])
        g_g = jnp.tanh(gates[:, 2 * H:3 * H])
        o_g = jax.nn.sigmoid(gates[:, 3 * H:4 * H])
        c_new = f_g * c + i_g * g_g
        h_new = o_g * jnp.tanh(c_new)                                # (Bb, H)

        # Attention scores: batched MXU contraction (not VPU-mult + XLU reduce).
        e_t = jnp.einsum('bqh,bsh->bqs', h_new[:, None, :], enc_att,
                         preferred_element_type=jnp.float32)         # (Bb, 1, S)
        e_max = jnp.max(e_t, axis=-1, keepdims=True)
        p = jnp.exp(e_t - e_max)
        denom = jnp.sum(p, axis=-1, keepdims=True)
        r = pl.reciprocal(denom, approx=True)                        # EUP slot
        r = r * (2.0 - denom * r)                                    # one NR step -> f32 accuracy
        alpha3 = p * r                                               # (Bb, 1, S)

        # Context vector: batched MXU contraction.
        a3 = jnp.einsum('bqs,bsd->bqd', alpha3, enc,
                        preferred_element_type=jnp.float32)          # (Bb, 1, 2H)
        a_t = a3.reshape(Bb, D)

        # dec_hidden_proj([a_t, h_new]) as split matmuls + tanh; dropout = identity (eval).
        v_t = (jnp.dot(a_t.astype(w_proj_a.dtype), w_proj_a, preferred_element_type=jnp.float32)
               + jnp.dot(h_new.astype(w_proj_h.dtype), w_proj_h, preferred_element_type=jnp.float32)
               + b_proj)
        o_t = jnp.tanh(v_t)                                          # (Bb, H)

        o_ref[t] = o_t.astype(o_ref.dtype)
        attn_ref[t] = alpha3.reshape(Bb, S).astype(attn_ref.dtype)
        return (h_new, c_new, o_t)

    h_f, c_f, p_f = jax.lax.fori_loop(
        0, tT, step, (h_sc[...], c_sc[...], prev_sc[...]), unroll=bool(tT <= 8))
    h_sc[...] = h_f
    c_sc[...] = c_f
    prev_sc[...] = p_f


# ---------------------------------------------------------------------------
# Wrapper
# ---------------------------------------------------------------------------
def decoder_forward(trg, enc_hiddens, enc_hiddens_att, enc_masks, init_hidden_cell, params,
                    matmul_dtype=jnp.float32):
    # enc_masks is unused by the original PyTorch forward; kept for signature parity.
    del enc_masks
    (emb_w, w_ih, w_hh, b_ih, b_hh, w_proj, b_proj, w_out, b_out) = params
    h0, c0 = init_hidden_cell
    f32 = jnp.float32

    T, B = trg.shape
    S, _, D = enc_hiddens.shape          # D = 2*H (bidirectional encoder)
    H = h0.shape[1]
    E = emb_w.shape[1]
    V = w_out.shape[0]

    # Glue: embedding lookup, layout permutes, weight transposes / stacking.
    trg_emb = jnp.take(emb_w, trg, axis=0).astype(f32)                  # (T, B, E)
    enc_b = jnp.transpose(enc_hiddens, (1, 0, 2)).astype(f32)           # (B, S, 2H)
    enc_att_b = jnp.transpose(enc_hiddens_att, (1, 0, 2)).astype(f32)   # (B, S, H)

    w_x = w_ih[:, :E].T.astype(matmul_dtype)                            # (E, 4H)
    w_rec = jnp.concatenate([w_ih[:, E:].T, w_hh.T], axis=0).astype(matmul_dtype)  # (2H, 4H)
    b_lstm = (b_ih + b_hh)[None, :].astype(f32)                         # (1, 4H)
    w_proj_a = w_proj[:, :2 * H].T.astype(matmul_dtype)                 # (2H, H)
    w_proj_h = w_proj[:, 2 * H:].T.astype(matmul_dtype)                 # (H, H)
    b_proj2 = b_proj[None, :].astype(f32)                               # (1, H)
    w_out_t = w_out.T.astype(matmul_dtype)                              # (H, V)
    b_out2 = b_out[None, :].astype(f32)                                 # (1, V)

    vmem_budget = _vmem_budget_bytes()

    # Pad B to a sublane multiple; split batch across v7x's 2 TensorCores when possible.
    Bp = _round_up(B, 8)
    bB = Bp // 2 if (Bp >= 16 and Bp % 16 == 0) else Bp

    # T-tile size: 8-16 steps per grid iteration, shrunk until the footprint fits the budget.
    def footprint(tT):
        per_tile = 2 * (_nbytes((tT, bB, E), f32) + _nbytes((tT, bB, H), f32)
                        + _nbytes((tT, bB, S), f32))                    # double-buffered tiles
        resident = 2 * (_nbytes((bB, S, D), f32) + _nbytes((bB, S, H), f32)
                        + 2 * _nbytes((bB, H), f32)
                        + _nbytes((E, 4 * H), matmul_dtype) + _nbytes((2 * H, 4 * H), matmul_dtype)
                        + _nbytes((2 * H, H), matmul_dtype) + _nbytes((H, H), matmul_dtype)
                        + _nbytes((1, 4 * H), f32) + _nbytes((1, H), f32))
        scratch = _nbytes((tT, bB, 4 * H), f32) + 3 * _nbytes((bB, H), f32)
        return per_tile + resident + scratch

    tT = T if T <= 16 else 16
    while tT > 1 and int(1.5 * footprint(tT)) + (8 << 20) > vmem_budget:
        tT = max(1, tT // 2)
    Tp = _round_up(T, tT)
    vmem_limit = int(min(vmem_budget, max(32 << 20, int(1.5 * footprint(tT)) + (8 << 20))))

    # Zero-pad inputs (padded steps/rows are computed and sliced away; they cannot NaN).
    emb_p = jnp.pad(trg_emb, ((0, Tp - T), (0, Bp - B), (0, 0)))
    enc_p = jnp.pad(enc_b, ((0, Bp - B), (0, 0), (0, 0)))
    enc_att_p = jnp.pad(enc_att_b, ((0, Bp - B), (0, 0), (0, 0)))
    h0_p = jnp.pad(h0.astype(f32), ((0, Bp - B), (0, 0)))
    c0_p = jnp.pad(c0.astype(f32), ((0, Bp - B), (0, 0)))

    o_pad, attn_pad = pl.pallas_call(
        decoder_recurrent_kernel,
        out_shape=(jax.ShapeDtypeStruct((Tp, Bp, H), f32),
                   jax.ShapeDtypeStruct((Tp, Bp, S), f32)),
        grid_spec=pltpu.PrefetchScalarGridSpec(
            num_scalar_prefetch=0,
            grid=(Bp // bB, Tp // tT),
            in_specs=[
                pl.BlockSpec((tT, bB, E), lambda bi, ti: (ti, bi, 0)),
                pl.BlockSpec((bB, S, D), lambda bi, ti: (bi, 0, 0)),
                pl.BlockSpec((bB, S, H), lambda bi, ti: (bi, 0, 0)),
                pl.BlockSpec((bB, H), lambda bi, ti: (bi, 0)),
                pl.BlockSpec((bB, H), lambda bi, ti: (bi, 0)),
                pl.BlockSpec((E, 4 * H), lambda bi, ti: (0, 0)),
                pl.BlockSpec((2 * H, 4 * H), lambda bi, ti: (0, 0)),
                pl.BlockSpec((1, 4 * H), lambda bi, ti: (0, 0)),
                pl.BlockSpec((2 * H, H), lambda bi, ti: (0, 0)),
                pl.BlockSpec((H, H), lambda bi, ti: (0, 0)),
                pl.BlockSpec((1, H), lambda bi, ti: (0, 0)),
            ],
            out_specs=[
                pl.BlockSpec((tT, bB, H), lambda bi, ti: (ti, bi, 0)),
                pl.BlockSpec((tT, bB, S), lambda bi, ti: (ti, bi, 0)),
            ],
            scratch_shapes=[
                pltpu.VMEM((bB, H), f32),            # h carry
                pltpu.VMEM((bB, H), f32),            # c carry
                pltpu.VMEM((bB, H), f32),            # prev_out carry
                pltpu.VMEM((tT, bB, 4 * H), f32),    # per-tile input-projected gates
            ]),
        compiler_params=pltpu.CompilerParams(
            dimension_semantics=("parallel", "arbitrary"),
            vmem_limit_bytes=vmem_limit),
    )(emb_p, enc_p, enc_att_p, h0_p, c0_p,
      w_x, w_rec, b_lstm, w_proj_a, w_proj_h, b_proj2)

    # Hoisted fc_out: one tiled (Tp*Bp, H) x (H, V) matmul (lane-dense output slab).
    logits_pad = _matmul_bias_tiled(
        o_pad.reshape(Tp * Bp, H).astype(matmul_dtype), w_out_t, b_out2, vmem_budget)
    logits = logits_pad.reshape(Tp, Bp, V)[:T, :B]

    # PyTorch attention_weight layout is (batch, src_len, trg_len).
    attention_weight = jnp.transpose(attn_pad[:T, :B], (1, 2, 0))
    return logits, attention_weight


# ---------------------------------------------------------------------------
# Pure-JAX reference mirroring the PyTorch module (dropout in eval mode).
# ---------------------------------------------------------------------------
def ref_forward(trg, enc_hiddens, enc_hiddens_att, init_hidden_cell, params):
    (emb_w, w_ih, w_hh, b_ih, b_hh, w_proj, b_proj, w_out, b_out) = params
    h, c = init_hidden_cell
    T, B = trg.shape
    H = h.shape[1]
    trg_emb = jnp.take(emb_w, trg, axis=0)
    enc_b = jnp.transpose(enc_hiddens, (1, 0, 2))
    enc_att_b = jnp.transpose(enc_hiddens_att, (1, 0, 2))
    prev = jnp.zeros((B, H), jnp.float32)
    outs, attns = [], []
    for i in range(T):
        x = jnp.concatenate([trg_emb[i], prev], axis=1)
        gates = x @ w_ih.T + b_ih + h @ w_hh.T + b_hh
        ii = jax.nn.sigmoid(gates[:, :H])
        ff = jax.nn.sigmoid(gates[:, H:2 * H])
        gg = jnp.tanh(gates[:, 2 * H:3 * H])
        oo = jax.nn.sigmoid(gates[:, 3 * H:])
        c = ff * c + ii * gg
        h = oo * jnp.tanh(c)
        e = jnp.einsum('bsh,bh->bs', enc_att_b, h)
        alpha = jax.nn.softmax(e, axis=1)
        a = jnp.einsum('bs,bsd->bd', alpha, enc_b)
        u = jnp.concatenate([a, h], axis=1)
        o = jnp.tanh(u @ w_proj.T + b_proj)
        prev = o
        outs.append(o)
        attns.append(alpha)
    outputs = jnp.stack(outs)                                  # (T, B, H)
    logits = outputs @ w_out.T + b_out                         # (T, B, V)
    attn = jnp.transpose(jnp.stack(attns), (1, 2, 0))          # (B, S, T)
    return logits, attn


if __name__ == "__main__":
    # Small synthetic config (consistent with the module's shape algebra: enc dim = 2*hidden).
    VOCAB = 32      # len(TRG.vocab)
    EMB = 16        # emb_dim
    HID = 32        # hidden_dim
    BATCH = 4
    SRC_LEN = 8
    TRG_LEN = 5
    PAD_IDX = 0

    key = jax.random.PRNGKey(0)
    keys = jax.random.split(key, 16)

    # Deterministic parameter init (synthetic; matches nn.Module shapes).
    emb_w = 0.1 * jax.random.normal(keys[0], (VOCAB, EMB), jnp.float32)
    emb_w = emb_w.at[PAD_IDX].set(0.0)                          # padding_idx row zeroed
    w_ih = 0.1 * jax.random.normal(keys[1], (4 * HID, EMB + HID), jnp.float32)   # LSTMCell weight_ih
    w_hh = 0.1 * jax.random.normal(keys[2], (4 * HID, HID), jnp.float32)         # LSTMCell weight_hh
    b_ih = 0.1 * jax.random.normal(keys[3], (4 * HID,), jnp.float32)
    b_hh = 0.1 * jax.random.normal(keys[4], (4 * HID,), jnp.float32)
    w_proj = 0.1 * jax.random.normal(keys[5], (HID, 3 * HID), jnp.float32)       # dec_hidden_proj
    b_proj = 0.1 * jax.random.normal(keys[6], (HID,), jnp.float32)
    w_out = 0.1 * jax.random.normal(keys[7], (VOCAB, HID), jnp.float32)          # fc_out
    b_out = 0.1 * jax.random.normal(keys[8], (VOCAB,), jnp.float32)
    params = (emb_w, w_ih, w_hh, b_ih, b_hh, w_proj, b_proj, w_out, b_out)

    # Deterministic example inputs.
    trg = jax.random.randint(keys[9], (TRG_LEN, BATCH), 0, VOCAB, dtype=jnp.int32)
    enc_hiddens = jax.random.normal(keys[10], (SRC_LEN, BATCH, 2 * HID), jnp.float32)
    enc_hiddens_att = jax.random.normal(keys[11], (SRC_LEN, BATCH, HID), jnp.float32)
    enc_masks = jnp.zeros((BATCH, SRC_LEN), jnp.float32)        # unused by forward (parity only)
    h0 = jax.random.normal(keys[12], (BATCH, HID), jnp.float32)
    c0 = jax.random.normal(keys[13], (BATCH, HID), jnp.float32)

    # matmul_dtype=jnp.bfloat16 enables the bf16 MXU path on v6e/v7x (halves resident weights),
    # but bf16 error compounds over the T-step recurrence; f32 keeps the strict 1e-4 check.
    logits, attn_w = decoder_forward(trg, enc_hiddens, enc_hiddens_att, enc_masks,
                                     (h0, c0), params, matmul_dtype=jnp.float32)
    logits = jax.block_until_ready(logits)
    attn_w = jax.block_until_ready(attn_w)

    ref_logits, ref_attn = ref_forward(trg, enc_hiddens, enc_hiddens_att, (h0, c0), params)

    assert logits.shape == (TRG_LEN, BATCH, VOCAB)
    assert attn_w.shape == (BATCH, SRC_LEN, TRG_LEN)
    assert jnp.allclose(logits, ref_logits, atol=1e-4, rtol=1e-4)
    assert jnp.allclose(attn_w, ref_attn, atol=1e-4, rtol=1e-4)

    print("KERNEL_OK")
</pallas_src>

<mosaic_0001>
module attributes {stable_mosaic.version = 11 : i64} {
  func.func @decoder_recurrent_kernel(%arg0: i32, %arg1: i32, %arg2: memref<5x8x16xf32, #tpu.memory_space<vmem>>, %arg3: memref<8x8x64xf32, #tpu.memory_space<vmem>>, %arg4: memref<8x8x32xf32, #tpu.memory_space<vmem>>, %arg5: memref<8x32xf32, #tpu.memory_space<vmem>>, %arg6: memref<8x32xf32, #tpu.memory_space<vmem>>, %arg7: memref<16x128xf32, #tpu.memory_space<vmem>>, %arg8: memref<64x128xf32, #tpu.memory_space<vmem>>, %arg9: memref<1x128xf32, #tpu.memory_space<vmem>>, %arg10: memref<64x32xf32, #tpu.memory_space<vmem>>, %arg11: memref<32x32xf32, #tpu.memory_space<vmem>>, %arg12: memref<1x32xf32, #tpu.memory_space<vmem>>, %arg13: memref<5x8x32xf32, #tpu.memory_space<vmem>>, %arg14: memref<5x8x8xf32, #tpu.memory_space<vmem>>, %arg15: memref<8x32xf32, #tpu.memory_space<vmem>>, %arg16: memref<8x32xf32, #tpu.memory_space<vmem>>, %arg17: memref<8x32xf32, #tpu.memory_space<vmem>>, %arg18: memref<5x8x128xf32, #tpu.memory_space<vmem>>) attributes {dimension_semantics = [#tpu.dimension_semantics<parallel>, #tpu.dimension_semantics<arbitrary>], iteration_bounds = array<i64: 1, 1>, scalar_prefetch = 0 : i64, scratch_operands = 4 : i64, tpu.core_type = #tpu.core_type<tc>, window_params = [{transform_indices = @transform_0, window_bounds = array<i64: 5, 8, 16>}, {transform_indices = @transform_1, window_bounds = array<i64: 8, 8, 64>}, {transform_indices = @transform_2, window_bounds = array<i64: 8, 8, 32>}, {transform_indices = @transform_3, window_bounds = array<i64: 8, 32>}, {transform_indices = @transform_4, window_bounds = array<i64: 8, 32>}, {pipeline_mode = #tpu.pipeline_mode<synchronous>, transform_indices = @transform_5, window_bounds = array<i64: 16, 128>}, {pipeline_mode = #tpu.pipeline_mode<synchronous>, transform_indices = @transform_6, window_bounds = array<i64: 64, 128>}, {pipeline_mode = #tpu.pipeline_mode<synchronous>, transform_indices = @transform_7, window_bounds = array<i64: 1, 128>}, {pipeline_mode = #tpu.pipeline_mode<synchronous>, transform_indices = @transform_8, window_bounds = array<i64: 64, 32>}, {pipeline_mode = #tpu.pipeline_mode<synchronous>, transform_indices = @transform_9, window_bounds = array<i64: 32, 32>}, {pipeline_mode = #tpu.pipeline_mode<synchronous>, transform_indices = @transform_10, window_bounds = array<i64: 1, 32>}, {transform_indices = @transform_11, window_bounds = array<i64: 5, 8, 32>}, {transform_indices = @transform_12, window_bounds = array<i64: 5, 8, 8>}]} {
    %c0_i32 = arith.constant 0 : i32
    %0 = arith.cmpi eq, %arg1, %c0_i32 : i32
    %1 = arith.extui %0 : i1 to i32
    %c0_i32_0 = arith.constant 0 : i32
    %2 = arith.cmpi ne, %1, %c0_i32_0 : i32
    scf.if %2 {
      %c0_122 = arith.constant 0 : index
      %c0_123 = arith.constant 0 : index
      %341 = vector.load %arg5[%c0_122, %c0_123] : memref<8x32xf32, #tpu.memory_space<vmem>>, vector<8x32xf32>
      %c0_124 = arith.constant 0 : index
      %c0_125 = arith.constant 0 : index
      %342 = vector.load %arg15[%c0_124, %c0_125] : memref<8x32xf32, #tpu.memory_space<vmem>>, vector<8x32xf32>
      tpu.vector_store %arg15[%c0_124, %c0_125], %341 {strides = array<i32>} : memref<8x32xf32, #tpu.memory_space<vmem>>, vector<8x32xf32>,
      %c0_126 = arith.constant 0 : index
      %c0_127 = arith.constant 0 : index
      %343 = vector.load %arg6[%c0_126, %c0_127] : memref<8x32xf32, #tpu.memory_space<vmem>>, vector<8x32xf32>
      %c0_128 = arith.constant 0 : index
      %c0_129 = arith.constant 0 : index
      %344 = vector.load %arg16[%c0_128, %c0_129] : memref<8x32xf32, #tpu.memory_space<vmem>>, vector<8x32xf32>
      tpu.vector_store %arg16[%c0_128, %c0_129], %343 {strides = array<i32>} : memref<8x32xf32, #tpu.memory_space<vmem>>, vector<8x32xf32>,
      %cst_130 = arith.constant 0.000000e+00 : f32
      %345 = vector.broadcast %cst_130 : f32 to vector<8x32xf32>
      %c0_131 = arith.constant 0 : index
      %c0_132 = arith.constant 0 : index
      %346 = vector.load %arg17[%c0_131, %c0_132] : memref<8x32xf32, #tpu.memory_space<vmem>>, vector<8x32xf32>
      tpu.vector_store %arg17[%c0_131, %c0_132], %345 {strides = array<i32>} : memref<8x32xf32, #tpu.memory_space<vmem>>, vector<8x32xf32>,
    } else {
    }
    %c0 = arith.constant 0 : index
    %c0_1 = arith.constant 0 : index
    %3 = vector.load %arg7[%c0, %c0_1] : memref<16x128xf32, #tpu.memory_space<vmem>>, vector<16x128xf32>
    %c0_2 = arith.constant 0 : index
    %c0_3 = arith.constant 0 : index
    %c0_4 = arith.constant 0 : index
    %4 = vector.load %arg2[%c0_2, %c0_3, %c0_4] : memref<5x8x16xf32, #tpu.memory_space<vmem>>, vector<5x8x16xf32>
    %5 = vector.shape_cast %4 : vector<5x8x16xf32> to vector<40x16xf32>
    %cst = arith.constant dense<0.000000e+00> : vector<40x128xf32>
    %6 = tpu.matmul %5, %3, %cst {dimension_numbers = #tpu.dot_dimension_numbers<[1], [0], [0], [1], [0, 0, 1, 1], [], []>} : vector<40x16xf32>, vector<16x128xf32>, vector<40x128xf32> -> vector<40x128xf32>
    %c0_5 = arith.constant 0 : index
    %c0_6 = arith.constant 0 : index
    %7 = vector.load %arg9[%c0_5, %c0_6] : memref<1x128xf32, #tpu.memory_space<vmem>>, vector<1x128xf32>
    %8 = vector.broadcast %7 : vector<1x128xf32> to vector<40x128xf32>
    %9 = arith.addf %6, %8 : vector<40x128xf32>
    %10 = vector.shape_cast %9 : vector<40x128xf32> to vector<5x8x128xf32>
    %c0_7 = arith.constant 0 : index
    %c0_8 = arith.constant 0 : index
    %c0_9 = arith.constant 0 : index
    %11 = vector.load %arg18[%c0_7, %c0_8, %c0_9] : memref<5x8x128xf32, #tpu.memory_space<vmem>>, vector<5x8x128xf32>
    tpu.vector_store %arg18[%c0_7, %c0_8, %c0_9], %10 {strides = array<i32>} : memref<5x8x128xf32, #tpu.memory_space<vmem>>, vector<5x8x128xf32>,
    %c0_10 = arith.constant 0 : index
    %c0_11 = arith.constant 0 : index
    %c0_12 = arith.constant 0 : index
    %12 = vector.load %arg3[%c0_10, %c0_11, %c0_12] : memref<8x8x64xf32, #tpu.memory_space<vmem>>, vector<8x8x64xf32>
    %c0_13 = arith.constant 0 : index
    %c0_14 = arith.constant 0 : index
    %c0_15 = arith.constant 0 : index
    %13 = vector.load %arg4[%c0_13, %c0_14, %c0_15] : memref<8x8x32xf32, #tpu.memory_space<vmem>>, vector<8x8x32xf32>
    %c0_16 = arith.constant 0 : index
    %c0_17 = arith.constant 0 : index
    %14 = vector.load %arg8[%c0_16, %c0_17] : memref<64x128xf32, #tpu.memory_space<vmem>>, vector<64x128xf32>
    %c0_18 = arith.constant 0 : index
    %c0_19 = arith.constant 0 : index
    %15 = vector.load %arg10[%c0_18, %c0_19] : memref<64x32xf32, #tpu.memory_space<vmem>>, vector<64x32xf32>
    %c0_20 = arith.constant 0 : index
    %c0_21 = arith.constant 0 : index
    %16 = vector.load %arg11[%c0_20, %c0_21] : memref<32x32xf32, #tpu.memory_space<vmem>>, vector<32x32xf32>
    %c0_22 = arith.constant 0 : index
    %c0_23 = arith.constant 0 : index
    %17 = vector.load %arg12[%c0_22, %c0_23] : memref<1x32xf32, #tpu.memory_space<vmem>>, vector<1x32xf32>
    %18 = vector.shape_cast %17 : vector<1x32xf32> to vector<1x32xf32>
    %19 = vector.broadcast %18 : vector<1x32xf32> to vector<8x32xf32>
    %c0_24 = arith.constant 0 : index
    %c0_25 = arith.constant 0 : index
    %20 = vector.load %arg15[%c0_24, %c0_25] : memref<8x32xf32, #tpu.memory_space<vmem>>, vector<8x32xf32>
    %c0_26 = arith.constant 0 : index
    %c0_27 = arith.constant 0 : index
    %21 = vector.load %arg16[%c0_26, %c0_27] : memref<8x32xf32, #tpu.memory_space<vmem>>, vector<8x32xf32>
    %c0_28 = arith.constant 0 : index
    %c0_29 = arith.constant 0 : index
    %22 = vector.load %arg17[%c0_28, %c0_29] : memref<8x32xf32, #tpu.memory_space<vmem>>, vector<8x32xf32>
    %c0_i32_30 = arith.constant 0 : i32
    %23 = tpu.concatenate %22, %20 in 1 : vector<8x32xf32>, vector<8x32xf32> -> vector<8x64xf32>
    %24 = arith.index_cast %c0_i32_30 : i32 to index
    %c0_31 = arith.constant 0 : index
    %c0_32 = arith.constant 0 : index
    %25 = vector.load %arg18[%24, %c0_31, %c0_32] : memref<5x8x128xf32, #tpu.memory_space<vmem>>, vector<1x8x128xf32>
    %26 = vector.shape_cast %25 : vector<1x8x128xf32> to vector<8x128xf32>
    %cst_33 = arith.constant dense<0.000000e+00> : vector<8x128xf32>
    %27 = tpu.matmul %23, %14, %cst_33 {dimension_numbers = #tpu.dot_dimension_numbers<[1], [0], [0], [1], [0, 0, 1, 1], [], []>} : vector<8x64xf32>, vector<64x128xf32>, vector<8x128xf32> -> vector<8x128xf32>
    %28 = arith.addf %26, %27 : vector<8x128xf32>
    %29 = vector.extract_strided_slice %28 {offsets = [0, 0], sizes = [8, 32], strides = [1, 1]} : vector<8x128xf32> to vector<8x32xf32>
    %30 = arith.negf %29 : vector<8x32xf32>
    %31 = math.exp %30 : vector<8x32xf32>
    %cst_34 = arith.constant 1.000000e+00 : f32
    %32 = vector.broadcast %cst_34 : f32 to vector<8x32xf32>
    %33 = arith.addf %32, %31 : vector<8x32xf32>
    %34 = arith.divf %32, %33 : vector<8x32xf32>
    %35 = vector.extract_strided_slice %28 {offsets = [0, 32], sizes = [8, 32], strides = [1, 1]} : vector<8x128xf32> to vector<8x32xf32>
    %36 = arith.negf %35 : vector<8x32xf32>
    %37 = math.exp %36 : vector<8x32xf32>
    %cst_35 = arith.constant 1.000000e+00 : f32
    %38 = vector.broadcast %cst_35 : f32 to vector<8x32xf32>
    %39 = arith.addf %38, %37 : vector<8x32xf32>
    %40 = arith.divf %38, %39 : vector<8x32xf32>
    %41 = vector.extract_strided_slice %28 {offsets = [0, 64], sizes = [8, 32], strides = [1, 1]} : vector<8x128xf32> to vector<8x32xf32>
    %42 = math.tanh %41 : vector<8x32xf32>
    %43 = vector.extract_strided_slice %28 {offsets = [0, 96], sizes = [8, 32], strides = [1, 1]} : vector<8x128xf32> to vector<8x32xf32>
    %44 = arith.negf %43 : vector<8x32xf32>
    %45 = math.exp %44 : vector<8x32xf32>
    %cst_36 = arith.constant 1.000000e+00 : f32
    %46 = vector.broadcast %cst_36 : f32 to vector<8x32xf32>
    %47 = arith.addf %46, %45 : vector<8x32xf32>
    %48 = arith.divf %46, %47 : vector<8x32xf32>
    %49 = arith.mulf %40, %21 : vector<8x32xf32>
    %50 = arith.mulf %34, %42 : vector<8x32xf32>
    %51 = arith.addf %49, %50 : vector<8x32xf32>
    %52 = math.tanh %51 : vector<8x32xf32>
    %53 = arith.mulf %48, %52 : vector<8x32xf32>
    %54 = vector.shape_cast %53 : vector<8x32xf32> to vector<8x1x32xf32>
    "tpu.trace_start"() <{level = 10 : i32, message = "bqh,bsh->bqs"}> : () -> ()
    %cst_37 = arith.constant dense<0.000000e+00> : vector<8x1x8xf32>
    %55 = tpu.matmul %54, %13, %cst_37 {dimension_numbers = #tpu.dot_dimension_numbers<[2], [2], [1], [1], [0, 0, 0, 1, 1, 1], [0], [0]>} : vector<8x1x32xf32>, vector<8x8x32xf32>, vector<8x1x8xf32> -> vector<8x1x8xf32>
    "tpu.trace_stop"() : () -> ()
    %cst_38 = arith.constant dense<0xFF800000> : vector<8x1xf32>
    %56 = vector.multi_reduction <maximumf>, %55, %cst_38 [2] : vector<8x1x8xf32> to vector<8x1xf32>
    %57 = vector.shape_cast %56 : vector<8x1xf32> to vector<8x1x1xf32>
    %58 = vector.broadcast %57 : vector<8x1x1xf32> to vector<8x1x8xf32>
    %59 = arith.subf %55, %58 : vector<8x1x8xf32>
    %60 = math.exp %59 : vector<8x1x8xf32>
    %cst_39 = arith.constant dense<0.000000e+00> : vector<8x1xf32>
    %61 = vector.multi_reduction <add>, %60, %cst_39 [2] : vector<8x1x8xf32> to vector<8x1xf32>
    %62 = vector.shape_cast %61 : vector<8x1xf32> to vector<8x1x1xf32>
    %63 = tpu.reciprocal %62 {approx = true} : vector<8x1x1xf32> -> vector<8x1x1xf32>
    %64 = arith.mulf %62, %63 : vector<8x1x1xf32>
    %cst_40 = arith.constant 2.000000e+00 : f32
    %65 = vector.broadcast %cst_40 : f32 to vector<8x1x1xf32>
    %66 = arith.subf %65, %64 : vector<8x1x1xf32>
    %67 = arith.mulf %63, %66 : vector<8x1x1xf32>
    %68 = vector.broadcast %67 : vector<8x1x1xf32> to vector<8x1x8xf32>
    %69 = arith.mulf %60, %68 : vector<8x1x8xf32>
    "tpu.trace_start"() <{level = 10 : i32, message = "bqs,bsd->bqd"}> : () -> ()
    %cst_41 = arith.constant dense<0.000000e+00> : vector<8x1x64xf32>
    %70 = tpu.matmul %69, %12, %cst_41 {dimension_numbers = #tpu.dot_dimension_numbers<[2], [1], [1], [2], [0, 0, 0, 1, 1, 2], [0], [0]>} : vector<8x1x8xf32>, vector<8x8x64xf32>, vector<8x1x64xf32> -> vector<8x1x64xf32>
    "tpu.trace_stop"() : () -> ()
    %71 = vector.shape_cast %70 : vector<8x1x64xf32> to vector<8x64xf32>
    %cst_42 = arith.constant dense<0.000000e+00> : vector<8x32xf32>
    %72 = tpu.matmul %71, %15, %cst_42 {dimension_numbers = #tpu.dot_dimension_numbers<[1], [0], [0], [1], [0, 0, 1, 1], [], []>} : vector<8x64xf32>, vector<64x32xf32>, vector<8x32xf32> -> vector<8x32xf32>
    %cst_43 = arith.constant dense<0.000000e+00> : vector<8x32xf32>
    %73 = tpu.matmul %53, %16, %cst_43 {dimension_numbers = #tpu.dot_dimension_numbers<[1], [0], [0], [1], [0, 0, 1, 1], [], []>} : vector<8x32xf32>, vector<32x32xf32>, vector<8x32xf32> -> vector<8x32xf32>
    %74 = arith.addf %72, %73 : vector<8x32xf32>
    %75 = arith.addf %74, %19 : vector<8x32xf32>
    %76 = math.tanh %75 : vector<8x32xf32>
    %77 = arith.index_cast %c0_i32_30 : i32 to index
    %c0_44 = arith.constant 0 : index
    %c0_45 = arith.constant 0 : index
    %78 = vector.load %arg13[%77, %c0_44, %c0_45] : memref<5x8x32xf32, #tpu.memory_space<vmem>>, vector<1x8x32xf32>
    %79 = vector.shape_cast %78 : vector<1x8x32xf32> to vector<8x32xf32>
    %80 = vector.shape_cast %76 : vector<8x32xf32> to vector<1x8x32xf32>
    tpu.vector_store %arg13[%77, %c0_44, %c0_45], %80 {strides = array<i32>} : memref<5x8x32xf32, #tpu.memory_space<vmem>>, vector<1x8x32xf32>,
    %81 = vector.shape_cast %69 : vector<8x1x8xf32> to vector<8x8xf32>
    %82 = arith.index_cast %c0_i32_30 : i32 to index
    %c0_46 = arith.constant 0 : index
    %c0_47 = arith.constant 0 : index
    %83 = vector.load %arg14[%82, %c0_46, %c0_47] : memref<5x8x8xf32, #tpu.memory_space<vmem>>, vector<1x8x8xf32>
    %84 = vector.shape_cast %83 : vector<1x8x8xf32> to vector<8x8xf32>
    %85 = vector.shape_cast %81 : vector<8x8xf32> to vector<1x8x8xf32>
    tpu.vector_store %arg14[%82, %c0_46, %c0_47], %85 {strides = array<i32>} : memref<5x8x8xf32, #tpu.memory_space<vmem>>, vector<1x8x8xf32>,
    %c1_i32 = arith.constant 1 : i32
    %86 = tpu.concatenate %76, %53 in 1 : vector<8x32xf32>, vector<8x32xf32> -> vector<8x64xf32>
    %87 = arith.index_cast %c1_i32 : i32 to index
    %c0_48 = arith.constant 0 : index
    %c0_49 = arith.constant 0 : index
    %88 = vector.load %arg18[%87, %c0_48, %c0_49] : memref<5x8x128xf32, #tpu.memory_space<vmem>>, vector<1x8x128xf32>
    %89 = vector.shape_cast %88 : vector<1x8x128xf32> to vector<8x128xf32>
    %cst_50 = arith.constant dense<0.000000e+00> : vector<8x128xf32>
    %90 = tpu.matmul %86, %14, %cst_50 {dimension_numbers = #tpu.dot_dimension_numbers<[1], [0], [0], [1], [0, 0, 1, 1], [], []>} : vector<8x64xf32>, vector<64x128xf32>, vector<8x128xf32> -> vector<8x128xf32>
    %91 = arith.addf %89, %90 : vector<8x128xf32>
    %92 = vector.extract_strided_slice %91 {offsets = [0, 0], sizes = [8, 32], strides = [1, 1]} : vector<8x128xf32> to vector<8x32xf32>
    %93 = arith.negf %92 : vector<8x32xf32>
    %94 = math.exp %93 : vector<8x32xf32>
    %cst_51 = arith.constant 1.000000e+00 : f32
    %95 = vector.broadcast %cst_51 : f32 to vector<8x32xf32>
    %96 = arith.addf %95, %94 : vector<8x32xf32>
    %97 = arith.divf %95, %96 : vector<8x32xf32>
    %98 = vector.extract_strided_slice %91 {offsets = [0, 32], sizes = [8, 32], strides = [1, 1]} : vector<8x128xf32> to vector<8x32xf32>
    %99 = arith.negf %98 : vector<8x32xf32>
    %100 = math.exp %99 : vector<8x32xf32>
    %cst_52 = arith.constant 1.000000e+00 : f32
    %101 = vector.broadcast %cst_52 : f32 to vector<8x32xf32>
    %102 = arith.addf %101, %100 : vector<8x32xf32>
    %103 = arith.divf %101, %102 : vector<8x32xf32>
    %104 = vector.extract_strided_slice %91 {offsets = [0, 64], sizes = [8, 32], strides = [1, 1]} : vector<8x128xf32> to vector<8x32xf32>
    %105 = math.tanh %104 : vector<8x32xf32>
    %106 = vector.extract_strided_slice %91 {offsets = [0, 96], sizes = [8, 32], strides = [1, 1]} : vector<8x128xf32> to vector<8x32xf32>
    %107 = arith.negf %106 : vector<8x32xf32>
    %108 = math.exp %107 : vector<8x32xf32>
    %cst_53 = arith.constant 1.000000e+00 : f32
    %109 = vector.broadcast %cst_53 : f32 to vector<8x32xf32>
    %110 = arith.addf %109, %108 : vector<8x32xf32>
    %111 = arith.divf %109, %110 : vector<8x32xf32>
    %112 = arith.mulf %103, %51 : vector<8x32xf32>
    %113 = arith.mulf %97, %105 : vector<8x32xf32>
    %114 = arith.addf %112, %113 : vector<8x32xf32>
    %115 = math.tanh %114 : vector<8x32xf32>
    %116 = arith.mulf %111, %115 : vector<8x32xf32>
    %117 = vector.shape_cast %116 : vector<8x32xf32> to vector<8x1x32xf32>
    "tpu.trace_start"() <{level = 10 : i32, message = "bqh,bsh->bqs"}> : () -> ()
    %cst_54 = arith.constant dense<0.000000e+00> : vector<8x1x8xf32>
    %118 = tpu.matmul %117, %13, %cst_54 {dimension_numbers = #tpu.dot_dimension_numbers<[2], [2], [1], [1], [0, 0, 0, 1, 1, 1], [0], [0]>} : vector<8x1x32xf32>, vector<8x8x32xf32>, vector<8x1x8xf32> -> vector<8x1x8xf32>
    "tpu.trace_stop"() : () -> ()
    %cst_55 = arith.constant dense<0xFF800000> : vector<8x1xf32>
    %119 = vector.multi_reduction <maximumf>, %118, %cst_55 [2] : vector<8x1x8xf32> to vector<8x1xf32>
    %120 = vector.shape_cast %119 : vector<8x1xf32> to vector<8x1x1xf32>
    %121 = vector.broadcast %120 : vector<8x1x1xf32> to vector<8x1x8xf32>
    %122 = arith.subf %118, %121 : vector<8x1x8xf32>
    %123 = math.exp %122 : vector<8x1x8xf32>
    %cst_56 = arith.constant dense<0.000000e+00> : vector<8x1xf32>
    %124 = vector.multi_reduction <add>, %123, %cst_56 [2] : vector<8x1x8xf32> to vector<8x1xf32>
    %125 = vector.shape_cast %124 : vector<8x1xf32> to vector<8x1x1xf32>
    %126 = tpu.reciprocal %125 {approx = true} : vector<8x1x1xf32> -> vector<8x1x1xf32>
    %127 = arith.mulf %125, %126 : vector<8x1x1xf32>
    %cst_57 = arith.constant 2.000000e+00 : f32
    %128 = vector.broadcast %cst_57 : f32 to vector<8x1x1xf32>
    %129 = arith.subf %128, %127 : vector<8x1x1xf32>
    %130 = arith.mulf %126, %129 : vector<8x1x1xf32>
    %131 = vector.broadcast %130 : vector<8x1x1xf32> to vector<8x1x8xf32>
    %132 = arith.mulf %123, %131 : vector<8x1x8xf32>
    "tpu.trace_start"() <{level = 10 : i32, message = "bqs,bsd->bqd"}> : () -> ()
    %cst_58 = arith.constant dense<0.000000e+00> : vector<8x1x64xf32>
    %133 = tpu.matmul %132, %12, %cst_58 {dimension_numbers = #tpu.dot_dimension_numbers<[2], [1], [1], [2], [0, 0, 0, 1, 1, 2], [0], [0]>} : vector<8x1x8xf32>, vector<8x8x64xf32>, vector<8x1x64xf32> -> vector<8x1x64xf32>
    "tpu.trace_stop"() : () -> ()
    %134 = vector.shape_cast %133 : vector<8x1x64xf32> to vector<8x64xf32>
    %cst_59 = arith.constant dense<0.000000e+00> : vector<8x32xf32>
    %135 = tpu.matmul %134, %15, %cst_59 {dimension_numbers = #tpu.dot_dimension_numbers<[1], [0], [0], [1], [0, 0, 1, 1], [], []>} : vector<8x64xf32>, vector<64x32xf32>, vector<8x32xf32> -> vector<8x32xf32>
    %cst_60 = arith.constant dense<0.000000e+00> : vector<8x32xf32>
    %136 = tpu.matmul %116, %16, %cst_60 {dimension_numbers = #tpu.dot_dimension_numbers<[1], [0], [0], [1], [0, 0, 1, 1], [], []>} : vector<8x32xf32>, vector<32x32xf32>, vector<8x32xf32> -> vector<8x32xf32>
    %137 = arith.addf %135, %136 : vector<8x32xf32>
    %138 = arith.addf %137, %19 : vector<8x32xf32>
    %139 = math.tanh %138 : vector<8x32xf32>
    %140 = arith.index_cast %c1_i32 : i32 to index
    %c0_61 = arith.constant 0 : index
    %c0_62 = arith.constant 0 : index
    %141 = vector.load %arg13[%140, %c0_61, %c0_62] : memref<5x8x32xf32, #tpu.memory_space<vmem>>, vector<1x8x32xf32>
    %142 = vector.shape_cast %141 : vector<1x8x32xf32> to vector<8x32xf32>
    %143 = vector.shape_cast %139 : vector<8x32xf32> to vector<1x8x32xf32>
    tpu.vector_store %arg13[%140, %c0_61, %c0_62], %143 {strides = array<i32>} : memref<5x8x32xf32, #tpu.memory_space<vmem>>, vector<1x8x32xf32>,
    %144 = vector.shape_cast %132 : vector<8x1x8xf32> to vector<8x8xf32>
    %145 = arith.index_cast %c1_i32 : i32 to index
    %c0_63 = arith.constant 0 : index
    %c0_64 = arith.constant 0 : index
    %146 = vector.load %arg14[%145, %c0_63, %c0_64] : memref<5x8x8xf32, #tpu.memory_space<vmem>>, vector<1x8x8xf32>
    %147 = vector.shape_cast %146 : vector<1x8x8xf32> to vector<8x8xf32>
    %148 = vector.shape_cast %144 : vector<8x8xf32> to vector<1x8x8xf32>
    tpu.vector_store %arg14[%145, %c0_63, %c0_64], %148 {strides = array<i32>} : memref<5x8x8xf32, #tpu.memory_space<vmem>>, vector<1x8x8xf32>,
    %c2_i32 = arith.constant 2 : i32
    %149 = tpu.concatenate %139, %116 in 1 : vector<8x32xf32>, vector<8x32xf32> -> vector<8x64xf32>
    %150 = arith.index_cast %c2_i32 : i32 to index
    %c0_65 = arith.constant 0 : index
    %c0_66 = arith.constant 0 : index
    %151 = vector.load %arg18[%150, %c0_65, %c0_66] : memref<5x8x128xf32, #tpu.memory_space<vmem>>, vector<1x8x128xf32>
    %152 = vector.shape_cast %151 : vector<1x8x128xf32> to vector<8x128xf32>
    %cst_67 = arith.constant dense<0.000000e+00> : vector<8x128xf32>
    %153 = tpu.matmul %149, %14, %cst_67 {dimension_numbers = #tpu.dot_dimension_numbers<[1], [0], [0], [1], [0, 0, 1, 1], [], []>} : vector<8x64xf32>, vector<64x128xf32>, vector<8x128xf32> -> vector<8x128xf32>
    %154 = arith.addf %152, %153 : vector<8x128xf32>
    %155 = vector.extract_strided_slice %154 {offsets = [0, 0], sizes = [8, 32], strides = [1, 1]} : vector<8x128xf32> to vector<8x32xf32>
    %156 = arith.negf %155 : vector<8x32xf32>
    %157 = math.exp %156 : vector<8x32xf32>
    %cst_68 = arith.constant 1.000000e+00 : f32
    %158 = vector.broadcast %cst_68 : f32 to vector<8x32xf32>
    %159 = arith.addf %158, %157 : vector<8x32xf32>
    %160 = arith.divf %158, %159 : vector<8x32xf32>
    %161 = vector.extract_strided_slice %154 {offsets = [0, 32], sizes = [8, 32], strides = [1, 1]} : vector<8x128xf32> to vector<8x32xf32>
    %162 = arith.negf %161 : vector<8x32xf32>
    %163 = math.exp %162 : vector<8x32xf32>
    %cst_69 = arith.constant 1.000000e+00 : f32
    %164 = vector.broadcast %cst_69 : f32 to vector<8x32xf32>
    %165 = arith.addf %164, %163 : vector<8x32xf32>
    %166 = arith.divf %164, %165 : vector<8x32xf32>
    %167 = vector.extract_strided_slice %154 {offsets = [0, 64], sizes = [8, 32], strides = [1, 1]} : vector<8x128xf32> to vector<8x32xf32>
    %168 = math.tanh %167 : vector<8x32xf32>
    %169 = vector.extract_strided_slice %154 {offsets = [0, 96], sizes = [8, 32], strides = [1, 1]} : vector<8x128xf32> to vector<8x32xf32>
    %170 = arith.negf %169 : vector<8x32xf32>
    %171 = math.exp %170 : vector<8x32xf32>
    %cst_70 = arith.constant 1.000000e+00 : f32
    %172 = vector.broadcast %cst_70 : f32 to vector<8x32xf32>
    %173 = arith.addf %172, %171 : vector<8x32xf32>
    %174 = arith.divf %172, %173 : vector<8x32xf32>
    %175 = arith.mulf %166, %114 : vector<8x32xf32>
    %176 = arith.mulf %160, %168 : vector<8x32xf32>
    %177 = arith.addf %175, %176 : vector<8x32xf32>
    %178 = math.tanh %177 : vector<8x32xf32>
    %179 = arith.mulf %174, %178 : vector<8x32xf32>
    %180 = vector.shape_cast %179 : vector<8x32xf32> to vector<8x1x32xf32>
    "tpu.trace_start"() <{level = 10 : i32, message = "bqh,bsh->bqs"}> : () -> ()
    %cst_71 = arith.constant dense<0.000000e+00> : vector<8x1x8xf32>
    %181 = tpu.matmul %180, %13, %cst_71 {dimension_numbers = #tpu.dot_dimension_numbers<[2], [2], [1], [1], [0, 0, 0, 1, 1, 1], [0], [0]>} : vector<8x1x32xf32>, vector<8x8x32xf32>, vector<8x1x8xf32> -> vector<8x1x8xf32>
    "tpu.trace_stop"() : () -> ()
    %cst_72 = arith.constant dense<0xFF800000> : vector<8x1xf32>
    %182 = vector.multi_reduction <maximumf>, %181, %cst_72 [2] : vector<8x1x8xf32> to vector<8x1xf32>
    %183 = vector.shape_cast %182 : vector<8x1xf32> to vector<8x1x1xf32>
    %184 = vector.broadcast %183 : vector<8x1x1xf32> to vector<8x1x8xf32>
    %185 = arith.subf %181, %184 : vector<8x1x8xf32>
    %186 = math.exp %185 : vector<8x1x8xf32>
    %cst_73 = arith.constant dense<0.000000e+00> : vector<8x1xf32>
    %187 = vector.multi_reduction <add>, %186, %cst_73 [2] : vector<8x1x8xf32> to vector<8x1xf32>
    %188 = vector.shape_cast %187 : vector<8x1xf32> to vector<8x1x1xf32>
    %189 = tpu.reciprocal %188 {approx = true} : vector<8x1x1xf32> -> vector<8x1x1xf32>
    %190 = arith.mulf %188, %189 : vector<8x1x1xf32>
    %cst_74 = arith.constant 2.000000e+00 : f32
    %191 = vector.broadcast %cst_74 : f32 to vector<8x1x1xf32>
    %192 = arith.subf %191, %190 : vector<8x1x1xf32>
    %193 = arith.mulf %189, %192 : vector<8x1x1xf32>
    %194 = vector.broadcast %193 : vector<8x1x1xf32> to vector<8x1x8xf32>
    %195 = arith.mulf %186, %194 : vector<8x1x8xf32>
    "tpu.trace_start"() <{level = 10 : i32, message = "bqs,bsd->bqd"}> : () -> ()
    %cst_75 = arith.constant dense<0.000000e+00> : vector<8x1x64xf32>
    %196 = tpu.matmul %195, %12, %cst_75 {dimension_numbers = #tpu.dot_dimension_numbers<[2], [1], [1], [2], [0, 0, 0, 1, 1, 2], [0], [0]>} : vector<8x1x8xf32>, vector<8x8x64xf32>, vector<8x1x64xf32> -> vector<8x1x64xf32>
    "tpu.trace_stop"() : () -> ()
    %197 = vector.shape_cast %196 : vector<8x1x64xf32> to vector<8x64xf32>
    %cst_76 = arith.constant dense<0.000000e+00> : vector<8x32xf32>
    %198 = tpu.matmul %197, %15, %cst_76 {dimension_numbers = #tpu.dot_dimension_numbers<[1], [0], [0], [1], [0, 0, 1, 1], [], []>} : vector<8x64xf32>, vector<64x32xf32>, vector<8x32xf32> -> vector<8x32xf32>
    %cst_77 = arith.constant dense<0.000000e+00> : vector<8x32xf32>
    %199 = tpu.matmul %179, %16, %cst_77 {dimension_numbers = #tpu.dot_dimension_numbers<[1], [0], [0], [1], [0, 0, 1, 1], [], []>} : vector<8x32xf32>, vector<32x32xf32>, vector<8x32xf32> -> vector<8x32xf32>
    %200 = arith.addf %198, %199 : vector<8x32xf32>
    %201 = arith.addf %200, %19 : vector<8x32xf32>
    %202 = math.tanh %201 : vector<8x32xf32>
    %203 = arith.index_cast %c2_i32 : i32 to index
    %c0_78 = arith.constant 0 : index
    %c0_79 = arith.constant 0 : index
    %204 = vector.load %arg13[%203, %c0_78, %c0_79] : memref<5x8x32xf32, #tpu.memory_space<vmem>>, vector<1x8x32xf32>
    %205 = vector.shape_cast %204 : vector<1x8x32xf32> to vector<8x32xf32>
    %206 = vector.shape_cast %202 : vector<8x32xf32> to vector<1x8x32xf32>
    tpu.vector_store %arg13[%203, %c0_78, %c0_79], %206 {strides = array<i32>} : memref<5x8x32xf32, #tpu.memory_space<vmem>>, vector<1x8x32xf32>,
    %207 = vector.shape_cast %195 : vector<8x1x8xf32> to vector<8x8xf32>
    %208 = arith.index_cast %c2_i32 : i32 to index
    %c0_80 = arith.constant 0 : index
    %c0_81 = arith.constant 0 : index
    %209 = vector.load %arg14[%208, %c0_80, %c0_81] : memref<5x8x8xf32, #tpu.memory_space<vmem>>, vector<1x8x8xf32>
    %210 = vector.shape_cast %209 : vector<1x8x8xf32> to vector<8x8xf32>
    %211 = vector.shape_cast %207 : vector<8x8xf32> to vector<1x8x8xf32>
    tpu.vector_store %arg14[%208, %c0_80, %c0_81], %211 {strides = array<i32>} : memref<5x8x8xf32, #tpu.memory_space<vmem>>, vector<1x8x8xf32>,
    %c3_i32 = arith.constant 3 : i32
    %212 = tpu.concatenate %202, %179 in 1 : vector<8x32xf32>, vector<8x32xf32> -> vector<8x64xf32>
    %213 = arith.index_cast %c3_i32 : i32 to index
    %c0_82 = arith.constant 0 : index
    %c0_83 = arith.constant 0 : index
    %214 = vector.load %arg18[%213, %c0_82, %c0_83] : memref<5x8x128xf32, #tpu.memory_space<vmem>>, vector<1x8x128xf32>
    %215 = vector.shape_cast %214 : vector<1x8x128xf32> to vector<8x128xf32>
    %cst_84 = arith.constant dense<0.000000e+00> : vector<8x128xf32>
    %216 = tpu.matmul %212, %14, %cst_84 {dimension_numbers = #tpu.dot_dimension_numbers<[1], [0], [0], [1], [0, 0, 1, 1], [], []>} : vector<8x64xf32>, vector<64x128xf32>, vector<8x128xf32> -> vector<8x128xf32>
    %217 = arith.addf %215, %216 : vector<8x128xf32>
    %218 = vector.extract_strided_slice %217 {offsets = [0, 0], sizes = [8, 32], strides = [1, 1]} : vector<8x128xf32> to vector<8x32xf32>
    %219 = arith.negf %218 : vector<8x32xf32>
    %220 = math.exp %219 : vector<8x32xf32>
    %cst_85 = arith.constant 1.000000e+00 : f32
    %221 = vector.broadcast %cst_85 : f32 to vector<8x32xf32>
    %222 = arith.addf %221, %220 : vector<8x32xf32>
    %223 = arith.divf %221, %222 : vector<8x32xf32>
    %224 = vector.extract_strided_slice %217 {offsets = [0, 32], sizes = [8, 32], strides = [1, 1]} : vector<8x128xf32> to vector<8x32xf32>
    %225 = arith.negf %224 : vector<8x32xf32>
    %226 = math.exp %225 : vector<8x32xf32>
    %cst_86 = arith.constant 1.000000e+00 : f32
    %227 = vector.broadcast %cst_86 : f32 to vector<8x32xf32>
    %228 = arith.addf %227, %226 : vector<8x32xf32>
    %229 = arith.divf %227, %228 : vector<8x32xf32>
    %230 = vector.extract_strided_slice %217 {offsets = [0, 64], sizes = [8, 32], strides = [1, 1]} : vector<8x128xf32> to vector<8x32xf32>
    %231 = math.tanh %230 : vector<8x32xf32>
    %232 = vector.extract_strided_slice %217 {offsets = [0, 96], sizes = [8, 32], strides = [1, 1]} : vector<8x128xf32> to vector<8x32xf32>
    %233 = arith.negf %232 : vector<8x32xf32>
    %234 = math.exp %233 : vector<8x32xf32>
    %cst_87 = arith.constant 1.000000e+00 : f32
    %235 = vector.broadcast %cst_87 : f32 to vector<8x32xf32>
    %236 = arith.addf %235, %234 : vector<8x32xf32>
    %237 = arith.divf %235, %236 : vector<8x32xf32>
    %238 = arith.mulf %229, %177 : vector<8x32xf32>
    %239 = arith.mulf %223, %231 : vector<8x32xf32>
    %240 = arith.addf %238, %239 : vector<8x32xf32>
    %241 = math.tanh %240 : vector<8x32xf32>
    %242 = arith.mulf %237, %241 : vector<8x32xf32>
    %243 = vector.shape_cast %242 : vector<8x32xf32> to vector<8x1x32xf32>
    "tpu.trace_start"() <{level = 10 : i32, message = "bqh,bsh->bqs"}> : () -> ()
    %cst_88 = arith.constant dense<0.000000e+00> : vector<8x1x8xf32>
    %244 = tpu.matmul %243, %13, %cst_88 {dimension_numbers = #tpu.dot_dimension_numbers<[2], [2], [1], [1], [0, 0, 0, 1, 1, 1], [0], [0]>} : vector<8x1x32xf32>, vector<8x8x32xf32>, vector<8x1x8xf32> -> vector<8x1x8xf32>
    "tpu.trace_stop"() : () -> ()
    %cst_89 = arith.constant dense<0xFF800000> : vector<8x1xf32>
    %245 = vector.multi_reduction <maximumf>, %244, %cst_89 [2] : vector<8x1x8xf32> to vector<8x1xf32>
    %246 = vector.shape_cast %245 : vector<8x1xf32> to vector<8x1x1xf32>
    %247 = vector.broadcast %246 : vector<8x1x1xf32> to vector<8x1x8xf32>
    %248 = arith.subf %244, %247 : vector<8x1x8xf32>
    %249 = math.exp %248 : vector<8x1x8xf32>
    %cst_90 = arith.constant dense<0.000000e+00> : vector<8x1xf32>
    %250 = vector.multi_reduction <add>, %249, %cst_90 [2] : vector<8x1x8xf32> to vector<8x1xf32>
    %251 = vector.shape_cast %250 : vector<8x1xf32> to vector<8x1x1xf32>
    %252 = tpu.reciprocal %251 {approx = true} : vector<8x1x1xf32> -> vector<8x1x1xf32>
    %253 = arith.mulf %251, %252 : vector<8x1x1xf32>
    %cst_91 = arith.constant 2.000000e+00 : f32
    %254 = vector.broadcast %cst_91 : f32 to vector<8x1x1xf32>
    %255 = arith.subf %254, %253 : vector<8x1x1xf32>
    %256 = arith.mulf %252, %255 : vector<8x1x1xf32>
    %257 = vector.broadcast %256 : vector<8x1x1xf32> to vector<8x1x8xf32>
    %258 = arith.mulf %249, %257 : vector<8x1x8xf32>
    "tpu.trace_start"() <{level = 10 : i32, message = "bqs,bsd->bqd"}> : () -> ()
    %cst_92 = arith.constant dense<0.000000e+00> : vector<8x1x64xf32>
    %259 = tpu.matmul %258, %12, %cst_92 {dimension_numbers = #tpu.dot_dimension_numbers<[2], [1], [1], [2], [0, 0, 0, 1, 1, 2], [0], [0]>} : vector<8x1x8xf32>, vector<8x8x64xf32>, vector<8x1x64xf32> -> vector<8x1x64xf32>
    "tpu.trace_stop"() : () -> ()
    %260 = vector.shape_cast %259 : vector<8x1x64xf32> to vector<8x64xf32>
    %cst_93 = arith.constant dense<0.000000e+00> : vector<8x32xf32>
    %261 = tpu.matmul %260, %15, %cst_93 {dimension_numbers = #tpu.dot_dimension_numbers<[1], [0], [0], [1], [0, 0, 1, 1], [], []>} : vector<8x64xf32>, vector<64x32xf32>, vector<8x32xf32> -> vector<8x32xf32>
    %cst_94 = arith.constant dense<0.000000e+00> : vector<8x32xf32>
    %262 = tpu.matmul %242, %16, %cst_94 {dimension_numbers = #tpu.dot_dimension_numbers<[1], [0], [0], [1], [0, 0, 1, 1], [], []>} : vector<8x32xf32>, vector<32x32xf32>, vector<8x32xf32> -> vector<8x32xf32>
    %263 = arith.addf %261, %262 : vector<8x32xf32>
    %264 = arith.addf %263, %19 : vector<8x32xf32>
    %265 = math.tanh %264 : vector<8x32xf32>
    %266 = arith.index_cast %c3_i32 : i32 to index
    %c0_95 = arith.constant 0 : index
    %c0_96 = arith.constant 0 : index
    %267 = vector.load %arg13[%266, %c0_95, %c0_96] : memref<5x8x32xf32, #tpu.memory_space<vmem>>, vector<1x8x32xf32>
    %268 = vector.shape_cast %267 : vector<1x8x32xf32> to vector<8x32xf32>
    %269 = vector.shape_cast %265 : vector<8x32xf32> to vector<1x8x32xf32>
    tpu.vector_store %arg13[%266, %c0_95, %c0_96], %269 {strides = array<i32>} : memref<5x8x32xf32, #tpu.memory_space<vmem>>, vector<1x8x32xf32>,
    %270 = vector.shape_cast %258 : vector<8x1x8xf32> to vector<8x8xf32>
    %271 = arith.index_cast %c3_i32 : i32 to index
    %c0_97 = arith.constant 0 : index
    %c0_98 = arith.constant 0 : index
    %272 = vector.load %arg14[%271, %c0_97, %c0_98] : memref<5x8x8xf32, #tpu.memory_space<vmem>>, vector<1x8x8xf32>
    %273 = vector.shape_cast %272 : vector<1x8x8xf32> to vector<8x8xf32>
    %274 = vector.shape_cast %270 : vector<8x8xf32> to vector<1x8x8xf32>
    tpu.vector_store %arg14[%271, %c0_97, %c0_98], %274 {strides = array<i32>} : memref<5x8x8xf32, #tpu.memory_space<vmem>>, vector<1x8x8xf32>,
    %c4_i32 = arith.constant 4 : i32
    %275 = tpu.concatenate %265, %242 in 1 : vector<8x32xf32>, vector<8x32xf32> -> vector<8x64xf32>
    %276 = arith.index_cast %c4_i32 : i32 to index
    %c0_99 = arith.constant 0 : index
    %c0_100 = arith.constant 0 : index
    %277 = vector.load %arg18[%276, %c0_99, %c0_100] : memref<5x8x128xf32, #tpu.memory_space<vmem>>, vector<1x8x128xf32>
    %278 = vector.shape_cast %277 : vector<1x8x128xf32> to vector<8x128xf32>
    %cst_101 = arith.constant dense<0.000000e+00> : vector<8x128xf32>
    %279 = tpu.matmul %275, %14, %cst_101 {dimension_numbers = #tpu.dot_dimension_numbers<[1], [0], [0], [1], [0, 0, 1, 1], [], []>} : vector<8x64xf32>, vector<64x128xf32>, vector<8x128xf32> -> vector<8x128xf32>
    %280 = arith.addf %278, %279 : vector<8x128xf32>
    %281 = vector.extract_strided_slice %280 {offsets = [0, 0], sizes = [8, 32], strides = [1, 1]} : vector<8x128xf32> to vector<8x32xf32>
    %282 = arith.negf %281 : vector<8x32xf32>
    %283 = math.exp %282 : vector<8x32xf32>
    %cst_102 = arith.constant 1.000000e+00 : f32
    %284 = vector.broadcast %cst_102 : f32 to vector<8x32xf32>
    %285 = arith.addf %284, %283 : vector<8x32xf32>
    %286 = arith.divf %284, %285 : vector<8x32xf32>
    %287 = vector.extract_strided_slice %280 {offsets = [0, 32], sizes = [8, 32], strides = [1, 1]} : vector<8x128xf32> to vector<8x32xf32>
    %288 = arith.negf %287 : vector<8x32xf32>
    %289 = math.exp %288 : vector<8x32xf32>
    %cst_103 = arith.constant 1.000000e+00 : f32
    %290 = vector.broadcast %cst_103 : f32 to vector<8x32xf32>
    %291 = arith.addf %290, %289 : vector<8x32xf32>
    %292 = arith.divf %290, %291 : vector<8x32xf32>
    %293 = vector.extract_strided_slice %280 {offsets = [0, 64], sizes = [8, 32], strides = [1, 1]} : vector<8x128xf32> to vector<8x32xf32>
    %294 = math.tanh %293 : vector<8x32xf32>
    %295 = vector.extract_strided_slice %280 {offsets = [0, 96], sizes = [8, 32], strides = [1, 1]} : vector<8x128xf32> to vector<8x32xf32>
    %296 = arith.negf %295 : vector<8x32xf32>
    %297 = math.exp %296 : vector<8x32xf32>
    %cst_104 = arith.constant 1.000000e+00 : f32
    %298 = vector.broadcast %cst_104 : f32 to vector<8x32xf32>
    %299 = arith.addf %298, %297 : vector<8x32xf32>
    %300 = arith.divf %298, %299 : vector<8x32xf32>
    %301 = arith.mulf %292, %240 : vector<8x32xf32>
    %302 = arith.mulf %286, %294 : vector<8x32xf32>
    %303 = arith.addf %301, %302 : vector<8x32xf32>
    %304 = math.tanh %303 : vector<8x32xf32>
    %305 = arith.mulf %300, %304 : vector<8x32xf32>
    %306 = vector.shape_cast %305 : vector<8x32xf32> to vector<8x1x32xf32>
    "tpu.trace_start"() <{level = 10 : i32, message = "bqh,bsh->bqs"}> : () -> ()
    %cst_105 = arith.constant dense<0.000000e+00> : vector<8x1x8xf32>
    %307 = tpu.matmul %306, %13, %cst_105 {dimension_numbers = #tpu.dot_dimension_numbers<[2], [2], [1], [1], [0, 0, 0, 1, 1, 1], [0], [0]>} : vector<8x1x32xf32>, vector<8x8x32xf32>, vector<8x1x8xf32> -> vector<8x1x8xf32>
    "tpu.trace_stop"() : () -> ()
    %cst_106 = arith.constant dense<0xFF800000> : vector<8x1xf32>
    %308 = vector.multi_reduction <maximumf>, %307, %cst_106 [2] : vector<8x1x8xf32> to vector<8x1xf32>
    %309 = vector.shape_cast %308 : vector<8x1xf32> to vector<8x1x1xf32>
    %310 = vector.broadcast %309 : vector<8x1x1xf32> to vector<8x1x8xf32>
    %311 = arith.subf %307, %310 : vector<8x1x8xf32>
    %312 = math.exp %311 : vector<8x1x8xf32>
    %cst_107 = arith.constant dense<0.000000e+00> : vector<8x1xf32>
    %313 = vector.multi_reduction <add>, %312, %cst_107 [2] : vector<8x1x8xf32> to vector<8x1xf32>
    %314 = vector.shape_cast %313 : vector<8x1xf32> to vector<8x1x1xf32>
    %315 = tpu.reciprocal %314 {approx = true} : vector<8x1x1xf32> -> vector<8x1x1xf32>
    %316 = arith.mulf %314, %315 : vector<8x1x1xf32>
    %cst_108 = arith.constant 2.000000e+00 : f32
    %317 = vector.broadcast %cst_108 : f32 to vector<8x1x1xf32>
    %318 = arith.subf %317, %316 : vector<8x1x1xf32>
    %319 = arith.mulf %315, %318 : vector<8x1x1xf32>
    %320 = vector.broadcast %319 : vector<8x1x1xf32> to vector<8x1x8xf32>
    %321 = arith.mulf %312, %320 : vector<8x1x8xf32>
    "tpu.trace_start"() <{level = 10 : i32, message = "bqs,bsd->bqd"}> : () -> ()
    %cst_109 = arith.constant dense<0.000000e+00> : vector<8x1x64xf32>
    %322 = tpu.matmul %321, %12, %cst_109 {dimension_numbers = #tpu.dot_dimension_numbers<[2], [1], [1], [2], [0, 0, 0, 1, 1, 2], [0], [0]>} : vector<8x1x8xf32>, vector<8x8x64xf32>, vector<8x1x64xf32> -> vector<8x1x64xf32>
    "tpu.trace_stop"() : () -> ()
    %323 = vector.shape_cast %322 : vector<8x1x64xf32> to vector<8x64xf32>
    %cst_110 = arith.constant dense<0.000000e+00> : vector<8x32xf32>
    %324 = tpu.matmul %323, %15, %cst_110 {dimension_numbers = #tpu.dot_dimension_numbers<[1], [0], [0], [1], [0, 0, 1, 1], [], []>} : vector<8x64xf32>, vector<64x32xf32>, vector<8x32xf32> -> vector<8x32xf32>
    %cst_111 = arith.constant dense<0.000000e+00> : vector<8x32xf32>
    %325 = tpu.matmul %305, %16, %cst_111 {dimension_numbers = #tpu.dot_dimension_numbers<[1], [0], [0], [1], [0, 0, 1, 1], [], []>} : vector<8x32xf32>, vector<32x32xf32>, vector<8x32xf32> -> vector<8x32xf32>
    %326 = arith.addf %324, %325 : vector<8x32xf32>
    %327 = arith.addf %326, %19 : vector<8x32xf32>
    %328 = math.tanh %327 : vector<8x32xf32>
    %329 = arith.index_cast %c4_i32 : i32 to index
    %c0_112 = arith.constant 0 : index
    %c0_113 = arith.constant 0 : index
    %330 = vector.load %arg13[%329, %c0_112, %c0_113] : memref<5x8x32xf32, #tpu.memory_space<vmem>>, vector<1x8x32xf32>
    %331 = vector.shape_cast %330 : vector<1x8x32xf32> to vector<8x32xf32>
    %332 = vector.shape_cast %328 : vector<8x32xf32> to vector<1x8x32xf32>
    tpu.vector_store %arg13[%329, %c0_112, %c0_113], %332 {strides = array<i32>} : memref<5x8x32xf32, #tpu.memory_space<vmem>>, vector<1x8x32xf32>,
    %333 = vector.shape_cast %321 : vector<8x1x8xf32> to vector<8x8xf32>
    %334 = arith.index_cast %c4_i32 : i32 to index
    %c0_114 = arith.constant 0 : index
    %c0_115 = arith.constant 0 : index
    %335 = vector.load %arg14[%334, %c0_114, %c0_115] : memref<5x8x8xf32, #tpu.memory_space<vmem>>, vector<1x8x8xf32>
    %336 = vector.shape_cast %335 : vector<1x8x8xf32> to vector<8x8xf32>
    %337 = vector.shape_cast %333 : vector<8x8xf32> to vector<1x8x8xf32>
    tpu.vector_store %arg14[%334, %c0_114, %c0_115], %337 {strides = array<i32>} : memref<5x8x8xf32, #tpu.memory_space<vmem>>, vector<1x8x8xf32>,
    %c5_i32 = arith.constant 5 : i32
    %c0_116 = arith.constant 0 : index
    %c0_117 = arith.constant 0 : index
    %338 = vector.load %arg15[%c0_116, %c0_117] : memref<8x32xf32, #tpu.memory_space<vmem>>, vector<8x32xf32>
    tpu.vector_store %arg15[%c0_116, %c0_117], %305 {strides = array<i32>} : memref<8x32xf32, #tpu.memory_space<vmem>>, vector<8x32xf32>,
    %c0_118 = arith.constant 0 : index
    %c0_119 = arith.constant 0 : index
    %339 = vector.load %arg16[%c0_118, %c0_119] : memref<8x32xf32, #tpu.memory_space<vmem>>, vector<8x32xf32>
    tpu.vector_store %arg16[%c0_118, %c0_119], %303 {strides = array<i32>} : memref<8x32xf32, #tpu.memory_space<vmem>>, vector<8x32xf32>,
    %c0_120 = arith.constant 0 : index
    %c0_121 = arith.constant 0 : index
    %340 = vector.load %arg17[%c0_120, %c0_121] : memref<8x32xf32, #tpu.memory_space<vmem>>, vector<8x32xf32>
    tpu.vector_store %arg17[%c0_120, %c0_121], %328 {strides = array<i32>} : memref<8x32xf32, #tpu.memory_space<vmem>>, vector<8x32xf32>,
    return
  }
  func.func @transform_0(%arg0: i32, %arg1: i32) -> (i32, i32, i32) {
    %c0_i32 = arith.constant 0 : i32
    %c0_i32_0 = arith.constant 0 : i32
    return %arg1, %arg0, %c0_i32 : i32, i32, i32
  }
  func.func @transform_1(%arg0: i32, %arg1: i32) -> (i32, i32, i32) {
    %c0_i32 = arith.constant 0 : i32
    %c0_i32_0 = arith.constant 0 : i32
    %c0_i32_1 = arith.constant 0 : i32
    return %arg0, %c0_i32, %c0_i32_0 : i32, i32, i32
  }
  func.func @transform_2(%arg0: i32, %arg1: i32) -> (i32, i32, i32) {
    %c0_i32 = arith.constant 0 : i32
    %c0_i32_0 = arith.constant 0 : i32
    %c0_i32_1 = arith.constant 0 : i32
    return %arg0, %c0_i32, %c0_i32_0 : i32, i32, i32
  }
  func.func @transform_3(%arg0: i32, %arg1: i32) -> (i32, i32) {
    %c0_i32 = arith.constant 0 : i32
    %c0_i32_0 = arith.constant 0 : i32
    return %arg0, %c0_i32 : i32, i32
  }
  func.func @transform_4(%arg0: i32, %arg1: i32) -> (i32, i32) {
    %c0_i32 = arith.constant 0 : i32
    %c0_i32_0 = arith.constant 0 : i32
    return %arg0, %c0_i32 : i32, i32
  }
  func.func @transform_5(%arg0: i32, %arg1: i32) -> (i32, i32) {
    %c0_i32 = arith.constant 0 : i32
    %c0_i32_0 = arith.constant 0 : i32
    %c0_i32_1 = arith.constant 0 : i32
    return %c0_i32, %c0_i32_0 : i32, i32
  }
  func.func @transform_6(%arg0: i32, %arg1: i32) -> (i32, i32) {
    %c0_i32 = arith.constant 0 : i32
    %c0_i32_0 = arith.constant 0 : i32
    %c0_i32_1 = arith.constant 0 : i32
    return %c0_i32, %c0_i32_0 : i32, i32
  }
  func.func @transform_7(%arg0: i32, %arg1: i32) -> (i32, i32) {
    %c0_i32 = arith.constant 0 : i32
    %c0_i32_0 = arith.constant 0 : i32
    %c0_i32_1 = arith.constant 0 : i32
    return %c0_i32, %c0_i32_0 : i32, i32
  }
  func.func @transform_8(%arg0: i32, %arg1: i32) -> (i32, i32) {
    %c0_i32 = arith.constant 0 : i32
    %c0_i32_0 = arith.constant 0 : i32
    %c0_i32_1 = arith.constant 0 : i32
    return %c0_i32, %c0_i32_0 : i32, i32
  }
  func.func @transform_9(%arg0: i32, %arg1: i32) -> (i32, i32) {
    %c0_i32 = arith.constant 0 : i32
    %c0_i32_0 = arith.constant 0 : i32
    %c0_i32_1 = arith.constant 0 : i32
    return %c0_i32, %c0_i32_0 : i32, i32
  }
  func.func @transform_10(%arg0: i32, %arg1: i32) -> (i32, i32) {
    %c0_i32 = arith.constant 0 : i32
    %c0_i32_0 = arith.constant 0 : i32
    %c0_i32_1 = arith.constant 0 : i32
    return %c0_i32, %c0_i32_0 : i32, i32
  }
  func.func @transform_11(%arg0: i32, %arg1: i32) -> (i32, i32, i32) {
    %c0_i32 = arith.constant 0 : i32
    %c0_i32_0 = arith.constant 0 : i32
    return %arg1, %arg0, %c0_i32 : i32, i32, i32
  }
  func.func @transform_12(%arg0: i32, %arg1: i32) -> (i32, i32, i32) {
    %c0_i32 = arith.constant 0 : i32
    %c0_i32_0 = arith.constant 0 : i32
    return %arg1, %arg0, %c0_i32 : i32, i32, i32
  }
}

</mosaic_0001>

<llo_original>
// kernel: tpu_custom_call.1
$region0: #{tpu_custom_call.1}
  #allocation0 [shape = 'u32[]', space=smem, size = 0x4, offset = 0x4, fixed_abs, tag = 'smem constant byte address 0x4 - core index']
  #allocation1 [shape = 'u32[144,128]{1,0:T(1,128)}', space=vmem, size = 0x12000, scoped, tag = 'internal scratch']
  #allocation2 [shape = 'f32[8,32]{1,0:T(8,128)}', space=vmem, size = 0x1000, scoped, tag = 'scratch operand']
  #allocation3 [shape = 'f32[8,32]{1,0:T(8,128)}', space=vmem, size = 0x1000, scoped, tag = 'scratch operand']
  #allocation4 [shape = 'f32[8,32]{1,0:T(8,128)}', space=vmem, size = 0x1000, scoped, tag = 'scratch operand']
  #allocation5 [shape = 'f32[5,8,128]{2,1,0:T(8,128)}', space=vmem, size = 0x5000, scoped, tag = 'scratch operand']
  %s0 = inlined_call_operand.hbm [shape: f32[5,8,16], index: 0, kind: input, shape index: {}]
  %s1 = inlined_call_operand.vmem [shape: f32[8,8,64], index: 1, kind: input, shape index: {}]
  %s2 = inlined_call_operand.hbm [shape: f32[8,8,32], index: 2, kind: input, shape index: {}]
  %s3 = inlined_call_operand.hbm [shape: f32[8,32], index: 3, kind: input, shape index: {}]
  %s4 = inlined_call_operand.hbm [shape: f32[8,32], index: 4, kind: input, shape index: {}]
  %s5 = inlined_call_operand.vmem [shape: f32[16,128], index: 5, kind: input, shape index: {}]
  %s6 = inlined_call_operand.hbm [shape: f32[64,128], index: 6, kind: input, shape index: {}]
  %s7 = inlined_call_operand.vmem [shape: f32[1,128], index: 7, kind: input, shape index: {}]
  %s8 = inlined_call_operand.vmem [shape: f32[64,32], index: 8, kind: input, shape index: {}]
  %s9 = inlined_call_operand.vmem [shape: f32[32,32], index: 9, kind: input, shape index: {}]
  %s10 = inlined_call_operand.vmem [shape: f32[1,32], index: 10, kind: input, shape index: {}]
  %s11 = inlined_call_operand.hbm [shape: f32[5,8,32], index: 11, kind: output, shape index: {0}]
  %s12 = inlined_call_operand.hbm [shape: f32[5,8,8], index: 12, kind: output, shape index: {1}]
  %13 = xla_tuple %s11, %s12
  %s14 = sld [smem:[#allocation0]]
  $region86: #{tpu_custom_call.1} parent=0
    _
  %s16 = ssub.s32 1, %s14
  %s17 = scalar_select 0, %s16, %s14
  $region1: #{tpu_custom_call.1} parent=0
    #allocation6 [shape = 'u8[20480]{0}', space=vmem, size = 0x5000, scoped, tag = 'input window, operand 0, single buffered']
    #allocation7 [shape = 's32[1]{0}', space=sflag, size = 0x4, scoped, tag = 'scoped memory for tpu_custom_call.1']
    #allocation8 [shape = 's32[1]{0}', space=sflag, size = 0x4, scoped, tag = 'scoped memory for tpu_custom_call.1']
    #allocation9 [shape = 'u8[32768]{0}', space=vmem, size = 0x8000, scoped, tag = 'input window, operand 2, single buffered']
    #allocation10 [shape = 's32[1]{0}', space=sflag, size = 0x4, scoped, tag = 'scoped memory for tpu_custom_call.1']
    #allocation11 [shape = 'u8[4096]{0}', space=vmem, size = 0x1000, scoped, tag = 'input window, operand 3, single buffered']
    #allocation12 [shape = 'u8[4096]{0}', space=vmem, size = 0x1000, scoped, tag = 'input window, operand 4, single buffered']
    #allocation13 [shape = 's32[1]{0}', space=sflag, size = 0x4, scoped, tag = 'scoped memory for tpu_custom_call.1']
    #allocation14 [shape = 'u8[32768]{0}', space=vmem, size = 0x8000, scoped, tag = 'input window, operand 6, single buffered']
    #allocation15 [shape = 'u8[20480]{0}', space=vmem, size = 0x5000, scoped, tag = 'output window, operand 0, single buffered']
    #allocation16 [shape = 'u8[20480]{0}', space=vmem, size = 0x5000, scoped, tag = 'output window, operand 1, single buffered']
    #allocation17 [shape = 's32[1]{0}', space=sflag, size = 0x4, scoped, tag = 'scoped memory for tpu_custom_call.1']
    %18 = vsyncpa [#allocation7], 0
    %19 = vsyncpa [#allocation10], 0
    %20 = vsyncpa [#allocation13], 0
    %21 = vsyncpa [#allocation8], 0
    %22 = vsyncpa [#allocation17], 0
    // Predicated region
    $region2: #{tpu_custom_call.1} parent=1 // pred_check
      _
    $region3: #{tpu_custom_call.1} parent=1 // pred_check_branch
      %24 = sbr.rel (0) target = $region5
    $region4: #{tpu_custom_call.1} parent=1 // pred_region
      %s26 = ssub.s32 640, 640
      %27 = vsyncadd [#allocation7], %s26
      %s28 = sshll.u32 [#allocation6], 4
      %s29 = int_to_ptr.vmem [resolvable:$true] %s28
      %34 = dma.hbm_to_vmem [thread:$0]  %s0, 640, %s29, [#allocation7], 128, 128, 8
    $region5: #{tpu_custom_call.1} parent=1 // pred_fallthru
      _
    // Predicated region
    $region6: #{tpu_custom_call.1} parent=1 // pred_check
      _
    $region7: #{tpu_custom_call.1} parent=1 // pred_check_branch
      %36 = sbr.rel (0) target = $region9
    $region8: #{tpu_custom_call.1} parent=1 // pred_region
      _
    $region9: #{tpu_custom_call.1} parent=1 // pred_fallthru
      _
    // Predicated region
    $region10: #{tpu_custom_call.1} parent=1 // pred_check
      _
    $region11: #{tpu_custom_call.1} parent=1 // pred_check_branch
      %38 = sbr.rel (0) target = $region13
    $region12: #{tpu_custom_call.1} parent=1 // pred_region
      %s40 = ssub.s32 1024, 1024
      %41 = vsyncadd [#allocation10], %s40
      %s42 = sshll.u32 [#allocation9], 4
      %s43 = int_to_ptr.vmem [resolvable:$true] %s42
      %48 = dma.hbm_to_vmem [thread:$0]  %s2, 1024, %s43, [#allocation10], 128, 128, 8
    $region13: #{tpu_custom_call.1} parent=1 // pred_fallthru
      _
    // Predicated region
    $region14: #{tpu_custom_call.1} parent=1 // pred_check
      _
    $region15: #{tpu_custom_call.1} parent=1 // pred_check_branch
      %50 = sbr.rel (0) target = $region17
    $region16: #{tpu_custom_call.1} parent=1 // pred_region
      %s52 = ssub.s32 128, 128
      %53 = vsyncadd [#allocation10], %s52
      %s55 = sshll.u32 [#allocation11], 4
      %s56 = int_to_ptr.vmem [resolvable:$true] %s55
      %58 = dma.hbm_to_vmem [thread:$0]  %s3, 128, %s56, [#allocation10]
    $region17: #{tpu_custom_call.1} parent=1 // pred_fallthru
      _
    // Predicated region
    $region18: #{tpu_custom_call.1} parent=1 // pred_check
      _
    $region19: #{tpu_custom_call.1} parent=1 // pred_check_branch
      %60 = sbr.rel (0) target = $region21
    $region20: #{tpu_custom_call.1} parent=1 // pred_region
      %s62 = ssub.s32 128, 128
      %63 = vsyncadd [#allocation13], %s62
      %s65 = sshll.u32 [#allocation12], 4
      %s66 = int_to_ptr.vmem [resolvable:$true] %s65
      %68 = dma.hbm_to_vmem [thread:$0]  %s4, 128, %s66, [#allocation13]
    $region21: #{tpu_custom_call.1} parent=1 // pred_fallthru
      _
    // Predicated region
    $region22: #{tpu_custom_call.1} parent=1 // pred_check
      _
    $region23: #{tpu_custom_call.1} parent=1 // pred_check_branch
      %70 = sbr.rel (0) target = $region25
    $region24: #{tpu_custom_call.1} parent=1 // pred_region
      _
    $region25: #{tpu_custom_call.1} parent=1 // pred_fallthru
      _
    // Predicated region
    $region26: #{tpu_custom_call.1} parent=1 // pred_check
      _
    $region27: #{tpu_custom_call.1} parent=1 // pred_check_branch
      %72 = sbr.rel (0) target = $region29
    $region28: #{tpu_custom_call.1} parent=1 // pred_region
      %s74 = ssub.s32 1024, 1024
      %75 = vsyncadd [#allocation13], %s74
      %s76 = sshll.u32 [#allocation14], 4
      %s77 = int_to_ptr.vmem [resolvable:$true] %s76
      %82 = dma.hbm_to_vmem [thread:$0]  %s6, 1024, %s77, [#allocation13], 128, 128, 8
    $region29: #{tpu_custom_call.1} parent=1 // pred_fallthru
      _
    // Predicated region
    $region30: #{tpu_custom_call.1} parent=1 // pred_check
      _
    $region31: #{tpu_custom_call.1} parent=1 // pred_check_branch
      %84 = sbr.rel (0) target = $region33
    $region32: #{tpu_custom_call.1} parent=1 // pred_region
      _
    $region33: #{tpu_custom_call.1} parent=1 // pred_fallthru
      _
    // Predicated region
    $region34: #{tpu_custom_call.1} parent=1 // pred_check
      _
    $region35: #{tpu_custom_call.1} parent=1 // pred_check_branch
      %86 = sbr.rel (0) target = $region37
    $region36: #{tpu_custom_call.1} parent=1 // pred_region
      _
    $region37: #{tpu_custom_call.1} parent=1 // pred_fallthru
      _
    // Predicated region
    $region38: #{tpu_custom_call.1} parent=1 // pred_check
      _
    $region39: #{tpu_custom_call.1} parent=1 // pred_check_branch
      %88 = sbr.rel (0) target = $region41
    $region40: #{tpu_custom_call.1} parent=1 // pred_region
      _
    $region41: #{tpu_custom_call.1} parent=1 // pred_fallthru
      _
    // Predicated region
    $region42: #{tpu_custom_call.1} parent=1 // pred_check
      _
    $region43: #{tpu_custom_call.1} parent=1 // pred_check_branch
      %90 = sbr.rel (0) target = $region45
    $region44: #{tpu_custom_call.1} parent=1 // pred_region
      _
    $region45: #{tpu_custom_call.1} parent=1 // pred_fallthru
      _
    // Predicated region
    $region46: #{tpu_custom_call.1} parent=1 // pred_check
      _
    $region47: #{tpu_custom_call.1} parent=1 // pred_check_branch
      %92 = sbr.rel (0) target = $region49
    $region48: #{tpu_custom_call.1} parent=1 // pred_region
      %93 = dma.done [#allocation7], 640
    $region49: #{tpu_custom_call.1} parent=1 // pred_fallthru
      _
    // Predicated region
    $region50: #{tpu_custom_call.1} parent=1 // pred_check
      _
    $region51: #{tpu_custom_call.1} parent=1 // pred_check_branch
      %95 = sbr.rel (0) target = $region53
    $region52: #{tpu_custom_call.1} parent=1 // pred_region
      %96 = dma.done [#allocation10], 1024
    $region53: #{tpu_custom_call.1} parent=1 // pred_fallthru
      _
    // Predicated region
    $region54: #{tpu_custom_call.1} parent=1 // pred_check
      _
    $region55: #{tpu_custom_call.1} parent=1 // pred_check_branch
      %98 = sbr.rel (0) target = $region57
    $region56: #{tpu_custom_call.1} parent=1 // pred_region
      %99 = dma.done [#allocation10], 128
    $region57: #{tpu_custom_call.1} parent=1 // pred_fallthru
      _
    // Predicated region
    $region58: #{tpu_custom_call.1} parent=1 // pred_check
      _
    $region59: #{tpu_custom_call.1} parent=1 // pred_check_branch
      %101 = sbr.rel (0) target = $region61
    $region60: #{tpu_custom_call.1} parent=1 // pred_region
      %102 = dma.done [#allocation13], 128
    $region61: #{tpu_custom_call.1} parent=1 // pred_fallthru
      _
    // Predicated region
    $region62: #{tpu_custom_call.1} parent=1 // pred_check
      _
    $region63: #{tpu_custom_call.1} parent=1 // pred_check_branch
      %104 = sbr.rel (0) target = $region65
    $region64: #{tpu_custom_call.1} parent=1 // pred_region
      %105 = dma.done [#allocation13], 1024
    $region65: #{tpu_custom_call.1} parent=1 // pred_fallthru
      _
    %p106 = scmp.eq.s32.totalorder 0, 0
    // Predicated region
    $region66: #{tpu_custom_call.1} parent=1 // pred_check
      %p107 = pneg %p106
    $region67: #{tpu_custom_call.1} parent=1 // pred_check_branch
      %109 = sbr.rel (%p107) target = $region69
    $region68: #{tpu_custom_call.1} parent=1 // pred_region
      %v110 = vld [vmem:[#allocation11] sm:$0xff]
      %vm111 = vcmask 261120
      %112 = vst.msk [vmem:[#allocation2] sm:$0xff] %vm111, %v110
      %v113 = vld [vmem:[#allocation12] sm:$0xff]
      %114 = vst.msk [vmem:[#allocation3] sm:$0xff] %vm111, %v113
      %115 = vst.msk [vmem:[#allocation4] sm:$0xff] %vm111, 0.0
    $region69: #{tpu_custom_call.1} parent=1 // pred_fallthru
      _
    %v116 = vld [vmem:[%s5] sm:$0xff]
    %v117 = vld [vmem:[%s5 + $0x8] sm:$0xff]
    %v118 = vld [vmem:[#allocation6] sm:$0xff]
    %v119 = vld [vmem:[#allocation6 + $0x8] sm:$0xff]
    %v120 = vld [vmem:[#allocation6 + $0x10] sm:$0xff]
    %v121 = vld [vmem:[#allocation6 + $0x18] sm:$0xff]
    %v122 = vld [vmem:[#allocation6 + $0x20] sm:$0xff]
    %v123 = vld [vmem:[%s7] sm:$0x1]
    %v125 = vlaneseq
    %v126 = vshrl.u32 %v125, 7
    %v127 = vsub.s32 0, %v126
    %v128 = vrot.slane %v123, %v127
    %vm130 = vcmask 130048
    %v132 = vsel %vm130, %v118, 0
    %v135 = vsel %vm130, %v119, 0
    %v138 = vsel %vm130, %v120, 0
    %v141 = vsel %vm130, %v121, 0
    %v144 = vsel %vm130, %v122, 0
    %146 = vmatprep.subr.mxu0 0.0
    %147 = vmatpush1.msra.mxu0 %v116
    %148 = vmatprep.subr.mxu0 0.0
    %149 = vmatpush1.msra.mxu0 %v117
    %150 = vmatprep.subr.mxu0 0.0
    %151 = vmatpush1.msra.mxu0 0.0
    %152 = vmatprep.subr.mxu0 0.0
    %153 = vmatpush1.msra.mxu0 0.0
    %154 = vmatprep.subr.mxu0 0.0
    %155 = vmatpush1.msra.mxu0 0.0
    %156 = vmatprep.subr.mxu0 0.0
    %157 = vmatpush1.msra.mxu0 0.0
    %158 = vmatprep.subr.mxu0 0.0
    %159 = vmatpush1.msra.mxu0 0.0
    %160 = vmatprep.subr.mxu0 0.0
    %161 = vmatpush1.msra.mxu0 0.0
    %162 = vmatprep.subr.mxu0 0.0
    %163 = vmatpush1.msra.mxu0 0.0
    %164 = vmatprep.subr.mxu0 0.0
    %165 = vmatpush1.msra.mxu0 0.0
    %166 = vmatprep.subr.mxu0 0.0
    %167 = vmatpush1.msra.mxu0 0.0
    %168 = vmatprep.subr.mxu0 0.0
    %169 = vmatpush1.msra.mxu0 0.0
    %170 = vmatprep.subr.mxu0 0.0
    %171 = vmatpush1.msra.mxu0 0.0
    %172 = vmatprep.subr.mxu0 0.0
    %173 = vmatpush1.msra.mxu0 0.0
    %174 = vmatprep.subr.mxu0 0.0
    %175 = vmatpush1.msra.mxu0 0.0
    %176 = vmatprep.subr.mxu0 0.0
    %177 = vmatpush1.msra.mxu0 0.0
    %178 = vmatprep.subr.mxu0 0.0
    %179 = vmatpush1.msra.mxu0 0.0
    %180 = vmatprep.subr.mxu0 0.0
    %181 = vmatpush1.msra.mxu0 0.0
    %182 = vmatprep.subr.mxu0 0.0
    %183 = vmatpush1.msra.mxu0 0.0
    %184 = vmatprep.subr.mxu0 0.0
    %185 = vmatpush1.msra.mxu0 0.0
    %186 = vmatprep.subr.mxu0 0.0
    %187 = vmatpush1.msra.mxu0 0.0
    %188 = vmatprep.subr.mxu0 0.0
    %189 = vmatpush1.msra.mxu0 0.0
    %190 = vmatprep.subr.mxu0 0.0
    %191 = vmatpush1.msra.mxu0 0.0
    %192 = vmatprep.subr.mxu0 0.0
    %193 = vmatpush1.msra.mxu0 0.0
    %194 = vmatprep.subr.mxu0 0.0
    %195 = vmatpush1.msra.mxu0 0.0
    %196 = vmatprep.subr.mxu0 0.0
    %197 = vmatpush1.msra.mxu0 0.0
    %198 = vmatprep.subr.mxu0 0.0
    %199 = vmatpush1.msra.mxu0 0.0
    %200 = vmatprep.subr.mxu0 0.0
    %201 = vmatpush1.msra.mxu0 0.0
    %202 = vmatprep.subr.mxu0 0.0
    %203 = vmatpush1.msra.mxu0 0.0
    %204 = vmatprep.subr.mxu0 0.0
    %205 = vmatpush1.msra.mxu0 0.0
    %206 = vmatprep.subr.mxu0 0.0
    %207 = vmatpush1.msra.mxu0 0.0
    %208 = vmatprep.subr.mxu0 0.0
    %209 = vmatpush1.msra.mxu0 0.0
    %210 = vmatprep.mubr.f32.mxu0 0.0
    %211 = vmatmul.mubr.f32.gmra.mrb[0].mxu0 %v132
    %v212 = vpop.f32.mrb[0].mxu0
    %v213 = vadd.f32 %v128, %v212
    %v214 = vpop.f32.mrb[0].mxu0
    %215 = vmatprep.mubr.f32.mxu0 0.0
    %216 = vmatmul.mubr.f32.gmra.mrb[0].mxu0 %v135
    %v217 = vpop.f32.mrb[0].mxu0
    %v218 = vadd.f32 %v128, %v217
    %v219 = vpop.f32.mrb[0].mxu0
    %220 = vmatprep.mubr.f32.mxu0 0.0
    %221 = vmatmul.mubr.f32.gmra.mrb[0].mxu0 %v138
    %v222 = vpop.f32.mrb[0].mxu0
    %v223 = vadd.f32 %v128, %v222
    %v224 = vpop.f32.mrb[0].mxu0
    %225 = vmatprep.mubr.f32.mxu0 0.0
    %226 = vmatmul.mubr.f32.gmra.mrb[0].mxu0 %v141
    %v227 = vpop.f32.mrb[0].mxu0
    %v228 = vadd.f32 %v128, %v227
    %v229 = vpop.f32.mrb[0].mxu0
    %230 = vmatprep.mubr.f32.mxu0 0.0
    %231 = vmatmul.mubr.f32.gmra.mrb[0].mxu0 %v144
    %v232 = vpop.f32.mrb[0].mxu0
    %v233 = vadd.f32 %v128, %v232
    %v234 = vpop.f32.mrb[0].mxu0
    %235 = vdwg.mxu0
    %236 = vst [vmem:[#allocation5] sm:$0xff] %v213
    %237 = vst [vmem:[#allocation5 + $0x8] sm:$0xff] %v218
    %238 = vst [vmem:[#allocation5 + $0x10] sm:$0xff] %v223
    %239 = vst [vmem:[#allocation5 + $0x18] sm:$0xff] %v228
    %240 = vst [vmem:[#allocation5 + $0x20] sm:$0xff] %v233
    %v241 = vld [vmem:[%s1] sm:$0xff]
    %v242 = vld [vmem:[%s1 + $0x8] sm:$0xff]
    %v243 = vld [vmem:[%s1 + $0x10] sm:$0xff]
    %v244 = vld [vmem:[%s1 + $0x18] sm:$0xff]
    %v245 = vld [vmem:[%s1 + $0x20] sm:$0xff]
    %v246 = vld [vmem:[%s1 + $0x28] sm:$0xff]
    %v247 = vld [vmem:[%s1 + $0x30] sm:$0xff]
    %v248 = vld [vmem:[%s1 + $0x38] sm:$0xff]
    %v249 = vld [vmem:[#allocation9] sm:$0xff]
    %v250 = vld [vmem:[#allocation9 + $0x8] sm:$0xff]
    %v251 = vld [vmem:[#allocation9 + $0x10] sm:$0xff]
    %v252 = vld [vmem:[#allocation9 + $0x18] sm:$0xff]
    %v253 = vld [vmem:[#allocation9 + $0x20] sm:$0xff]
    %v254 = vld [vmem:[#allocation9 + $0x28] sm:$0xff]
    %v255 = vld [vmem:[#allocation9 + $0x30] sm:$0xff]
    %v256 = vld [vmem:[#allocation9 + $0x38] sm:$0xff]
    %v257 = vld [vmem:[#allocation14] sm:$0xff]
    %v258 = vld [vmem:[#allocation14 + $0x8] sm:$0xff]
    %v259 = vld [vmem:[#allocation14 + $0x10] sm:$0xff]
    %v260 = vld [vmem:[#allocation14 + $0x18] sm:$0xff]
    %v261 = vld [vmem:[#allocation14 + $0x20] sm:$0xff]
    %v262 = vld [vmem:[#allocation14 + $0x28] sm:$0xff]
    %v263 = vld [vmem:[#allocation14 + $0x30] sm:$0xff]
    %v264 = vld [vmem:[#allocation14 + $0x38] sm:$0xff]
    %v265 = vld [vmem:[%s8] sm:$0xff]
    %v266 = vld [vmem:[%s8 + $0x8] sm:$0xff]
    %v267 = vld [vmem:[%s8 + $0x10] sm:$0xff]
    %v268 = vld [vmem:[%s8 + $0x18] sm:$0xff]
    %v269 = vld [vmem:[%s8 + $0x20] sm:$0xff]
    %v270 = vld [vmem:[%s8 + $0x28] sm:$0xff]
    %v271 = vld [vmem:[%s8 + $0x30] sm:$0xff]
    %v272 = vld [vmem:[%s8 + $0x38] sm:$0xff]
    %v273 = vld [vmem:[%s9] sm:$0xff]
    %v274 = vld [vmem:[%s9 + $0x8] sm:$0xff]
    %v275 = vld [vmem:[%s9 + $0x10] sm:$0xff]
    %v276 = vld [vmem:[%s9 + $0x18] sm:$0xff]
    %v277 = vld [vmem:[%s10] sm:$0x1]
    %v279 = vlaneseq
    %v280 = vshrl.u32 %v279, 7
    %v281 = vsub.s32 0, %v280
    %v282 = vrot.slane %v277, %v281
    %v284 = vld [vmem:[#allocation2] sm:$0xff]
    %v285 = vld [vmem:[#allocation3] sm:$0xff]
    %v286 = vld [vmem:[#allocation4] sm:$0xff]
    %288 = vrot.lane.b32.xlu0 %v284, 32
    %v289 = vpop.permute.xlu0 %288
    %vm291 = vcmask 261120
    %v292 = vsel %vm291, %v286, %v289
    %v293 = vld [vmem:[#allocation5] sm:$0xff]
    %vm294 = vcmask 523264
    %v296 = vsel %vm294, %v292, 0
    %298 = vmatprep.subr.mxu0 0.0
    %299 = vmatpush1.msra.mxu0 %v257
    %300 = vmatprep.subr.mxu0 0.0
    %301 = vmatpush1.msra.mxu0 %v258
    %302 = vmatprep.subr.mxu0 0.0
    %303 = vmatpush1.msra.mxu0 %v259
    %304 = vmatprep.subr.mxu0 0.0
    %305 = vmatpush1.msra.mxu0 %v260
    %306 = vmatprep.subr.mxu0 0.0
    %307 = vmatpush1.msra.mxu0 %v261
    %308 = vmatprep.subr.mxu0 0.0
    %309 = vmatpush1.msra.mxu0 %v262
    %310 = vmatprep.subr.mxu0 0.0
    %311 = vmatpush1.msra.mxu0 %v263
    %312 = vmatprep.subr.mxu0 0.0
    %313 = vmatpush1.msra.mxu0 %v264
    %314 = vmatprep.subr.mxu0 0.0
    %315 = vmatpush1.msra.mxu0 0.0
    %316 = vmatprep.subr.mxu0 0.0
    %317 = vmatpush1.msra.mxu0 0.0
    %318 = vmatprep.subr.mxu0 0.0
    %319 = vmatpush1.msra.mxu0 0.0
    %320 = vmatprep.subr.mxu0 0.0
    %321 = vmatpush1.msra.mxu0 0.0
    %322 = vmatprep.subr.mxu0 0.0
    %323 = vmatpush1.msra.mxu0 0.0
    %324 = vmatprep.subr.mxu0 0.0
    %325 = vmatpush1.msra.mxu0 0.0
    %326 = vmatprep.subr.mxu0 0.0
    %327 = vmatpush1.msra.mxu0 0.0
    %328 = vmatprep.subr.mxu0 0.0
    %329 = vmatpush1.msra.mxu0 0.0
    %330 = vmatprep.subr.mxu0 0.0
    %331 = vmatpush1.msra.mxu0 0.0
    %332 = vmatprep.subr.mxu0 0.0
    %333 = vmatpush1.msra.mxu0 0.0
    %334 = vmatprep.subr.mxu0 0.0
    %335 = vmatpush1.msra.mxu0 0.0
    %336 = vmatprep.subr.mxu0 0.0
    %337 = vmatpush1.msra.mxu0 0.0
    %338 = vmatprep.subr.mxu0 0.0
    %339 = vmatpush1.msra.mxu0 0.0
    %340 = vmatprep.subr.mxu0 0.0
    %341 = vmatpush1.msra.mxu0 0.0
    %342 = vmatprep.subr.mxu0 0.0
    %343 = vmatpush1.msra.mxu0 0.0
    %344 = vmatprep.subr.mxu0 0.0
    %345 = vmatpush1.msra.mxu0 0.0
    %346 = vmatprep.subr.mxu0 0.0
    %347 = vmatpush1.msra.mxu0 0.0
    %348 = vmatprep.subr.mxu0 0.0
    %349 = vmatpush1.msra.mxu0 0.0
    %350 = vmatprep.subr.mxu0 0.0
    %351 = vmatpush1.msra.mxu0 0.0
    %352 = vmatprep.subr.mxu0 0.0
    %353 = vmatpush1.msra.mxu0 0.0
    %354 = vmatprep.subr.mxu0 0.0
    %355 = vmatpush1.msra.mxu0 0.0
    %356 = vmatprep.subr.mxu0 0.0
    %357 = vmatpush1.msra.mxu0 0.0
    %358 = vmatprep.subr.mxu0 0.0
    %359 = vmatpush1.msra.mxu0 0.0
    %360 = vmatprep.subr.mxu0 0.0
    %361 = vmatpush1.msra.mxu0 0.0
    %362 = vmatprep.mubr.f32.mxu0 0.0
    %363 = vmatmul.mubr.f32.gmra.mrb[0].mxu0 %v296
    %v364 = vpop.f32.mrb[0].mxu0
    %v365 = vadd.f32 0.0, %v364
    %v366 = vpop.f32.mrb[0].mxu0
    %367 = vdwg.mxu0
    %v368 = vadd.f32 %v293, %v365
    %v369 = vxor.u32 %v368, 2147483648
    %v370 = vmul.f32 %v369, 1.442695
    %v371 = vpow.pop %v370
    %v372 = vadd.f32 %v371, 1.0
    %v373 = vrcp.pop %v372
    %v374 = vmul.f32 1.0, %v373
    %v375 = vtanh.pop %v368
    %377 = vrot.lane.b32.xlu0 %v285, 32
    %v378 = vpop.permute.xlu0 %377
    %v380 = vmul.f32 %v374, %v378
    %382 = vrot.lane.b32.xlu0 %v375, 64
    %v383 = vpop.permute.xlu0 %382
    %v385 = vmul.f32 %v374, %v383
    %387 = vrot.lane.b32.xlu0 %v385, 32
    %v388 = vpop.permute.xlu0 %387
    %v390 = vadd.f32 %v380, %v388
    %v391 = vtanh.pop %v390
    %393 = vrot.lane.b32.xlu0 %v391, 64
    %v394 = vpop.permute.xlu0 %393
    %v396 = vmul.f32 %v374, %v394
    %v398 = vcombine.high %v396, %v396
    %v400 = vunpack.c.l.s4 1966171168
    %v401 = vunpack.c.0.s8 %v400
    %v402 = vlaneseq
    %v403 = vshrl.u32 %v402, 7
    %v404 = vsub.s32 %v401, %v403
    %v405 = vrot.slane %v396, %v404
    %v407 = vunpack.c.l.s4 1966171168
    %v408 = vunpack.c.0.s8 %v407
    %v409 = vlaneseq
    %v410 = vshrl.u32 %v409, 7
    %v411 = vsub.s32 %v408, %v410
    %v412 = vrot.slane %v398, %v411
    %v413 = vcombine.high %v405, %v405
    %v414 = vcombine.high %v412, %v412
    %v416 = vunpack.c.l.s4 1966171168
    %v417 = vunpack.c.0.s8 %v416
    %v418 = vlaneseq
    %v419 = vshrl.u32 %v418, 7
    %v420 = vsub.s32 %v417, %v419
    %v421 = vrot.slane %v405, %v420
    %v423 = vunpack.c.l.s4 1966171168
    %v424 = vunpack.c.0.s8 %v423
    %v425 = vlaneseq
    %v426 = vshrl.u32 %v425, 7
    %v427 = vsub.s32 %v424, %v426
    %v428 = vrot.slane %v412, %v427
    %v430 = vunpack.c.l.s4 1966171168
    %v431 = vunpack.c.0.s8 %v430
    %v432 = vlaneseq
    %v433 = vshrl.u32 %v432, 7
    %v434 = vsub.s32 %v431, %v433
    %v435 = vrot.slane %v413, %v434
    %v437 = vunpack.c.l.s4 1966171168
    %v438 = vunpack.c.0.s8 %v437
    %v439 = vlaneseq
    %v440 = vshrl.u32 %v439, 7
    %v441 = vsub.s32 %v438, %v440
    %v442 = vrot.slane %v414, %v441
    %v443 = vcombine.high %v421, %v421
    %v444 = vcombine.high %v428, %v428
    %v445 = vcombine.high %v435, %v435
    %v446 = vcombine.high %v442, %v442
    %v447 = vlaneseq
    %v448 = vshrl.u32 %v447, 7
    %v449 = vsub.s32 0, %v448
    %v450 = vrot.slane %v421, %v449
    %451 = vrot.lane.b32.xlu0 %v450, 32
    %v452 = vpop.permute.xlu0 %451
    %v453 = vsel %vm291, %v452, 0
    %v456 = vsel %vm291, %v249, 0
    %458 = vmatprep.subr.mxu0 0.0
    %459 = vmatpush1.xpose.msra.mxu0 %v456
    %460 = vmatprep.subr.mxu0 0.0
    %461 = vmatpush1.xpose.msra.mxu0 0.0
    %462 = vmatprep.subr.mxu0 0.0
    %463 = vmatpush1.xpose.msra.mxu0 0.0
    %464 = vmatprep.subr.mxu0 0.0
    %465 = vmatpush1.xpose.msra.mxu0 0.0
    %466 = vmatprep.subr.mxu0 0.0
    %467 = vmatpush1.xpose.msra.mxu0 0.0
    %468 = vmatprep.subr.mxu0 0.0
    %469 = vmatpush1.xpose.msra.mxu0 0.0
    %470 = vmatprep.subr.mxu0 0.0
    %471 = vmatpush1.xpose.msra.mxu0 0.0
    %472 = vmatprep.subr.mxu0 0.0
    %473 = vmatpush1.xpose.msra.mxu0 0.0
    %474 = vmatprep.subr.mxu0 0.0
    %475 = vmatpush1.xpose.msra.mxu0 0.0
    %476 = vmatprep.subr.mxu0 0.0
    %477 = vmatpush1.xpose.msra.mxu0 0.0
    %478 = vmatprep.subr.mxu0 0.0
    %479 = vmatpush1.xpose.msra.mxu0 0.0
    %480 = vmatprep.subr.mxu0 0.0
    %481 = vmatpush1.xpose.msra.mxu0 0.0
    %482 = vmatprep.subr.mxu0 0.0
    %483 = vmatpush1.xpose.msra.mxu0 0.0
    %484 = vmatprep.subr.mxu0 0.0
    %485 = vmatpush1.xpose.msra.mxu0 0.0
    %486 = vmatprep.subr.mxu0 0.0
    %487 = vmatpush1.xpose.msra.mxu0 0.0
    %488 = vmatprep.subr.mxu0 0.0
    %489 = vmatpush1.xpose.msra.mxu0 0.0
    %490 = vmatprep.subr.mxu0 0.0
    %491 = vmatpush1.xpose.msra.mxu0 0.0
    %492 = vmatprep.subr.mxu0 0.0
    %493 = vmatpush1.xpose.msra.mxu0 0.0
    %494 = vmatprep.subr.mxu0 0.0
    %495 = vmatpush1.xpose.msra.mxu0 0.0
    %496 = vmatprep.subr.mxu0 0.0
    %497 = vmatpush1.xpose.msra.mxu0 0.0
    %498 = vmatprep.subr.mxu0 0.0
    %499 = vmatpush1.xpose.msra.mxu0 0.0
    %500 = vmatprep.subr.mxu0 0.0
    %501 = vmatpush1.xpose.msra.mxu0 0.0
    %502 = vmatprep.subr.mxu0 0.0
    %503 = vmatpush1.xpose.msra.mxu0 0.0
    %504 = vmatprep.subr.mxu0 0.0
    %505 = vmatpush1.xpose.msra.mxu0 0.0
    %506 = vmatprep.subr.mxu0 0.0
    %507 = vmatpush1.xpose.msra.mxu0 0.0
    %508 = vmatprep.subr.mxu0 0.0
    %509 = vmatpush1.xpose.msra.mxu0 0.0
    %510 = vmatprep.subr.mxu0 0.0
    %511 = vmatpush1.xpose.msra.mxu0 0.0
    %512 = vmatprep.subr.mxu0 0.0
    %513 = vmatpush1.xpose.msra.mxu0 0.0
    %514 = vmatprep.subr.mxu0 0.0
    %515 = vmatpush1.xpose.msra.mxu0 0.0
    %516 = vmatprep.subr.mxu0 0.0
    %517 = vmatpush1.xpose.msra.mxu0 0.0
    %518 = vmatprep.subr.mxu0 0.0
    %519 = vmatpush1.xpose.msra.mxu0 0.0
    %520 = vmatprep.subr.mxu0 0.0
    %521 = vmatpush1.xpose.msra.mxu0 0.0
    %522 = vmatprep.mubr.f32.mxu0 0.0
    %523 = vmatmul.mubr.f32.gmra.mrb[0].mxu0 %v453
    %v524 = vpop.f32.mrb[0].mxu0
    %v525 = vadd.f32 0.0, %v524
    %v526 = vpop.f32.mrb[0].mxu0
    %527 = vdwg.mxu0
    %v528 = vlaneseq
    %v529 = vshrl.u32 %v528, 7
    %v530 = vsub.s32 0, %v529
    %v531 = vrot.slane %v435, %v530
    %532 = vrot.lane.b32.xlu0 %v531, 32
    %v533 = vpop.permute.xlu0 %532
    %v534 = vsel %vm291, %v533, 0
    %v537 = vsel %vm291, %v250, 0
    %539 = vmatprep.subr.mxu0 0.0
    %540 = vmatpush1.xpose.msra.mxu0 %v537
    %541 = vmatprep.subr.mxu0 0.0
    %542 = vmatpush1.xpose.msra.mxu0 0.0
    %543 = vmatprep.subr.mxu0 0.0
    %544 = vmatpush1.xpose.msra.mxu0 0.0
    %545 = vmatprep.subr.mxu0 0.0
    %546 = vmatpush1.xpose.msra.mxu0 0.0
    %547 = vmatprep.subr.mxu0 0.0
    %548 = vmatpush1.xpose.msra.mxu0 0.0
    %549 = vmatprep.subr.mxu0 0.0
    %550 = vmatpush1.xpose.msra.mxu0 0.0
    %551 = vmatprep.subr.mxu0 0.0
    %552 = vmatpush1.xpose.msra.mxu0 0.0
    %553 = vmatprep.subr.mxu0 0.0
    %554 = vmatpush1.xpose.msra.mxu0 0.0
    %555 = vmatprep.subr.mxu0 0.0
    %556 = vmatpush1.xpose.msra.mxu0 0.0
    %557 = vmatprep.subr.mxu0 0.0
    %558 = vmatpush1.xpose.msra.mxu0 0.0
    %559 = vmatprep.subr.mxu0 0.0
    %560 = vmatpush1.xpose.msra.mxu0 0.0
    %561 = vmatprep.subr.mxu0 0.0
    %562 = vmatpush1.xpose.msra.mxu0 0.0
    %563 = vmatprep.subr.mxu0 0.0
    %564 = vmatpush1.xpose.msra.mxu0 0.0
    %565 = vmatprep.subr.mxu0 0.0
    %566 = vmatpush1.xpose.msra.mxu0 0.0
    %567 = vmatprep.subr.mxu0 0.0
    %568 = vmatpush1.xpose.msra.mxu0 0.0
    %569 = vmatprep.subr.mxu0 0.0
    %570 = vmatpush1.xpose.msra.mxu0 0.0
    %571 = vmatprep.subr.mxu0 0.0
    %572 = vmatpush1.xpose.msra.mxu0 0.0
    %573 = vmatprep.subr.mxu0 0.0
    %574 = vmatpush1.xpose.msra.mxu0 0.0
    %575 = vmatprep.subr.mxu0 0.0
    %576 = vmatpush1.xpose.msra.mxu0 0.0
    %577 = vmatprep.subr.mxu0 0.0
    %578 = vmatpush1.xpose.msra.mxu0 0.0
    %579 = vmatprep.subr.mxu0 0.0
    %580 = vmatpush1.xpose.msra.mxu0 0.0
    %581 = vmatprep.subr.mxu0 0.0
    %582 = vmatpush1.xpose.msra.mxu0 0.0
    %583 = vmatprep.subr.mxu0 0.0
    %584 = vmatpush1.xpose.msra.mxu0 0.0
    %585 = vmatprep.subr.mxu0 0.0
    %586 = vmatpush1.xpose.msra.mxu0 0.0
    %587 = vmatprep.subr.mxu0 0.0
    %588 = vmatpush1.xpose.msra.mxu0 0.0
    %589 = vmatprep.subr.mxu0 0.0
    %590 = vmatpush1.xpose.msra.mxu0 0.0
    %591 = vmatprep.subr.mxu0 0.0
    %592 = vmatpush1.xpose.msra.mxu0 0.0
    %593 = vmatprep.subr.mxu0 0.0
    %594 = vmatpush1.xpose.msra.mxu0 0.0
    %595 = vmatprep.subr.mxu0 0.0
    %596 = vmatpush1.xpose.msra.mxu0 0.0
    %597 = vmatprep.subr.mxu0 0.0
    %598 = vmatpush1.xpose.msra.mxu0 0.0
    %599 = vmatprep.subr.mxu0 0.0
    %600 = vmatpush1.xpose.msra.mxu0 0.0
    %601 = vmatprep.subr.mxu0 0.0
    %602 = vmatpush1.xpose.msra.mxu0 0.0
    %603 = vmatprep.mubr.f32.mxu0 0.0
    %604 = vmatmul.mubr.f32.gmra.mrb[0].mxu0 %v534
    %v605 = vpop.f32.mrb[0].mxu0
    %v606 = vadd.f32 0.0, %v605
    %v607 = vpop.f32.mrb[0].mxu0
    %608 = vdwg.mxu0
    %v609 = vlaneseq
    %v610 = vshrl.u32 %v609, 7
    %v611 = vsub.s32 0, %v610
    %v612 = vrot.slane %v443, %v611
    %613 = vrot.lane.b32.xlu0 %v612, 32
    %v614 = vpop.permute.xlu0 %613
    %v615 = vsel %vm291, %v614, 0
    %v618 = vsel %vm291, %v251, 0
    %620 = vmatprep.subr.mxu0 0.0
    %621 = vmatpush1.xpose.msra.mxu0 %v618
    %622 = vmatprep.subr.mxu0 0.0
    %623 = vmatpush1.xpose.msra.mxu0 0.0
    %624 = vmatprep.subr.mxu0 0.0
    %625 = vmatpush1.xpose.msra.mxu0 0.0
    %626 = vmatprep.subr.mxu0 0.0
    %627 = vmatpush1.xpose.msra.mxu0 0.0
    %628 = vmatprep.subr.mxu0 0.0
    %629 = vmatpush1.xpose.msra.mxu0 0.0
    %630 = vmatprep.subr.mxu0 0.0
    %631 = vmatpush1.xpose.msra.mxu0 0.0
    %632 = vmatprep.subr.mxu0 0.0
    %633 = vmatpush1.xpose.msra.mxu0 0.0
    %634 = vmatprep.subr.mxu0 0.0
    %635 = vmatpush1.xpose.msra.mxu0 0.0
    %636 = vmatprep.subr.mxu0 0.0
    %637 = vmatpush1.xpose.msra.mxu0 0.0
    %638 = vmatprep.subr.mxu0 0.0
    %639 = vmatpush1.xpose.msra.mxu0 0.0
    %640 = vmatprep.subr.mxu0 0.0
    %641 = vmatpush1.xpose.msra.mxu0 0.0
    %642 = vmatprep.subr.mxu0 0.0
    %643 = vmatpush1.xpose.msra.mxu0 0.0
    %644 = vmatprep.subr.mxu0 0.0
    %645 = vmatpush1.xpose.msra.mxu0 0.0
    %646 = vmatprep.subr.mxu0 0.0
    %647 = vmatpush1.xpose.msra.mxu0 0.0
    %648 = vmatprep.subr.mxu0 0.0
    %649 = vmatpush1.xpose.msra.mxu0 0.0
    %650 = vmatprep.subr.mxu0 0.0
    %651 = vmatpush1.xpose.msra.mxu0 0.0
    %652 = vmatprep.subr.mxu0 0.0
    %653 = vmatpush1.xpose.msra.mxu0 0.0
    %654 = vmatprep.subr.mxu0 0.0
    %655 = vmatpush1.xpose.msra.mxu0 0.0
    %656 = vmatprep.subr.mxu0 0.0
    %657 = vmatpush1.xpose.msra.mxu0 0.0
    %658 = vmatprep.subr.mxu0 0.0
    %659 = vmatpush1.xpose.msra.mxu0 0.0
    %660 = vmatprep.subr.mxu0 0.0
    %661 = vmatpush1.xpose.msra.mxu0 0.0
    %662 = vmatprep.subr.mxu0 0.0
    %663 = vmatpush1.xpose.msra.mxu0 0.0
    %664 = vmatprep.subr.mxu0 0.0
    %665 = vmatpush1.xpose.msra.mxu0 0.0
    %666 = vmatprep.subr.mxu0 0.0
    %667 = vmatpush1.xpose.msra.mxu0 0.0
    %668 = vmatprep.subr.mxu0 0.0
    %669 = vmatpush1.xpose.msra.mxu0 0.0
    %670 = vmatprep.subr.mxu0 0.0
    %671 = vmatpush1.xpose.msra.mxu0 0.0
    %672 = vmatprep.subr.mxu0 0.0
    %673 = vmatpush1.xpose.msra.mxu0 0.0
    %674 = vmatprep.subr.mxu0 0.0
    %675 = vmatpush1.xpose.msra.mxu0 0.0
    %676 = vmatprep.subr.mxu0 0.0
    %677 = vmatpush1.xpose.msra.mxu0 0.0
    %678 = vmatprep.subr.mxu0 0.0
    %679 = vmatpush1.xpose.msra.mxu0 0.0
    %680 = vmatprep.subr.mxu0 0.0
    %681 = vmatpush1.xpose.msra.mxu0 0.0
    %682 = vmatprep.subr.mxu0 0.0
    %683 = vmatpush1.xpose.msra.mxu0 0.0
    %684 = vmatprep.mubr.f32.mxu0 0.0
    %685 = vmatmul.mubr.f32.gmra.mrb[0].mxu0 %v615
    %v686 = vpop.f32.mrb[0].mxu0
    %v687 = vadd.f32 0.0, %v686
    %v688 = vpop.f32.mrb[0].mxu0
    %689 = vdwg.mxu0
    %v690 = vlaneseq
    %v691 = vshrl.u32 %v690, 7
    %v692 = vsub.s32 0, %v691
    %v693 = vrot.slane %v445, %v692
    %694 = vrot.lane.b32.xlu0 %v693, 32
    %v695 = vpop.permute.xlu0 %694
    %v696 = vsel %vm291, %v695, 0
    %v699 = vsel %vm291, %v252, 0
    %701 = vmatprep.subr.mxu0 0.0
    %702 = vmatpush1.xpose.msra.mxu0 %v699
    %703 = vmatprep.subr.mxu0 0.0
    %704 = vmatpush1.xpose.msra.mxu0 0.0
    %705 = vmatprep.subr.mxu0 0.0
    %706 = vmatpush1.xpose.msra.mxu0 0.0
    %707 = vmatprep.subr.mxu0 0.0
    %708 = vmatpush1.xpose.msra.mxu0 0.0
    %709 = vmatprep.subr.mxu0 0.0
    %710 = vmatpush1.xpose.msra.mxu0 0.0
    %711 = vmatprep.subr.mxu0 0.0
    %712 = vmatpush1.xpose.msra.mxu0 0.0
    %713 = vmatprep.subr.mxu0 0.0
    %714 = vmatpush1.xpose.msra.mxu0 0.0
    %715 = vmatprep.subr.mxu0 0.0
    %716 = vmatpush1.xpose.msra.mxu0 0.0
    %717 = vmatprep.subr.mxu0 0.0
    %718 = vmatpush1.xpose.msra.mxu0 0.0
    %719 = vmatprep.subr.mxu0 0.0
    %720 = vmatpush1.xpose.msra.mxu0 0.0
    %721 = vmatprep.subr.mxu0 0.0
    %722 = vmatpush1.xpose.msra.mxu0 0.0
    %723 = vmatprep.subr.mxu0 0.0
    %724 = vmatpush1.xpose.msra.mxu0 0.0
    %725 = vmatprep.subr.mxu0 0.0
    %726 = vmatpush1.xpose.msra.mxu0 0.0
    %727 = vmatprep.subr.mxu0 0.0
    %728 = vmatpush1.xpose.msra.mxu0 0.0
    %729 = vmatprep.subr.mxu0 0.0
    %730 = vmatpush1.xpose.msra.mxu0 0.0
    %731 = vmatprep.subr.mxu0 0.0
    %732 = vmatpush1.xpose.msra.mxu0 0.0
    %733 = vmatprep.subr.mxu0 0.0
    %734 = vmatpush1.xpose.msra.mxu0 0.0
    %735 = vmatprep.subr.mxu0 0.0
    %736 = vmatpush1.xpose.msra.mxu0 0.0
    %737 = vmatprep.subr.mxu0 0.0
    %738 = vmatpush1.xpose.msra.mxu0 0.0
    %739 = vmatprep.subr.mxu0 0.0
    %740 = vmatpush1.xpose.msra.mxu0 0.0
    %741 = vmatprep.subr.mxu0 0.0
    %742 = vmatpush1.xpose.msra.mxu0 0.0
    %743 = vmatprep.subr.mxu0 0.0
    %744 = vmatpush1.xpose.msra.mxu0 0.0
    %745 = vmatprep.subr.mxu0 0.0
    %746 = vmatpush1.xpose.msra.mxu0 0.0
    %747 = vmatprep.subr.mxu0 0.0
    %748 = vmatpush1.xpose.msra.mxu0 0.0
    %749 = vmatprep.subr.mxu0 0.0
    %750 = vmatpush1.xpose.msra.mxu0 0.0
    %751 = vmatprep.subr.mxu0 0.0
    %752 = vmatpush1.xpose.msra.mxu0 0.0
    %753 = vmatprep.subr.mxu0 0.0
    %754 = vmatpush1.xpose.msra.mxu0 0.0
    %755 = vmatprep.subr.mxu0 0.0
    %756 = vmatpush1.xpose.msra.mxu0 0.0
    %757 = vmatprep.subr.mxu0 0.0
    %758 = vmatpush1.xpose.msra.mxu0 0.0
    %759 = vmatprep.subr.mxu0 0.0
    %760 = vmatpush1.xpose.msra.mxu0 0.0
    %761 = vmatprep.subr.mxu0 0.0
    %762 = vmatpush1.xpose.msra.mxu0 0.0
    %763 = vmatprep.subr.mxu0 0.0
    %764 = vmatpush1.xpose.msra.mxu0 0.0
    %765 = vmatprep.mubr.f32.mxu0 0.0
    %766 = vmatmul.mubr.f32.gmra.mrb[0].mxu0 %v696
    %v767 = vpop.f32.mrb[0].mxu0
    %v768 = vadd.f32 0.0, %v767
    %v769 = vpop.f32.mrb[0].mxu0
    %770 = vdwg.mxu0
    %v771 = vlaneseq
    %v772 = vshrl.u32 %v771, 7
    %v773 = vsub.s32 0, %v772
    %v774 = vrot.slane %v428, %v773
    %775 = vrot.lane.b32.xlu0 %v774, 32
    %v776 = vpop.permute.xlu0 %775
    %v777 = vsel %vm291, %v776, 0
    %v780 = vsel %vm291, %v253, 0
    %782 = vmatprep.subr.mxu0 0.0
    %783 = vmatpush1.xpose.msra.mxu0 %v780
    %784 = vmatprep.subr.mxu0 0.0
    %785 = vmatpush1.xpose.msra.mxu0 0.0
    %786 = vmatprep.subr.mxu0 0.0
    %787 = vmatpush1.xpose.msra.mxu0 0.0
    %788 = vmatprep.subr.mxu0 0.0
    %789 = vmatpush1.xpose.msra.mxu0 0.0
    %790 = vmatprep.subr.mxu0 0.0
    %791 = vmatpush1.xpose.msra.mxu0 0.0
    %792 = vmatprep.subr.mxu0 0.0
    %793 = vmatpush1.xpose.msra.mxu0 0.0
    %794 = vmatprep.subr.mxu0 0.0
    %795 = vmatpush1.xpose.msra.mxu0 0.0
    %796 = vmatprep.subr.mxu0 0.0
    %797 = vmatpush1.xpose.msra.mxu0 0.0
    %798 = vmatprep.subr.mxu0 0.0
    %799 = vmatpush1.xpose.msra.mxu0 0.0
    %800 = vmatprep.subr.mxu0 0.0
    %801 = vmatpush1.xpose.msra.mxu0 0.0
    %802 = vmatprep.subr.mxu0 0.0
    %803 = vmatpush1.xpose.msra.mxu0 0.0
    %804 = vmatprep.subr.mxu0 0.0
    %805 = vmatpush1.xpose.msra.mxu0 0.0
    %806 = vmatprep.subr.mxu0 0.0
    %807 = vmatpush1.xpose.msra.mxu0 0.0
    %808 = vmatprep.subr.mxu0 0.0
    %809 = vmatpush1.xpose.msra.mxu0 0.0
    %810 = vmatprep.subr.mxu0 0.0
    %811 = vmatpush1.xpose.msra.mxu0 0.0
    %812 = vmatprep.subr.mxu0 0.0
    %813 = vmatpush1.xpose.msra.mxu0 0.0
    %814 = vmatprep.subr.mxu0 0.0
    %815 = vmatpush1.xpose.msra.mxu0 0.0
    %816 = vmatprep.subr.mxu0 0.0
    %817 = vmatpush1.xpose.msra.mxu0 0.0
    %818 = vmatprep.subr.mxu0 0.0
    %819 = vmatpush1.xpose.msra.mxu0 0.0
    %820 = vmatprep.subr.mxu0 0.0
    %821 = vmatpush1.xpose.msra.mxu0 0.0
    %822 = vmatprep.subr.mxu0 0.0
    %823 = vmatpush1.xpose.msra.mxu0 0.0
    %824 = vmatprep.subr.mxu0 0.0
    %825 = vmatpush1.xpose.msra.mxu0 0.0
    %826 = vmatprep.subr.mxu0 0.0
    %827 = vmatpush1.xpose.msra.mxu0 0.0
    %828 = vmatprep.subr.mxu0 0.0
    %829 = vmatpush1.xpose.msra.mxu0 0.0
    %830 = vmatprep.subr.mxu0 0.0
    %831 = vmatpush1.xpose.msra.mxu0 0.0
    %832 = vmatprep.subr.mxu0 0.0
    %833 = vmatpush1.xpose.msra.mxu0 0.0
    %834 = vmatprep.subr.mxu0 0.0
    %835 = vmatpush1.xpose.msra.mxu0 0.0
    %836 = vmatprep.subr.mxu0 0.0
    %837 = vmatpush1.xpose.msra.mxu0 0.0
    %838 = vmatprep.subr.mxu0 0.0
    %839 = vmatpush1.xpose.msra.mxu0 0.0
    %840 = vmatprep.subr.mxu0 0.0
    %841 = vmatpush1.xpose.msra.mxu0 0.0
    %842 = vmatprep.subr.mxu0 0.0
    %843 = vmatpush1.xpose.msra.mxu0 0.0
    %844 = vmatprep.subr.mxu0 0.0
    %845 = vmatpush1.xpose.msra.mxu0 0.0
    %846 = vmatprep.mubr.f32.mxu0 0.0
    %847 = vmatmul.mubr.f32.gmra.mrb[0].mxu0 %v777
    %v848 = vpop.f32.mrb[0].mxu0
    %v849 = vadd.f32 0.0, %v848
    %v850 = vpop.f32.mrb[0].mxu0
    %851 = vdwg.mxu0
    %v852 = vlaneseq
    %v853 = vshrl.u32 %v852, 7
    %v854 = vsub.s32 0, %v853
    %v855 = vrot.slane %v442, %v854
    %856 = vrot.lane.b32.xlu0 %v855, 32
    %v857 = vpop.permute.xlu0 %856
    %v858 = vsel %vm291, %v857, 0
    %v861 = vsel %vm291, %v254, 0
    %863 = vmatprep.subr.mxu0 0.0
    %864 = vmatpush1.xpose.msra.mxu0 %v861
    %865 = vmatprep.subr.mxu0 0.0
    %866 = vmatpush1.xpose.msra.mxu0 0.0
    %867 = vmatprep.subr.mxu0 0.0
    %868 = vmatpush1.xpose.msra.mxu0 0.0
    %869 = vmatprep.subr.mxu0 0.0
    %870 = vmatpush1.xpose.msra.mxu0 0.0
    %871 = vmatprep.subr.mxu0 0.0
    %872 = vmatpush1.xpose.msra.mxu0 0.0
    %873 = vmatprep.subr.mxu0 0.0
    %874 = vmatpush1.xpose.msra.mxu0 0.0
    %875 = vmatprep.subr.mxu0 0.0
    %876 = vmatpush1.xpose.msra.mxu0 0.0
    %877 = vmatprep.subr.mxu0 0.0
    %878 = vmatpush1.xpose.msra.mxu0 0.0
    %879 = vmatprep.subr.mxu0 0.0
    %880 = vmatpush1.xpose.msra.mxu0 0.0
    %881 = vmatprep.subr.mxu0 0.0
    %882 = vmatpush1.xpose.msra.mxu0 0.0
    %883 = vmatprep.subr.mxu0 0.0
    %884 = vmatpush1.xpose.msra.mxu0 0.0
    %885 = vmatprep.subr.mxu0 0.0
    %886 = vmatpush1.xpose.msra.mxu0 0.0
    %887 = vmatprep.subr.mxu0 0.0
    %888 = vmatpush1.xpose.msra.mxu0 0.0
    %889 = vmatprep.subr.mxu0 0.0
    %890 = vmatpush1.xpose.msra.mxu0 0.0
    %891 = vmatprep.subr.mxu0 0.0
    %892 = vmatpush1.xpose.msra.mxu0 0.0
    %893 = vmatprep.subr.mxu0 0.0
    %894 = vmatpush1.xpose.msra.mxu0 0.0
    %895 = vmatprep.subr.mxu0 0.0
    %896 = vmatpush1.xpose.msra.mxu0 0.0
    %897 = vmatprep.subr.mxu0 0.0
    %898 = vmatpush1.xpose.msra.mxu0 0.0
    %899 = vmatprep.subr.mxu0 0.0
    %900 = vmatpush1.xpose.msra.mxu0 0.0
    %901 = vmatprep.subr.mxu0 0.0
    %902 = vmatpush1.xpose.msra.mxu0 0.0
    %903 = vmatprep.subr.mxu0 0.0
    %904 = vmatpush1.xpose.msra.mxu0 0.0
    %905 = vmatprep.subr.mxu0 0.0
    %906 = vmatpush1.xpose.msra.mxu0 0.0
    %907 = vmatprep.subr.mxu0 0.0
    %908 = vmatpush1.xpose.msra.mxu0 0.0
    %909 = vmatprep.subr.mxu0 0.0
    %910 = vmatpush1.xpose.msra.mxu0 0.0
    %911 = vmatprep.subr.mxu0 0.0
    %912 = vmatpush1.xpose.msra.mxu0 0.0
    %913 = vmatprep.subr.mxu0 0.0
    %914 = vmatpush1.xpose.msra.mxu0 0.0
    %915 = vmatprep.subr.mxu0 0.0
    %916 = vmatpush1.xpose.msra.mxu0 0.0
    %917 = vmatprep.subr.mxu0 0.0
    %918 = vmatpush1.xpose.msra.mxu0 0.0
    %919 = vmatprep.subr.mxu0 0.0
    %920 = vmatpush1.xpose.msra.mxu0 0.0
    %921 = vmatprep.subr.mxu0 0.0
    %922 = vmatpush1.xpose.msra.mxu0 0.0
    %923 = vmatprep.subr.mxu0 0.0
    %924 = vmatpush1.xpose.msra.mxu0 0.0
    %925 = vmatprep.subr.mxu0 0.0
    %926 = vmatpush1.xpose.msra.mxu0 0.0
    %927 = vmatprep.mubr.f32.mxu0 0.0
    %928 = vmatmul.mubr.f32.gmra.mrb[0].mxu0 %v858
    %v929 = vpop.f32.mrb[0].mxu0
    %v930 = vadd.f32 0.0, %v929
    %v931 = vpop.f32.mrb[0].mxu0
    %932 = vdwg.mxu0
    %v933 = vlaneseq
    %v934 = vshrl.u32 %v933, 7
    %v935 = vsub.s32 0, %v934
    %v936 = vrot.slane %v444, %v935
    %937 = vrot.lane.b32.xlu0 %v936, 32
    %v938 = vpop.permute.xlu0 %937
    %v939 = vsel %vm291, %v938, 0
    %v942 = vsel %vm291, %v255, 0
    %944 = vmatprep.subr.mxu0 0.0
    %945 = vmatpush1.xpose.msra.mxu0 %v942
    %946 = vmatprep.subr.mxu0 0.0
    %947 = vmatpush1.xpose.msra.mxu0 0.0
    %948 = vmatprep.subr.mxu0 0.0
    %949 = vmatpush1.xpose.msra.mxu0 0.0
    %950 = vmatprep.subr.mxu0 0.0
    %951 = vmatpush1.xpose.msra.mxu0 0.0
    %952 = vmatprep.subr.mxu0 0.0
    %953 = vmatpush1.xpose.msra.mxu0 0.0
    %954 = vmatprep.subr.mxu0 0.0
    %955 = vmatpush1.xpose.msra.mxu0 0.0
    %956 = vmatprep.subr.mxu0 0.0
    %957 = vmatpush1.xpose.msra.mxu0 0.0
    %958 = vmatprep.subr.mxu0 0.0
    %959 = vmatpush1.xpose.msra.mxu0 0.0
    %960 = vmatprep.subr.mxu0 0.0
    %961 = vmatpush1.xpose.msra.mxu0 0.0
    %962 = vmatprep.subr.mxu0 0.0
    %963 = vmatpush1.xpose.msra.mxu0 0.0
    %964 = vmatprep.subr.mxu0 0.0
    %965 = vmatpush1.xpose.msra.mxu0 0.0
    %966 = vmatprep.subr.mxu0 0.0
    %967 = vmatpush1.xpose.msra.mxu0 0.0
    %968 = vmatprep.subr.mxu0 0.0
    %969 = vmatpush1.xpose.msra.mxu0 0.0
    %970 = vmatprep.subr.mxu0 0.0
    %971 = vmatpush1.xpose.msra.mxu0 0.0
    %972 = vmatprep.subr.mxu0 0.0
    %973 = vmatpush1.xpose.msra.mxu0 0.0
    %974 = vmatprep.subr.mxu0 0.0
    %975 = vmatpush1.xpose.msra.mxu0 0.0
    %976 = vmatprep.subr.mxu0 0.0
    %977 = vmatpush1.xpose.msra.mxu0 0.0
    %978 = vmatprep.subr.mxu0 0.0
    %979 = vmatpush1.xpose.msra.mxu0 0.0
    %980 = vmatprep.subr.mxu0 0.0
    %981 = vmatpush1.xpose.msra.mxu0 0.0
    %982 = vmatprep.subr.mxu0 0.0
    %983 = vmatpush1.xpose.msra.mxu0 0.0
    %984 = vmatprep.subr.mxu0 0.0
    %985 = vmatpush1.xpose.msra.mxu0 0.0
    %986 = vmatprep.subr.mxu0 0.0
    %987 = vmatpush1.xpose.msra.mxu0 0.0
    %988 = vmatprep.subr.mxu0 0.0
    %989 = vmatpush1.xpose.msra.mxu0 0.0
    %990 = vmatprep.subr.mxu0 0.0
    %991 = vmatpush1.xpose.msra.mxu0 0.0
    %992 = vmatprep.subr.mxu0 0.0
    %993 = vmatpush1.xpose.msra.mxu0 0.0
    %994 = vmatprep.subr.mxu0 0.0
    %995 = vmatpush1.xpose.msra.mxu0 0.0
    %996 = vmatprep.subr.mxu0 0.0
    %997 = vmatpush1.xpose.msra.mxu0 0.0
    %998 = vmatprep.subr.mxu0 0.0
    %999 = vmatpush1.xpose.msra.mxu0 0.0
    %1000 = vmatprep.subr.mxu0 0.0
    %1001 = vmatpush1.xpose.msra.mxu0 0.0
    %1002 = vmatprep.subr.mxu0 0.0
    %1003 = vmatpush1.xpose.msra.mxu0 0.0
    %1004 = vmatprep.subr.mxu0 0.0
    %1005 = vmatpush1.xpose.msra.mxu0 0.0
    %1006 = vmatprep.subr.mxu0 0.0
    %1007 = vmatpush1.xpose.msra.mxu0 0.0
    %1008 = vmatprep.mubr.f32.mxu0 0.0
    %1009 = vmatmul.mubr.f32.gmra.mrb[0].mxu0 %v939
    %v1010 = vpop.f32.mrb[0].mxu0
    %v1011 = vadd.f32 0.0, %v1010
    %v1012 = vpop.f32.mrb[0].mxu0
    %1013 = vdwg.mxu0
    %v1014 = vlaneseq
    %v1015 = vshrl.u32 %v1014, 7
    %v1016 = vsub.s32 0, %v1015
    %v1017 = vrot.slane %v446, %v1016
    %1018 = vrot.lane.b32.xlu0 %v1017, 32
    %v1019 = vpop.permute.xlu0 %1018
    %v1020 = vsel %vm291, %v1019, 0
    %v1023 = vsel %vm291, %v256, 0
    %1025 = vmatprep.subr.mxu0 0.0
    %1026 = vmatpush1.xpose.msra.mxu0 %v1023
    %1027 = vmatprep.subr.mxu0 0.0
    %1028 = vmatpush1.xpose.msra.mxu0 0.0
    %1029 = vmatprep.subr.mxu0 0.0
    %1030 = vmatpush1.xpose.msra.mxu0 0.0
    %1031 = vmatprep.subr.mxu0 0.0
    %1032 = vmatpush1.xpose.msra.mxu0 0.0
    %1033 = vmatprep.subr.mxu0 0.0
    %1034 = vmatpush1.xpose.msra.mxu0 0.0
    %1035 = vmatprep.subr.mxu0 0.0
    %1036 = vmatpush1.xpose.msra.mxu0 0.0
    %1037 = vmatprep.subr.mxu0 0.0
    %1038 = vmatpush1.xpose.msra.mxu0 0.0
    %1039 = vmatprep.subr.mxu0 0.0
    %1040 = vmatpush1.xpose.msra.mxu0 0.0
    %1041 = vmatprep.subr.mxu0 0.0
    %1042 = vmatpush1.xpose.msra.mxu0 0.0
    %1043 = vmatprep.subr.mxu0 0.0
    %1044 = vmatpush1.xpose.msra.mxu0 0.0
    %1045 = vmatprep.subr.mxu0 0.0
    %1046 = vmatpush1.xpose.msra.mxu0 0.0
    %1047 = vmatprep.subr.mxu0 0.0
    %1048 = vmatpush1.xpose.msra.mxu0 0.0
    %1049 = vmatprep.subr.mxu0 0.0
    %1050 = vmatpush1.xpose.msra.mxu0 0.0
    %1051 = vmatprep.subr.mxu0 0.0
    %1052 = vmatpush1.xpose.msra.mxu0 0.0
    %1053 = vmatprep.subr.mxu0 0.0
    %1054 = vmatpush1.xpose.msra.mxu0 0.0
    %1055 = vmatprep.subr.mxu0 0.0
    %1056 = vmatpush1.xpose.msra.mxu0 0.0
    %1057 = vmatprep.subr.mxu0 0.0
    %1058 = vmatpush1.xpose.msra.mxu0 0.0
    %1059 = vmatprep.subr.mxu0 0.0
    %1060 = vmatpush1.xpose.msra.mxu0 0.0
    %1061 = vmatprep.subr.mxu0 0.0
    %1062 = vmatpush1.xpose.msra.mxu0 0.0
    %1063 = vmatprep.subr.mxu0 0.0
    %1064 = vmatpush1.xpose.msra.mxu0 0.0
    %1065 = vmatprep.subr.mxu0 0.0
    %1066 = vmatpush1.xpose.msra.mxu0 0.0
    %1067 = vmatprep.subr.mxu0 0.0
    %1068 = vmatpush1.xpose.msra.mxu0 0.0
    %1069 = vmatprep.subr.mxu0 0.0
    %1070 = vmatpush1.xpose.msra.mxu0 0.0
    %1071 = vmatprep.subr.mxu0 0.0
    %1072 = vmatpush1.xpose.msra.mxu0 0.0
    %1073 = vmatprep.subr.mxu0 0.0
    %1074 = vmatpush1.xpose.msra.mxu0 0.0
    %1075 = vmatprep.subr.mxu0 0.0
    %1076 = vmatpush1.xpose.msra.mxu0 0.0
    %1077 = vmatprep.subr.mxu0 0.0
    %1078 = vmatpush1.xpose.msra.mxu0 0.0
    %1079 = vmatprep.subr.mxu0 0.0
    %1080 = vmatpush1.xpose.msra.mxu0 0.0
    %1081 = vmatprep.subr.mxu0 0.0
    %1082 = vmatpush1.xpose.msra.mxu0 0.0
    %1083 = vmatprep.subr.mxu0 0.0
    %1084 = vmatpush1.xpose.msra.mxu0 0.0
    %1085 = vmatprep.subr.mxu0 0.0
    %1086 = vmatpush1.xpose.msra.mxu0 0.0
    %1087 = vmatprep.subr.mxu0 0.0
    %1088 = vmatpush1.xpose.msra.mxu0 0.0
    %1089 = vmatprep.mubr.f32.mxu0 0.0
    %1090 = vmatmul.mubr.f32.gmra.mrb[0].mxu0 %v1020
    %v1091 = vpop.f32.mrb[0].mxu0
    %v1092 = vadd.f32 0.0, %v1091
    %v1093 = vpop.f32.mrb[0].mxu0
    %1094 = vdwg.mxu0
    %vm1095 = vcmask 57344
    %v1096 = vsel %vm1095, %v525, -inf
    %1097 = vmax.xlane.f32.xlu0 %v1096
    %v1098 = vpop.xlane.xlu0 %1097
    %v1099 = vsel %vm1095, %v606, -inf
    %1100 = vmax.xlane.f32.xlu0 %v1099
    %v1101 = vpop.xlane.xlu0 %1100
    %v1102 = vsel %vm1095, %v687, -inf
    %1103 = vmax.xlane.f32.xlu0 %v1102
    %v1104 = vpop.xlane.xlu0 %1103
    %v1105 = vsel %vm1095, %v768, -inf
    %1106 = vmax.xlane.f32.xlu0 %v1105
    %v1107 = vpop.xlane.xlu0 %1106
    %v1108 = vsel %vm1095, %v849, -inf
    %1109 = vmax.xlane.f32.xlu0 %v1108
    %v1110 = vpop.xlane.xlu0 %1109
    %v1111 = vsel %vm1095, %v930, -inf
    %1112 = vmax.xlane.f32.xlu0 %v1111
    %v1113 = vpop.xlane.xlu0 %1112
    %v1114 = vsel %vm1095, %v1011, -inf
    %1115 = vmax.xlane.f32.xlu0 %v1114
    %v1116 = vpop.xlane.xlu0 %1115
    %v1117 = vsel %vm1095, %v1092, -inf
    %1118 = vmax.xlane.f32.xlu0 %v1117
    %v1119 = vpop.xlane.xlu0 %1118
    %v1120 = vsub.f32 %v525, %v1098
    %v1121 = vsub.f32 %v606, %v1101
    %v1122 = vsub.f32 %v687, %v1104
    %v1123 = vsub.f32 %v768, %v1107
    %v1124 = vsub.f32 %v849, %v1110
    %v1125 = vsub.f32 %v930, %v1113
    %v1126 = vsub.f32 %v1011, %v1116
    %v1127 = vsub.f32 %v1092, %v1119
    %v1128 = vmul.f32 %v1120, 1.442695
    %v1129 = vpow.pop %v1128
    %v1130 = vmul.f32 %v1121, 1.442695
    %v1131 = vpow.pop %v1130
    %v1132 = vmul.f32 %v1122, 1.442695
    %v1133 = vpow.pop %v1132
    %v1134 = vmul.f32 %v1123, 1.442695
    %v1135 = vpow.pop %v1134
    %v1136 = vmul.f32 %v1124, 1.442695
    %v1137 = vpow.pop %v1136
    %v1138 = vmul.f32 %v1125, 1.442695
    %v1139 = vpow.pop %v1138
    %v1140 = vmul.f32 %v1126, 1.442695
    %v1141 = vpow.pop %v1140
    %v1142 = vmul.f32 %v1127, 1.442695
    %v1143 = vpow.pop %v1142
    %v1144 = vsel %vm1095, %v1129, 0.0
    %1145 = vadd.xlane.f32.xlu0 %v1144
    %v1146 = vpop.xlane.xlu0 %1145
    %v1147 = vsel %vm1095, %v1131, 0.0
    %1148 = vadd.xlane.f32.xlu0 %v1147
    %v1149 = vpop.xlane.xlu0 %1148
    %v1150 = vsel %vm1095, %v1133, 0.0
    %1151 = vadd.xlane.f32.xlu0 %v1150
    %v1152 = vpop.xlane.xlu0 %1151
    %v1153 = vsel %vm1095, %v1135, 0.0
    %1154 = vadd.xlane.f32.xlu0 %v1153
    %v1155 = vpop.xlane.xlu0 %1154
    %v1156 = vsel %vm1095, %v1137, 0.0
    %1157 = vadd.xlane.f32.xlu0 %v1156
    %v1158 = vpop.xlane.xlu0 %1157
    %v1159 = vsel %vm1095, %v1139, 0.0
    %1160 = vadd.xlane.f32.xlu0 %v1159
    %v1161 = vpop.xlane.xlu0 %1160
    %v1162 = vsel %vm1095, %v1141, 0.0
    %1163 = vadd.xlane.f32.xlu0 %v1162
    %v1164 = vpop.xlane.xlu0 %1163
    %v1165 = vsel %vm1095, %v1143, 0.0
    %1166 = vadd.xlane.f32.xlu0 %v1165
    %v1167 = vpop.xlane.xlu0 %1166
    %v1168 = vrcp.pop %v1146
    %v1169 = vrcp.pop %v1149
    %v1170 = vrcp.pop %v1152
    %v1171 = vrcp.pop %v1155
    %v1172 = vrcp.pop %v1158
    %v1173 = vrcp.pop %v1161
    %v1174 = vrcp.pop %v1164
    %v1175 = vrcp.pop %v1167
    %v1176 = vmul.f32 %v1146, %v1168
    %v1177 = vmul.f32 %v1149, %v1169
    %v1178 = vmul.f32 %v1152, %v1170
    %v1179 = vmul.f32 %v1155, %v1171
    %v1180 = vmul.f32 %v1158, %v1172
    %v1181 = vmul.f32 %v1161, %v1173
    %v1182 = vmul.f32 %v1164, %v1174
    %v1183 = vmul.f32 %v1167, %v1175
    %v1184 = vsub.f32 2.0, %v1176
    %v1185 = vsub.f32 2.0, %v1177
    %v1186 = vsub.f32 2.0, %v1178
    %v1187 = vsub.f32 2.0, %v1179
    %v1188 = vsub.f32 2.0, %v1180
    %v1189 = vsub.f32 2.0, %v1181
    %v1190 = vsub.f32 2.0, %v1182
    %v1191 = vsub.f32 2.0, %v1183
    %v1192 = vmul.f32 %v1168, %v1184
    %v1193 = vmul.f32 %v1169, %v1185
    %v1194 = vmul.f32 %v1170, %v1186
    %v1195 = vmul.f32 %v1171, %v1187
    %v1196 = vmul.f32 %v1172, %v1188
    %v1197 = vmul.f32 %v1173, %v1189
    %v1198 = vmul.f32 %v1174, %v1190
    %v1199 = vmul.f32 %v1175, %v1191
    %v1200 = vmul.f32 %v1129, %v1192
    %v1201 = vmul.f32 %v1131, %v1193
    %v1202 = vmul.f32 %v1133, %v1194
    %v1203 = vmul.f32 %v1135, %v1195
    %v1204 = vmul.f32 %v1137, %v1196
    %v1205 = vmul.f32 %v1139, %v1197
    %v1206 = vmul.f32 %v1141, %v1198
    %v1207 = vmul.f32 %v1143, %v1199
    %vm1208 = vcmask 64512
    %v1210 = vsel %vm1208, %v1200, 0
    %1212 = vmatprep.subr.mxu0 0.0
    %1213 = vmatpush1.msra.mxu0 %v241
    %1214 = vmatprep.subr.mxu0 0.0
    %1215 = vmatpush1.msra.mxu0 0.0
    %1216 = vmatprep.subr.mxu0 0.0
    %1217 = vmatpush1.msra.mxu0 0.0
    %1218 = vmatprep.subr.mxu0 0.0
    %1219 = vmatpush1.msra.mxu0 0.0
    %1220 = vmatprep.subr.mxu0 0.0
    %1221 = vmatpush1.msra.mxu0 0.0
    %1222 = vmatprep.subr.mxu0 0.0
    %1223 = vmatpush1.msra.mxu0 0.0
    %1224 = vmatprep.subr.mxu0 0.0
    %1225 = vmatpush1.msra.mxu0 0.0
    %1226 = vmatprep.subr.mxu0 0.0
    %1227 = vmatpush1.msra.mxu0 0.0
    %1228 = vmatprep.subr.mxu0 0.0
    %1229 = vmatpush1.msra.mxu0 0.0
    %1230 = vmatprep.subr.mxu0 0.0
    %1231 = vmatpush1.msra.mxu0 0.0
    %1232 = vmatprep.subr.mxu0 0.0
    %1233 = vmatpush1.msra.mxu0 0.0
    %1234 = vmatprep.subr.mxu0 0.0
    %1235 = vmatpush1.msra.mxu0 0.0
    %1236 = vmatprep.subr.mxu0 0.0
    %1237 = vmatpush1.msra.mxu0 0.0
    %1238 = vmatprep.subr.mxu0 0.0
    %1239 = vmatpush1.msra.mxu0 0.0
    %1240 = vmatprep.subr.mxu0 0.0
    %1241 = vmatpush1.msra.mxu0 0.0
    %1242 = vmatprep.subr.mxu0 0.0
    %1243 = vmatpush1.msra.mxu0 0.0
    %1244 = vmatprep.subr.mxu0 0.0
    %1245 = vmatpush1.msra.mxu0 0.0
    %1246 = vmatprep.subr.mxu0 0.0
    %1247 = vmatpush1.msra.mxu0 0.0
    %1248 = vmatprep.subr.mxu0 0.0
    %1249 = vmatpush1.msra.mxu0 0.0
    %1250 = vmatprep.subr.mxu0 0.0
    %1251 = vmatpush1.msra.mxu0 0.0
    %1252 = vmatprep.subr.mxu0 0.0
    %1253 = vmatpush1.msra.mxu0 0.0
    %1254 = vmatprep.subr.mxu0 0.0
    %1255 = vmatpush1.msra.mxu0 0.0
    %1256 = vmatprep.subr.mxu0 0.0
    %1257 = vmatpush1.msra.mxu0 0.0
    %1258 = vmatprep.subr.mxu0 0.0
    %1259 = vmatpush1.msra.mxu0 0.0
    %1260 = vmatprep.subr.mxu0 0.0
    %1261 = vmatpush1.msra.mxu0 0.0
    %1262 = vmatprep.subr.mxu0 0.0
    %1263 = vmatpush1.msra.mxu0 0.0
    %1264 = vmatprep.subr.mxu0 0.0
    %1265 = vmatpush1.msra.mxu0 0.0
    %1266 = vmatprep.subr.mxu0 0.0
    %1267 = vmatpush1.msra.mxu0 0.0
    %1268 = vmatprep.subr.mxu0 0.0
    %1269 = vmatpush1.msra.mxu0 0.0
    %1270 = vmatprep.subr.mxu0 0.0
    %1271 = vmatpush1.msra.mxu0 0.0
    %1272 = vmatprep.subr.mxu0 0.0
    %1273 = vmatpush1.msra.mxu0 0.0
    %1274 = vmatprep.subr.mxu0 0.0
    %1275 = vmatpush1.msra.mxu0 0.0
    %1276 = vmatprep.mubr.f32.mxu0 0.0
    %1277 = vmatmul.mubr.f32.gmra.mrb[0].mxu0 %v1210
    %v1278 = vpop.f32.mrb[0].mxu0
    %v1279 = vadd.f32 0.0, %v1278
    %v1280 = vpop.f32.mrb[0].mxu0
    %1281 = vdwg.mxu0
    %v1283 = vsel %vm1208, %v1201, 0
    %1285 = vmatprep.subr.mxu0 0.0
    %1286 = vmatpush1.msra.mxu0 %v242
    %1287 = vmatprep.subr.mxu0 0.0
    %1288 = vmatpush1.msra.mxu0 0.0
    %1289 = vmatprep.subr.mxu0 0.0
    %1290 = vmatpush1.msra.mxu0 0.0
    %1291 = vmatprep.subr.mxu0 0.0
    %1292 = vmatpush1.msra.mxu0 0.0
    %1293 = vmatprep.subr.mxu0 0.0
    %1294 = vmatpush1.msra.mxu0 0.0
    %1295 = vmatprep.subr.mxu0 0.0
    %1296 = vmatpush1.msra.mxu0 0.0
    %1297 = vmatprep.subr.mxu0 0.0
    %1298 = vmatpush1.msra.mxu0 0.0
    %1299 = vmatprep.subr.mxu0 0.0
    %1300 = vmatpush1.msra.mxu0 0.0
    %1301 = vmatprep.subr.mxu0 0.0
    %1302 = vmatpush1.msra.mxu0 0.0
    %1303 = vmatprep.subr.mxu0 0.0
    %1304 = vmatpush1.msra.mxu0 0.0
    %1305 = vmatprep.subr.mxu0 0.0
    %1306 = vmatpush1.msra.mxu0 0.0
    %1307 = vmatprep.subr.mxu0 0.0
    %1308 = vmatpush1.msra.mxu0 0.0
    %1309 = vmatprep.subr.mxu0 0.0
    %1310 = vmatpush1.msra.mxu0 0.0
    %1311 = vmatprep.subr.mxu0 0.0
    %1312 = vmatpush1.msra.mxu0 0.0
    %1313 = vmatprep.subr.mxu0 0.0
    %1314 = vmatpush1.msra.mxu0 0.0
    %1315 = vmatprep.subr.mxu0 0.0
    %1316 = vmatpush1.msra.mxu0 0.0
    %1317 = vmatprep.subr.mxu0 0.0
    %1318 = vmatpush1.msra.mxu0 0.0
    %1319 = vmatprep.subr.mxu0 0.0
    %1320 = vmatpush1.msra.mxu0 0.0
    %1321 = vmatprep.subr.mxu0 0.0
    %1322 = vmatpush1.msra.mxu0 0.0
    %1323 = vmatprep.subr.mxu0 0.0
    %1324 = vmatpush1.msra.mxu0 0.0
    %1325 = vmatprep.subr.mxu0 0.0
    %1326 = vmatpush1.msra.mxu0 0.0
    %1327 = vmatprep.subr.mxu0 0.0
    %1328 = vmatpush1.msra.mxu0 0.0
    %1329 = vmatprep.subr.mxu0 0.0
    %1330 = vmatpush1.msra.mxu0 0.0
    %1331 = vmatprep.subr.mxu0 0.0
    %1332 = vmatpush1.msra.mxu0 0.0
    %1333 = vmatprep.subr.mxu0 0.0
    %1334 = vmatpush1.msra.mxu0 0.0
    %1335 = vmatprep.subr.mxu0 0.0
    %1336 = vmatpush1.msra.mxu0 0.0
    %1337 = vmatprep.subr.mxu0 0.0
    %1338 = vmatpush1.msra.mxu0 0.0
    %1339 = vmatprep.subr.mxu0 0.0
    %1340 = vmatpush1.msra.mxu0 0.0
    %1341 = vmatprep.subr.mxu0 0.0
    %1342 = vmatpush1.msra.mxu0 0.0
    %1343 = vmatprep.subr.mxu0 0.0
    %1344 = vmatpush1.msra.mxu0 0.0
    %1345 = vmatprep.subr.mxu0 0.0
    %1346 = vmatpush1.msra.mxu0 0.0
    %1347 = vmatprep.subr.mxu0 0.0
    %1348 = vmatpush1.msra.mxu0 0.0
    %1349 = vmatprep.mubr.f32.mxu0 0.0
    %1350 = vmatmul.mubr.f32.gmra.mrb[0].mxu0 %v1283
    %v1351 = vpop.f32.mrb[0].mxu0
    %v1352 = vadd.f32 0.0, %v1351
    %v1353 = vpop.f32.mrb[0].mxu0
    %1354 = vdwg.mxu0
    %v1356 = vsel %vm1208, %v1202, 0
    %1358 = vmatprep.subr.mxu0 0.0
    %1359 = vmatpush1.msra.mxu0 %v243
    %1360 = vmatprep.subr.mxu0 0.0
    %1361 = vmatpush1.msra.mxu0 0.0
    %1362 = vmatprep.subr.mxu0 0.0
    %1363 = vmatpush1.msra.mxu0 0.0
    %1364 = vmatprep.subr.mxu0 0.0
    %1365 = vmatpush1.msra.mxu0 0.0
    %1366 = vmatprep.subr.mxu0 0.0
    %1367 = vmatpush1.msra.mxu0 0.0
    %1368 = vmatprep.subr.mxu0 0.0
    %1369 = vmatpush1.msra.mxu0 0.0
    %1370 = vmatprep.subr.mxu0 0.0
    %1371 = vmatpush1.msra.mxu0 0.0
    %1372 = vmatprep.subr.mxu0 0.0
    %1373 = vmatpush1.msra.mxu0 0.0
    %1374 = vmatprep.subr.mxu0 0.0
    %1375 = vmatpush1.msra.mxu0 0.0
    %1376 = vmatprep.subr.mxu0 0.0
    %1377 = vmatpush1.msra.mxu0 0.0
    %1378 = vmatprep.subr.mxu0 0.0
    %1379 = vmatpush1.msra.mxu0 0.0
    %1380 = vmatprep.subr.mxu0 0.0
    %1381 = vmatpush1.msra.mxu0 0.0
    %1382 = vmatprep.subr.mxu0 0.0
    %1383 = vmatpush1.msra.mxu0 0.0
    %1384 = vmatprep.subr.mxu0 0.0
    %1385 = vmatpush1.msra.mxu0 0.0
    %1386 = vmatprep.subr.mxu0 0.0
    %1387 = vmatpush1.msra.mxu0 0.0
    %1388 = vmatprep.subr.mxu0 0.0
    %1389 = vmatpush1.msra.mxu0 0.0
    %1390 = vmatprep.subr.mxu0 0.0
    %1391 = vmatpush1.msra.mxu0 0.0
    %1392 = vmatprep.subr.mxu0 0.0
    %1393 = vmatpush1.msra.mxu0 0.0
    %1394 = vmatprep.subr.mxu0 0.0
    %1395 = vmatpush1.msra.mxu0 0.0
    %1396 = vmatprep.subr.mxu0 0.0
    %1397 = vmatpush1.msra.mxu0 0.0
    %1398 = vmatprep.subr.mxu0 0.0
    %1399 = vmatpush1.msra.mxu0 0.0
    %1400 = vmatprep.subr.mxu0 0.0
    %1401 = vmatpush1.msra.mxu0 0.0
    %1402 = vmatprep.subr.mxu0 0.0
    %1403 = vmatpush1.msra.mxu0 0.0
    %1404 = vmatprep.subr.mxu0 0.0
    %1405 = vmatpush1.msra.mxu0 0.0
    %1406 = vmatprep.subr.mxu0 0.0
    %1407 = vmatpush1.msra.mxu0 0.0
    %1408 = vmatprep.subr.mxu0 0.0
    %1409 = vmatpush1.msra.mxu0 0.0
    %1410 = vmatprep.subr.mxu0 0.0
    %1411 = vmatpush1.msra.mxu0 0.0
    %1412 = vmatprep.subr.mxu0 0.0
    %1413 = vmatpush1.msra.mxu0 0.0
    %1414 = vmatprep.subr.mxu0 0.0
    %1415 = vmatpush1.msra.mxu0 0.0
    %1416 = vmatprep.subr.mxu0 0.0
    %1417 = vmatpush1.msra.mxu0 0.0
    %1418 = vmatprep.subr.mxu0 0.0
    %1419 = vmatpush1.msra.mxu0 0.0
    %1420 = vmatprep.subr.mxu0 0.0
    %1421 = vmatpush1.msra.mxu0 0.0
    %1422 = vmatprep.mubr.f32.mxu0 0.0
    %1423 = vmatmul.mubr.f32.gmra.mrb[0].mxu0 %v1356
    %v1424 = vpop.f32.mrb[0].mxu0
    %v1425 = vadd.f32 0.0, %v1424
    %v1426 = vpop.f32.mrb[0].mxu0
    %1427 = vdwg.mxu0
    %v1429 = vsel %vm1208, %v1203, 0
    %1431 = vmatprep.subr.mxu0 0.0
    %1432 = vmatpush1.msra.mxu0 %v244
    %1433 = vmatprep.subr.mxu0 0.0
    %1434 = vmatpush1.msra.mxu0 0.0
    %1435 = vmatprep.subr.mxu0 0.0
    %1436 = vmatpush1.msra.mxu0 0.0
    %1437 = vmatprep.subr.mxu0 0.0
    %1438 = vmatpush1.msra.mxu0 0.0
    %1439 = vmatprep.subr.mxu0 0.0
    %1440 = vmatpush1.msra.mxu0 0.0
    %1441 = vmatprep.subr.mxu0 0.0
    %1442 = vmatpush1.msra.mxu0 0.0
    %1443 = vmatprep.subr.mxu0 0.0
    %1444 = vmatpush1.msra.mxu0 0.0
    %1445 = vmatprep.subr.mxu0 0.0
    %1446 = vmatpush1.msra.mxu0 0.0
    %1447 = vmatprep.subr.mxu0 0.0
    %1448 = vmatpush1.msra.mxu0 0.0
    %1449 = vmatprep.subr.mxu0 0.0
    %1450 = vmatpush1.msra.mxu0 0.0
    %1451 = vmatprep.subr.mxu0 0.0
    %1452 = vmatpush1.msra.mxu0 0.0
    %1453 = vmatprep.subr.mxu0 0.0
    %1454 = vmatpush1.msra.mxu0 0.0
    %1455 = vmatprep.subr.mxu0 0.0
    %1456 = vmatpush1.msra.mxu0 0.0
    %1457 = vmatprep.subr.mxu0 0.0
    %1458 = vmatpush1.msra.mxu0 0.0
    %1459 = vmatprep.subr.mxu0 0.0
    %1460 = vmatpush1.msra.mxu0 0.0
    %1461 = vmatprep.subr.mxu0 0.0
    %1462 = vmatpush1.msra.mxu0 0.0
    %1463 = vmatprep.subr.mxu0 0.0
    %1464 = vmatpush1.msra.mxu0 0.0
    %1465 = vmatprep.subr.mxu0 0.0
    %1466 = vmatpush1.msra.mxu0 0.0
    %1467 = vmatprep.subr.mxu0 0.0
    %1468 = vmatpush1.msra.mxu0 0.0
    %1469 = vmatprep.subr.mxu0 0.0
    %1470 = vmatpush1.msra.mxu0 0.0
    %1471 = vmatprep.subr.mxu0 0.0
    %1472 = vmatpush1.msra.mxu0 0.0
    %1473 = vmatprep.subr.mxu0 0.0
    %1474 = vmatpush1.msra.mxu0 0.0
    %1475 = vmatprep.subr.mxu0 0.0
    %1476 = vmatpush1.msra.mxu0 0.0
    %1477 = vmatprep.subr.mxu0 0.0
    %1478 = vmatpush1.msra.mxu0 0.0
    %1479 = vmatprep.subr.mxu0 0.0
    %1480 = vmatpush1.msra.mxu0 0.0
    %1481 = vmatprep.subr.mxu0 0.0
    %1482 = vmatpush1.msra.mxu0 0.0
    %1483 = vmatprep.subr.mxu0 0.0
    %1484 = vmatpush1.msra.mxu0 0.0
    %1485 = vmatprep.subr.mxu0 0.0
    %1486 = vmatpush1.msra.mxu0 0.0
    %1487 = vmatprep.subr.mxu0 0.0
    %1488 = vmatpush1.msra.mxu0 0.0
    %1489 = vmatprep.subr.mxu0 0.0
    %1490 = vmatpush1.msra.mxu0 0.0
    %1491 = vmatprep.subr.mxu0 0.0
    %1492 = vmatpush1.msra.mxu0 0.0
    %1493 = vmatprep.subr.mxu0 0.0
    %1494 = vmatpush1.msra.mxu0 0.0
    %1495 = vmatprep.mubr.f32.mxu0 0.0
    %1496 = vmatmul.mubr.f32.gmra.mrb[0].mxu0 %v1429
    %v1497 = vpop.f32.mrb[0].mxu0
    %v1498 = vadd.f32 0.0, %v1497
    %v1499 = vpop.f32.mrb[0].mxu0
    %1500 = vdwg.mxu0
    %v1502 = vsel %vm1208, %v1204, 0
    %1504 = vmatprep.subr.mxu0 0.0
    %1505 = vmatpush1.msra.mxu0 %v245
    %1506 = vmatprep.subr.mxu0 0.0
    %1507 = vmatpush1.msra.mxu0 0.0
    %1508 = vmatprep.subr.mxu0 0.0
    %1509 = vmatpush1.msra.mxu0 0.0
    %1510 = vmatprep.subr.mxu0 0.0
    %1511 = vmatpush1.msra.mxu0 0.0
    %1512 = vmatprep.subr.mxu0 0.0
    %1513 = vmatpush1.msra.mxu0 0.0
    %1514 = vmatprep.subr.mxu0 0.0
    %1515 = vmatpush1.msra.mxu0 0.0
    %1516 = vmatprep.subr.mxu0 0.0
    %1517 = vmatpush1.msra.mxu0 0.0
    %1518 = vmatprep.subr.mxu0 0.0
    %1519 = vmatpush1.msra.mxu0 0.0
    %1520 = vmatprep.subr.mxu0 0.0
    %1521 = vmatpush1.msra.mxu0 0.0
    %1522 = vmatprep.subr.mxu0 0.0
    %1523 = vmatpush1.msra.mxu0 0.0
    %1524 = vmatprep.subr.mxu0 0.0
    %1525 = vmatpush1.msra.mxu0 0.0
    %1526 = vmatprep.subr.mxu0 0.0
    %1527 = vmatpush1.msra.mxu0 0.0
    %1528 = vmatprep.subr.mxu0 0.0
    %1529 = vmatpush1.msra.mxu0 0.0
    %1530 = vmatprep.subr.mxu0 0.0
    %1531 = vmatpush1.msra.mxu0 0.0
    %1532 = vmatprep.subr.mxu0 0.0
    %1533 = vmatpush1.msra.mxu0 0.0
    %1534 = vmatprep.subr.mxu0 0.0
    %1535 = vmatpush1.msra.mxu0 0.0
    %1536 = vmatprep.subr.mxu0 0.0
    %1537 = vmatpush1.msra.mxu0 0.0
    %1538 = vmatprep.subr.mxu0 0.0
    %1539 = vmatpush1.msra.mxu0 0.0
    %1540 = vmatprep.subr.mxu0 0.0
    %1541 = vmatpush1.msra.mxu0 0.0
    %1542 = vmatprep.subr.mxu0 0.0
    %1543 = vmatpush1.msra.mxu0 0.0
    %1544 = vmatprep.subr.mxu0 0.0
    %1545 = vmatpush1.msra.mxu0 0.0
    %1546 = vmatprep.subr.mxu0 0.0
    %1547 = vmatpush1.msra.mxu0 0.0
    %1548 = vmatprep.subr.mxu0 0.0
    %1549 = vmatpush1.msra.mxu0 0.0
    %1550 = vmatprep.subr.mxu0 0.0
    %1551 = vmatpush1.msra.mxu0 0.0
    %1552 = vmatprep.subr.mxu0 0.0
    %1553 = vmatpush1.msra.mxu0 0.0
    %1554 = vmatprep.subr.mxu0 0.0
    %1555 = vmatpush1.msra.mxu0 0.0
    %1556 = vmatprep.subr.mxu0 0.0
    %1557 = vmatpush1.msra.mxu0 0.0
    %1558 = vmatprep.subr.mxu0 0.0
    %1559 = vmatpush1.msra.mxu0 0.0
    %1560 = vmatprep.subr.mxu0 0.0
    %1561 = vmatpush1.msra.mxu0 0.0
    %1562 = vmatprep.subr.mxu0 0.0
    %1563 = vmatpush1.msra.mxu0 0.0
    %1564 = vmatprep.subr.mxu0 0.0
    %1565 = vmatpush1.msra.mxu0 0.0
    %1566 = vmatprep.subr.mxu0 0.0
    %1567 = vmatpush1.msra.mxu0 0.0
    %1568 = vmatprep.mubr.f32.mxu0 0.0
    %1569 = vmatmul.mubr.f32.gmra.mrb[0].mxu0 %v1502
    %v1570 = vpop.f32.mrb[0].mxu0
    %v1571 = vadd.f32 0.0, %v1570
    %v1572 = vpop.f32.mrb[0].mxu0
    %1573 = vdwg.mxu0
    %v1575 = vsel %vm1208, %v1205, 0
    %1577 = vmatprep.subr.mxu0 0.0
    %1578 = vmatpush1.msra.mxu0 %v246
    %1579 = vmatprep.subr.mxu0 0.0
    %1580 = vmatpush1.msra.mxu0 0.0
    %1581 = vmatprep.subr.mxu0 0.0
    %1582 = vmatpush1.msra.mxu0 0.0
    %1583 = vmatprep.subr.mxu0 0.0
    %1584 = vmatpush1.msra.mxu0 0.0
    %1585 = vmatprep.subr.mxu0 0.0
    %1586 = vmatpush1.msra.mxu0 0.0
    %1587 = vmatprep.subr.mxu0 0.0
    %1588 = vmatpush1.msra.mxu0 0.0
    %1589 = vmatprep.subr.mxu0 0.0
    %1590 = vmatpush1.msra.mxu0 0.0
    %1591 = vmatprep.subr.mxu0 0.0
    %1592 = vmatpush1.msra.mxu0 0.0
    %1593 = vmatprep.subr.mxu0 0.0
    %1594 = vmatpush1.msra.mxu0 0.0
    %1595 = vmatprep.subr.mxu0 0.0
    %1596 = vmatpush1.msra.mxu0 0.0
    %1597 = vmatprep.subr.mxu0 0.0
    %1598 = vmatpush1.msra.mxu0 0.0
    %1599 = vmatprep.subr.mxu0 0.0
    %1600 = vmatpush1.msra.mxu0 0.0
    %1601 = vmatprep.subr.mxu0 0.0
    %1602 = vmatpush1.msra.mxu0 0.0
    %1603 = vmatprep.subr.mxu0 0.0
    %1604 = vmatpush1.msra.mxu0 0.0
    %1605 = vmatprep.subr.mxu0 0.0
    %1606 = vmatpush1.msra.mxu0 0.0
    %1607 = vmatprep.subr.mxu0 0.0
    %1608 = vmatpush1.msra.mxu0 0.0
    %1609 = vmatprep.subr.mxu0 0.0
    %1610 = vmatpush1.msra.mxu0 0.0
    %1611 = vmatprep.subr.mxu0 0.0
    %1612 = vmatpush1.msra.mxu0 0.0
    %1613 = vmatprep.subr.mxu0 0.0
    %1614 = vmatpush1.msra.mxu0 0.0
    %1615 = vmatprep.subr.mxu0 0.0
    %1616 = vmatpush1.msra.mxu0 0.0
    %1617 = vmatprep.subr.mxu0 0.0
    %1618 = vmatpush1.msra.mxu0 0.0
    %1619 = vmatprep.subr.mxu0 0.0
    %1620 = vmatpush1.msra.mxu0 0.0
    %1621 = vmatprep.subr.mxu0 0.0
    %1622 = vmatpush1.msra.mxu0 0.0
    %1623 = vmatprep.subr.mxu0 0.0
    %1624 = vmatpush1.msra.mxu0 0.0
    %1625 = vmatprep.subr.mxu0 0.0
    %1626 = vmatpush1.msra.mxu0 0.0
    %1627 = vmatprep.subr.mxu0 0.0
    %1628 = vmatpush1.msra.mxu0 0.0
    %1629 = vmatprep.subr.mxu0 0.0
    %1630 = vmatpush1.msra.mxu0 0.0
    %1631 = vmatprep.subr.mxu0 0.0
    %1632 = vmatpush1.msra.mxu0 0.0
    %1633 = vmatprep.subr.mxu0 0.0
    %1634 = vmatpush1.msra.mxu0 0.0
    %1635 = vmatprep.subr.mxu0 0.0
    %1636 = vmatpush1.msra.mxu0 0.0
    %1637 = vmatprep.subr.mxu0 0.0
    %1638 = vmatpush1.msra.mxu0 0.0
    %1639 = vmatprep.subr.mxu0 0.0
    %1640 = vmatpush1.msra.mxu0 0.0
    %1641 = vmatprep.mubr.f32.mxu0 0.0
    %1642 = vmatmul.mubr.f32.gmra.mrb[0].mxu0 %v1575
    %v1643 = vpop.f32.mrb[0].mxu0
    %v1644 = vadd.f32 0.0, %v1643
    %v1645 = vpop.f32.mrb[0].mxu0
    %1646 = vdwg.mxu0
    %v1648 = vsel %vm1208, %v1206, 0
    %1650 = vmatprep.subr.mxu0 0.0
    %1651 = vmatpush1.msra.mxu0 %v247
    %1652 = vmatprep.subr.mxu0 0.0
    %1653 = vmatpush1.msra.mxu0 0.0
    %1654 = vmatprep.subr.mxu0 0.0
    %1655 = vmatpush1.msra.mxu0 0.0
    %1656 = vmatprep.subr.mxu0 0.0
    %1657 = vmatpush1.msra.mxu0 0.0
    %1658 = vmatprep.subr.mxu0 0.0
    %1659 = vmatpush1.msra.mxu0 0.0
    %1660 = vmatprep.subr.mxu0 0.0
    %1661 = vmatpush1.msra.mxu0 0.0
    %1662 = vmatprep.subr.mxu0 0.0
    %1663 = vmatpush1.msra.mxu0 0.0
    %1664 = vmatprep.subr.mxu0 0.0
    %1665 = vmatpush1.msra.mxu0 0.0
    %1666 = vmatprep.subr.mxu0 0.0
    %1667 = vmatpush1.msra.mxu0 0.0
    %1668 = vmatprep.subr.mxu0 0.0
    %1669 = vmatpush1.msra.mxu0 0.0
    %1670 = vmatprep.subr.mxu0 0.0
    %1671 = vmatpush1.msra.mxu0 0.0
    %1672 = vmatprep.subr.mxu0 0.0
    %1673 = vmatpush1.msra.mxu0 0.0
    %1674 = vmatprep.subr.mxu0 0.0
    %1675 = vmatpush1.msra.mxu0 0.0
    %1676 = vmatprep.subr.mxu0 0.0
    %1677 = vmatpush1.msra.mxu0 0.0
    %1678 = vmatprep.subr.mxu0 0.0
    %1679 = vmatpush1.msra.mxu0 0.0
    %1680 = vmatprep.subr.mxu0 0.0
    %1681 = vmatpush1.msra.mxu0 0.0
    %1682 = vmatprep.subr.mxu0 0.0
    %1683 = vmatpush1.msra.mxu0 0.0
    %1684 = vmatprep.subr.mxu0 0.0
    %1685 = vmatpush1.msra.mxu0 0.0
    %1686 = vmatprep.subr.mxu0 0.0
    %1687 = vmatpush1.msra.mxu0 0.0
    %1688 = vmatprep.subr.mxu0 0.0
    %1689 = vmatpush1.msra.mxu0 0.0
    %1690 = vmatprep.subr.mxu0 0.0
    %1691 = vmatpush1.msra.mxu0 0.0
    %1692 = vmatprep.subr.mxu0 0.0
    %1693 = vmatpush1.msra.mxu0 0.0
    %1694 = vmatprep.subr.mxu0 0.0
    %1695 = vmatpush1.msra.mxu0 0.0
    %1696 = vmatprep.subr.mxu0 0.0
    %1697 = vmatpush1.msra.mxu0 0.0
    %1698 = vmatprep.subr.mxu0 0.0
    %1699 = vmatpush1.msra.mxu0 0.0
    %1700 = vmatprep.subr.mxu0 0.0
    %1701 = vmatpush1.msra.mxu0 0.0
    %1702 = vmatprep.subr.mxu0 0.0
    %1703 = vmatpush1.msra.mxu0 0.0
    %1704 = vmatprep.subr.mxu0 0.0
    %1705 = vmatpush1.msra.mxu0 0.0
    %1706 = vmatprep.subr.mxu0 0.0
    %1707 = vmatpush1.msra.mxu0 0.0
    %1708 = vmatprep.subr.mxu0 0.0
    %1709 = vmatpush1.msra.mxu0 0.0
    %1710 = vmatprep.subr.mxu0 0.0
    %1711 = vmatpush1.msra.mxu0 0.0
    %1712 = vmatprep.subr.mxu0 0.0
    %1713 = vmatpush1.msra.mxu0 0.0
    %1714 = vmatprep.mubr.f32.mxu0 0.0
    %1715 = vmatmul.mubr.f32.gmra.mrb[0].mxu0 %v1648
    %v1716 = vpop.f32.mrb[0].mxu0
    %v1717 = vadd.f32 0.0, %v1716
    %v1718 = vpop.f32.mrb[0].mxu0
    %1719 = vdwg.mxu0
    %v1721 = vsel %vm1208, %v1207, 0
    %1723 = vmatprep.subr.mxu0 0.0
    %1724 = vmatpush1.msra.mxu0 %v248
    %1725 = vmatprep.subr.mxu0 0.0
    %1726 = vmatpush1.msra.mxu0 0.0
    %1727 = vmatprep.subr.mxu0 0.0
    %1728 = vmatpush1.msra.mxu0 0.0
    %1729 = vmatprep.subr.mxu0 0.0
    %1730 = vmatpush1.msra.mxu0 0.0
    %1731 = vmatprep.subr.mxu0 0.0
    %1732 = vmatpush1.msra.mxu0 0.0
    %1733 = vmatprep.subr.mxu0 0.0
    %1734 = vmatpush1.msra.mxu0 0.0
    %1735 = vmatprep.subr.mxu0 0.0
    %1736 = vmatpush1.msra.mxu0 0.0
    %1737 = vmatprep.subr.mxu0 0.0
    %1738 = vmatpush1.msra.mxu0 0.0
    %1739 = vmatprep.subr.mxu0 0.0
    %1740 = vmatpush1.msra.mxu0 0.0
    %1741 = vmatprep.subr.mxu0 0.0
    %1742 = vmatpush1.msra.mxu0 0.0
    %1743 = vmatprep.subr.mxu0 0.0
    %1744 = vmatpush1.msra.mxu0 0.0
    %1745 = vmatprep.subr.mxu0 0.0
    %1746 = vmatpush1.msra.mxu0 0.0
    %1747 = vmatprep.subr.mxu0 0.0
    %1748 = vmatpush1.msra.mxu0 0.0
    %1749 = vmatprep.subr.mxu0 0.0
    %1750 = vmatpush1.msra.mxu0 0.0
    %1751 = vmatprep.subr.mxu0 0.0
    %1752 = vmatpush1.msra.mxu0 0.0
    %1753 = vmatprep.subr.mxu0 0.0
    %1754 = vmatpush1.msra.mxu0 0.0
    %1755 = vmatprep.subr.mxu0 0.0
    %1756 = vmatpush1.msra.mxu0 0.0
    %1757 = vmatprep.subr.mxu0 0.0
    %1758 = vmatpush1.msra.mxu0 0.0
    %1759 = vmatprep.subr.mxu0 0.0
    %1760 = vmatpush1.msra.mxu0 0.0
    %1761 = vmatprep.subr.mxu0 0.0
    %1762 = vmatpush1.msra.mxu0 0.0
    %1763 = vmatprep.subr.mxu0 0.0
    %1764 = vmatpush1.msra.mxu0 0.0
    %1765 = vmatprep.subr.mxu0 0.0
    %1766 = vmatpush1.msra.mxu0 0.0
    %1767 = vmatprep.subr.mxu0 0.0
    %1768 = vmatpush1.msra.mxu0 0.0
    %1769 = vmatprep.subr.mxu0 0.0
    %1770 = vmatpush1.msra.mxu0 0.0
    %1771 = vmatprep.subr.mxu0 0.0
    %1772 = vmatpush1.msra.mxu0 0.0
    %1773 = vmatprep.subr.mxu0 0.0
    %1774 = vmatpush1.msra.mxu0 0.0
    %1775 = vmatprep.subr.mxu0 0.0
    %1776 = vmatpush1.msra.mxu0 0.0
    %1777 = vmatprep.subr.mxu0 0.0
    %1778 = vmatpush1.msra.mxu0 0.0
    %1779 = vmatprep.subr.mxu0 0.0
    %1780 = vmatpush1.msra.mxu0 0.0
    %1781 = vmatprep.subr.mxu0 0.0
    %1782 = vmatpush1.msra.mxu0 0.0
    %1783 = vmatprep.subr.mxu0 0.0
    %1784 = vmatpush1.msra.mxu0 0.0
    %1785 = vmatprep.subr.mxu0 0.0
    %1786 = vmatpush1.msra.mxu0 0.0
    %1787 = vmatprep.mubr.f32.mxu0 0.0
    %1788 = vmatmul.mubr.f32.gmra.mrb[0].mxu0 %v1721
    %v1789 = vpop.f32.mrb[0].mxu0
    %v1790 = vadd.f32 0.0, %v1789
    %v1791 = vpop.f32.mrb[0].mxu0
    %1792 = vdwg.mxu0
    %1793 = vrot.lane.b32.xlu0 %v396, 32
    %v1794 = vpop.permute.xlu0 %1793
    %v1795 = vsel %vm291, %v1794, 0
    %1797 = vmatprep.subr.mxu0 0.0
    %1798 = vmatpush1.msra.mxu0 %v273
    %1799 = vmatprep.subr.mxu0 0.0
    %1800 = vmatpush1.msra.mxu0 %v274
    %1801 = vmatprep.subr.mxu0 0.0
    %1802 = vmatpush1.msra.mxu0 %v275
    %1803 = vmatprep.subr.mxu0 0.0
    %1804 = vmatpush1.msra.mxu0 %v276
    %1805 = vmatprep.subr.mxu0 0.0
    %1806 = vmatpush1.msra.mxu0 0.0
    %1807 = vmatprep.subr.mxu0 0.0
    %1808 = vmatpush1.msra.mxu0 0.0
    %1809 = vmatprep.subr.mxu0 0.0
    %1810 = vmatpush1.msra.mxu0 0.0
    %1811 = vmatprep.subr.mxu0 0.0
    %1812 = vmatpush1.msra.mxu0 0.0
    %1813 = vmatprep.subr.mxu0 0.0
    %1814 = vmatpush1.msra.mxu0 0.0
    %1815 = vmatprep.subr.mxu0 0.0
    %1816 = vmatpush1.msra.mxu0 0.0
    %1817 = vmatprep.subr.mxu0 0.0
    %1818 = vmatpush1.msra.mxu0 0.0
    %1819 = vmatprep.subr.mxu0 0.0
    %1820 = vmatpush1.msra.mxu0 0.0
    %1821 = vmatprep.subr.mxu0 0.0
    %1822 = vmatpush1.msra.mxu0 0.0
    %1823 = vmatprep.subr.mxu0 0.0
    %1824 = vmatpush1.msra.mxu0 0.0
    %1825 = vmatprep.subr.mxu0 0.0
    %1826 = vmatpush1.msra.mxu0 0.0
    %1827 = vmatprep.subr.mxu0 0.0
    %1828 = vmatpush1.msra.mxu0 0.0
    %1829 = vmatprep.subr.mxu0 0.0
    %1830 = vmatpush1.msra.mxu0 0.0
    %1831 = vmatprep.subr.mxu0 0.0
    %1832 = vmatpush1.msra.mxu0 0.0
    %1833 = vmatprep.subr.mxu0 0.0
    %1834 = vmatpush1.msra.mxu0 0.0
    %1835 = vmatprep.subr.mxu0 0.0
    %1836 = vmatpush1.msra.mxu0 0.0
    %1837 = vmatprep.subr.mxu0 0.0
    %1838 = vmatpush1.msra.mxu0 0.0
    %1839 = vmatprep.subr.mxu0 0.0
    %1840 = vmatpush1.msra.mxu0 0.0
    %1841 = vmatprep.subr.mxu0 0.0
    %1842 = vmatpush1.msra.mxu0 0.0
    %1843 = vmatprep.subr.mxu0 0.0
    %1844 = vmatpush1.msra.mxu0 0.0
    %1845 = vmatprep.subr.mxu0 0.0
    %1846 = vmatpush1.msra.mxu0 0.0
    %1847 = vmatprep.subr.mxu0 0.0
    %1848 = vmatpush1.msra.mxu0 0.0
    %1849 = vmatprep.subr.mxu0 0.0
    %1850 = vmatpush1.msra.mxu0 0.0
    %1851 = vmatprep.subr.mxu0 0.0
    %1852 = vmatpush1.msra.mxu0 0.0
    %1853 = vmatprep.subr.mxu0 0.0
    %1854 = vmatpush1.msra.mxu0 0.0
    %1855 = vmatprep.subr.mxu0 0.0
    %1856 = vmatpush1.msra.mxu0 0.0
    %1857 = vmatprep.subr.mxu0 0.0
    %1858 = vmatpush1.msra.mxu0 0.0
    %1859 = vmatprep.subr.mxu0 0.0
    %1860 = vmatpush1.msra.mxu0 0.0
    %1861 = vmatprep.mubr.f32.mxu0 0.0
    %1862 = vmatmul.mubr.f32.gmra.mrb[0].mxu0 %v1795
    %v1863 = vpop.f32.mrb[0].mxu0
    %v1864 = vadd.f32 0.0, %v1863
    %v1865 = vpop.f32.mrb[0].mxu0
    %1866 = vdwg.mxu0
    %v1875 = vrot.slane %v1352, 7
    %vm1876 = vcmask 1041409
    %v1877 = vsel %vm1876, %v1875, %v1279
    %v1878 = vrot.slane %v1425, 6
    %vm1879 = vcmask 1042434
    %v1880 = vsel %vm1879, %v1878, %v1877
    %v1881 = vrot.slane %v1498, 5
    %vm1882 = vcmask 1043459
    %v1883 = vsel %vm1882, %v1881, %v1880
    %v1884 = vrot.slane %v1571, 4
    %vm1885 = vcmask 1044484
    %v1886 = vsel %vm1885, %v1884, %v1883
    %v1887 = vrot.slane %v1644, 3
    %vm1888 = vcmask 1045509
    %v1889 = vsel %vm1888, %v1887, %v1886
    %v1890 = vrot.slane %v1717, 2
    %vm1891 = vcmask 1046534
    %v1892 = vsel %vm1891, %v1890, %v1889
    %v1893 = vrot.slane %v1790, 1
    %vm1894 = vcmask 1047559
    %v1895 = vsel %vm1894, %v1893, %v1892
    %v1896 = vsel %vm294, %v1895, 0
    %1898 = vmatprep.subr.mxu0 0.0
    %1899 = vmatpush1.msra.mxu0 %v265
    %1900 = vmatprep.subr.mxu0 0.0
    %1901 = vmatpush1.msra.mxu0 %v266
    %1902 = vmatprep.subr.mxu0 0.0
    %1903 = vmatpush1.msra.mxu0 %v267
    %1904 = vmatprep.subr.mxu0 0.0
    %1905 = vmatpush1.msra.mxu0 %v268
    %1906 = vmatprep.subr.mxu0 0.0
    %1907 = vmatpush1.msra.mxu0 %v269
    %1908 = vmatprep.subr.mxu0 0.0
    %1909 = vmatpush1.msra.mxu0 %v270
    %1910 = vmatprep.subr.mxu0 0.0
    %1911 = vmatpush1.msra.mxu0 %v271
    %1912 = vmatprep.subr.mxu0 0.0
    %1913 = vmatpush1.msra.mxu0 %v272
    %1914 = vmatprep.subr.mxu0 0.0
    %1915 = vmatpush1.msra.mxu0 0.0
    %1916 = vmatprep.subr.mxu0 0.0
    %1917 = vmatpush1.msra.mxu0 0.0
    %1918 = vmatprep.subr.mxu0 0.0
    %1919 = vmatpush1.msra.mxu0 0.0
    %1920 = vmatprep.subr.mxu0 0.0
    %1921 = vmatpush1.msra.mxu0 0.0
    %1922 = vmatprep.subr.mxu0 0.0
    %1923 = vmatpush1.msra.mxu0 0.0
    %1924 = vmatprep.subr.mxu0 0.0
    %1925 = vmatpush1.msra.mxu0 0.0
    %1926 = vmatprep.subr.mxu0 0.0
    %1927 = vmatpush1.msra.mxu0 0.0
    %1928 = vmatprep.subr.mxu0 0.0
    %1929 = vmatpush1.msra.mxu0 0.0
    %1930 = vmatprep.subr.mxu0 0.0
    %1931 = vmatpush1.msra.mxu0 0.0
    %1932 = vmatprep.subr.mxu0 0.0
    %1933 = vmatpush1.msra.mxu0 0.0
    %1934 = vmatprep.subr.mxu0 0.0
    %1935 = vmatpush1.msra.mxu0 0.0
    %1936 = vmatprep.subr.mxu0 0.0
    %1937 = vmatpush1.msra.mxu0 0.0
    %1938 = vmatprep.subr.mxu0 0.0
    %1939 = vmatpush1.msra.mxu0 0.0
    %1940 = vmatprep.subr.mxu0 0.0
    %1941 = vmatpush1.msra.mxu0 0.0
    %1942 = vmatprep.subr.mxu0 0.0
    %1943 = vmatpush1.msra.mxu0 0.0
    %1944 = vmatprep.subr.mxu0 0.0
    %1945 = vmatpush1.msra.mxu0 0.0
    %1946 = vmatprep.subr.mxu0 0.0
    %1947 = vmatpush1.msra.mxu0 0.0
    %1948 = vmatprep.subr.mxu0 0.0
    %1949 = vmatpush1.msra.mxu0 0.0
    %1950 = vmatprep.subr.mxu0 0.0
    %1951 = vmatpush1.msra.mxu0 0.0
    %1952 = vmatprep.subr.mxu0 0.0
    %1953 = vmatpush1.msra.mxu0 0.0
    %1954 = vmatprep.subr.mxu0 0.0
    %1955 = vmatpush1.msra.mxu0 0.0
    %1956 = vmatprep.subr.mxu0 0.0
    %1957 = vmatpush1.msra.mxu0 0.0
    %1958 = vmatprep.subr.mxu0 0.0
    %1959 = vmatpush1.msra.mxu0 0.0
    %1960 = vmatprep.subr.mxu0 0.0
    %1961 = vmatpush1.msra.mxu0 0.0
    %1962 = vmatprep.mubr.f32.mxu0 0.0
    %1963 = vmatmul.mubr.f32.gmra.mrb[0].mxu0 %v1896
    %v1964 = vpop.f32.mrb[0].mxu0
    %v1965 = vadd.f32 %v1864, %v1964
    %v1966 = vpop.f32.mrb[0].mxu0
    %1967 = vdwg.mxu0
    %v1968 = vadd.f32 %v1965, %v282
    %v1969 = vtanh.pop %v1968
    %1970 = vst.msk [vmem:[#allocation15] sm:$0xff] %vm291, %v1969
    %v1971 = vrot.slane %v1201, 7
    %v1972 = vsel %vm1876, %v1971, %v1200
    %v1973 = vrot.slane %v1202, 6
    %v1974 = vsel %vm1879, %v1973, %v1972
    %v1975 = vrot.slane %v1203, 5
    %v1976 = vsel %vm1882, %v1975, %v1974
    %v1977 = vrot.slane %v1204, 4
    %v1978 = vsel %vm1885, %v1977, %v1976
    %v1979 = vrot.slane %v1205, 3
    %v1980 = vsel %vm1888, %v1979, %v1978
    %v1981 = vrot.slane %v1206, 2
    %v1982 = vsel %vm1891, %v1981, %v1980
    %v1983 = vrot.slane %v1207, 1
    %v1984 = vsel %vm1894, %v1983, %v1982
    %1986 = vst.msk [vmem:[#allocation16] sm:$0xff] %vm1208, %v1984
    %1987 = vrot.lane.b32.xlu0 %v396, 64
    %v1988 = vpop.permute.xlu0 %1987
    %v1990 = vsel %vm291, %v1969, %v1988
    %s1991 = scalar_lea.vmem [#allocation5], 8
    %v1992 = vld [vmem:[%s1991] sm:$0xff]
    %v1994 = vsel %vm294, %v1990, 0
    %1996 = vmatprep.subr.mxu0 0.0
    %1997 = vmatpush1.msra.mxu0 %v257
    %1998 = vmatprep.subr.mxu0 0.0
    %1999 = vmatpush1.msra.mxu0 %v258
    %2000 = vmatprep.subr.mxu0 0.0
    %2001 = vmatpush1.msra.mxu0 %v259
    %2002 = vmatprep.subr.mxu0 0.0
    %2003 = vmatpush1.msra.mxu0 %v260
    %2004 = vmatprep.subr.mxu0 0.0
    %2005 = vmatpush1.msra.mxu0 %v261
    %2006 = vmatprep.subr.mxu0 0.0
    %2007 = vmatpush1.msra.mxu0 %v262
    %2008 = vmatprep.subr.mxu0 0.0
    %2009 = vmatpush1.msra.mxu0 %v263
    %2010 = vmatprep.subr.mxu0 0.0
    %2011 = vmatpush1.msra.mxu0 %v264
    %2012 = vmatprep.subr.mxu0 0.0
    %2013 = vmatpush1.msra.mxu0 0.0
    %2014 = vmatprep.subr.mxu0 0.0
    %2015 = vmatpush1.msra.mxu0 0.0
    %2016 = vmatprep.subr.mxu0 0.0
    %2017 = vmatpush1.msra.mxu0 0.0
    %2018 = vmatprep.subr.mxu0 0.0
    %2019 = vmatpush1.msra.mxu0 0.0
    %2020 = vmatprep.subr.mxu0 0.0
    %2021 = vmatpush1.msra.mxu0 0.0
    %2022 = vmatprep.subr.mxu0 0.0
    %2023 = vmatpush1.msra.mxu0 0.0
    %2024 = vmatprep.subr.mxu0 0.0
    %2025 = vmatpush1.msra.mxu0 0.0
    %2026 = vmatprep.subr.mxu0 0.0
    %2027 = vmatpush1.msra.mxu0 0.0
    %2028 = vmatprep.subr.mxu0 0.0
    %2029 = vmatpush1.msra.mxu0 0.0
    %2030 = vmatprep.subr.mxu0 0.0
    %2031 = vmatpush1.msra.mxu0 0.0
    %2032 = vmatprep.subr.mxu0 0.0
    %2033 = vmatpush1.msra.mxu0 0.0
    %2034 = vmatprep.subr.mxu0 0.0
    %2035 = vmatpush1.msra.mxu0 0.0
    %2036 = vmatprep.subr.mxu0 0.0
    %2037 = vmatpush1.msra.mxu0 0.0
    %2038 = vmatprep.subr.mxu0 0.0
    %2039 = vmatpush1.msra.mxu0 0.0
    %2040 = vmatprep.subr.mxu0 0.0
    %2041 = vmatpush1.msra.mxu0 0.0
    %2042 = vmatprep.subr.mxu0 0.0
    %2043 = vmatpush1.msra.mxu0 0.0
    %2044 = vmatprep.subr.mxu0 0.0
    %2045 = vmatpush1.msra.mxu0 0.0
    %2046 = vmatprep.subr.mxu0 0.0
    %2047 = vmatpush1.msra.mxu0 0.0
    %2048 = vmatprep.subr.mxu0 0.0
    %2049 = vmatpush1.msra.mxu0 0.0
    %2050 = vmatprep.subr.mxu0 0.0
    %2051 = vmatpush1.msra.mxu0 0.0
    %2052 = vmatprep.subr.mxu0 0.0
    %2053 = vmatpush1.msra.mxu0 0.0
    %2054 = vmatprep.subr.mxu0 0.0
    %2055 = vmatpush1.msra.mxu0 0.0
    %2056 = vmatprep.subr.mxu0 0.0
    %2057 = vmatpush1.msra.mxu0 0.0
    %2058 = vmatprep.subr.mxu0 0.0
    %2059 = vmatpush1.msra.mxu0 0.0
    %2060 = vmatprep.mubr.f32.mxu0 0.0
    %2061 = vmatmul.mubr.f32.gmra.mrb[0].mxu0 %v1994
    %v2062 = vpop.f32.mrb[0].mxu0
    %v2063 = vadd.f32 0.0, %v2062
    %v2064 = vpop.f32.mrb[0].mxu0
    %2065 = vdwg.mxu0
    %v2066 = vadd.f32 %v1992, %v2063
    %v2067 = vxor.u32 %v2066, 2147483648
    %v2068 = vmul.f32 %v2067, 1.442695
    %v2069 = vpow.pop %v2068
    %v2070 = vadd.f32 %v2069, 1.0
    %v2071 = vrcp.pop %v2070
    %v2072 = vmul.f32 1.0, %v2071
    %v2073 = vtanh.pop %v2066
    %v2074 = vmul.f32 %v2072, %v390
    %2076 = vrot.lane.b32.xlu0 %v2073, 64
    %v2077 = vpop.permute.xlu0 %2076
    %v2079 = vmul.f32 %v2072, %v2077
    %2081 = vrot.lane.b32.xlu0 %v2079, 32
    %v2082 = vpop.permute.xlu0 %2081
    %v2084 = vadd.f32 %v2074, %v2082
    %v2085 = vtanh.pop %v2084
    %2087 = vrot.lane.b32.xlu0 %v2085, 64
    %v2088 = vpop.permute.xlu0 %2087
    %v2090 = vmul.f32 %v2072, %v2088
    %v2092 = vcombine.high %v2090, %v2090
    %v2094 = vunpack.c.l.s4 1966171168
    %v2095 = vunpack.c.0.s8 %v2094
    %v2096 = vlaneseq
    %v2097 = vshrl.u32 %v2096, 7
    %v2098 = vsub.s32 %v2095, %v2097
    %v2099 = vrot.slane %v2090, %v2098
    %v2101 = vunpack.c.l.s4 1966171168
    %v2102 = vunpack.c.0.s8 %v2101
    %v2103 = vlaneseq
    %v2104 = vshrl.u32 %v2103, 7
    %v2105 = vsub.s32 %v2102, %v2104
    %v2106 = vrot.slane %v2092, %v2105
    %v2107 = vcombine.high %v2099, %v2099
    %v2108 = vcombine.high %v2106, %v2106
    %v2110 = vunpack.c.l.s4 1966171168
    %v2111 = vunpack.c.0.s8 %v2110
    %v2112 = vlaneseq
    %v2113 = vshrl.u32 %v2112, 7
    %v2114 = vsub.s32 %v2111, %v2113
    %v2115 = vrot.slane %v2099, %v2114
    %v2117 = vunpack.c.l.s4 1966171168
    %v2118 = vunpack.c.0.s8 %v2117
    %v2119 = vlaneseq
    %v2120 = vshrl.u32 %v2119, 7
    %v2121 = vsub.s32 %v2118, %v2120
    %v2122 = vrot.slane %v2106, %v2121
    %v2124 = vunpack.c.l.s4 1966171168
    %v2125 = vunpack.c.0.s8 %v2124
    %v2126 = vlaneseq
    %v2127 = vshrl.u32 %v2126, 7
    %v2128 = vsub.s32 %v2125, %v2127
    %v2129 = vrot.slane %v2107, %v2128
    %v2131 = vunpack.c.l.s4 1966171168
    %v2132 = vunpack.c.0.s8 %v2131
    %v2133 = vlaneseq
    %v2134 = vshrl.u32 %v2133, 7
    %v2135 = vsub.s32 %v2132, %v2134
    %v2136 = vrot.slane %v2108, %v2135
    %v2137 = vcombine.high %v2115, %v2115
    %v2138 = vcombine.high %v2122, %v2122
    %v2139 = vcombine.high %v2129, %v2129
    %v2140 = vcombine.high %v2136, %v2136
    %v2141 = vlaneseq
    %v2142 = vshrl.u32 %v2141, 7
    %v2143 = vsub.s32 0, %v2142
    %v2144 = vrot.slane %v2115, %v2143
    %2145 = vrot.lane.b32.xlu0 %v2144, 32
    %v2146 = vpop.permute.xlu0 %2145
    %v2147 = vsel %vm291, %v2146, 0
    %2149 = vmatprep.subr.mxu0 0.0
    %2150 = vmatpush1.xpose.msra.mxu0 %v456
    %2151 = vmatprep.subr.mxu0 0.0
    %2152 = vmatpush1.xpose.msra.mxu0 0.0
    %2153 = vmatprep.subr.mxu0 0.0
    %2154 = vmatpush1.xpose.msra.mxu0 0.0
    %2155 = vmatprep.subr.mxu0 0.0
    %2156 = vmatpush1.xpose.msra.mxu0 0.0
    %2157 = vmatprep.subr.mxu0 0.0
    %2158 = vmatpush1.xpose.msra.mxu0 0.0
    %2159 = vmatprep.subr.mxu0 0.0
    %2160 = vmatpush1.xpose.msra.mxu0 0.0
    %2161 = vmatprep.subr.mxu0 0.0
    %2162 = vmatpush1.xpose.msra.mxu0 0.0
    %2163 = vmatprep.subr.mxu0 0.0
    %2164 = vmatpush1.xpose.msra.mxu0 0.0
    %2165 = vmatprep.subr.mxu0 0.0
    %2166 = vmatpush1.xpose.msra.mxu0 0.0
    %2167 = vmatprep.subr.mxu0 0.0
    %2168 = vmatpush1.xpose.msra.mxu0 0.0
    %2169 = vmatprep.subr.mxu0 0.0
    %2170 = vmatpush1.xpose.msra.mxu0 0.0
    %2171 = vmatprep.subr.mxu0 0.0
    %2172 = vmatpush1.xpose.msra.mxu0 0.0
    %2173 = vmatprep.subr.mxu0 0.0
    %2174 = vmatpush1.xpose.msra.mxu0 0.0
    %2175 = vmatprep.subr.mxu0 0.0
    %2176 = vmatpush1.xpose.msra.mxu0 0.0
    %2177 = vmatprep.subr.mxu0 0.0
    %2178 = vmatpush1.xpose.msra.mxu0 0.0
    %2179 = vmatprep.subr.mxu0 0.0
    %2180 = vmatpush1.xpose.msra.mxu0 0.0
    %2181 = vmatprep.subr.mxu0 0.0
    %2182 = vmatpush1.xpose.msra.mxu0 0.0
    %2183 = vmatprep.subr.mxu0 0.0
    %2184 = vmatpush1.xpose.msra.mxu0 0.0
    %2185 = vmatprep.subr.mxu0 0.0
    %2186 = vmatpush1.xpose.msra.mxu0 0.0
    %2187 = vmatprep.subr.mxu0 0.0
    %2188 = vmatpush1.xpose.msra.mxu0 0.0
    %2189 = vmatprep.subr.mxu0 0.0
    %2190 = vmatpush1.xpose.msra.mxu0 0.0
    %2191 = vmatprep.subr.mxu0 0.0
    %2192 = vmatpush1.xpose.msra.mxu0 0.0
    %2193 = vmatprep.subr.mxu0 0.0
    %2194 = vmatpush1.xpose.msra.mxu0 0.0
    %2195 = vmatprep.subr.mxu0 0.0
    %2196 = vmatpush1.xpose.msra.mxu0 0.0
    %2197 = vmatprep.subr.mxu0 0.0
    %2198 = vmatpush1.xpose.msra.mxu0 0.0
    %2199 = vmatprep.subr.mxu0 0.0
    %2200 = vmatpush1.xpose.msra.mxu0 0.0
    %2201 = vmatprep.subr.mxu0 0.0
    %2202 = vmatpush1.xpose.msra.mxu0 0.0
    %2203 = vmatprep.subr.mxu0 0.0
    %2204 = vmatpush1.xpose.msra.mxu0 0.0
    %2205 = vmatprep.subr.mxu0 0.0
    %2206 = vmatpush1.xpose.msra.mxu0 0.0
    %2207 = vmatprep.subr.mxu0 0.0
    %2208 = vmatpush1.xpose.msra.mxu0 0.0
    %2209 = vmatprep.subr.mxu0 0.0
    %2210 = vmatpush1.xpose.msra.mxu0 0.0
    %2211 = vmatprep.subr.mxu0 0.0
    %2212 = vmatpush1.xpose.msra.mxu0 0.0
    %2213 = vmatprep.mubr.f32.mxu0 0.0
    %2214 = vmatmul.mubr.f32.gmra.mrb[0].mxu0 %v2147
    %v2215 = vpop.f32.mrb[0].mxu0
    %v2216 = vadd.f32 0.0, %v2215
    %v2217 = vpop.f32.mrb[0].mxu0
    %2218 = vdwg.mxu0
    %v2219 = vlaneseq
    %v2220 = vshrl.u32 %v2219, 7
    %v2221 = vsub.s32 0, %v2220
    %v2222 = vrot.slane %v2129, %v2221
    %2223 = vrot.lane.b32.xlu0 %v2222, 32
    %v2224 = vpop.permute.xlu0 %2223
    %v2225 = vsel %vm291, %v2224, 0
    %2227 = vmatprep.subr.mxu0 0.0
    %2228 = vmatpush1.xpose.msra.mxu0 %v537
    %2229 = vmatprep.subr.mxu0 0.0
    %2230 = vmatpush1.xpose.msra.mxu0 0.0
    %2231 = vmatprep.subr.mxu0 0.0
    %2232 = vmatpush1.xpose.msra.mxu0 0.0
    %2233 = vmatprep.subr.mxu0 0.0
    %2234 = vmatpush1.xpose.msra.mxu0 0.0
    %2235 = vmatprep.subr.mxu0 0.0
    %2236 = vmatpush1.xpose.msra.mxu0 0.0
    %2237 = vmatprep.subr.mxu0 0.0
    %2238 = vmatpush1.xpose.msra.mxu0 0.0
    %2239 = vmatprep.subr.mxu0 0.0
    %2240 = vmatpush1.xpose.msra.mxu0 0.0
    %2241 = vmatprep.subr.mxu0 0.0
    %2242 = vmatpush1.xpose.msra.mxu0 0.0
    %2243 = vmatprep.subr.mxu0 0.0
    %2244 = vmatpush1.xpose.msra.mxu0 0.0
    %2245 = vmatprep.subr.mxu0 0.0
    %2246 = vmatpush1.xpose.msra.mxu0 0.0
    %2247 = vmatprep.subr.mxu0 0.0
    %2248 = vmatpush1.xpose.msra.mxu0 0.0
    %2249 = vmatprep.subr.mxu0 0.0
    %2250 = vmatpush1.xpose.msra.mxu0 0.0
    %2251 = vmatprep.subr.mxu0 0.0
    %2252 = vmatpush1.xpose.msra.mxu0 0.0
    %2253 = vmatprep.subr.mxu0 0.0
    %2254 = vmatpush1.xpose.msra.mxu0 0.0
    %2255 = vmatprep.subr.mxu0 0.0
    %2256 = vmatpush1.xpose.msra.mxu0 0.0
    %2257 = vmatprep.subr.mxu0 0.0
    %2258 = vmatpush1.xpose.msra.mxu0 0.0
    %2259 = vmatprep.subr.mxu0 0.0
    %2260 = vmatpush1.xpose.msra.mxu0 0.0
    %2261 = vmatprep.subr.mxu0 0.0
    %2262 = vmatpush1.xpose.msra.mxu0 0.0
    %2263 = vmatprep.subr.mxu0 0.0
    %2264 = vmatpush1.xpose.msra.mxu0 0.0
    %2265 = vmatprep.subr.mxu0 0.0
    %2266 = vmatpush1.xpose.msra.mxu0 0.0
    %2267 = vmatprep.subr.mxu0 0.0
    %2268 = vmatpush1.xpose.msra.mxu0 0.0
    %2269 = vmatprep.subr.mxu0 0.0
    %2270 = vmatpush1.xpose.msra.mxu0 0.0
    %2271 = vmatprep.subr.mxu0 0.0
    %2272 = vmatpush1.xpose.msra.mxu0 0.0
    %2273 = vmatprep.subr.mxu0 0.0
    %2274 = vmatpush1.xpose.msra.mxu0 0.0
    %2275 = vmatprep.subr.mxu0 0.0
    %2276 = vmatpush1.xpose.msra.mxu0 0.0
    %2277 = vmatprep.subr.mxu0 0.0
    %2278 = vmatpush1.xpose.msra.mxu0 0.0
    %2279 = vmatprep.subr.mxu0 0.0
    %2280 = vmatpush1.xpose.msra.mxu0 0.0
    %2281 = vmatprep.subr.mxu0 0.0
    %2282 = vmatpush1.xpose.msra.mxu0 0.0
    %2283 = vmatprep.subr.mxu0 0.0
    %2284 = vmatpush1.xpose.msra.mxu0 0.0
    %2285 = vmatprep.subr.mxu0 0.0
    %2286 = vmatpush1.xpose.msra.mxu0 0.0
    %2287 = vmatprep.subr.mxu0 0.0
    %2288 = vmatpush1.xpose.msra.mxu0 0.0
    %2289 = vmatprep.subr.mxu0 0.0
    %2290 = vmatpush1.xpose.msra.mxu0 0.0
    %2291 = vmatprep.mubr.f32.mxu0 0.0
    %2292 = vmatmul.mubr.f32.gmra.mrb[0].mxu0 %v2225
    %v2293 = vpop.f32.mrb[0].mxu0
    %v2294 = vadd.f32 0.0, %v2293
    %v2295 = vpop.f32.mrb[0].mxu0
    %2296 = vdwg.mxu0
    %v2297 = vlaneseq
    %v2298 = vshrl.u32 %v2297, 7
    %v2299 = vsub.s32 0, %v2298
    %v2300 = vrot.slane %v2137, %v2299
    %2301 = vrot.lane.b32.xlu0 %v2300, 32
    %v2302 = vpop.permute.xlu0 %2301
    %v2303 = vsel %vm291, %v2302, 0
    %2305 = vmatprep.subr.mxu0 0.0
    %2306 = vmatpush1.xpose.msra.mxu0 %v618
    %2307 = vmatprep.subr.mxu0 0.0
    %2308 = vmatpush1.xpose.msra.mxu0 0.0
    %2309 = vmatprep.subr.mxu0 0.0
    %2310 = vmatpush1.xpose.msra.mxu0 0.0
    %2311 = vmatprep.subr.mxu0 0.0
    %2312 = vmatpush1.xpose.msra.mxu0 0.0
    %2313 = vmatprep.subr.mxu0 0.0
    %2314 = vmatpush1.xpose.msra.mxu0 0.0
    %2315 = vmatprep.subr.mxu0 0.0
    %2316 = vmatpush1.xpose.msra.mxu0 0.0
    %2317 = vmatprep.subr.mxu0 0.0
    %2318 = vmatpush1.xpose.msra.mxu0 0.0
    %2319 = vmatprep.subr.mxu0 0.0
    %2320 = vmatpush1.xpose.msra.mxu0 0.0
    %2321 = vmatprep.subr.mxu0 0.0
    %2322 = vmatpush1.xpose.msra.mxu0 0.0
    %2323 = vmatprep.subr.mxu0 0.0
    %2324 = vmatpush1.xpose.msra.mxu0 0.0
    %2325 = vmatprep.subr.mxu0 0.0
    %2326 = vmatpush1.xpose.msra.mxu0 0.0
    %2327 = vmatprep.subr.mxu0 0.0
    %2328 = vmatpush1.xpose.msra.mxu0 0.0
    %2329 = vmatprep.subr.mxu0 0.0
    %2330 = vmatpush1.xpose.msra.mxu0 0.0
    %2331 = vmatprep.subr.mxu0 0.0
    %2332 = vmatpush1.xpose.msra.mxu0 0.0
    %2333 = vmatprep.subr.mxu0 0.0
    %2334 = vmatpush1.xpose.msra.mxu0 0.0
    %2335 = vmatprep.subr.mxu0 0.0
    %2336 = vmatpush1.xpose.msra.mxu0 0.0
    %2337 = vmatprep.subr.mxu0 0.0
    %2338 = vmatpush1.xpose.msra.mxu0 0.0
    %2339 = vmatprep.subr.mxu0 0.0
    %2340 = vmatpush1.xpose.msra.mxu0 0.0
    %2341 = vmatprep.subr.mxu0 0.0
    %2342 = vmatpush1.xpose.msra.mxu0 0.0
    %2343 = vmatprep.subr.mxu0 0.0
    %2344 = vmatpush1.xpose.msra.mxu0 0.0
    %2345 = vmatprep.subr.mxu0 0.0
    %2346 = vmatpush1.xpose.msra.mxu0 0.0
    %2347 = vmatprep.subr.mxu0 0.0
    %2348 = vmatpush1.xpose.msra.mxu0 0.0
    %2349 = vmatprep.subr.mxu0 0.0
    %2350 = vmatpush1.xpose.msra.mxu0 0.0
    %2351 = vmatprep.subr.mxu0 0.0
    %2352 = vmatpush1.xpose.msra.mxu0 0.0
    %2353 = vmatprep.subr.mxu0 0.0
    %2354 = vmatpush1.xpose.msra.mxu0 0.0
    %2355 = vmatprep.subr.mxu0 0.0
    %2356 = vmatpush1.xpose.msra.mxu0 0.0
    %2357 = vmatprep.subr.mxu0 0.0
    %2358 = vmatpush1.xpose.msra.mxu0 0.0
    %2359 = vmatprep.subr.mxu0 0.0
    %2360 = vmatpush1.xpose.msra.mxu0 0.0
    %2361 = vmatprep.subr.mxu0 0.0
    %2362 = vmatpush1.xpose.msra.mxu0 0.0
    %2363 = vmatprep.subr.mxu0 0.0
    %2364 = vmatpush1.xpose.msra.mxu0 0.0
    %2365 = vmatprep.subr.mxu0 0.0
    %2366 = vmatpush1.xpose.msra.mxu0 0.0
    %2367 = vmatprep.subr.mxu0 0.0
    %2368 = vmatpush1.xpose.msra.mxu0 0.0
    %2369 = vmatprep.mubr.f32.mxu0 0.0
    %2370 = vmatmul.mubr.f32.gmra.mrb[0].mxu0 %v2303
    %v2371 = vpop.f32.mrb[0].mxu0
    %v2372 = vadd.f32 0.0, %v2371
    %v2373 = vpop.f32.mrb[0].mxu0
    %2374 = vdwg.mxu0
    %v2375 = vlaneseq
    %v2376 = vshrl.u32 %v2375, 7
    %v2377 = vsub.s32 0, %v2376
    %v2378 = vrot.slane %v2139, %v2377
    %2379 = vrot.lane.b32.xlu0 %v2378, 32
    %v2380 = vpop.permute.xlu0 %2379
    %v2381 = vsel %vm291, %v2380, 0
    %2383 = vmatprep.subr.mxu0 0.0
    %2384 = vmatpush1.xpose.msra.mxu0 %v699
    %2385 = vmatprep.subr.mxu0 0.0
    %2386 = vmatpush1.xpose.msra.mxu0 0.0
    %2387 = vmatprep.subr.mxu0 0.0
    %2388 = vmatpush1.xpose.msra.mxu0 0.0
    %2389 = vmatprep.subr.mxu0 0.0
    %2390 = vmatpush1.xpose.msra.mxu0 0.0
    %2391 = vmatprep.subr.mxu0 0.0
    %2392 = vmatpush1.xpose.msra.mxu0 0.0
    %2393 = vmatprep.subr.mxu0 0.0
    %2394 = vmatpush1.xpose.msra.mxu0 0.0
    %2395 = vmatprep.subr.mxu0 0.0
    %2396 = vmatpush1.xpose.msra.mxu0 0.0
    %2397 = vmatprep.subr.mxu0 0.0
    %2398 = vmatpush1.xpose.msra.mxu0 0.0
    %2399 = vmatprep.subr.mxu0 0.0
    %2400 = vmatpush1.xpose.msra.mxu0 0.0
    %2401 = vmatprep.subr.mxu0 0.0
    %2402 = vmatpush1.xpose.msra.mxu0 0.0
    %2403 = vmatprep.subr.mxu0 0.0
    %2404 = vmatpush1.xpose.msra.mxu0 0.0
    %2405 = vmatprep.subr.mxu0 0.0
    %2406 = vmatpush1.xpose.msra.mxu0 0.0
    %2407 = vmatprep.subr.mxu0 0.0
    %2408 = vmatpush1.xpose.msra.mxu0 0.0
    %2409 = vmatprep.subr.mxu0 0.0
    %2410 = vmatpush1.xpose.msra.mxu0 0.0
    %2411 = vmatprep.subr.mxu0 0.0
    %2412 = vmatpush1.xpose.msra.mxu0 0.0
    %2413 = vmatprep.subr.mxu0 0.0
    %2414 = vmatpush1.xpose.msra.mxu0 0.0
    %2415 = vmatprep.subr.mxu0 0.0
    %2416 = vmatpush1.xpose.msra.mxu0 0.0
    %2417 = vmatprep.subr.mxu0 0.0
    %2418 = vmatpush1.xpose.msra.mxu0 0.0
    %2419 = vmatprep.subr.mxu0 0.0
    %2420 = vmatpush1.xpose.msra.mxu0 0.0
    %2421 = vmatprep.subr.mxu0 0.0
    %2422 = vmatpush1.xpose.msra.mxu0 0.0
    %2423 = vmatprep.subr.mxu0 0.0
    %2424 = vmatpush1.xpose.msra.mxu0 0.0
    %2425 = vmatprep.subr.mxu0 0.0
    %2426 = vmatpush1.xpose.msra.mxu0 0.0
    %2427 = vmatprep.subr.mxu0 0.0
    %2428 = vmatpush1.xpose.msra.mxu0 0.0
    %2429 = vmatprep.subr.mxu0 0.0
    %2430 = vmatpush1.xpose.msra.mxu0 0.0
    %2431 = vmatprep.subr.mxu0 0.0
    %2432 = vmatpush1.xpose.msra.mxu0 0.0
    %2433 = vmatprep.subr.mxu0 0.0
    %2434 = vmatpush1.xpose.msra.mxu0 0.0
    %2435 = vmatprep.subr.mxu0 0.0
    %2436 = vmatpush1.xpose.msra.mxu0 0.0
    %2437 = vmatprep.subr.mxu0 0.0
    %2438 = vmatpush1.xpose.msra.mxu0 0.0
    %2439 = vmatprep.subr.mxu0 0.0
    %2440 = vmatpush1.xpose.msra.mxu0 0.0
    %2441 = vmatprep.subr.mxu0 0.0
    %2442 = vmatpush1.xpose.msra.mxu0 0.0
    %2443 = vmatprep.subr.mxu0 0.0
    %2444 = vmatpush1.xpose.msra.mxu0 0.0
    %2445 = vmatprep.subr.mxu0 0.0
    %2446 = vmatpush1.xpose.msra.mxu0 0.0
    %2447 = vmatprep.mubr.f32.mxu0 0.0
    %2448 = vmatmul.mubr.f32.gmra.mrb[0].mxu0 %v2381
    %v2449 = vpop.f32.mrb[0].mxu0
    %v2450 = vadd.f32 0.0, %v2449
    %v2451 = vpop.f32.mrb[0].mxu0
    %2452 = vdwg.mxu0
    %v2453 = vlaneseq
    %v2454 = vshrl.u32 %v2453, 7
    %v2455 = vsub.s32 0, %v2454
    %v2456 = vrot.slane %v2122, %v2455
    %2457 = vrot.lane.b32.xlu0 %v2456, 32
    %v2458 = vpop.permute.xlu0 %2457
    %v2459 = vsel %vm291, %v2458, 0
    %2461 = vmatprep.subr.mxu0 0.0
    %2462 = vmatpush1.xpose.msra.mxu0 %v780
    %2463 = vmatprep.subr.mxu0 0.0
    %2464 = vmatpush1.xpose.msra.mxu0 0.0
    %2465 = vmatprep.subr.mxu0 0.0
    %2466 = vmatpush1.xpose.msra.mxu0 0.0
    %2467 = vmatprep.subr.mxu0 0.0
    %2468 = vmatpush1.xpose.msra.mxu0 0.0
    %2469 = vmatprep.subr.mxu0 0.0
    %2470 = vmatpush1.xpose.msra.mxu0 0.0
    %2471 = vmatprep.subr.mxu0 0.0
    %2472 = vmatpush1.xpose.msra.mxu0 0.0
    %2473 = vmatprep.subr.mxu0 0.0
    %2474 = vmatpush1.xpose.msra.mxu0 0.0
    %2475 = vmatprep.subr.mxu0 0.0
    %2476 = vmatpush1.xpose.msra.mxu0 0.0
    %2477 = vmatprep.subr.mxu0 0.0
    %2478 = vmatpush1.xpose.msra.mxu0 0.0
    %2479 = vmatprep.subr.mxu0 0.0
    %2480 = vmatpush1.xpose.msra.mxu0 0.0
    %2481 = vmatprep.subr.mxu0 0.0
    %2482 = vmatpush1.xpose.msra.mxu0 0.0
    %2483 = vmatprep.subr.mxu0 0.0
    %2484 = vmatpush1.xpose.msra.mxu0 0.0
    %2485 = vmatprep.subr.mxu0 0.0
    %2486 = vmatpush1.xpose.msra.mxu0 0.0
    %2487 = vmatprep.subr.mxu0 0.0
    %2488 = vmatpush1.xpose.msra.mxu0 0.0
    %2489 = vmatprep.subr.mxu0 0.0
    %2490 = vmatpush1.xpose.msra.mxu0 0.0
    %2491 = vmatprep.subr.mxu0 0.0
    %2492 = vmatpush1.xpose.msra.mxu0 0.0
    %2493 = vmatprep.subr.mxu0 0.0
    %2494 = vmatpush1.xpose.msra.mxu0 0.0
    %2495 = vmatprep.subr.mxu0 0.0
    %2496 = vmatpush1.xpose.msra.mxu0 0.0
    %2497 = vmatprep.subr.mxu0 0.0
    %2498 = vmatpush1.xpose.msra.mxu0 0.0
    %2499 = vmatprep.subr.mxu0 0.0
    %2500 = vmatpush1.xpose.msra.mxu0 0.0
    %2501 = vmatprep.subr.mxu0 0.0
    %2502 = vmatpush1.xpose.msra.mxu0 0.0
    %2503 = vmatprep.subr.mxu0 0.0
    %2504 = vmatpush1.xpose.msra.mxu0 0.0
    %2505 = vmatprep.subr.mxu0 0.0
    %2506 = vmatpush1.xpose.msra.mxu0 0.0
    %2507 = vmatprep.subr.mxu0 0.0
    %2508 = vmatpush1.xpose.msra.mxu0 0.0
    %2509 = vmatprep.subr.mxu0 0.0
    %2510 = vmatpush1.xpose.msra.mxu0 0.0
    %2511 = vmatprep.subr.mxu0 0.0
    %2512 = vmatpush1.xpose.msra.mxu0 0.0
    %2513 = vmatprep.subr.mxu0 0.0
    %2514 = vmatpush1.xpose.msra.mxu0 0.0
    %2515 = vmatprep.subr.mxu0 0.0
    %2516 = vmatpush1.xpose.msra.mxu0 0.0
    %2517 = vmatprep.subr.mxu0 0.0
    %2518 = vmatpush1.xpose.msra.mxu0 0.0
    %2519 = vmatprep.subr.mxu0 0.0
    %2520 = vmatpush1.xpose.msra.mxu0 0.0
    %2521 = vmatprep.subr.mxu0 0.0
    %2522 = vmatpush1.xpose.msra.mxu0 0.0
    %2523 = vmatprep.subr.mxu0 0.0
    %2524 = vmatpush1.xpose.msra.mxu0 0.0
    %2525 = vmatprep.mubr.f32.mxu0 0.0
    %2526 = vmatmul.mubr.f32.gmra.mrb[0].mxu0 %v2459
    %v2527 = vpop.f32.mrb[0].mxu0
    %v2528 = vadd.f32 0.0, %v2527
    %v2529 = vpop.f32.mrb[0].mxu0
    %2530 = vdwg.mxu0
    %v2531 = vlaneseq
    %v2532 = vshrl.u32 %v2531, 7
    %v2533 = vsub.s32 0, %v2532
    %v2534 = vrot.slane %v2136, %v2533
    %2535 = vrot.lane.b32.xlu0 %v2534, 32
    %v2536 = vpop.permute.xlu0 %2535
    %v2537 = vsel %vm291, %v2536, 0
    %2539 = vmatprep.subr.mxu0 0.0
    %2540 = vmatpush1.xpose.msra.mxu0 %v861
    %2541 = vmatprep.subr.mxu0 0.0
    %2542 = vmatpush1.xpose.msra.mxu0 0.0
    %2543 = vmatprep.subr.mxu0 0.0
    %2544 = vmatpush1.xpose.msra.mxu0 0.0
    %2545 = vmatprep.subr.mxu0 0.0
    %2546 = vmatpush1.xpose.msra.mxu0 0.0
    %2547 = vmatprep.subr.mxu0 0.0
    %2548 = vmatpush1.xpose.msra.mxu0 0.0
    %2549 = vmatprep.subr.mxu0 0.0
    %2550 = vmatpush1.xpose.msra.mxu0 0.0
    %2551 = vmatprep.subr.mxu0 0.0
    %2552 = vmatpush1.xpose.msra.mxu0 0.0
    %2553 = vmatprep.subr.mxu0 0.0
    %2554 = vmatpush1.xpose.msra.mxu0 0.0
    %2555 = vmatprep.subr.mxu0 0.0
    %2556 = vmatpush1.xpose.msra.mxu0 0.0
    %2557 = vmatprep.subr.mxu0 0.0
    %2558 = vmatpush1.xpose.msra.mxu0 0.0
    %2559 = vmatprep.subr.mxu0 0.0
    %2560 = vmatpush1.xpose.msra.mxu0 0.0
    %2561 = vmatprep.subr.mxu0 0.0
    %2562 = vmatpush1.xpose.msra.mxu0 0.0
    %2563 = vmatprep.subr.mxu0 0.0
    %2564 = vmatpush1.xpose.msra.mxu0 0.0
    %2565 = vmatprep.subr.mxu0 0.0
    %2566 = vmatpush1.xpose.msra.mxu0 0.0
    %2567 = vmatprep.subr.mxu0 0.0
    %2568 = vmatpush1.xpose.msra.mxu0 0.0
    %2569 = vmatprep.subr.mxu0 0.0
    %2570 = vmatpush1.xpose.msra.mxu0 0.0
    %2571 = vmatprep.subr.mxu0 0.0
    %2572 = vmatpush1.xpose.msra.mxu0 0.0
    %2573 = vmatprep.subr.mxu0 0.0
    %2574 = vmatpush1.xpose.msra.mxu0 0.0
    %2575 = vmatprep.subr.mxu0 0.0
    %2576 = vmatpush1.xpose.msra.mxu0 0.0
    %2577 = vmatprep.subr.mxu0 0.0
    %2578 = vmatpush1.xpose.msra.mxu0 0.0
    %2579 = vmatprep.subr.mxu0 0.0
    %2580 = vmatpush1.xpose.msra.mxu0 0.0
    %2581 = vmatprep.subr.mxu0 0.0
    %2582 = vmatpush1.xpose.msra.mxu0 0.0
    %2583 = vmatprep.subr.mxu0 0.0
    %2584 = vmatpush1.xpose.msra.mxu0 0.0
    %2585 = vmatprep.subr.mxu0 0.0
    %2586 = vmatpush1.xpose.msra.mxu0 0.0
    %2587 = vmatprep.subr.mxu0 0.0
    %2588 = vmatpush1.xpose.msra.mxu0 0.0
    %2589 = vmatprep.subr.mxu0 0.0
    %2590 = vmatpush1.xpose.msra.mxu0 0.0
    %2591 = vmatprep.subr.mxu0 0.0
    %2592 = vmatpush1.xpose.msra.mxu0 0.0
    %2593 = vmatprep.subr.mxu0 0.0
    %2594 = vmatpush1.xpose.msra.mxu0 0.0
    %2595 = vmatprep.subr.mxu0 0.0
    %2596 = vmatpush1.xpose.msra.mxu0 0.0
    %2597 = vmatprep.subr.mxu0 0.0
    %2598 = vmatpush1.xpose.msra.mxu0 0.0
    %2599 = vmatprep.subr.mxu0 0.0
    %2600 = vmatpush1.xpose.msra.mxu0 0.0
    %2601 = vmatprep.subr.mxu0 0.0
    %2602 = vmatpush1.xpose.msra.mxu0 0.0
    %2603 = vmatprep.mubr.f32.mxu0 0.0
    %2604 = vmatmul.mubr.f32.gmra.mrb[0].mxu0 %v2537
    %v2605 = vpop.f32.mrb[0].mxu0
    %v2606 = vadd.f32 0.0, %v2605
    %v2607 = vpop.f32.mrb[0].mxu0
    %2608 = vdwg.mxu0
    %v2609 = vlaneseq
    %v2610 = vshrl.u32 %v2609, 7
    %v2611 = vsub.s32 0, %v2610
    %v2612 = vrot.slane %v2138, %v2611
    %2613 = vrot.lane.b32.xlu0 %v2612, 32
    %v2614 = vpop.permute.xlu0 %2613
    %v2615 = vsel %vm291, %v2614, 0
    %2617 = vmatprep.subr.mxu0 0.0
    %2618 = vmatpush1.xpose.msra.mxu0 %v942
    %2619 = vmatprep.subr.mxu0 0.0
    %2620 = vmatpush1.xpose.msra.mxu0 0.0
    %2621 = vmatprep.subr.mxu0 0.0
    %2622 = vmatpush1.xpose.msra.mxu0 0.0
    %2623 = vmatprep.subr.mxu0 0.0
    %2624 = vmatpush1.xpose.msra.mxu0 0.0
    %2625 = vmatprep.subr.mxu0 0.0
    %2626 = vmatpush1.xpose.msra.mxu0 0.0
    %2627 = vmatprep.subr.mxu0 0.0
    %2628 = vmatpush1.xpose.msra.mxu0 0.0
    %2629 = vmatprep.subr.mxu0 0.0
    %2630 = vmatpush1.xpose.msra.mxu0 0.0
    %2631 = vmatprep.subr.mxu0 0.0
    %2632 = vmatpush1.xpose.msra.mxu0 0.0
    %2633 = vmatprep.subr.mxu0 0.0
    %2634 = vmatpush1.xpose.msra.mxu0 0.0
    %2635 = vmatprep.subr.mxu0 0.0
    %2636 = vmatpush1.xpose.msra.mxu0 0.0
    %2637 = vmatprep.subr.mxu0 0.0
    %2638 = vmatpush1.xpose.msra.mxu0 0.0
    %2639 = vmatprep.subr.mxu0 0.0
    %2640 = vmatpush1.xpose.msra.mxu0 0.0
    %2641 = vmatprep.subr.mxu0 0.0
    %2642 = vmatpush1.xpose.msra.mxu0 0.0
    %2643 = vmatprep.subr.mxu0 0.0
    %2644 = vmatpush1.xpose.msra.mxu0 0.0
    %2645 = vmatprep.subr.mxu0 0.0
    %2646 = vmatpush1.xpose.msra.mxu0 0.0
    %2647 = vmatprep.subr.mxu0 0.0
    %2648 = vmatpush1.xpose.msra.mxu0 0.0
    %2649 = vmatprep.subr.mxu0 0.0
    %2650 = vmatpush1.xpose.msra.mxu0 0.0
    %2651 = vmatprep.subr.mxu0 0.0
    %2652 = vmatpush1.xpose.msra.mxu0 0.0
    %2653 = vmatprep.subr.mxu0 0.0
    %2654 = vmatpush1.xpose.msra.mxu0 0.0
    %2655 = vmatprep.subr.mxu0 0.0
    %2656 = vmatpush1.xpose.msra.mxu0 0.0
    %2657 = vmatprep.subr.mxu0 0.0
    %2658 = vmatpush1.xpose.msra.mxu0 0.0
    %2659 = vmatprep.subr.mxu0 0.0
    %2660 = vmatpush1.xpose.msra.mxu0 0.0
    %2661 = vmatprep.subr.mxu0 0.0
    %2662 = vmatpush1.xpose.msra.mxu0 0.0
    %2663 = vmatprep.subr.mxu0 0.0
    %2664 = vmatpush1.xpose.msra.mxu0 0.0
    %2665 = vmatprep.subr.mxu0 0.0
    %2666 = vmatpush1.xpose.msra.mxu0 0.0
    %2667 = vmatprep.subr.mxu0 0.0
    %2668 = vmatpush1.xpose.msra.mxu0 0.0
    %2669 = vmatprep.subr.mxu0 0.0
    %2670 = vmatpush1.xpose.msra.mxu0 0.0
    %2671 = vmatprep.subr.mxu0 0.0
    %2672 = vmatpush1.xpose.msra.mxu0 0.0
    %2673 = vmatprep.subr.mxu0 0.0
    %2674 = vmatpush1.xpose.msra.mxu0 0.0
    %2675 = vmatprep.subr.mxu0 0.0
    %2676 = vmatpush1.xpose.msra.mxu0 0.0
    %2677 = vmatprep.subr.mxu0 0.0
    %2678 = vmatpush1.xpose.msra.mxu0 0.0
    %2679 = vmatprep.subr.mxu0 0.0
    %2680 = vmatpush1.xpose.msra.mxu0 0.0
    %2681 = vmatprep.mubr.f32.mxu0 0.0
    %2682 = vmatmul.mubr.f32.gmra.mrb[0].mxu0 %v2615
    %v2683 = vpop.f32.mrb[0].mxu0
    %v2684 = vadd.f32 0.0, %v2683
    %v2685 = vpop.f32.mrb[0].mxu0
    %2686 = vdwg.mxu0
    %v2687 = vlaneseq
    %v2688 = vshrl.u32 %v2687, 7
    %v2689 = vsub.s32 0, %v2688
    %v2690 = vrot.slane %v2140, %v2689
    %2691 = vrot.lane.b32.xlu0 %v2690, 32
    %v2692 = vpop.permute.xlu0 %2691
    %v2693 = vsel %vm291, %v2692, 0
    %2695 = vmatprep.subr.mxu0 0.0
    %2696 = vmatpush1.xpose.msra.mxu0 %v1023
    %2697 = vmatprep.subr.mxu0 0.0
    %2698 = vmatpush1.xpose.msra.mxu0 0.0
    %2699 = vmatprep.subr.mxu0 0.0
    %2700 = vmatpush1.xpose.msra.mxu0 0.0
    %2701 = vmatprep.subr.mxu0 0.0
    %2702 = vmatpush1.xpose.msra.mxu0 0.0
    %2703 = vmatprep.subr.mxu0 0.0
    %2704 = vmatpush1.xpose.msra.mxu0 0.0
    %2705 = vmatprep.subr.mxu0 0.0
    %2706 = vmatpush1.xpose.msra.mxu0 0.0
    %2707 = vmatprep.subr.mxu0 0.0
    %2708 = vmatpush1.xpose.msra.mxu0 0.0
    %2709 = vmatprep.subr.mxu0 0.0
    %2710 = vmatpush1.xpose.msra.mxu0 0.0
    %2711 = vmatprep.subr.mxu0 0.0
    %2712 = vmatpush1.xpose.msra.mxu0 0.0
    %2713 = vmatprep.subr.mxu0 0.0
    %2714 = vmatpush1.xpose.msra.mxu0 0.0
    %2715 = vmatprep.subr.mxu0 0.0
    %2716 = vmatpush1.xpose.msra.mxu0 0.0
    %2717 = vmatprep.subr.mxu0 0.0
    %2718 = vmatpush1.xpose.msra.mxu0 0.0
    %2719 = vmatprep.subr.mxu0 0.0
    %2720 = vmatpush1.xpose.msra.mxu0 0.0
    %2721 = vmatprep.subr.mxu0 0.0
    %2722 = vmatpush1.xpose.msra.mxu0 0.0
    %2723 = vmatprep.subr.mxu0 0.0
    %2724 = vmatpush1.xpose.msra.mxu0 0.0
    %2725 = vmatprep.subr.mxu0 0.0
    %2726 = vmatpush1.xpose.msra.mxu0 0.0
    %2727 = vmatprep.subr.mxu0 0.0
    %2728 = vmatpush1.xpose.msra.mxu0 0.0
    %2729 = vmatprep.subr.mxu0 0.0
    %2730 = vmatpush1.xpose.msra.mxu0 0.0
    %2731 = vmatprep.subr.mxu0 0.0
    %2732 = vmatpush1.xpose.msra.mxu0 0.0
    %2733 = vmatprep.subr.mxu0 0.0
    %2734 = vmatpush1.xpose.msra.mxu0 0.0
    %2735 = vmatprep.subr.mxu0 0.0
    %2736 = vmatpush1.xpose.msra.mxu0 0.0
    %2737 = vmatprep.subr.mxu0 0.0
    %2738 = vmatpush1.xpose.msra.mxu0 0.0
    %2739 = vmatprep.subr.mxu0 0.0
    %2740 = vmatpush1.xpose.msra.mxu0 0.0
    %2741 = vmatprep.subr.mxu0 0.0
    %2742 = vmatpush1.xpose.msra.mxu0 0.0
    %2743 = vmatprep.subr.mxu0 0.0
    %2744 = vmatpush1.xpose.msra.mxu0 0.0
    %2745 = vmatprep.subr.mxu0 0.0
    %2746 = vmatpush1.xpose.msra.mxu0 0.0
    %2747 = vmatprep.subr.mxu0 0.0
    %2748 = vmatpush1.xpose.msra.mxu0 0.0
    %2749 = vmatprep.subr.mxu0 0.0
    %2750 = vmatpush1.xpose.msra.mxu0 0.0
    %2751 = vmatprep.subr.mxu0 0.0
    %2752 = vmatpush1.xpose.msra.mxu0 0.0
    %2753 = vmatprep.subr.mxu0 0.0
    %2754 = vmatpush1.xpose.msra.mxu0 0.0
    %2755 = vmatprep.subr.mxu0 0.0
    %2756 = vmatpush1.xpose.msra.mxu0 0.0
    %2757 = vmatprep.subr.mxu0 0.0
    %2758 = vmatpush1.xpose.msra.mxu0 0.0
    %2759 = vmatprep.mubr.f32.mxu0 0.0
    %2760 = vmatmul.mubr.f32.gmra.mrb[0].mxu0 %v2693
    %v2761 = vpop.f32.mrb[0].mxu0
    %v2762 = vadd.f32 0.0, %v2761
    %v2763 = vpop.f32.mrb[0].mxu0
    %2764 = vdwg.mxu0
    %v2765 = vsel %vm1095, %v2216, -inf
    %2766 = vmax.xlane.f32.xlu0 %v2765
    %v2767 = vpop.xlane.xlu0 %2766
    %v2768 = vsel %vm1095, %v2294, -inf
    %2769 = vmax.xlane.f32.xlu0 %v2768
    %v2770 = vpop.xlane.xlu0 %2769
    %v2771 = vsel %vm1095, %v2372, -inf
    %2772 = vmax.xlane.f32.xlu0 %v2771
    %v2773 = vpop.xlane.xlu0 %2772
    %v2774 = vsel %vm1095, %v2450, -inf
    %2775 = vmax.xlane.f32.xlu0 %v2774
    %v2776 = vpop.xlane.xlu0 %2775
    %v2777 = vsel %vm1095, %v2528, -inf
    %2778 = vmax.xlane.f32.xlu0 %v2777
    %v2779 = vpop.xlane.xlu0 %2778
    %v2780 = vsel %vm1095, %v2606, -inf
    %2781 = vmax.xlane.f32.xlu0 %v2780
    %v2782 = vpop.xlane.xlu0 %2781
    %v2783 = vsel %vm1095, %v2684, -inf
    %2784 = vmax.xlane.f32.xlu0 %v2783
    %v2785 = vpop.xlane.xlu0 %2784
    %v2786 = vsel %vm1095, %v2762, -inf
    %2787 = vmax.xlane.f32.xlu0 %v2786
    %v2788 = vpop.xlane.xlu0 %2787
    %v2789 = vsub.f32 %v2216, %v2767
    %v2790 = vsub.f32 %v2294, %v2770
    %v2791 = vsub.f32 %v2372, %v2773
    %v2792 = vsub.f32 %v2450, %v2776
    %v2793 = vsub.f32 %v2528, %v2779
    %v2794 = vsub.f32 %v2606, %v2782
    %v2795 = vsub.f32 %v2684, %v2785
    %v2796 = vsub.f32 %v2762, %v2788
    %v2797 = vmul.f32 %v2789, 1.442695
    %v2798 = vpow.pop %v2797
    %v2799 = vmul.f32 %v2790, 1.442695
    %v2800 = vpow.pop %v2799
    %v2801 = vmul.f32 %v2791, 1.442695
    %v2802 = vpow.pop %v2801
    %v2803 = vmul.f32 %v2792, 1.442695
    %v2804 = vpow.pop %v2803
    %v2805 = vmul.f32 %v2793, 1.442695
    %v2806 = vpow.pop %v2805
    %v2807 = vmul.f32 %v2794, 1.442695
    %v2808 = vpow.pop %v2807
    %v2809 = vmul.f32 %v2795, 1.442695
    %v2810 = vpow.pop %v2809
    %v2811 = vmul.f32 %v2796, 1.442695
    %v2812 = vpow.pop %v2811
    %v2813 = vsel %vm1095, %v2798, 0.0
    %2814 = vadd.xlane.f32.xlu0 %v2813
    %v2815 = vpop.xlane.xlu0 %2814
    %v2816 = vsel %vm1095, %v2800, 0.0
    %2817 = vadd.xlane.f32.xlu0 %v2816
    %v2818 = vpop.xlane.xlu0 %2817
    %v2819 = vsel %vm1095, %v2802, 0.0
    %2820 = vadd.xlane.f32.xlu0 %v2819
    %v2821 = vpop.xlane.xlu0 %2820
    %v2822 = vsel %vm1095, %v2804, 0.0
    %2823 = vadd.xlane.f32.xlu0 %v2822
    %v2824 = vpop.xlane.xlu0 %2823
    %v2825 = vsel %vm1095, %v2806, 0.0
    %2826 = vadd.xlane.f32.xlu0 %v2825
    %v2827 = vpop.xlane.xlu0 %2826
    %v2828 = vsel %vm1095, %v2808, 0.0
    %2829 = vadd.xlane.f32.xlu0 %v2828
    %v2830 = vpop.xlane.xlu0 %2829
    %v2831 = vsel %vm1095, %v2810, 0.0
    %2832 = vadd.xlane.f32.xlu0 %v2831
    %v2833 = vpop.xlane.xlu0 %2832
    %v2834 = vsel %vm1095, %v2812, 0.0
    %2835 = vadd.xlane.f32.xlu0 %v2834
    %v2836 = vpop.xlane.xlu0 %2835
    %v2837 = vrcp.pop %v2815
    %v2838 = vrcp.pop %v2818
    %v2839 = vrcp.pop %v2821
    %v2840 = vrcp.pop %v2824
    %v2841 = vrcp.pop %v2827
    %v2842 = vrcp.pop %v2830
    %v2843 = vrcp.pop %v2833
    %v2844 = vrcp.pop %v2836
    %v2845 = vmul.f32 %v2815, %v2837
    %v2846 = vmul.f32 %v2818, %v2838
    %v2847 = vmul.f32 %v2821, %v2839
    %v2848 = vmul.f32 %v2824, %v2840
    %v2849 = vmul.f32 %v2827, %v2841
    %v2850 = vmul.f32 %v2830, %v2842
    %v2851 = vmul.f32 %v2833, %v2843
    %v2852 = vmul.f32 %v2836, %v2844
    %v2853 = vsub.f32 2.0, %v2845
    %v2854 = vsub.f32 2.0, %v2846
    %v2855 = vsub.f32 2.0, %v2847
    %v2856 = vsub.f32 2.0, %v2848
    %v2857 = vsub.f32 2.0, %v2849
    %v2858 = vsub.f32 2.0, %v2850
    %v2859 = vsub.f32 2.0, %v2851
    %v2860 = vsub.f32 2.0, %v2852
    %v2861 = vmul.f32 %v2837, %v2853
    %v2862 = vmul.f32 %v2838, %v2854
    %v2863 = vmul.f32 %v2839, %v2855
    %v2864 = vmul.f32 %v2840, %v2856
    %v2865 = vmul.f32 %v2841, %v2857
    %v2866 = vmul.f32 %v2842, %v2858
    %v2867 = vmul.f32 %v2843, %v2859
    %v2868 = vmul.f32 %v2844, %v2860
    %v2869 = vmul.f32 %v2798, %v2861
    %v2870 = vmul.f32 %v2800, %v2862
    %v2871 = vmul.f32 %v2802, %v2863
    %v2872 = vmul.f32 %v2804, %v2864
    %v2873 = vmul.f32 %v2806, %v2865
    %v2874 = vmul.f32 %v2808, %v2866
    %v2875 = vmul.f32 %v2810, %v2867
    %v2876 = vmul.f32 %v2812, %v2868
    %v2878 = vsel %vm1208, %v2869, 0
    %2880 = vmatprep.subr.mxu0 0.0
    %2881 = vmatpush1.msra.mxu0 %v241
    %2882 = vmatprep.subr.mxu0 0.0
    %2883 = vmatpush1.msra.mxu0 0.0
    %2884 = vmatprep.subr.mxu0 0.0
    %2885 = vmatpush1.msra.mxu0 0.0
    %2886 = vmatprep.subr.mxu0 0.0
    %2887 = vmatpush1.msra.mxu0 0.0
    %2888 = vmatprep.subr.mxu0 0.0
    %2889 = vmatpush1.msra.mxu0 0.0
    %2890 = vmatprep.subr.mxu0 0.0
    %2891 = vmatpush1.msra.mxu0 0.0
    %2892 = vmatprep.subr.mxu0 0.0
    %2893 = vmatpush1.msra.mxu0 0.0
    %2894 = vmatprep.subr.mxu0 0.0
    %2895 = vmatpush1.msra.mxu0 0.0
    %2896 = vmatprep.subr.mxu0 0.0
    %2897 = vmatpush1.msra.mxu0 0.0
    %2898 = vmatprep.subr.mxu0 0.0
    %2899 = vmatpush1.msra.mxu0 0.0
    %2900 = vmatprep.subr.mxu0 0.0
    %2901 = vmatpush1.msra.mxu0 0.0
    %2902 = vmatprep.subr.mxu0 0.0
    %2903 = vmatpush1.msra.mxu0 0.0
    %2904 = vmatprep.subr.mxu0 0.0
    %2905 = vmatpush1.msra.mxu0 0.0
    %2906 = vmatprep.subr.mxu0 0.0
    %2907 = vmatpush1.msra.mxu0 0.0
    %2908 = vmatprep.subr.mxu0 0.0
    %2909 = vmatpush1.msra.mxu0 0.0
    %2910 = vmatprep.subr.mxu0 0.0
    %2911 = vmatpush1.msra.mxu0 0.0
    %2912 = vmatprep.subr.mxu0 0.0
    %2913 = vmatpush1.msra.mxu0 0.0
    %2914 = vmatprep.subr.mxu0 0.0
    %2915 = vmatpush1.msra.mxu0 0.0
    %2916 = vmatprep.subr.mxu0 0.0
    %2917 = vmatpush1.msra.mxu0 0.0
    %2918 = vmatprep.subr.mxu0 0.0
    %2919 = vmatpush1.msra.mxu0 0.0
    %2920 = vmatprep.subr.mxu0 0.0
    %2921 = vmatpush1.msra.mxu0 0.0
    %2922 = vmatprep.subr.mxu0 0.0
    %2923 = vmatpush1.msra.mxu0 0.0
    %2924 = vmatprep.subr.mxu0 0.0
    %2925 = vmatpush1.msra.mxu0 0.0
    %2926 = vmatprep.subr.mxu0 0.0
    %2927 = vmatpush1.msra.mxu0 0.0
    %2928 = vmatprep.subr.mxu0 0.0
    %2929 = vmatpush1.msra.mxu0 0.0
    %2930 = vmatprep.subr.mxu0 0.0
    %2931 = vmatpush1.msra.mxu0 0.0
    %2932 = vmatprep.subr.mxu0 0.0
    %2933 = vmatpush1.msra.mxu0 0.0
    %2934 = vmatprep.subr.mxu0 0.0
    %2935 = vmatpush1.msra.mxu0 0.0
    %2936 = vmatprep.subr.mxu0 0.0
    %2937 = vmatpush1.msra.mxu0 0.0
    %2938 = vmatprep.subr.mxu0 0.0
    %2939 = vmatpush1.msra.mxu0 0.0
    %2940 = vmatprep.subr.mxu0 0.0
    %2941 = vmatpush1.msra.mxu0 0.0
    %2942 = vmatprep.subr.mxu0 0.0
    %2943 = vmatpush1.msra.mxu0 0.0
    %2944 = vmatprep.mubr.f32.mxu0 0.0
    %2945 = vmatmul.mubr.f32.gmra.mrb[0].mxu0 %v2878
    %v2946 = vpop.f32.mrb[0].mxu0
    %v2947 = vadd.f32 0.0, %v2946
    %v2948 = vpop.f32.mrb[0].mxu0
    %2949 = vdwg.mxu0
    %v2951 = vsel %vm1208, %v2870, 0
    %2953 = vmatprep.subr.mxu0 0.0
    %2954 = vmatpush1.msra.mxu0 %v242
    %2955 = vmatprep.subr.mxu0 0.0
    %2956 = vmatpush1.msra.mxu0 0.0
    %2957 = vmatprep.subr.mxu0 0.0
    %2958 = vmatpush1.msra.mxu0 0.0
    %2959 = vmatprep.subr.mxu0 0.0
    %2960 = vmatpush1.msra.mxu0 0.0
    %2961 = vmatprep.subr.mxu0 0.0
    %2962 = vmatpush1.msra.mxu0 0.0
    %2963 = vmatprep.subr.mxu0 0.0
    %2964 = vmatpush1.msra.mxu0 0.0
    %2965 = vmatprep.subr.mxu0 0.0
    %2966 = vmatpush1.msra.mxu0 0.0
    %2967 = vmatprep.subr.mxu0 0.0
    %2968 = vmatpush1.msra.mxu0 0.0
    %2969 = vmatprep.subr.mxu0 0.0
    %2970 = vmatpush1.msra.mxu0 0.0
    %2971 = vmatprep.subr.mxu0 0.0
    %2972 = vmatpush1.msra.mxu0 0.0
    %2973 = vmatprep.subr.mxu0 0.0
    %2974 = vmatpush1.msra.mxu0 0.0
    %2975 = vmatprep.subr.mxu0 0.0
    %2976 = vmatpush1.msra.mxu0 0.0
    %2977 = vmatprep.subr.mxu0 0.0
    %2978 = vmatpush1.msra.mxu0 0.0
    %2979 = vmatprep.subr.mxu0 0.0
    %2980 = vmatpush1.msra.mxu0 0.0
    %2981 = vmatprep.subr.mxu0 0.0
    %2982 = vmatpush1.msra.mxu0 0.0
    %2983 = vmatprep.subr.mxu0 0.0
    %2984 = vmatpush1.msra.mxu0 0.0
    %2985 = vmatprep.subr.mxu0 0.0
    %2986 = vmatpush1.msra.mxu0 0.0
    %2987 = vmatprep.subr.mxu0 0.0
    %2988 = vmatpush1.msra.mxu0 0.0
    %2989 = vmatprep.subr.mxu0 0.0
    %2990 = vmatpush1.msra.mxu0 0.0
    %2991 = vmatprep.subr.mxu0 0.0
    %2992 = vmatpush1.msra.mxu0 0.0
    %2993 = vmatprep.subr.mxu0 0.0
    %2994 = vmatpush1.msra.mxu0 0.0
    %2995 = vmatprep.subr.mxu0 0.0
    %2996 = vmatpush1.msra.mxu0 0.0
    %2997 = vmatprep.subr.mxu0 0.0
    %2998 = vmatpush1.msra.mxu0 0.0
    %2999 = vmatprep.subr.mxu0 0.0
    %3000 = vmatpush1.msra.mxu0 0.0
    %3001 = vmatprep.subr.mxu0 0.0
    %3002 = vmatpush1.msra.mxu0 0.0
    %3003 = vmatprep.subr.mxu0 0.0
    %3004 = vmatpush1.msra.mxu0 0.0
    %3005 = vmatprep.subr.mxu0 0.0
    %3006 = vmatpush1.msra.mxu0 0.0
    %3007 = vmatprep.subr.mxu0 0.0
    %3008 = vmatpush1.msra.mxu0 0.0
    %3009 = vmatprep.subr.mxu0 0.0
    %3010 = vmatpush1.msra.mxu0 0.0
    %3011 = vmatprep.subr.mxu0 0.0
    %3012 = vmatpush1.msra.mxu0 0.0
    %3013 = vmatprep.subr.mxu0 0.0
    %3014 = vmatpush1.msra.mxu0 0.0
    %3015 = vmatprep.subr.mxu0 0.0
    %3016 = vmatpush1.msra.mxu0 0.0
    %3017 = vmatprep.mubr.f32.mxu0 0.0
    %3018 = vmatmul.mubr.f32.gmra.mrb[0].mxu0 %v2951
    %v3019 = vpop.f32.mrb[0].mxu0
    %v3020 = vadd.f32 0.0, %v3019
    %v3021 = vpop.f32.mrb[0].mxu0
    %3022 = vdwg.mxu0
    %v3024 = vsel %vm1208, %v2871, 0
    %3026 = vmatprep.subr.mxu0 0.0
    %3027 = vmatpush1.msra.mxu0 %v243
    %3028 = vmatprep.subr.mxu0 0.0
    %3029 = vmatpush1.msra.mxu0 0.0
    %3030 = vmatprep.subr.mxu0 0.0
    %3031 = vmatpush1.msra.mxu0 0.0
    %3032 = vmatprep.subr.mxu0 0.0
    %3033 = vmatpush1.msra.mxu0 0.0
    %3034 = vmatprep.subr.mxu0 0.0
    %3035 = vmatpush1.msra.mxu0 0.0
    %3036 = vmatprep.subr.mxu0 0.0
    %3037 = vmatpush1.msra.mxu0 0.0
    %3038 = vmatprep.subr.mxu0 0.0
    %3039 = vmatpush1.msra.mxu0 0.0
    %3040 = vmatprep.subr.mxu0 0.0
    %3041 = vmatpush1.msra.mxu0 0.0
    %3042 = vmatprep.subr.mxu0 0.0
    %3043 = vmatpush1.msra.mxu0 0.0
    %3044 = vmatprep.subr.mxu0 0.0
    %3045 = vmatpush1.msra.mxu0 0.0
    %3046 = vmatprep.subr.mxu0 0.0
    %3047 = vmatpush1.msra.mxu0 0.0
    %3048 = vmatprep.subr.mxu0 0.0
    %3049 = vmatpush1.msra.mxu0 0.0
    %3050 = vmatprep.subr.mxu0 0.0
    %3051 = vmatpush1.msra.mxu0 0.0
    %3052 = vmatprep.subr.mxu0 0.0
    %3053 = vmatpush1.msra.mxu0 0.0
    %3054 = vmatprep.subr.mxu0 0.0
    %3055 = vmatpush1.msra.mxu0 0.0
    %3056 = vmatprep.subr.mxu0 0.0
    %3057 = vmatpush1.msra.mxu0 0.0
    %3058 = vmatprep.subr.mxu0 0.0
    %3059 = vmatpush1.msra.mxu0 0.0
    %3060 = vmatprep.subr.mxu0 0.0
    %3061 = vmatpush1.msra.mxu0 0.0
    %3062 = vmatprep.subr.mxu0 0.0
    %3063 = vmatpush1.msra.mxu0 0.0
    %3064 = vmatprep.subr.mxu0 0.0
    %3065 = vmatpush1.msra.mxu0 0.0
    %3066 = vmatprep.subr.mxu0 0.0
    %3067 = vmatpush1.msra.mxu0 0.0
    %3068 = vmatprep.subr.mxu0 0.0
    %3069 = vmatpush1.msra.mxu0 0.0
    %3070 = vmatprep.subr.mxu0 0.0
    %3071 = vmatpush1.msra.mxu0 0.0
    %3072 = vmatprep.subr.mxu0 0.0
    %3073 = vmatpush1.msra.mxu0 0.0
    %3074 = vmatprep.subr.mxu0 0.0
    %3075 = vmatpush1.msra.mxu0 0.0
    %3076 = vmatprep.subr.mxu0 0.0
    %3077 = vmatpush1.msra.mxu0 0.0
    %3078 = vmatprep.subr.mxu0 0.0
    %3079 = vmatpush1.msra.mxu0 0.0
    %3080 = vmatprep.subr.mxu0 0.0
    %3081 = vmatpush1.msra.mxu0 0.0
    %3082 = vmatprep.subr.mxu0 0.0
    %3083 = vmatpush1.msra.mxu0 0.0
    %3084 = vmatprep.subr.mxu0 0.0
    %3085 = vmatpush1.msra.mxu0 0.0
    %3086 = vmatprep.subr.mxu0 0.0
    %3087 = vmatpush1.msra.mxu0 0.0
    %3088 = vmatprep.subr.mxu0 0.0
    %3089 = vmatpush1.msra.mxu0 0.0
    %3090 = vmatprep.mubr.f32.mxu0 0.0
    %3091 = vmatmul.mubr.f32.gmra.mrb[0].mxu0 %v3024
    %v3092 = vpop.f32.mrb[0].mxu0
    %v3093 = vadd.f32 0.0, %v3092
    %v3094 = vpop.f32.mrb[0].mxu0
    %3095 = vdwg.mxu0
    %v3097 = vsel %vm1208, %v2872, 0
    %3099 = vmatprep.subr.mxu0 0.0
    %3100 = vmatpush1.msra.mxu0 %v244
    %3101 = vmatprep.subr.mxu0 0.0
    %3102 = vmatpush1.msra.mxu0 0.0
    %3103 = vmatprep.subr.mxu0 0.0
    %3104 = vmatpush1.msra.mxu0 0.0
    %3105 = vmatprep.subr.mxu0 0.0
    %3106 = vmatpush1.msra.mxu0 0.0
    %3107 = vmatprep.subr.mxu0 0.0
    %3108 = vmatpush1.msra.mxu0 0.0
    %3109 = vmatprep.subr.mxu0 0.0
    %3110 = vmatpush1.msra.mxu0 0.0
    %3111 = vmatprep.subr.mxu0 0.0
    %3112 = vmatpush1.msra.mxu0 0.0
    %3113 = vmatprep.subr.mxu0 0.0
    %3114 = vmatpush1.msra.mxu0 0.0
    %3115 = vmatprep.subr.mxu0 0.0
    %3116 = vmatpush1.msra.mxu0 0.0
    %3117 = vmatprep.subr.mxu0 0.0
    %3118 = vmatpush1.msra.mxu0 0.0
    %3119 = vmatprep.subr.mxu0 0.0
    %3120 = vmatpush1.msra.mxu0 0.0
    %3121 = vmatprep.subr.mxu0 0.0
    %3122 = vmatpush1.msra.mxu0 0.0
    %3123 = vmatprep.subr.mxu0 0.0
    %3124 = vmatpush1.msra.mxu0 0.0
    %3125 = vmatprep.subr.mxu0 0.0
    %3126 = vmatpush1.msra.mxu0 0.0
    %3127 = vmatprep.subr.mxu0 0.0
    %3128 = vmatpush1.msra.mxu0 0.0
    %3129 = vmatprep.subr.mxu0 0.0
    %3130 = vmatpush1.msra.mxu0 0.0
    %3131 = vmatprep.subr.mxu0 0.0
    %3132 = vmatpush1.msra.mxu0 0.0
    %3133 = vmatprep.subr.mxu0 0.0
    %3134 = vmatpush1.msra.mxu0 0.0
    %3135 = vmatprep.subr.mxu0 0.0
    %3136 = vmatpush1.msra.mxu0 0.0
    %3137 = vmatprep.subr.mxu0 0.0
    %3138 = vmatpush1.msra.mxu0 0.0
    %3139 = vmatprep.subr.mxu0 0.0
    %3140 = vmatpush1.msra.mxu0 0.0
    %3141 = vmatprep.subr.mxu0 0.0
    %3142 = vmatpush1.msra.mxu0 0.0
    %3143 = vmatprep.subr.mxu0 0.0
    %3144 = vmatpush1.msra.mxu0 0.0
    %3145 = vmatprep.subr.mxu0 0.0
    %3146 = vmatpush1.msra.mxu0 0.0
    %3147 = vmatprep.subr.mxu0 0.0
    %3148 = vmatpush1.msra.mxu0 0.0
    %3149 = vmatprep.subr.mxu0 0.0
    %3150 = vmatpush1.msra.mxu0 0.0
    %3151 = vmatprep.subr.mxu0 0.0
    %3152 = vmatpush1.msra.mxu0 0.0
    %3153 = vmatprep.subr.mxu0 0.0
    %3154 = vmatpush1.msra.mxu0 0.0
    %3155 = vmatprep.subr.mxu0 0.0
    %3156 = vmatpush1.msra.mxu0 0.0
    %3157 = vmatprep.subr.mxu0 0.0
    %3158 = vmatpush1.msra.mxu0 0.0
    %3159 = vmatprep.subr.mxu0 0.0
    %3160 = vmatpush1.msra.mxu0 0.0
    %3161 = vmatprep.subr.mxu0 0.0
    %3162 = vmatpush1.msra.mxu0 0.0
    %3163 = vmatprep.mubr.f32.mxu0 0.0
    %3164 = vmatmul.mubr.f32.gmra.mrb[0].mxu0 %v3097
    %v3165 = vpop.f32.mrb[0].mxu0
    %v3166 = vadd.f32 0.0, %v3165
    %v3167 = vpop.f32.mrb[0].mxu0
    %3168 = vdwg.mxu0
    %v3170 = vsel %vm1208, %v2873, 0
    %3172 = vmatprep.subr.mxu0 0.0
    %3173 = vmatpush1.msra.mxu0 %v245
    %3174 = vmatprep.subr.mxu0 0.0
    %3175 = vmatpush1.msra.mxu0 0.0
    %3176 = vmatprep.subr.mxu0 0.0
    %3177 = vmatpush1.msra.mxu0 0.0
    %3178 = vmatprep.subr.mxu0 0.0
    %3179 = vmatpush1.msra.mxu0 0.0
    %3180 = vmatprep.subr.mxu0 0.0
    %3181 = vmatpush1.msra.mxu0 0.0
    %3182 = vmatprep.subr.mxu0 0.0
    %3183 = vmatpush1.msra.mxu0 0.0
    %3184 = vmatprep.subr.mxu0 0.0
    %3185 = vmatpush1.msra.mxu0 0.0
    %3186 = vmatprep.subr.mxu0 0.0
    %3187 = vmatpush1.msra.mxu0 0.0
    %3188 = vmatprep.subr.mxu0 0.0
    %3189 = vmatpush1.msra.mxu0 0.0
    %3190 = vmatprep.subr.mxu0 0.0
    %3191 = vmatpush1.msra.mxu0 0.0
    %3192 = vmatprep.subr.mxu0 0.0
    %3193 = vmatpush1.msra.mxu0 0.0
    %3194 = vmatprep.subr.mxu0 0.0
    %3195 = vmatpush1.msra.mxu0 0.0
    %3196 = vmatprep.subr.mxu0 0.0
    %3197 = vmatpush1.msra.mxu0 0.0
    %3198 = vmatprep.subr.mxu0 0.0
    %3199 = vmatpush1.msra.mxu0 0.0
    %3200 = vmatprep.subr.mxu0 0.0
    %3201 = vmatpush1.msra.mxu0 0.0
    %3202 = vmatprep.subr.mxu0 0.0
    %3203 = vmatpush1.msra.mxu0 0.0
    %3204 = vmatprep.subr.mxu0 0.0
    %3205 = vmatpush1.msra.mxu0 0.0
    %3206 = vmatprep.subr.mxu0 0.0
    %3207 = vmatpush1.msra.mxu0 0.0
    %3208 = vmatprep.subr.mxu0 0.0
    %3209 = vmatpush1.msra.mxu0 0.0
    %3210 = vmatprep.subr.mxu0 0.0
    %3211 = vmatpush1.msra.mxu0 0.0
    %3212 = vmatprep.subr.mxu0 0.0
    %3213 = vmatpush1.msra.mxu0 0.0
    %3214 = vmatprep.subr.mxu0 0.0
    %3215 = vmatpush1.msra.mxu0 0.0
    %3216 = vmatprep.subr.mxu0 0.0
    %3217 = vmatpush1.msra.mxu0 0.0
    %3218 = vmatprep.subr.mxu0 0.0
    %3219 = vmatpush1.msra.mxu0 0.0
    %3220 = vmatprep.subr.mxu0 0.0
    %3221 = vmatpush1.msra.mxu0 0.0
    %3222 = vmatprep.subr.mxu0 0.0
    %3223 = vmatpush1.msra.mxu0 0.0
    %3224 = vmatprep.subr.mxu0 0.0
    %3225 = vmatpush1.msra.mxu0 0.0
    %3226 = vmatprep.subr.mxu0 0.0
    %3227 = vmatpush1.msra.mxu0 0.0
    %3228 = vmatprep.subr.mxu0 0.0
    %3229 = vmatpush1.msra.mxu0 0.0
    %3230 = vmatprep.subr.mxu0 0.0
    %3231 = vmatpush1.msra.mxu0 0.0
    %3232 = vmatprep.subr.mxu0 0.0
    %3233 = vmatpush1.msra.mxu0 0.0
    %3234 = vmatprep.subr.mxu0 0.0
    %3235 = vmatpush1.msra.mxu0 0.0
    %3236 = vmatprep.mubr.f32.mxu0 0.0
    %3237 = vmatmul.mubr.f32.gmra.mrb[0].mxu0 %v3170
    %v3238 = vpop.f32.mrb[0].mxu0
    %v3239 = vadd.f32 0.0, %v3238
    %v3240 = vpop.f32.mrb[0].mxu0
    %3241 = vdwg.mxu0
    %v3243 = vsel %vm1208, %v2874, 0
    %3245 = vmatprep.subr.mxu0 0.0
    %3246 = vmatpush1.msra.mxu0 %v246
    %3247 = vmatprep.subr.mxu0 0.0
    %3248 = vmatpush1.msra.mxu0 0.0
    %3249 = vmatprep.subr.mxu0 0.0
    %3250 = vmatpush1.msra.mxu0 0.0
    %3251 = vmatprep.subr.mxu0 0.0
    %3252 = vmatpush1.msra.mxu0 0.0
    %3253 = vmatprep.subr.mxu0 0.0
    %3254 = vmatpush1.msra.mxu0 0.0
    %3255 = vmatprep.subr.mxu0 0.0
    %3256 = vmatpush1.msra.mxu0 0.0
    %3257 = vmatprep.subr.mxu0 0.0
    %3258 = vmatpush1.msra.mxu0 0.0
    %3259 = vmatprep.subr.mxu0 0.0
    %3260 = vmatpush1.msra.mxu0 0.0
    %3261 = vmatprep.subr.mxu0 0.0
    %3262 = vmatpush1.msra.mxu0 0.0
    %3263 = vmatprep.subr.mxu0 0.0
    %3264 = vmatpush1.msra.mxu0 0.0
    %3265 = vmatprep.subr.mxu0 0.0
    %3266 = vmatpush1.msra.mxu0 0.0
    %3267 = vmatprep.subr.mxu0 0.0
    %3268 = vmatpush1.msra.mxu0 0.0
    %3269 = vmatprep.subr.mxu0 0.0
    %3270 = vmatpush1.msra.mxu0 0.0
    %3271 = vmatprep.subr.mxu0 0.0
    %3272 = vmatpush1.msra.mxu0 0.0
    %3273 = vmatprep.subr.mxu0 0.0
    %3274 = vmatpush1.msra.mxu0 0.0
    %3275 = vmatprep.subr.mxu0 0.0
    %3276 = vmatpush1.msra.mxu0 0.0
    %3277 = vmatprep.subr.mxu0 0.0
    %3278 = vmatpush1.msra.mxu0 0.0
    %3279 = vmatprep.subr.mxu0 0.0
    %3280 = vmatpush1.msra.mxu0 0.0
    %3281 = vmatprep.subr.mxu0 0.0
    %3282 = vmatpush1.msra.mxu0 0.0
    %3283 = vmatprep.subr.mxu0 0.0
    %3284 = vmatpush1.msra.mxu0 0.0
    %3285 = vmatprep.subr.mxu0 0.0
    %3286 = vmatpush1.msra.mxu0 0.0
    %3287 = vmatprep.subr.mxu0 0.0
    %3288 = vmatpush1.msra.mxu0 0.0
    %3289 = vmatprep.subr.mxu0 0.0
    %3290 = vmatpush1.msra.mxu0 0.0
    %3291 = vmatprep.subr.mxu0 0.0
    %3292 = vmatpush1.msra.mxu0 0.0
    %3293 = vmatprep.subr.mxu0 0.0
    %3294 = vmatpush1.msra.mxu0 0.0
    %3295 = vmatprep.subr.mxu0 0.0
    %3296 = vmatpush1.msra.mxu0 0.0
    %3297 = vmatprep.subr.mxu0 0.0
    %3298 = vmatpush1.msra.mxu0 0.0
    %3299 = vmatprep.subr.mxu0 0.0
    %3300 = vmatpush1.msra.mxu0 0.0
    %3301 = vmatprep.subr.mxu0 0.0
    %3302 = vmatpush1.msra.mxu0 0.0
    %3303 = vmatprep.subr.mxu0 0.0
    %3304 = vmatpush1.msra.mxu0 0.0
    %3305 = vmatprep.subr.mxu0 0.0
    %3306 = vmatpush1.msra.mxu0 0.0
    %3307 = vmatprep.subr.mxu0 0.0
    %3308 = vmatpush1.msra.mxu0 0.0
    %3309 = vmatprep.mubr.f32.mxu0 0.0
    %3310 = vmatmul.mubr.f32.gmra.mrb[0].mxu0 %v3243
    %v3311 = vpop.f32.mrb[0].mxu0
    %v3312 = vadd.f32 0.0, %v3311
    %v3313 = vpop.f32.mrb[0].mxu0
    %3314 = vdwg.mxu0
    %v3316 = vsel %vm1208, %v2875, 0
    %3318 = vmatprep.subr.mxu0 0.0
    %3319 = vmatpush1.msra.mxu0 %v247
    %3320 = vmatprep.subr.mxu0 0.0
    %3321 = vmatpush1.msra.mxu0 0.0
    %3322 = vmatprep.subr.mxu0 0.0
    %3323 = vmatpush1.msra.mxu0 0.0
    %3324 = vmatprep.subr.mxu0 0.0
    %3325 = vmatpush1.msra.mxu0 0.0
    %3326 = vmatprep.subr.mxu0 0.0
    %3327 = vmatpush1.msra.mxu0 0.0
    %3328 = vmatprep.subr.mxu0 0.0
    %3329 = vmatpush1.msra.mxu0 0.0
    %3330 = vmatprep.subr.mxu0 0.0
    %3331 = vmatpush1.msra.mxu0 0.0
    %3332 = vmatprep.subr.mxu0 0.0
    %3333 = vmatpush1.msra.mxu0 0.0
    %3334 = vmatprep.subr.mxu0 0.0
    %3335 = vmatpush1.msra.mxu0 0.0
    %3336 = vmatprep.subr.mxu0 0.0
    %3337 = vmatpush1.msra.mxu0 0.0
    %3338 = vmatprep.subr.mxu0 0.0
    %3339 = vmatpush1.msra.mxu0 0.0
    %3340 = vmatprep.subr.mxu0 0.0
    %3341 = vmatpush1.msra.mxu0 0.0
    %3342 = vmatprep.subr.mxu0 0.0
    %3343 = vmatpush1.msra.mxu0 0.0
    %3344 = vmatprep.subr.mxu0 0.0
    %3345 = vmatpush1.msra.mxu0 0.0
    %3346 = vmatprep.subr.mxu0 0.0
    %3347 = vmatpush1.msra.mxu0 0.0
    %3348 = vmatprep.subr.mxu0 0.0
    %3349 = vmatpush1.msra.mxu0 0.0
    %3350 = vmatprep.subr.mxu0 0.0
    %3351 = vmatpush1.msra.mxu0 0.0
    %3352 = vmatprep.subr.mxu0 0.0
    %3353 = vmatpush1.msra.mxu0 0.0
    %3354 = vmatprep.subr.mxu0 0.0
    %3355 = vmatpush1.msra.mxu0 0.0
    %3356 = vmatprep.subr.mxu0 0.0
    %3357 = vmatpush1.msra.mxu0 0.0
    %3358 = vmatprep.subr.mxu0 0.0
    %3359 = vmatpush1.msra.mxu0 0.0
    %3360 = vmatprep.subr.mxu0 0.0
    %3361 = vmatpush1.msra.mxu0 0.0
    %3362 = vmatprep.subr.mxu0 0.0
    %3363 = vmatpush1.msra.mxu0 0.0
    %3364 = vmatprep.subr.mxu0 0.0
    %3365 = vmatpush1.msra.mxu0 0.0
    %3366 = vmatprep.subr.mxu0 0.0
    %3367 = vmatpush1.msra.mxu0 0.0
    %3368 = vmatprep.subr.mxu0 0.0
    %3369 = vmatpush1.msra.mxu0 0.0
    %3370 = vmatprep.subr.mxu0 0.0
    %3371 = vmatpush1.msra.mxu0 0.0
    %3372 = vmatprep.subr.mxu0 0.0
    %3373 = vmatpush1.msra.mxu0 0.0
    %3374 = vmatprep.subr.mxu0 0.0
    %3375 = vmatpush1.msra.mxu0 0.0
    %3376 = vmatprep.subr.mxu0 0.0
    %3377 = vmatpush1.msra.mxu0 0.0
    %3378 = vmatprep.subr.mxu0 0.0
    %3379 = vmatpush1.msra.mxu0 0.0
    %3380 = vmatprep.subr.mxu0 0.0
    %3381 = vmatpush1.msra.mxu0 0.0
    %3382 = vmatprep.mubr.f32.mxu0 0.0
    %3383 = vmatmul.mubr.f32.gmra.mrb[0].mxu0 %v3316
    %v3384 = vpop.f32.mrb[0].mxu0
    %v3385 = vadd.f32 0.0, %v3384
    %v3386 = vpop.f32.mrb[0].mxu0
    %3387 = vdwg.mxu0
    %v3389 = vsel %vm1208, %v2876, 0
    %3391 = vmatprep.subr.mxu0 0.0
    %3392 = vmatpush1.msra.mxu0 %v248
    %3393 = vmatprep.subr.mxu0 0.0
    %3394 = vmatpush1.msra.mxu0 0.0
    %3395 = vmatprep.subr.mxu0 0.0
    %3396 = vmatpush1.msra.mxu0 0.0
    %3397 = vmatprep.subr.mxu0 0.0
    %3398 = vmatpush1.msra.mxu0 0.0
    %3399 = vmatprep.subr.mxu0 0.0
    %3400 = vmatpush1.msra.mxu0 0.0
    %3401 = vmatprep.subr.mxu0 0.0
    %3402 = vmatpush1.msra.mxu0 0.0
    %3403 = vmatprep.subr.mxu0 0.0
    %3404 = vmatpush1.msra.mxu0 0.0
    %3405 = vmatprep.subr.mxu0 0.0
    %3406 = vmatpush1.msra.mxu0 0.0
    %3407 = vmatprep.subr.mxu0 0.0
    %3408 = vmatpush1.msra.mxu0 0.0
    %3409 = vmatprep.subr.mxu0 0.0
    %3410 = vmatpush1.msra.mxu0 0.0
    %3411 = vmatprep.subr.mxu0 0.0
    %3412 = vmatpush1.msra.mxu0 0.0
    %3413 = vmatprep.subr.mxu0 0.0
    %3414 = vmatpush1.msra.mxu0 0.0
    %3415 = vmatprep.subr.mxu0 0.0
    %3416 = vmatpush1.msra.mxu0 0.0
    %3417 = vmatprep.subr.mxu0 0.0
    %3418 = vmatpush1.msra.mxu0 0.0
    %3419 = vmatprep.subr.mxu0 0.0
    %3420 = vmatpush1.msra.mxu0 0.0
    %3421 = vmatprep.subr.mxu0 0.0
    %3422 = vmatpush1.msra.mxu0 0.0
    %3423 = vmatprep.subr.mxu0 0.0
    %3424 = vmatpush1.msra.mxu0 0.0
    %3425 = vmatprep.subr.mxu0 0.0
    %3426 = vmatpush1.msra.mxu0 0.0
    %3427 = vmatprep.subr.mxu0 0.0
    %3428 = vmatpush1.msra.mxu0 0.0
    %3429 = vmatprep.subr.mxu0 0.0
    %3430 = vmatpush1.msra.mxu0 0.0
    %3431 = vmatprep.subr.mxu0 0.0
    %3432 = vmatpush1.msra.mxu0 0.0
    %3433 = vmatprep.subr.mxu0 0.0
    %3434 = vmatpush1.msra.mxu0 0.0
    %3435 = vmatprep.subr.mxu0 0.0
    %3436 = vmatpush1.msra.mxu0 0.0
    %3437 = vmatprep.subr.mxu0 0.0
    %3438 = vmatpush1.msra.mxu0 0.0
    %3439 = vmatprep.subr.mxu0 0.0
    %3440 = vmatpush1.msra.mxu0 0.0
    %3441 = vmatprep.subr.mxu0 0.0
    %3442 = vmatpush1.msra.mxu0 0.0
    %3443 = vmatprep.subr.mxu0 0.0
    %3444 = vmatpush1.msra.mxu0 0.0
    %3445 = vmatprep.subr.mxu0 0.0
    %3446 = vmatpush1.msra.mxu0 0.0
    %3447 = vmatprep.subr.mxu0 0.0
    %3448 = vmatpush1.msra.mxu0 0.0
    %3449 = vmatprep.subr.mxu0 0.0
    %3450 = vmatpush1.msra.mxu0 0.0
    %3451 = vmatprep.subr.mxu0 0.0
    %3452 = vmatpush1.msra.mxu0 0.0
    %3453 = vmatprep.subr.mxu0 0.0
    %3454 = vmatpush1.msra.mxu0 0.0
    %3455 = vmatprep.mubr.f32.mxu0 0.0
    %3456 = vmatmul.mubr.f32.gmra.mrb[0].mxu0 %v3389
    %v3457 = vpop.f32.mrb[0].mxu0
    %v3458 = vadd.f32 0.0, %v3457
    %v3459 = vpop.f32.mrb[0].mxu0
    %3460 = vdwg.mxu0
    %3461 = vrot.lane.b32.xlu0 %v2090, 32
    %v3462 = vpop.permute.xlu0 %3461
    %v3463 = vsel %vm291, %v3462, 0
    %3465 = vmatprep.subr.mxu0 0.0
    %3466 = vmatpush1.msra.mxu0 %v273
    %3467 = vmatprep.subr.mxu0 0.0
    %3468 = vmatpush1.msra.mxu0 %v274
    %3469 = vmatprep.subr.mxu0 0.0
    %3470 = vmatpush1.msra.mxu0 %v275
    %3471 = vmatprep.subr.mxu0 0.0
    %3472 = vmatpush1.msra.mxu0 %v276
    %3473 = vmatprep.subr.mxu0 0.0
    %3474 = vmatpush1.msra.mxu0 0.0
    %3475 = vmatprep.subr.mxu0 0.0
    %3476 = vmatpush1.msra.mxu0 0.0
    %3477 = vmatprep.subr.mxu0 0.0
    %3478 = vmatpush1.msra.mxu0 0.0
    %3479 = vmatprep.subr.mxu0 0.0
    %3480 = vmatpush1.msra.mxu0 0.0
    %3481 = vmatprep.subr.mxu0 0.0
    %3482 = vmatpush1.msra.mxu0 0.0
    %3483 = vmatprep.subr.mxu0 0.0
    %3484 = vmatpush1.msra.mxu0 0.0
    %3485 = vmatprep.subr.mxu0 0.0
    %3486 = vmatpush1.msra.mxu0 0.0
    %3487 = vmatprep.subr.mxu0 0.0
    %3488 = vmatpush1.msra.mxu0 0.0
    %3489 = vmatprep.subr.mxu0 0.0
    %3490 = vmatpush1.msra.mxu0 0.0
    %3491 = vmatprep.subr.mxu0 0.0
    %3492 = vmatpush1.msra.mxu0 0.0
    %3493 = vmatprep.subr.mxu0 0.0
    %3494 = vmatpush1.msra.mxu0 0.0
    %3495 = vmatprep.subr.mxu0 0.0
    %3496 = vmatpush1.msra.mxu0 0.0
    %3497 = vmatprep.subr.mxu0 0.0
    %3498 = vmatpush1.msra.mxu0 0.0
    %3499 = vmatprep.subr.mxu0 0.0
    %3500 = vmatpush1.msra.mxu0 0.0
    %3501 = vmatprep.subr.mxu0 0.0
    %3502 = vmatpush1.msra.mxu0 0.0
    %3503 = vmatprep.subr.mxu0 0.0
    %3504 = vmatpush1.msra.mxu0 0.0
    %3505 = vmatprep.subr.mxu0 0.0
    %3506 = vmatpush1.msra.mxu0 0.0
    %3507 = vmatprep.subr.mxu0 0.0
    %3508 = vmatpush1.msra.mxu0 0.0
    %3509 = vmatprep.subr.mxu0 0.0
    %3510 = vmatpush1.msra.mxu0 0.0
    %3511 = vmatprep.subr.mxu0 0.0
    %3512 = vmatpush1.msra.mxu0 0.0
    %3513 = vmatprep.subr.mxu0 0.0
    %3514 = vmatpush1.msra.mxu0 0.0
    %3515 = vmatprep.subr.mxu0 0.0
    %3516 = vmatpush1.msra.mxu0 0.0
    %3517 = vmatprep.subr.mxu0 0.0
    %3518 = vmatpush1.msra.mxu0 0.0
    %3519 = vmatprep.subr.mxu0 0.0
    %3520 = vmatpush1.msra.mxu0 0.0
    %3521 = vmatprep.subr.mxu0 0.0
    %3522 = vmatpush1.msra.mxu0 0.0
    %3523 = vmatprep.subr.mxu0 0.0
    %3524 = vmatpush1.msra.mxu0 0.0
    %3525 = vmatprep.subr.mxu0 0.0
    %3526 = vmatpush1.msra.mxu0 0.0
    %3527 = vmatprep.subr.mxu0 0.0
    %3528 = vmatpush1.msra.mxu0 0.0
    %3529 = vmatprep.mubr.f32.mxu0 0.0
    %3530 = vmatmul.mubr.f32.gmra.mrb[0].mxu0 %v3463
    %v3531 = vpop.f32.mrb[0].mxu0
    %v3532 = vadd.f32 0.0, %v3531
    %v3533 = vpop.f32.mrb[0].mxu0
    %3534 = vdwg.mxu0
    %v3543 = vrot.slane %v3020, 7
    %v3544 = vsel %vm1876, %v3543, %v2947
    %v3545 = vrot.slane %v3093, 6
    %v3546 = vsel %vm1879, %v3545, %v3544
    %v3547 = vrot.slane %v3166, 5
    %v3548 = vsel %vm1882, %v3547, %v3546
    %v3549 = vrot.slane %v3239, 4
    %v3550 = vsel %vm1885, %v3549, %v3548
    %v3551 = vrot.slane %v3312, 3
    %v3552 = vsel %vm1888, %v3551, %v3550
    %v3553 = vrot.slane %v3385, 2
    %v3554 = vsel %vm1891, %v3553, %v3552
    %v3555 = vrot.slane %v3458, 1
    %v3556 = vsel %vm1894, %v3555, %v3554
    %v3557 = vsel %vm294, %v3556, 0
    %3559 = vmatprep.subr.mxu0 0.0
    %3560 = vmatpush1.msra.mxu0 %v265
    %3561 = vmatprep.subr.mxu0 0.0
    %3562 = vmatpush1.msra.mxu0 %v266
    %3563 = vmatprep.subr.mxu0 0.0
    %3564 = vmatpush1.msra.mxu0 %v267
    %3565 = vmatprep.subr.mxu0 0.0
    %3566 = vmatpush1.msra.mxu0 %v268
    %3567 = vmatprep.subr.mxu0 0.0
    %3568 = vmatpush1.msra.mxu0 %v269
    %3569 = vmatprep.subr.mxu0 0.0
    %3570 = vmatpush1.msra.mxu0 %v270
    %3571 = vmatprep.subr.mxu0 0.0
    %3572 = vmatpush1.msra.mxu0 %v271
    %3573 = vmatprep.subr.mxu0 0.0
    %3574 = vmatpush1.msra.mxu0 %v272
    %3575 = vmatprep.subr.mxu0 0.0
    %3576 = vmatpush1.msra.mxu0 0.0
    %3577 = vmatprep.subr.mxu0 0.0
    %3578 = vmatpush1.msra.mxu0 0.0
    %3579 = vmatprep.subr.mxu0 0.0
    %3580 = vmatpush1.msra.mxu0 0.0
    %3581 = vmatprep.subr.mxu0 0.0
    %3582 = vmatpush1.msra.mxu0 0.0
    %3583 = vmatprep.subr.mxu0 0.0
    %3584 = vmatpush1.msra.mxu0 0.0
    %3585 = vmatprep.subr.mxu0 0.0
    %3586 = vmatpush1.msra.mxu0 0.0
    %3587 = vmatprep.subr.mxu0 0.0
    %3588 = vmatpush1.msra.mxu0 0.0
    %3589 = vmatprep.subr.mxu0 0.0
    %3590 = vmatpush1.msra.mxu0 0.0
    %3591 = vmatprep.subr.mxu0 0.0
    %3592 = vmatpush1.msra.mxu0 0.0
    %3593 = vmatprep.subr.mxu0 0.0
    %3594 = vmatpush1.msra.mxu0 0.0
    %3595 = vmatprep.subr.mxu0 0.0
    %3596 = vmatpush1.msra.mxu0 0.0
    %3597 = vmatprep.subr.mxu0 0.0
    %3598 = vmatpush1.msra.mxu0 0.0
    %3599 = vmatprep.subr.mxu0 0.0
    %3600 = vmatpush1.msra.mxu0 0.0
    %3601 = vmatprep.subr.mxu0 0.0
    %3602 = vmatpush1.msra.mxu0 0.0
    %3603 = vmatprep.subr.mxu0 0.0
    %3604 = vmatpush1.msra.mxu0 0.0
    %3605 = vmatprep.subr.mxu0 0.0
    %3606 = vmatpush1.msra.mxu0 0.0
    %3607 = vmatprep.subr.mxu0 0.0
    %3608 = vmatpush1.msra.mxu0 0.0
    %3609 = vmatprep.subr.mxu0 0.0
    %3610 = vmatpush1.msra.mxu0 0.0
    %3611 = vmatprep.subr.mxu0 0.0
    %3612 = vmatpush1.msra.mxu0 0.0
    %3613 = vmatprep.subr.mxu0 0.0
    %3614 = vmatpush1.msra.mxu0 0.0
    %3615 = vmatprep.subr.mxu0 0.0
    %3616 = vmatpush1.msra.mxu0 0.0
    %3617 = vmatprep.subr.mxu0 0.0
    %3618 = vmatpush1.msra.mxu0 0.0
    %3619 = vmatprep.subr.mxu0 0.0
    %3620 = vmatpush1.msra.mxu0 0.0
    %3621 = vmatprep.subr.mxu0 0.0
    %3622 = vmatpush1.msra.mxu0 0.0
    %3623 = vmatprep.mubr.f32.mxu0 0.0
    %3624 = vmatmul.mubr.f32.gmra.mrb[0].mxu0 %v3557
    %v3625 = vpop.f32.mrb[0].mxu0
    %v3626 = vadd.f32 %v3532, %v3625
    %v3627 = vpop.f32.mrb[0].mxu0
    %3628 = vdwg.mxu0
    %v3629 = vadd.f32 %v3626, %v282
    %v3630 = vtanh.pop %v3629
    %s3631 = scalar_lea.vmem [#allocation15], 8
    %3632 = vst.msk [vmem:[%s3631] sm:$0xff] %vm291, %v3630
    %v3633 = vrot.slane %v2870, 7
    %v3634 = vsel %vm1876, %v3633, %v2869
    %v3635 = vrot.slane %v2871, 6
    %v3636 = vsel %vm1879, %v3635, %v3634
    %v3637 = vrot.slane %v2872, 5
    %v3638 = vsel %vm1882, %v3637, %v3636
    %v3639 = vrot.slane %v2873, 4
    %v3640 = vsel %vm1885, %v3639, %v3638
    %v3641 = vrot.slane %v2874, 3
    %v3642 = vsel %vm1888, %v3641, %v3640
    %v3643 = vrot.slane %v2875, 2
    %v3644 = vsel %vm1891, %v3643, %v3642
    %v3645 = vrot.slane %v2876, 1
    %v3646 = vsel %vm1894, %v3645, %v3644
    %s3648 = scalar_lea.vmem [#allocation16], 8
    %3649 = vst.msk [vmem:[%s3648] sm:$0xff] %vm1208, %v3646
    %3650 = vrot.lane.b32.xlu0 %v2090, 64
    %v3651 = vpop.permute.xlu0 %3650
    %v3653 = vsel %vm291, %v3630, %v3651
    %s3654 = scalar_lea.vmem [#allocation5], 16
    %v3655 = vld [vmem:[%s3654] sm:$0xff]
    %v3657 = vsel %vm294, %v3653, 0
    %3659 = vmatprep.subr.mxu0 0.0
    %3660 = vmatpush1.msra.mxu0 %v257
    %3661 = vmatprep.subr.mxu0 0.0
    %3662 = vmatpush1.msra.mxu0 %v258
    %3663 = vmatprep.subr.mxu0 0.0
    %3664 = vmatpush1.msra.mxu0 %v259
    %3665 = vmatprep.subr.mxu0 0.0
    %3666 = vmatpush1.msra.mxu0 %v260
    %3667 = vmatprep.subr.mxu0 0.0
    %3668 = vmatpush1.msra.mxu0 %v261
    %3669 = vmatprep.subr.mxu0 0.0
    %3670 = vmatpush1.msra.mxu0 %v262
    %3671 = vmatprep.subr.mxu0 0.0
    %3672 = vmatpush1.msra.mxu0 %v263
    %3673 = vmatprep.subr.mxu0 0.0
    %3674 = vmatpush1.msra.mxu0 %v264
    %3675 = vmatprep.subr.mxu0 0.0
    %3676 = vmatpush1.msra.mxu0 0.0
    %3677 = vmatprep.subr.mxu0 0.0
    %3678 = vmatpush1.msra.mxu0 0.0
    %3679 = vmatprep.subr.mxu0 0.0
    %3680 = vmatpush1.msra.mxu0 0.0
    %3681 = vmatprep.subr.mxu0 0.0
    %3682 = vmatpush1.msra.mxu0 0.0
    %3683 = vmatprep.subr.mxu0 0.0
    %3684 = vmatpush1.msra.mxu0 0.0
    %3685 = vmatprep.subr.mxu0 0.0
    %3686 = vmatpush1.msra.mxu0 0.0
    %3687 = vmatprep.subr.mxu0 0.0
    %3688 = vmatpush1.msra.mxu0 0.0
    %3689 = vmatprep.subr.mxu0 0.0
    %3690 = vmatpush1.msra.mxu0 0.0
    %3691 = vmatprep.subr.mxu0 0.0
    %3692 = vmatpush1.msra.mxu0 0.0
    %3693 = vmatprep.subr.mxu0 0.0
    %3694 = vmatpush1.msra.mxu0 0.0
    %3695 = vmatprep.subr.mxu0 0.0
    %3696 = vmatpush1.msra.mxu0 0.0
    %3697 = vmatprep.subr.mxu0 0.0
    %3698 = vmatpush1.msra.mxu0 0.0
    %3699 = vmatprep.subr.mxu0 0.0
    %3700 = vmatpush1.msra.mxu0 0.0
    %3701 = vmatprep.subr.mxu0 0.0
    %3702 = vmatpush1.msra.mxu0 0.0
    %3703 = vmatprep.subr.mxu0 0.0
    %3704 = vmatpush1.msra.mxu0 0.0
    %3705 = vmatprep.subr.mxu0 0.0
    %3706 = vmatpush1.msra.mxu0 0.0
    %3707 = vmatprep.subr.mxu0 0.0
    %3708 = vmatpush1.msra.mxu0 0.0
    %3709 = vmatprep.subr.mxu0 0.0
    %3710 = vmatpush1.msra.mxu0 0.0
    %3711 = vmatprep.subr.mxu0 0.0
    %3712 = vmatpush1.msra.mxu0 0.0
    %3713 = vmatprep.subr.mxu0 0.0
    %3714 = vmatpush1.msra.mxu0 0.0
    %3715 = vmatprep.subr.mxu0 0.0
    %3716 = vmatpush1.msra.mxu0 0.0
    %3717 = vmatprep.subr.mxu0 0.0
    %3718 = vmatpush1.msra.mxu0 0.0
    %3719 = vmatprep.subr.mxu0 0.0
    %3720 = vmatpush1.msra.mxu0 0.0
    %3721 = vmatprep.subr.mxu0 0.0
    %3722 = vmatpush1.msra.mxu0 0.0
    %3723 = vmatprep.mubr.f32.mxu0 0.0
    %3724 = vmatmul.mubr.f32.gmra.mrb[0].mxu0 %v3657
    %v3725 = vpop.f32.mrb[0].mxu0
    %v3726 = vadd.f32 0.0, %v3725
    %v3727 = vpop.f32.mrb[0].mxu0
    %3728 = vdwg.mxu0
    %v3729 = vadd.f32 %v3655, %v3726
    %v3730 = vxor.u32 %v3729, 2147483648
    %v3731 = vmul.f32 %v3730, 1.442695
    %v3732 = vpow.pop %v3731
    %v3733 = vadd.f32 %v3732, 1.0
    %v3734 = vrcp.pop %v3733
    %v3735 = vmul.f32 1.0, %v3734
    %v3736 = vtanh.pop %v3729
    %v3737 = vmul.f32 %v3735, %v2084
    %3739 = vrot.lane.b32.xlu0 %v3736, 64
    %v3740 = vpop.permute.xlu0 %3739
    %v3742 = vmul.f32 %v3735, %v3740
    %3744 = vrot.lane.b32.xlu0 %v3742, 32
    %v3745 = vpop.permute.xlu0 %3744
    %v3747 = vadd.f32 %v3737, %v3745
    %v3748 = vtanh.pop %v3747
    %3750 = vrot.lane.b32.xlu0 %v3748, 64
    %v3751 = vpop.permute.xlu0 %3750
    %v3753 = vmul.f32 %v3735, %v3751
    %v3755 = vcombine.high %v3753, %v3753
    %v3757 = vunpack.c.l.s4 1966171168
    %v3758 = vunpack.c.0.s8 %v3757
    %v3759 = vlaneseq
    %v3760 = vshrl.u32 %v3759, 7
    %v3761 = vsub.s32 %v3758, %v3760
    %v3762 = vrot.slane %v3753, %v3761
    %v3764 = vunpack.c.l.s4 1966171168
    %v3765 = vunpack.c.0.s8 %v3764
    %v3766 = vlaneseq
    %v3767 = vshrl.u32 %v3766, 7
    %v3768 = vsub.s32 %v3765, %v3767
    %v3769 = vrot.slane %v3755, %v3768
    %v3770 = vcombine.high %v3762, %v3762
    %v3771 = vcombine.high %v3769, %v3769
    %v3773 = vunpack.c.l.s4 1966171168
    %v3774 = vunpack.c.0.s8 %v3773
    %v3775 = vlaneseq
    %v3776 = vshrl.u32 %v3775, 7
    %v3777 = vsub.s32 %v3774, %v3776
    %v3778 = vrot.slane %v3762, %v3777
    %v3780 = vunpack.c.l.s4 1966171168
    %v3781 = vunpack.c.0.s8 %v3780
    %v3782 = vlaneseq
    %v3783 = vshrl.u32 %v3782, 7
    %v3784 = vsub.s32 %v3781, %v3783
    %v3785 = vrot.slane %v3769, %v3784
    %v3787 = vunpack.c.l.s4 1966171168
    %v3788 = vunpack.c.0.s8 %v3787
    %v3789 = vlaneseq
    %v3790 = vshrl.u32 %v3789, 7
    %v3791 = vsub.s32 %v3788, %v3790
    %v3792 = vrot.slane %v3770, %v3791
    %v3794 = vunpack.c.l.s4 1966171168
    %v3795 = vunpack.c.0.s8 %v3794
    %v3796 = vlaneseq
    %v3797 = vshrl.u32 %v3796, 7
    %v3798 = vsub.s32 %v3795, %v3797
    %v3799 = vrot.slane %v3771, %v3798
    %v3800 = vcombine.high %v3778, %v3778
    %v3801 = vcombine.high %v3785, %v3785
    %v3802 = vcombine.high %v3792, %v3792
    %v3803 = vcombine.high %v3799, %v3799
    %v3804 = vlaneseq
    %v3805 = vshrl.u32 %v3804, 7
    %v3806 = vsub.s32 0, %v3805
    %v3807 = vrot.slane %v3778, %v3806
    %3808 = vrot.lane.b32.xlu0 %v3807, 32
    %v3809 = vpop.permute.xlu0 %3808
    %v3810 = vsel %vm291, %v3809, 0
    %3812 = vmatprep.subr.mxu0 0.0
    %3813 = vmatpush1.xpose.msra.mxu0 %v456
    %3814 = vmatprep.subr.mxu0 0.0
    %3815 = vmatpush1.xpose.msra.mxu0 0.0
    %3816 = vmatprep.subr.mxu0 0.0
    %3817 = vmatpush1.xpose.msra.mxu0 0.0
    %3818 = vmatprep.subr.mxu0 0.0
    %3819 = vmatpush1.xpose.msra.mxu0 0.0
    %3820 = vmatprep.subr.mxu0 0.0
    %3821 = vmatpush1.xpose.msra.mxu0 0.0
    %3822 = vmatprep.subr.mxu0 0.0
    %3823 = vmatpush1.xpose.msra.mxu0 0.0
    %3824 = vmatprep.subr.mxu0 0.0
    %3825 = vmatpush1.xpose.msra.mxu0 0.0
    %3826 = vmatprep.subr.mxu0 0.0
    %3827 = vmatpush1.xpose.msra.mxu0 0.0
    %3828 = vmatprep.subr.mxu0 0.0
    %3829 = vmatpush1.xpose.msra.mxu0 0.0
    %3830 = vmatprep.subr.mxu0 0.0
    %3831 = vmatpush1.xpose.msra.mxu0 0.0
    %3832 = vmatprep.subr.mxu0 0.0
    %3833 = vmatpush1.xpose.msra.mxu0 0.0
    %3834 = vmatprep.subr.mxu0 0.0
    %3835 = vmatpush1.xpose.msra.mxu0 0.0
    %3836 = vmatprep.subr.mxu0 0.0
    %3837 = vmatpush1.xpose.msra.mxu0 0.0
    %3838 = vmatprep.subr.mxu0 0.0
    %3839 = vmatpush1.xpose.msra.mxu0 0.0
    %3840 = vmatprep.subr.mxu0 0.0
    %3841 = vmatpush1.xpose.msra.mxu0 0.0
    %3842 = vmatprep.subr.mxu0 0.0
    %3843 = vmatpush1.xpose.msra.mxu0 0.0
    %3844 = vmatprep.subr.mxu0 0.0
    %3845 = vmatpush1.xpose.msra.mxu0 0.0
    %3846 = vmatprep.subr.mxu0 0.0
    %3847 = vmatpush1.xpose.msra.mxu0 0.0
    %3848 = vmatprep.subr.mxu0 0.0
    %3849 = vmatpush1.xpose.msra.mxu0 0.0
    %3850 = vmatprep.subr.mxu0 0.0
    %3851 = vmatpush1.xpose.msra.mxu0 0.0
    %3852 = vmatprep.subr.mxu0 0.0
    %3853 = vmatpush1.xpose.msra.mxu0 0.0
    %3854 = vmatprep.subr.mxu0 0.0
    %3855 = vmatpush1.xpose.msra.mxu0 0.0
    %3856 = vmatprep.subr.mxu0 0.0
    %3857 = vmatpush1.xpose.msra.mxu0 0.0
    %3858 = vmatprep.subr.mxu0 0.0
    %3859 = vmatpush1.xpose.msra.mxu0 0.0
    %3860 = vmatprep.subr.mxu0 0.0
    %3861 = vmatpush1.xpose.msra.mxu0 0.0
    %3862 = vmatprep.subr.mxu0 0.0
    %3863 = vmatpush1.xpose.msra.mxu0 0.0
    %3864 = vmatprep.subr.mxu0 0.0
    %3865 = vmatpush1.xpose.msra.mxu0 0.0
    %3866 = vmatprep.subr.mxu0 0.0
    %3867 = vmatpush1.xpose.msra.mxu0 0.0
    %3868 = vmatprep.subr.mxu0 0.0
    %3869 = vmatpush1.xpose.msra.mxu0 0.0
    %3870 = vmatprep.subr.mxu0 0.0
    %3871 = vmatpush1.xpose.msra.mxu0 0.0
    %3872 = vmatprep.subr.mxu0 0.0
    %3873 = vmatpush1.xpose.msra.mxu0 0.0
    %3874 = vmatprep.subr.mxu0 0.0
    %3875 = vmatpush1.xpose.msra.mxu0 0.0
    %3876 = vmatprep.mubr.f32.mxu0 0.0
    %3877 = vmatmul.mubr.f32.gmra.mrb[0].mxu0 %v3810
    %v3878 = vpop.f32.mrb[0].mxu0
    %v3879 = vadd.f32 0.0, %v3878
    %v3880 = vpop.f32.mrb[0].mxu0
    %3881 = vdwg.mxu0
    %v3882 = vlaneseq
    %v3883 = vshrl.u32 %v3882, 7
    %v3884 = vsub.s32 0, %v3883
    %v3885 = vrot.slane %v3792, %v3884
    %3886 = vrot.lane.b32.xlu0 %v3885, 32
    %v3887 = vpop.permute.xlu0 %3886
    %v3888 = vsel %vm291, %v3887, 0
    %3890 = vmatprep.subr.mxu0 0.0
    %3891 = vmatpush1.xpose.msra.mxu0 %v537
    %3892 = vmatprep.subr.mxu0 0.0
    %3893 = vmatpush1.xpose.msra.mxu0 0.0
    %3894 = vmatprep.subr.mxu0 0.0
    %3895 = vmatpush1.xpose.msra.mxu0 0.0
    %3896 = vmatprep.subr.mxu0 0.0
    %3897 = vmatpush1.xpose.msra.mxu0 0.0
    %3898 = vmatprep.subr.mxu0 0.0
    %3899 = vmatpush1.xpose.msra.mxu0 0.0
    %3900 = vmatprep.subr.mxu0 0.0
    %3901 = vmatpush1.xpose.msra.mxu0 0.0
    %3902 = vmatprep.subr.mxu0 0.0
    %3903 = vmatpush1.xpose.msra.mxu0 0.0
    %3904 = vmatprep.subr.mxu0 0.0
    %3905 = vmatpush1.xpose.msra.mxu0 0.0
    %3906 = vmatprep.subr.mxu0 0.0
    %3907 = vmatpush1.xpose.msra.mxu0 0.0
    %3908 = vmatprep.subr.mxu0 0.0
    %3909 = vmatpush1.xpose.msra.mxu0 0.0
    %3910 = vmatprep.subr.mxu0 0.0
    %3911 = vmatpush1.xpose.msra.mxu0 0.0
    %3912 = vmatprep.subr.mxu0 0.0
    %3913 = vmatpush1.xpose.msra.mxu0 0.0
    %3914 = vmatprep.subr.mxu0 0.0
    %3915 = vmatpush1.xpose.msra.mxu0 0.0
    %3916 = vmatprep.subr.mxu0 0.0
    %3917 = vmatpush1.xpose.msra.mxu0 0.0
    %3918 = vmatprep.subr.mxu0 0.0
    %3919 = vmatpush1.xpose.msra.mxu0 0.0
    %3920 = vmatprep.subr.mxu0 0.0
    %3921 = vmatpush1.xpose.msra.mxu0 0.0
    %3922 = vmatprep.subr.mxu0 0.0
    %3923 = vmatpush1.xpose.msra.mxu0 0.0
    %3924 = vmatprep.subr.mxu0 0.0
    %3925 = vmatpush1.xpose.msra.mxu0 0.0
    %3926 = vmatprep.subr.mxu0 0.0
    %3927 = vmatpush1.xpose.msra.mxu0 0.0
    %3928 = vmatprep.subr.mxu0 0.0
    %3929 = vmatpush1.xpose.msra.mxu0 0.0
    %3930 = vmatprep.subr.mxu0 0.0
    %3931 = vmatpush1.xpose.msra.mxu0 0.0
    %3932 = vmatprep.subr.mxu0 0.0
    %3933 = vmatpush1.xpose.msra.mxu0 0.0
    %3934 = vmatprep.subr.mxu0 0.0
    %3935 = vmatpush1.xpose.msra.mxu0 0.0
    %3936 = vmatprep.subr.mxu0 0.0
    %3937 = vmatpush1.xpose.msra.mxu0 0.0
    %3938 = vmatprep.subr.mxu0 0.0
    %3939 = vmatpush1.xpose.msra.mxu0 0.0
    %3940 = vmatprep.subr.mxu0 0.0
    %3941 = vmatpush1.xpose.msra.mxu0 0.0
    %3942 = vmatprep.subr.mxu0 0.0
    %3943 = vmatpush1.xpose.msra.mxu0 0.0
    %3944 = vmatprep.subr.mxu0 0.0
    %3945 = vmatpush1.xpose.msra.mxu0 0.0
    %3946 = vmatprep.subr.mxu0 0.0
    %3947 = vmatpush1.xpose.msra.mxu0 0.0
    %3948 = vmatprep.subr.mxu0 0.0
    %3949 = vmatpush1.xpose.msra.mxu0 0.0
    %3950 = vmatprep.subr.mxu0 0.0
    %3951 = vmatpush1.xpose.msra.mxu0 0.0
    %3952 = vmatprep.subr.mxu0 0.0
    %3953 = vmatpush1.xpose.msra.mxu0 0.0
    %3954 = vmatprep.mubr.f32.mxu0 0.0
    %3955 = vmatmul.mubr.f32.gmra.mrb[0].mxu0 %v3888
    %v3956 = vpop.f32.mrb[0].mxu0
    %v3957 = vadd.f32 0.0, %v3956
    %v3958 = vpop.f32.mrb[0].mxu0
    %3959 = vdwg.mxu0
    %v3960 = vlaneseq
    %v3961 = vshrl.u32 %v3960, 7
    %v3962 = vsub.s32 0, %v3961
    %v3963 = vrot.slane %v3800, %v3962
    %3964 = vrot.lane.b32.xlu0 %v3963, 32
    %v3965 = vpop.permute.xlu0 %3964
    %v3966 = vsel %vm291, %v3965, 0
    %3968 = vmatprep.subr.mxu0 0.0
    %3969 = vmatpush1.xpose.msra.mxu0 %v618
    %3970 = vmatprep.subr.mxu0 0.0
    %3971 = vmatpush1.xpose.msra.mxu0 0.0
    %3972 = vmatprep.subr.mxu0 0.0
    %3973 = vmatpush1.xpose.msra.mxu0 0.0
    %3974 = vmatprep.subr.mxu0 0.0
    %3975 = vmatpush1.xpose.msra.mxu0 0.0
    %3976 = vmatprep.subr.mxu0 0.0
    %3977 = vmatpush1.xpose.msra.mxu0 0.0
    %3978 = vmatprep.subr.mxu0 0.0
    %3979 = vmatpush1.xpose.msra.mxu0 0.0
    %3980 = vmatprep.subr.mxu0 0.0
    %3981 = vmatpush1.xpose.msra.mxu0 0.0
    %3982 = vmatprep.subr.mxu0 0.0
    %3983 = vmatpush1.xpose.msra.mxu0 0.0
    %3984 = vmatprep.subr.mxu0 0.0
    %3985 = vmatpush1.xpose.msra.mxu0 0.0
    %3986 = vmatprep.subr.mxu0 0.0
    %3987 = vmatpush1.xpose.msra.mxu0 0.0
    %3988 = vmatprep.subr.mxu0 0.0
    %3989 = vmatpush1.xpose.msra.mxu0 0.0
    %3990 = vmatprep.subr.mxu0 0.0
    %3991 = vmatpush1.xpose.msra.mxu0 0.0
    %3992 = vmatprep.subr.mxu0 0.0
    %3993 = vmatpush1.xpose.msra.mxu0 0.0
    %3994 = vmatprep.subr.mxu0 0.0
    %3995 = vmatpush1.xpose.msra.mxu0 0.0
    %3996 = vmatprep.subr.mxu0 0.0
    %3997 = vmatpush1.xpose.msra.mxu0 0.0
    %3998 = vmatprep.subr.mxu0 0.0
    %3999 = vmatpush1.xpose.msra.mxu0 0.0
    %4000 = vmatprep.subr.mxu0 0.0
    %4001 = vmatpush1.xpose.msra.mxu0 0.0
    %4002 = vmatprep.subr.mxu0 0.0
    %4003 = vmatpush1.xpose.msra.mxu0 0.0
    %4004 = vmatprep.subr.mxu0 0.0
    %4005 = vmatpush1.xpose.msra.mxu0 0.0
    %4006 = vmatprep.subr.mxu0 0.0
    %4007 = vmatpush1.xpose.msra.mxu0 0.0
    %4008 = vmatprep.subr.mxu0 0.0
    %4009 = vmatpush1.xpose.msra.mxu0 0.0
    %4010 = vmatprep.subr.mxu0 0.0
    %4011 = vmatpush1.xpose.msra.mxu0 0.0
    %4012 = vmatprep.subr.mxu0 0.0
    %4013 = vmatpush1.xpose.msra.mxu0 0.0
    %4014 = vmatprep.subr.mxu0 0.0
    %4015 = vmatpush1.xpose.msra.mxu0 0.0
    %4016 = vmatprep.subr.mxu0 0.0
    %4017 = vmatpush1.xpose.msra.mxu0 0.0
    %4018 = vmatprep.subr.mxu0 0.0
    %4019 = vmatpush1.xpose.msra.mxu0 0.0
    %4020 = vmatprep.subr.mxu0 0.0
    %4021 = vmatpush1.xpose.msra.mxu0 0.0
    %4022 = vmatprep.subr.mxu0 0.0
    %4023 = vmatpush1.xpose.msra.mxu0 0.0
    %4024 = vmatprep.subr.mxu0 0.0
    %4025 = vmatpush1.xpose.msra.mxu0 0.0
    %4026 = vmatprep.subr.mxu0 0.0
    %4027 = vmatpush1.xpose.msra.mxu0 0.0
    %4028 = vmatprep.subr.mxu0 0.0
    %4029 = vmatpush1.xpose.msra.mxu0 0.0
    %4030 = vmatprep.subr.mxu0 0.0
    %4031 = vmatpush1.xpose.msra.mxu0 0.0
    %4032 = vmatprep.mubr.f32.mxu0 0.0
    %4033 = vmatmul.mubr.f32.gmra.mrb[0].mxu0 %v3966
    %v4034 = vpop.f32.mrb[0].mxu0
    %v4035 = vadd.f32 0.0, %v4034
    %v4036 = vpop.f32.mrb[0].mxu0
    %4037 = vdwg.mxu0
    %v4038 = vlaneseq
    %v4039 = vshrl.u32 %v4038, 7
    %v4040 = vsub.s32 0, %v4039
    %v4041 = vrot.slane %v3802, %v4040
    %4042 = vrot.lane.b32.xlu0 %v4041, 32
    %v4043 = vpop.permute.xlu0 %4042
    %v4044 = vsel %vm291, %v4043, 0
    %4046 = vmatprep.subr.mxu0 0.0
    %4047 = vmatpush1.xpose.msra.mxu0 %v699
    %4048 = vmatprep.subr.mxu0 0.0
    %4049 = vmatpush1.xpose.msra.mxu0 0.0
    %4050 = vmatprep.subr.mxu0 0.0
    %4051 = vmatpush1.xpose.msra.mxu0 0.0
    %4052 = vmatprep.subr.mxu0 0.0
    %4053 = vmatpush1.xpose.msra.mxu0 0.0
    %4054 = vmatprep.subr.mxu0 0.0
    %4055 = vmatpush1.xpose.msra.mxu0 0.0
    %4056 = vmatprep.subr.mxu0 0.0
    %4057 = vmatpush1.xpose.msra.mxu0 0.0
    %4058 = vmatprep.subr.mxu0 0.0
    %4059 = vmatpush1.xpose.msra.mxu0 0.0
    %4060 = vmatprep.subr.mxu0 0.0
    %4061 = vmatpush1.xpose.msra.mxu0 0.0
    %4062 = vmatprep.subr.mxu0 0.0
    %4063 = vmatpush1.xpose.msra.mxu0 0.0
    %4064 = vmatprep.subr.mxu0 0.0
    %4065 = vmatpush1.xpose.msra.mxu0 0.0
    %4066 = vmatprep.subr.mxu0 0.0
    %4067 = vmatpush1.xpose.msra.mxu0 0.0
    %4068 = vmatprep.subr.mxu0 0.0
    %4069 = vmatpush1.xpose.msra.mxu0 0.0
    %4070 = vmatprep.subr.mxu0 0.0
    %4071 = vmatpush1.xpose.msra.mxu0 0.0
    %4072 = vmatprep.subr.mxu0 0.0
    %4073 = vmatpush1.xpose.msra.mxu0 0.0
    %4074 = vmatprep.subr.mxu0 0.0
    %4075 = vmatpush1.xpose.msra.mxu0 0.0
    %4076 = vmatprep.subr.mxu0 0.0
    %4077 = vmatpush1.xpose.msra.mxu0 0.0
    %4078 = vmatprep.subr.mxu0 0.0
    %4079 = vmatpush1.xpose.msra.mxu0 0.0
    %4080 = vmatprep.subr.mxu0 0.0
    %4081 = vmatpush1.xpose.msra.mxu0 0.0
    %4082 = vmatprep.subr.mxu0 0.0
    %4083 = vmatpush1.xpose.msra.mxu0 0.0
    %4084 = vmatprep.subr.mxu0 0.0
    %4085 = vmatpush1.xpose.msra.mxu0 0.0
    %4086 = vmatprep.subr.mxu0 0.0
    %4087 = vmatpush1.xpose.msra.mxu0 0.0
    %4088 = vmatprep.subr.mxu0 0.0
    %4089 = vmatpush1.xpose.msra.mxu0 0.0
    %4090 = vmatprep.subr.mxu0 0.0
    %4091 = vmatpush1.xpose.msra.mxu0 0.0
    %4092 = vmatprep.subr.mxu0 0.0
    %4093 = vmatpush1.xpose.msra.mxu0 0.0
    %4094 = vmatprep.subr.mxu0 0.0
    %4095 = vmatpush1.xpose.msra.mxu0 0.0
    %4096 = vmatprep.subr.mxu0 0.0
    %4097 = vmatpush1.xpose.msra.mxu0 0.0
    %4098 = vmatprep.subr.mxu0 0.0
    %4099 = vmatpush1.xpose.msra.mxu0 0.0
    %4100 = vmatprep.subr.mxu0 0.0
    %4101 = vmatpush1.xpose.msra.mxu0 0.0
    %4102 = vmatprep.subr.mxu0 0.0
    %4103 = vmatpush1.xpose.msra.mxu0 0.0
    %4104 = vmatprep.subr.mxu0 0.0
    %4105 = vmatpush1.xpose.msra.mxu0 0.0
    %4106 = vmatprep.subr.mxu0 0.0
    %4107 = vmatpush1.xpose.msra.mxu0 0.0
    %4108 = vmatprep.subr.mxu0 0.0
    %4109 = vmatpush1.xpose.msra.mxu0 0.0
    %4110 = vmatprep.mubr.f32.mxu0 0.0
    %4111 = vmatmul.mubr.f32.gmra.mrb[0].mxu0 %v4044
    %v4112 = vpop.f32.mrb[0].mxu0
    %v4113 = vadd.f32 0.0, %v4112
    %v4114 = vpop.f32.mrb[0].mxu0
    %4115 = vdwg.mxu0
    %v4116 = vlaneseq
    %v4117 = vshrl.u32 %v4116, 7
    %v4118 = vsub.s32 0, %v4117
    %v4119 = vrot.slane %v3785, %v4118
    %4120 = vrot.lane.b32.xlu0 %v4119, 32
    %v4121 = vpop.permute.xlu0 %4120
    %v4122 = vsel %vm291, %v4121, 0
    %4124 = vmatprep.subr.mxu0 0.0
    %4125 = vmatpush1.xpose.msra.mxu0 %v780
    %4126 = vmatprep.subr.mxu0 0.0
    %4127 = vmatpush1.xpose.msra.mxu0 0.0
    %4128 = vmatprep.subr.mxu0 0.0
    %4129 = vmatpush1.xpose.msra.mxu0 0.0
    %4130 = vmatprep.subr.mxu0 0.0
    %4131 = vmatpush1.xpose.msra.mxu0 0.0
    %4132 = vmatprep.subr.mxu0 0.0
    %4133 = vmatpush1.xpose.msra.mxu0 0.0
    %4134 = vmatprep.subr.mxu0 0.0
    %4135 = vmatpush1.xpose.msra.mxu0 0.0
    %4136 = vmatprep.subr.mxu0 0.0
    %4137 = vmatpush1.xpose.msra.mxu0 0.0
    %4138 = vmatprep.subr.mxu0 0.0
    %4139 = vmatpush1.xpose.msra.mxu0 0.0
    %4140 = vmatprep.subr.mxu0 0.0
    %4141 = vmatpush1.xpose.msra.mxu0 0.0
    %4142 = vmatprep.subr.mxu0 0.0
    %4143 = vmatpush1.xpose.msra.mxu0 0.0
    %4144 = vmatprep.subr.mxu0 0.0
    %4145 = vmatpush1.xpose.msra.mxu0 0.0
    %4146 = vmatprep.subr.mxu0 0.0
    %4147 = vmatpush1.xpose.msra.mxu0 0.0
    %4148 = vmatprep.subr.mxu0 0.0
    %4149 = vmatpush1.xpose.msra.mxu0 0.0
    %4150 = vmatprep.subr.mxu0 0.0
    %4151 = vmatpush1.xpose.msra.mxu0 0.0
    %4152 = vmatprep.subr.mxu0 0.0
    %4153 = vmatpush1.xpose.msra.mxu0 0.0
    %4154 = vmatprep.subr.mxu0 0.0
    %4155 = vmatpush1.xpose.msra.mxu0 0.0
    %4156 = vmatprep.subr.mxu0 0.0
    %4157 = vmatpush1.xpose.msra.mxu0 0.0
    %4158 = vmatprep.subr.mxu0 0.0
    %4159 = vmatpush1.xpose.msra.mxu0 0.0
    %4160 = vmatprep.subr.mxu0 0.0
    %4161 = vmatpush1.xpose.msra.mxu0 0.0
    %4162 = vmatprep.subr.mxu0 0.0
    %4163 = vmatpush1.xpose.msra.mxu0 0.0
    %4164 = vmatprep.subr.mxu0 0.0
    %4165 = vmatpush1.xpose.msra.mxu0 0.0
    %4166 = vmatprep.subr.mxu0 0.0
    %4167 = vmatpush1.xpose.msra.mxu0 0.0
    %4168 = vmatprep.subr.mxu0 0.0
    %4169 = vmatpush1.xpose.msra.mxu0 0.0
    %4170 = vmatprep.subr.mxu0 0.0
    %4171 = vmatpush1.xpose.msra.mxu0 0.0
    %4172 = vmatprep.subr.mxu0 0.0
    %4173 = vmatpush1.xpose.msra.mxu0 0.0
    %4174 = vmatprep.subr.mxu0 0.0
    %4175 = vmatpush1.xpose.msra.mxu0 0.0
    %4176 = vmatprep.subr.mxu0 0.0
    %4177 = vmatpush1.xpose.msra.mxu0 0.0
    %4178 = vmatprep.subr.mxu0 0.0
    %4179 = vmatpush1.xpose.msra.mxu0 0.0
    %4180 = vmatprep.subr.mxu0 0.0
    %4181 = vmatpush1.xpose.msra.mxu0 0.0
    %4182 = vmatprep.subr.mxu0 0.0
    %4183 = vmatpush1.xpose.msra.mxu0 0.0
    %4184 = vmatprep.subr.mxu0 0.0
    %4185 = vmatpush1.xpose.msra.mxu0 0.0
    %4186 = vmatprep.subr.mxu0 0.0
    %4187 = vmatpush1.xpose.msra.mxu0 0.0
    %4188 = vmatprep.mubr.f32.mxu0 0.0
    %4189 = vmatmul.mubr.f32.gmra.mrb[0].mxu0 %v4122
    %v4190 = vpop.f32.mrb[0].mxu0
    %v4191 = vadd.f32 0.0, %v4190
    %v4192 = vpop.f32.mrb[0].mxu0
    %4193 = vdwg.mxu0
    %v4194 = vlaneseq
    %v4195 = vshrl.u32 %v4194, 7
    %v4196 = vsub.s32 0, %v4195
    %v4197 = vrot.slane %v3799, %v4196
    %4198 = vrot.lane.b32.xlu0 %v4197, 32
    %v4199 = vpop.permute.xlu0 %4198
    %v4200 = vsel %vm291, %v4199, 0
    %4202 = vmatprep.subr.mxu0 0.0
    %4203 = vmatpush1.xpose.msra.mxu0 %v861
    %4204 = vmatprep.subr.mxu0 0.0
    %4205 = vmatpush1.xpose.msra.mxu0 0.0
    %4206 = vmatprep.subr.mxu0 0.0
    %4207 = vmatpush1.xpose.msra.mxu0 0.0
    %4208 = vmatprep.subr.mxu0 0.0
    %4209 = vmatpush1.xpose.msra.mxu0 0.0
    %4210 = vmatprep.subr.mxu0 0.0
    %4211 = vmatpush1.xpose.msra.mxu0 0.0
    %4212 = vmatprep.subr.mxu0 0.0
    %4213 = vmatpush1.xpose.msra.mxu0 0.0
    %4214 = vmatprep.subr.mxu0 0.0
    %4215 = vmatpush1.xpose.msra.mxu0 0.0
    %4216 = vmatprep.subr.mxu0 0.0
    %4217 = vmatpush1.xpose.msra.mxu0 0.0
    %4218 = vmatprep.subr.mxu0 0.0
    %4219 = vmatpush1.xpose.msra.mxu0 0.0
    %4220 = vmatprep.subr.mxu0 0.0
    %4221 = vmatpush1.xpose.msra.mxu0 0.0
    %4222 = vmatprep.subr.mxu0 0.0
    %4223 = vmatpush1.xpose.msra.mxu0 0.0
    %4224 = vmatprep.subr.mxu0 0.0
    %4225 = vmatpush1.xpose.msra.mxu0 0.0
    %4226 = vmatprep.subr.mxu0 0.0
    %4227 = vmatpush1.xpose.msra.mxu0 0.0
    %4228 = vmatprep.subr.mxu0 0.0
    %4229 = vmatpush1.xpose.msra.mxu0 0.0
    %4230 = vmatprep.subr.mxu0 0.0
    %4231 = vmatpush1.xpose.msra.mxu0 0.0
    %4232 = vmatprep.subr.mxu0 0.0
    %4233 = vmatpush1.xpose.msra.mxu0 0.0
    %4234 = vmatprep.subr.mxu0 0.0
    %4235 = vmatpush1.xpose.msra.mxu0 0.0
    %4236 = vmatprep.subr.mxu0 0.0
    %4237 = vmatpush1.xpose.msra.mxu0 0.0
    %4238 = vmatprep.subr.mxu0 0.0
    %4239 = vmatpush1.xpose.msra.mxu0 0.0
    %4240 = vmatprep.subr.mxu0 0.0
    %4241 = vmatpush1.xpose.msra.mxu0 0.0
    %4242 = vmatprep.subr.mxu0 0.0
    %4243 = vmatpush1.xpose.msra.mxu0 0.0
    %4244 = vmatprep.subr.mxu0 0.0
    %4245 = vmatpush1.xpose.msra.mxu0 0.0
    %4246 = vmatprep.subr.mxu0 0.0
    %4247 = vmatpush1.xpose.msra.mxu0 0.0
    %4248 = vmatprep.subr.mxu0 0.0
    %4249 = vmatpush1.xpose.msra.mxu0 0.0
    %4250 = vmatprep.subr.mxu0 0.0
    %4251 = vmatpush1.xpose.msra.mxu0 0.0
    %4252 = vmatprep.subr.mxu0 0.0
    %4253 = vmatpush1.xpose.msra.mxu0 0.0
    %4254 = vmatprep.subr.mxu0 0.0
    %4255 = vmatpush1.xpose.msra.mxu0 0.0
    %4256 = vmatprep.subr.mxu0 0.0
    %4257 = vmatpush1.xpose.msra.mxu0 0.0
    %4258 = vmatprep.subr.mxu0 0.0
    %4259 = vmatpush1.xpose.msra.mxu0 0.0
    %4260 = vmatprep.subr.mxu0 0.0
    %4261 = vmatpush1.xpose.msra.mxu0 0.0
    %4262 = vmatprep.subr.mxu0 0.0
    %4263 = vmatpush1.xpose.msra.mxu0 0.0
    %4264 = vmatprep.subr.mxu0 0.0
    %4265 = vmatpush1.xpose.msra.mxu0 0.0
    %4266 = vmatprep.mubr.f32.mxu0 0.0
    %4267 = vmatmul.mubr.f32.gmra.mrb[0].mxu0 %v4200
    %v4268 = vpop.f32.mrb[0].mxu0
    %v4269 = vadd.f32 0.0, %v4268
    %v4270 = vpop.f32.mrb[0].mxu0
    %4271 = vdwg.mxu0
    %v4272 = vlaneseq
    %v4273 = vshrl.u32 %v4272, 7
    %v4274 = vsub.s32 0, %v4273
    %v4275 = vrot.slane %v3801, %v4274
    %4276 = vrot.lane.b32.xlu0 %v4275, 32
    %v4277 = vpop.permute.xlu0 %4276
    %v4278 = vsel %vm291, %v4277, 0
    %4280 = vmatprep.subr.mxu0 0.0
    %4281 = vmatpush1.xpose.msra.mxu0 %v942
    %4282 = vmatprep.subr.mxu0 0.0
    %4283 = vmatpush1.xpose.msra.mxu0 0.0
    %4284 = vmatprep.subr.mxu0 0.0
    %4285 = vmatpush1.xpose.msra.mxu0 0.0
    %4286 = vmatprep.subr.mxu0 0.0
    %4287 = vmatpush1.xpose.msra.mxu0 0.0
    %4288 = vmatprep.subr.mxu0 0.0
    %4289 = vmatpush1.xpose.msra.mxu0 0.0
    %4290 = vmatprep.subr.mxu0 0.0
    %4291 = vmatpush1.xpose.msra.mxu0 0.0
    %4292 = vmatprep.subr.mxu0 0.0
    %4293 = vmatpush1.xpose.msra.mxu0 0.0
    %4294 = vmatprep.subr.mxu0 0.0
    %4295 = vmatpush1.xpose.msra.mxu0 0.0
    %4296 = vmatprep.subr.mxu0 0.0
    %4297 = vmatpush1.xpose.msra.mxu0 0.0
    %4298 = vmatprep.subr.mxu0 0.0
    %4299 = vmatpush1.xpose.msra.mxu0 0.0
    %4300 = vmatprep.subr.mxu0 0.0
    %4301 = vmatpush1.xpose.msra.mxu0 0.0
    %4302 = vmatprep.subr.mxu0 0.0
    %4303 = vmatpush1.xpose.msra.mxu0 0.0
    %4304 = vmatprep.subr.mxu0 0.0
    %4305 = vmatpush1.xpose.msra.mxu0 0.0
    %4306 = vmatprep.subr.mxu0 0.0
    %4307 = vmatpush1.xpose.msra.mxu0 0.0
    %4308 = vmatprep.subr.mxu0 0.0
    %4309 = vmatpush1.xpose.msra.mxu0 0.0
    %4310 = vmatprep.subr.mxu0 0.0
    %4311 = vmatpush1.xpose.msra.mxu0 0.0
    %4312 = vmatprep.subr.mxu0 0.0
    %4313 = vmatpush1.xpose.msra.mxu0 0.0
    %4314 = vmatprep.subr.mxu0 0.0
    %4315 = vmatpush1.xpose.msra.mxu0 0.0
    %4316 = vmatprep.subr.mxu0 0.0
    %4317 = vmatpush1.xpose.msra.mxu0 0.0
    %4318 = vmatprep.subr.mxu0 0.0
    %4319 = vmatpush1.xpose.msra.mxu0 0.0
    %4320 = vmatprep.subr.mxu0 0.0
    %4321 = vmatpush1.xpose.msra.mxu0 0.0
    %4322 = vmatprep.subr.mxu0 0.0
    %4323 = vmatpush1.xpose.msra.mxu0 0.0
    %4324 = vmatprep.subr.mxu0 0.0
    %4325 = vmatpush1.xpose.msra.mxu0 0.0
    %4326 = vmatprep.subr.mxu0 0.0
    %4327 = vmatpush1.xpose.msra.mxu0 0.0
    %4328 = vmatprep.subr.mxu0 0.0
    %4329 = vmatpush1.xpose.msra.mxu0 0.0
    %4330 = vmatprep.subr.mxu0 0.0
    %4331 = vmatpush1.xpose.msra.mxu0 0.0
    %4332 = vmatprep.subr.mxu0 0.0
    %4333 = vmatpush1.xpose.msra.mxu0 0.0
    %4334 = vmatprep.subr.mxu0 0.0
    %4335 = vmatpush1.xpose.msra.mxu0 0.0
    %4336 = vmatprep.subr.mxu0 0.0
    %4337 = vmatpush1.xpose.msra.mxu0 0.0
    %4338 = vmatprep.subr.mxu0 0.0
    %4339 = vmatpush1.xpose.msra.mxu0 0.0
    %4340 = vmatprep.subr.mxu0 0.0
    %4341 = vmatpush1.xpose.msra.mxu0 0.0
    %4342 = vmatprep.subr.mxu0 0.0
    %4343 = vmatpush1.xpose.msra.mxu0 0.0
    %4344 = vmatprep.mubr.f32.mxu0 0.0
    %4345 = vmatmul.mubr.f32.gmra.mrb[0].mxu0 %v4278
    %v4346 = vpop.f32.mrb[0].mxu0
    %v4347 = vadd.f32 0.0, %v4346
    %v4348 = vpop.f32.mrb[0].mxu0
    %4349 = vdwg.mxu0
    %v4350 = vlaneseq
    %v4351 = vshrl.u32 %v4350, 7
    %v4352 = vsub.s32 0, %v4351
    %v4353 = vrot.slane %v3803, %v4352
    %4354 = vrot.lane.b32.xlu0 %v4353, 32
    %v4355 = vpop.permute.xlu0 %4354
    %v4356 = vsel %vm291, %v4355, 0
    %4358 = vmatprep.subr.mxu0 0.0
    %4359 = vmatpush1.xpose.msra.mxu0 %v1023
    %4360 = vmatprep.subr.mxu0 0.0
    %4361 = vmatpush1.xpose.msra.mxu0 0.0
    %4362 = vmatprep.subr.mxu0 0.0
    %4363 = vmatpush1.xpose.msra.mxu0 0.0
    %4364 = vmatprep.subr.mxu0 0.0
    %4365 = vmatpush1.xpose.msra.mxu0 0.0
    %4366 = vmatprep.subr.mxu0 0.0
    %4367 = vmatpush1.xpose.msra.mxu0 0.0
    %4368 = vmatprep.subr.mxu0 0.0
    %4369 = vmatpush1.xpose.msra.mxu0 0.0
    %4370 = vmatprep.subr.mxu0 0.0
    %4371 = vmatpush1.xpose.msra.mxu0 0.0
    %4372 = vmatprep.subr.mxu0 0.0
    %4373 = vmatpush1.xpose.msra.mxu0 0.0
    %4374 = vmatprep.subr.mxu0 0.0
    %4375 = vmatpush1.xpose.msra.mxu0 0.0
    %4376 = vmatprep.subr.mxu0 0.0
    %4377 = vmatpush1.xpose.msra.mxu0 0.0
    %4378 = vmatprep.subr.mxu0 0.0
    %4379 = vmatpush1.xpose.msra.mxu0 0.0
    %4380 = vmatprep.subr.mxu0 0.0
    %4381 = vmatpush1.xpose.msra.mxu0 0.0
    %4382 = vmatprep.subr.mxu0 0.0
    %4383 = vmatpush1.xpose.msra.mxu0 0.0
    %4384 = vmatprep.subr.mxu0 0.0
    %4385 = vmatpush1.xpose.msra.mxu0 0.0
    %4386 = vmatprep.subr.mxu0 0.0
    %4387 = vmatpush1.xpose.msra.mxu0 0.0
    %4388 = vmatprep.subr.mxu0 0.0
    %4389 = vmatpush1.xpose.msra.mxu0 0.0
    %4390 = vmatprep.subr.mxu0 0.0
    %4391 = vmatpush1.xpose.msra.mxu0 0.0
    %4392 = vmatprep.subr.mxu0 0.0
    %4393 = vmatpush1.xpose.msra.mxu0 0.0
    %4394 = vmatprep.subr.mxu0 0.0
    %4395 = vmatpush1.xpose.msra.mxu0 0.0
    %4396 = vmatprep.subr.mxu0 0.0
    %4397 = vmatpush1.xpose.msra.mxu0 0.0
    %4398 = vmatprep.subr.mxu0 0.0
    %4399 = vmatpush1.xpose.msra.mxu0 0.0
    %4400 = vmatprep.subr.mxu0 0.0
    %4401 = vmatpush1.xpose.msra.mxu0 0.0
    %4402 = vmatprep.subr.mxu0 0.0
    %4403 = vmatpush1.xpose.msra.mxu0 0.0
    %4404 = vmatprep.subr.mxu0 0.0
    %4405 = vmatpush1.xpose.msra.mxu0 0.0
    %4406 = vmatprep.subr.mxu0 0.0
    %4407 = vmatpush1.xpose.msra.mxu0 0.0
    %4408 = vmatprep.subr.mxu0 0.0
    %4409 = vmatpush1.xpose.msra.mxu0 0.0
    %4410 = vmatprep.subr.mxu0 0.0
    %4411 = vmatpush1.xpose.msra.mxu0 0.0
    %4412 = vmatprep.subr.mxu0 0.0
    %4413 = vmatpush1.xpose.msra.mxu0 0.0
    %4414 = vmatprep.subr.mxu0 0.0
    %4415 = vmatpush1.xpose.msra.mxu0 0.0
    %4416 = vmatprep.subr.mxu0 0.0
    %4417 = vmatpush1.xpose.msra.mxu0 0.0
    %4418 = vmatprep.subr.mxu0 0.0
    %4419 = vmatpush1.xpose.msra.mxu0 0.0
    %4420 = vmatprep.subr.mxu0 0.0
    %4421 = vmatpush1.xpose.msra.mxu0 0.0
    %4422 = vmatprep.mubr.f32.mxu0 0.0
    %4423 = vmatmul.mubr.f32.gmra.mrb[0].mxu0 %v4356
    %v4424 = vpop.f32.mrb[0].mxu0
    %v4425 = vadd.f32 0.0, %v4424
    %v4426 = vpop.f32.mrb[0].mxu0
    %4427 = vdwg.mxu0
    %v4428 = vsel %vm1095, %v3879, -inf
    %4429 = vmax.xlane.f32.xlu0 %v4428
    %v4430 = vpop.xlane.xlu0 %4429
    %v4431 = vsel %vm1095, %v3957, -inf
    %4432 = vmax.xlane.f32.xlu0 %v4431
    %v4433 = vpop.xlane.xlu0 %4432
    %v4434 = vsel %vm1095, %v4035, -inf
    %4435 = vmax.xlane.f32.xlu0 %v4434
    %v4436 = vpop.xlane.xlu0 %4435
    %v4437 = vsel %vm1095, %v4113, -inf
    %4438 = vmax.xlane.f32.xlu0 %v4437
    %v4439 = vpop.xlane.xlu0 %4438
    %v4440 = vsel %vm1095, %v4191, -inf
    %4441 = vmax.xlane.f32.xlu0 %v4440
    %v4442 = vpop.xlane.xlu0 %4441
    %v4443 = vsel %vm1095, %v4269, -inf
    %4444 = vmax.xlane.f32.xlu0 %v4443
    %v4445 = vpop.xlane.xlu0 %4444
    %v4446 = vsel %vm1095, %v4347, -inf
    %4447 = vmax.xlane.f32.xlu0 %v4446
    %v4448 = vpop.xlane.xlu0 %4447
    %v4449 = vsel %vm1095, %v4425, -inf
    %4450 = vmax.xlane.f32.xlu0 %v4449
    %v4451 = vpop.xlane.xlu0 %4450
    %v4452 = vsub.f32 %v3879, %v4430
    %v4453 = vsub.f32 %v3957, %v4433
    %v4454 = vsub.f32 %v4035, %v4436
    %v4455 = vsub.f32 %v4113, %v4439
    %v4456 = vsub.f32 %v4191, %v4442
    %v4457 = vsub.f32 %v4269, %v4445
    %v4458 = vsub.f32 %v4347, %v4448
    %v4459 = vsub.f32 %v4425, %v4451
    %v4460 = vmul.f32 %v4452, 1.442695
    %v4461 = vpow.pop %v4460
    %v4462 = vmul.f32 %v4453, 1.442695
    %v4463 = vpow.pop %v4462
    %v4464 = vmul.f32 %v4454, 1.442695
    %v4465 = vpow.pop %v4464
    %v4466 = vmul.f32 %v4455, 1.442695
    %v4467 = vpow.pop %v4466
    %v4468 = vmul.f32 %v4456, 1.442695
    %v4469 = vpow.pop %v4468
    %v4470 = vmul.f32 %v4457, 1.442695
    %v4471 = vpow.pop %v4470
    %v4472 = vmul.f32 %v4458, 1.442695
    %v4473 = vpow.pop %v4472
    %v4474 = vmul.f32 %v4459, 1.442695
    %v4475 = vpow.pop %v4474
    %v4476 = vsel %vm1095, %v4461, 0.0
    %4477 = vadd.xlane.f32.xlu0 %v4476
    %v4478 = vpop.xlane.xlu0 %4477
    %v4479 = vsel %vm1095, %v4463, 0.0
    %4480 = vadd.xlane.f32.xlu0 %v4479
    %v4481 = vpop.xlane.xlu0 %4480
    %v4482 = vsel %vm1095, %v4465, 0.0
    %4483 = vadd.xlane.f32.xlu0 %v4482
    %v4484 = vpop.xlane.xlu0 %4483
    %v4485 = vsel %vm1095, %v4467, 0.0
    %4486 = vadd.xlane.f32.xlu0 %v4485
    %v4487 = vpop.xlane.xlu0 %4486
    %v4488 = vsel %vm1095, %v4469, 0.0
    %4489 = vadd.xlane.f32.xlu0 %v4488
    %v4490 = vpop.xlane.xlu0 %4489
    %v4491 = vsel %vm1095, %v4471, 0.0
    %4492 = vadd.xlane.f32.xlu0 %v4491
    %v4493 = vpop.xlane.xlu0 %4492
    %v4494 = vsel %vm1095, %v4473, 0.0
    %4495 = vadd.xlane.f32.xlu0 %v4494
    %v4496 = vpop.xlane.xlu0 %4495
    %v4497 = vsel %vm1095, %v4475, 0.0
    %4498 = vadd.xlane.f32.xlu0 %v4497
    %v4499 = vpop.xlane.xlu0 %4498
    %v4500 = vrcp.pop %v4478
    %v4501 = vrcp.pop %v4481
    %v4502 = vrcp.pop %v4484
    %v4503 = vrcp.pop %v4487
    %v4504 = vrcp.pop %v4490
    %v4505 = vrcp.pop %v4493
    %v4506 = vrcp.pop %v4496
    %v4507 = vrcp.pop %v4499
    %v4508 = vmul.f32 %v4478, %v4500
    %v4509 = vmul.f32 %v4481, %v4501
    %v4510 = vmul.f32 %v4484, %v4502
    %v4511 = vmul.f32 %v4487, %v4503
    %v4512 = vmul.f32 %v4490, %v4504
    %v4513 = vmul.f32 %v4493, %v4505
    %v4514 = vmul.f32 %v4496, %v4506
    %v4515 = vmul.f32 %v4499, %v4507
    %v4516 = vsub.f32 2.0, %v4508
    %v4517 = vsub.f32 2.0, %v4509
    %v4518 = vsub.f32 2.0, %v4510
    %v4519 = vsub.f32 2.0, %v4511
    %v4520 = vsub.f32 2.0, %v4512
    %v4521 = vsub.f32 2.0, %v4513
    %v4522 = vsub.f32 2.0, %v4514
    %v4523 = vsub.f32 2.0, %v4515
    %v4524 = vmul.f32 %v4500, %v4516
    %v4525 = vmul.f32 %v4501, %v4517
    %v4526 = vmul.f32 %v4502, %v4518
    %v4527 = vmul.f32 %v4503, %v4519
    %v4528 = vmul.f32 %v4504, %v4520
    %v4529 = vmul.f32 %v4505, %v4521
    %v4530 = vmul.f32 %v4506, %v4522
    %v4531 = vmul.f32 %v4507, %v4523
    %v4532 = vmul.f32 %v4461, %v4524
    %v4533 = vmul.f32 %v4463, %v4525
    %v4534 = vmul.f32 %v4465, %v4526
    %v4535 = vmul.f32 %v4467, %v4527
    %v4536 = vmul.f32 %v4469, %v4528
    %v4537 = vmul.f32 %v4471, %v4529
    %v4538 = vmul.f32 %v4473, %v4530
    %v4539 = vmul.f32 %v4475, %v4531
    %v4541 = vsel %vm1208, %v4532, 0
    %4543 = vmatprep.subr.mxu0 0.0
    %4544 = vmatpush1.msra.mxu0 %v241
    %4545 = vmatprep.subr.mxu0 0.0
    %4546 = vmatpush1.msra.mxu0 0.0
    %4547 = vmatprep.subr.mxu0 0.0
    %4548 = vmatpush1.msra.mxu0 0.0
    %4549 = vmatprep.subr.mxu0 0.0
    %4550 = vmatpush1.msra.mxu0 0.0
    %4551 = vmatprep.subr.mxu0 0.0
    %4552 = vmatpush1.msra.mxu0 0.0
    %4553 = vmatprep.subr.mxu0 0.0
    %4554 = vmatpush1.msra.mxu0 0.0
    %4555 = vmatprep.subr.mxu0 0.0
    %4556 = vmatpush1.msra.mxu0 0.0
    %4557 = vmatprep.subr.mxu0 0.0
    %4558 = vmatpush1.msra.mxu0 0.0
    %4559 = vmatprep.subr.mxu0 0.0
    %4560 = vmatpush1.msra.mxu0 0.0
    %4561 = vmatprep.subr.mxu0 0.0
    %4562 = vmatpush1.msra.mxu0 0.0
    %4563 = vmatprep.subr.mxu0 0.0
    %4564 = vmatpush1.msra.mxu0 0.0
    %4565 = vmatprep.subr.mxu0 0.0
    %4566 = vmatpush1.msra.mxu0 0.0
    %4567 = vmatprep.subr.mxu0 0.0
    %4568 = vmatpush1.msra.mxu0 0.0
    %4569 = vmatprep.subr.mxu0 0.0
    %4570 = vmatpush1.msra.mxu0 0.0
    %4571 = vmatprep.subr.mxu0 0.0
    %4572 = vmatpush1.msra.mxu0 0.0
    %4573 = vmatprep.subr.mxu0 0.0
    %4574 = vmatpush1.msra.mxu0 0.0
    %4575 = vmatprep.subr.mxu0 0.0
    %4576 = vmatpush1.msra.mxu0 0.0
    %4577 = vmatprep.subr.mxu0 0.0
    %4578 = vmatpush1.msra.mxu0 0.0
    %4579 = vmatprep.subr.mxu0 0.0
    %4580 = vmatpush1.msra.mxu0 0.0
    %4581 = vmatprep.subr.mxu0 0.0
    %4582 = vmatpush1.msra.mxu0 0.0
    %4583 = vmatprep.subr.mxu0 0.0
    %4584 = vmatpush1.msra.mxu0 0.0
    %4585 = vmatprep.subr.mxu0 0.0
    %4586 = vmatpush1.msra.mxu0 0.0
    %4587 = vmatprep.subr.mxu0 0.0
    %4588 = vmatpush1.msra.mxu0 0.0
    %4589 = vmatprep.subr.mxu0 0.0
    %4590 = vmatpush1.msra.mxu0 0.0
    %4591 = vmatprep.subr.mxu0 0.0
    %4592 = vmatpush1.msra.mxu0 0.0
    %4593 = vmatprep.subr.mxu0 0.0
    %4594 = vmatpush1.msra.mxu0 0.0
    %4595 = vmatprep.subr.mxu0 0.0
    %4596 = vmatpush1.msra.mxu0 0.0
    %4597 = vmatprep.subr.mxu0 0.0
    %4598 = vmatpush1.msra.mxu0 0.0
    %4599 = vmatprep.subr.mxu0 0.0
    %4600 = vmatpush1.msra.mxu0 0.0
    %4601 = vmatprep.subr.mxu0 0.0
    %4602 = vmatpush1.msra.mxu0 0.0
    %4603 = vmatprep.subr.mxu0 0.0
    %4604 = vmatpush1.msra.mxu0 0.0
    %4605 = vmatprep.subr.mxu0 0.0
    %4606 = vmatpush1.msra.mxu0 0.0
    %4607 = vmatprep.mubr.f32.mxu0 0.0
    %4608 = vmatmul.mubr.f32.gmra.mrb[0].mxu0 %v4541
    %v4609 = vpop.f32.mrb[0].mxu0
    %v4610 = vadd.f32 0.0, %v4609
    %v4611 = vpop.f32.mrb[0].mxu0
    %4612 = vdwg.mxu0
    %v4614 = vsel %vm1208, %v4533, 0
    %4616 = vmatprep.subr.mxu0 0.0
    %4617 = vmatpush1.msra.mxu0 %v242
    %4618 = vmatprep.subr.mxu0 0.0
    %4619 = vmatpush1.msra.mxu0 0.0
    %4620 = vmatprep.subr.mxu0 0.0
    %4621 = vmatpush1.msra.mxu0 0.0
    %4622 = vmatprep.subr.mxu0 0.0
    %4623 = vmatpush1.msra.mxu0 0.0
    %4624 = vmatprep.subr.mxu0 0.0
    %4625 = vmatpush1.msra.mxu0 0.0
    %4626 = vmatprep.subr.mxu0 0.0
    %4627 = vmatpush1.msra.mxu0 0.0
    %4628 = vmatprep.subr.mxu0 0.0
    %4629 = vmatpush1.msra.mxu0 0.0
    %4630 = vmatprep.subr.mxu0 0.0
    %4631 = vmatpush1.msra.mxu0 0.0
    %4632 = vmatprep.subr.mxu0 0.0
    %4633 = vmatpush1.msra.mxu0 0.0
    %4634 = vmatprep.subr.mxu0 0.0
    %4635 = vmatpush1.msra.mxu0 0.0
    %4636 = vmatprep.subr.mxu0 0.0
    %4637 = vmatpush1.msra.mxu0 0.0
    %4638 = vmatprep.subr.mxu0 0.0
    %4639 = vmatpush1.msra.mxu0 0.0
    %4640 = vmatprep.subr.mxu0 0.0
    %4641 = vmatpush1.msra.mxu0 0.0
    %4642 = vmatprep.subr.mxu0 0.0
    %4643 = vmatpush1.msra.mxu0 0.0
    %4644 = vmatprep.subr.mxu0 0.0
    %4645 = vmatpush1.msra.mxu0 0.0
    %4646 = vmatprep.subr.mxu0 0.0
    %4647 = vmatpush1.msra.mxu0 0.0
    %4648 = vmatprep.subr.mxu0 0.0
    %4649 = vmatpush1.msra.mxu0 0.0
    %4650 = vmatprep.subr.mxu0 0.0
    %4651 = vmatpush1.msra.mxu0 0.0
    %4652 = vmatprep.subr.mxu0 0.0
    %4653 = vmatpush1.msra.mxu0 0.0
    %4654 = vmatprep.subr.mxu0 0.0
    %4655 = vmatpush1.msra.mxu0 0.0
    %4656 = vmatprep.subr.mxu0 0.0
    %4657 = vmatpush1.msra.mxu0 0.0
    %4658 = vmatprep.subr.mxu0 0.0
    %4659 = vmatpush1.msra.mxu0 0.0
    %4660 = vmatprep.subr.mxu0 0.0
    %4661 = vmatpush1.msra.mxu0 0.0
    %4662 = vmatprep.subr.mxu0 0.0
    %4663 = vmatpush1.msra.mxu0 0.0
    %4664 = vmatprep.subr.mxu0 0.0
    %4665 = vmatpush1.msra.mxu0 0.0
    %4666 = vmatprep.subr.mxu0 0.0
    %4667 = vmatpush1.msra.mxu0 0.0
    %4668 = vmatprep.subr.mxu0 0.0
    %4669 = vmatpush1.msra.mxu0 0.0
    %4670 = vmatprep.subr.mxu0 0.0
    %4671 = vmatpush1.msra.mxu0 0.0
    %4672 = vmatprep.subr.mxu0 0.0
    %4673 = vmatpush1.msra.mxu0 0.0
    %4674 = vmatprep.subr.mxu0 0.0
    %4675 = vmatpush1.msra.mxu0 0.0
    %4676 = vmatprep.subr.mxu0 0.0
    %4677 = vmatpush1.msra.mxu0 0.0
    %4678 = vmatprep.subr.mxu0 0.0
    %4679 = vmatpush1.msra.mxu0 0.0
    %4680 = vmatprep.mubr.f32.mxu0 0.0
    %4681 = vmatmul.mubr.f32.gmra.mrb[0].mxu0 %v4614
    %v4682 = vpop.f32.mrb[0].mxu0
    %v4683 = vadd.f32 0.0, %v4682
    %v4684 = vpop.f32.mrb[0].mxu0
    %4685 = vdwg.mxu0
    %v4687 = vsel %vm1208, %v4534, 0
    %4689 = vmatprep.subr.mxu0 0.0
    %4690 = vmatpush1.msra.mxu0 %v243
    %4691 = vmatprep.subr.mxu0 0.0
    %4692 = vmatpush1.msra.mxu0 0.0
    %4693 = vmatprep.subr.mxu0 0.0
    %4694 = vmatpush1.msra.mxu0 0.0
    %4695 = vmatprep.subr.mxu0 0.0
    %4696 = vmatpush1.msra.mxu0 0.0
    %4697 = vmatprep.subr.mxu0 0.0
    %4698 = vmatpush1.msra.mxu0 0.0
    %4699 = vmatprep.subr.mxu0 0.0
    %4700 = vmatpush1.msra.mxu0 0.0
    %4701 = vmatprep.subr.mxu0 0.0
    %4702 = vmatpush1.msra.mxu0 0.0
    %4703 = vmatprep.subr.mxu0 0.0
    %4704 = vmatpush1.msra.mxu0 0.0
    %4705 = vmatprep.subr.mxu0 0.0
    %4706 = vmatpush1.msra.mxu0 0.0
    %4707 = vmatprep.subr.mxu0 0.0
    %4708 = vmatpush1.msra.mxu0 0.0
    %4709 = vmatprep.subr.mxu0 0.0
    %4710 = vmatpush1.msra.mxu0 0.0
    %4711 = vmatprep.subr.mxu0 0.0
    %4712 = vmatpush1.msra.mxu0 0.0
    %4713 = vmatprep.subr.mxu0 0.0
    %4714 = vmatpush1.msra.mxu0 0.0
    %4715 = vmatprep.subr.mxu0 0.0
    %4716 = vmatpush1.msra.mxu0 0.0
    %4717 = vmatprep.subr.mxu0 0.0
    %4718 = vmatpush1.msra.mxu0 0.0
    %4719 = vmatprep.subr.mxu0 0.0
    %4720 = vmatpush1.msra.mxu0 0.0
    %4721 = vmatprep.subr.mxu0 0.0
    %4722 = vmatpush1.msra.mxu0 0.0
    %4723 = vmatprep.subr.mxu0 0.0
    %4724 = vmatpush1.msra.mxu0 0.0
    %4725 = vmatprep.subr.mxu0 0.0
    %4726 = vmatpush1.msra.mxu0 0.0
    %4727 = vmatprep.subr.mxu0 0.0
    %4728 = vmatpush1.msra.mxu0 0.0
    %4729 = vmatprep.subr.mxu0 0.0
    %4730 = vmatpush1.msra.mxu0 0.0
    %4731 = vmatprep.subr.mxu0 0.0
    %4732 = vmatpush1.msra.mxu0 0.0
    %4733 = vmatprep.subr.mxu0 0.0
    %4734 = vmatpush1.msra.mxu0 0.0
    %4735 = vmatprep.subr.mxu0 0.0
    %4736 = vmatpush1.msra.mxu0 0.0
    %4737 = vmatprep.subr.mxu0 0.0
    %4738 = vmatpush1.msra.mxu0 0.0
    %4739 = vmatprep.subr.mxu0 0.0
    %4740 = vmatpush1.msra.mxu0 0.0
    %4741 = vmatprep.subr.mxu0 0.0
    %4742 = vmatpush1.msra.mxu0 0.0
    %4743 = vmatprep.subr.mxu0 0.0
    %4744 = vmatpush1.msra.mxu0 0.0
    %4745 = vmatprep.subr.mxu0 0.0
    %4746 = vmatpush1.msra.mxu0 0.0
    %4747 = vmatprep.subr.mxu0 0.0
    %4748 = vmatpush1.msra.mxu0 0.0
    %4749 = vmatprep.subr.mxu0 0.0
    %4750 = vmatpush1.msra.mxu0 0.0
    %4751 = vmatprep.subr.mxu0 0.0
    %4752 = vmatpush1.msra.mxu0 0.0
    %4753 = vmatprep.mubr.f32.mxu0 0.0
    %4754 = vmatmul.mubr.f32.gmra.mrb[0].mxu0 %v4687
    %v4755 = vpop.f32.mrb[0].mxu0
    %v4756 = vadd.f32 0.0, %v4755
    %v4757 = vpop.f32.mrb[0].mxu0
    %4758 = vdwg.mxu0
    %v4760 = vsel %vm1208, %v4535, 0
    %4762 = vmatprep.subr.mxu0 0.0
    %4763 = vmatpush1.msra.mxu0 %v244
    %4764 = vmatprep.subr.mxu0 0.0
    %4765 = vmatpush1.msra.mxu0 0.0
    %4766 = vmatprep.subr.mxu0 0.0
    %4767 = vmatpush1.msra.mxu0 0.0
    %4768 = vmatprep.subr.mxu0 0.0
    %4769 = vmatpush1.msra.mxu0 0.0
    %4770 = vmatprep.subr.mxu0 0.0
    %4771 = vmatpush1.msra.mxu0 0.0
    %4772 = vmatprep.subr.mxu0 0.0
    %4773 = vmatpush1.msra.mxu0 0.0
    %4774 = vmatprep.subr.mxu0 0.0
    %4775 = vmatpush1.msra.mxu0 0.0
    %4776 = vmatprep.subr.mxu0 0.0
    %4777 = vmatpush1.msra.mxu0 0.0
    %4778 = vmatprep.subr.mxu0 0.0
    %4779 = vmatpush1.msra.mxu0 0.0
    %4780 = vmatprep.subr.mxu0 0.0
    %4781 = vmatpush1.msra.mxu0 0.0
    %4782 = vmatprep.subr.mxu0 0.0
    %4783 = vmatpush1.msra.mxu0 0.0
    %4784 = vmatprep.subr.mxu0 0.0
    %4785 = vmatpush1.msra.mxu0 0.0
    %4786 = vmatprep.subr.mxu0 0.0
    %4787 = vmatpush1.msra.mxu0 0.0
    %4788 = vmatprep.subr.mxu0 0.0
    %4789 = vmatpush1.msra.mxu0 0.0
    %4790 = vmatprep.subr.mxu0 0.0
    %4791 = vmatpush1.msra.mxu0 0.0
    %4792 = vmatprep.subr.mxu0 0.0
    %4793 = vmatpush1.msra.mxu0 0.0
    %4794 = vmatprep.subr.mxu0 0.0
    %4795 = vmatpush1.msra.mxu0 0.0
    %4796 = vmatprep.subr.mxu0 0.0
    %4797 = vmatpush1.msra.mxu0 0.0
    %4798 = vmatprep.subr.mxu0 0.0
    %4799 = vmatpush1.msra.mxu0 0.0
    %4800 = vmatprep.subr.mxu0 0.0
    %4801 = vmatpush1.msra.mxu0 0.0
    %4802 = vmatprep.subr.mxu0 0.0
    %4803 = vmatpush1.msra.mxu0 0.0
    %4804 = vmatprep.subr.mxu0 0.0
    %4805 = vmatpush1.msra.mxu0 0.0
    %4806 = vmatprep.subr.mxu0 0.0
    %4807 = vmatpush1.msra.mxu0 0.0
    %4808 = vmatprep.subr.mxu0 0.0
    %4809 = vmatpush1.msra.mxu0 0.0
    %4810 = vmatprep.subr.mxu0 0.0
    %4811 = vmatpush1.msra.mxu0 0.0
    %4812 = vmatprep.subr.mxu0 0.0
    %4813 = vmatpush1.msra.mxu0 0.0
    %4814 = vmatprep.subr.mxu0 0.0
    %4815 = vmatpush1.msra.mxu0 0.0
    %4816 = vmatprep.subr.mxu0 0.0
    %4817 = vmatpush1.msra.mxu0 0.0
    %4818 = vmatprep.subr.mxu0 0.0
    %4819 = vmatpush1.msra.mxu0 0.0
    %4820 = vmatprep.subr.mxu0 0.0
    %4821 = vmatpush1.msra.mxu0 0.0
    %4822 = vmatprep.subr.mxu0 0.0
    %4823 = vmatpush1.msra.mxu0 0.0
    %4824 = vmatprep.subr.mxu0 0.0
    %4825 = vmatpush1.msra.mxu0 0.0
    %4826 = vmatprep.mubr.f32.mxu0 0.0
    %4827 = vmatmul.mubr.f32.gmra.mrb[0].mxu0 %v4760
    %v4828 = vpop.f32.mrb[0].mxu0
    %v4829 = vadd.f32 0.0, %v4828
    %v4830 = vpop.f32.mrb[0].mxu0
    %4831 = vdwg.mxu0
    %v4833 = vsel %vm1208, %v4536, 0
    %4835 = vmatprep.subr.mxu0 0.0
    %4836 = vmatpush1.msra.mxu0 %v245
    %4837 = vmatprep.subr.mxu0 0.0
    %4838 = vmatpush1.msra.mxu0 0.0
    %4839 = vmatprep.subr.mxu0 0.0
    %4840 = vmatpush1.msra.mxu0 0.0
    %4841 = vmatprep.subr.mxu0 0.0
    %4842 = vmatpush1.msra.mxu0 0.0
    %4843 = vmatprep.subr.mxu0 0.0
    %4844 = vmatpush1.msra.mxu0 0.0
    %4845 = vmatprep.subr.mxu0 0.0
    %4846 = vmatpush1.msra.mxu0 0.0
    %4847 = vmatprep.subr.mxu0 0.0
    %4848 = vmatpush1.msra.mxu0 0.0
    %4849 = vmatprep.subr.mxu0 0.0
    %4850 = vmatpush1.msra.mxu0 0.0
    %4851 = vmatprep.subr.mxu0 0.0
    %4852 = vmatpush1.msra.mxu0 0.0
    %4853 = vmatprep.subr.mxu0 0.0
    %4854 = vmatpush1.msra.mxu0 0.0
    %4855 = vmatprep.subr.mxu0 0.0
    %4856 = vmatpush1.msra.mxu0 0.0
    %4857 = vmatprep.subr.mxu0 0.0
    %4858 = vmatpush1.msra.mxu0 0.0
    %4859 = vmatprep.subr.mxu0 0.0
    %4860 = vmatpush1.msra.mxu0 0.0
    %4861 = vmatprep.subr.mxu0 0.0
    %4862 = vmatpush1.msra.mxu0 0.0
    %4863 = vmatprep.subr.mxu0 0.0
    %4864 = vmatpush1.msra.mxu0 0.0
    %4865 = vmatprep.subr.mxu0 0.0
    %4866 = vmatpush1.msra.mxu0 0.0
    %4867 = vmatprep.subr.mxu0 0.0
    %4868 = vmatpush1.msra.mxu0 0.0
    %4869 = vmatprep.subr.mxu0 0.0
    %4870 = vmatpush1.msra.mxu0 0.0
    %4871 = vmatprep.subr.mxu0 0.0
    %4872 = vmatpush1.msra.mxu0 0.0
    %4873 = vmatprep.subr.mxu0 0.0
    %4874 = vmatpush1.msra.mxu0 0.0
    %4875 = vmatprep.subr.mxu0 0.0
    %4876 = vmatpush1.msra.mxu0 0.0
    %4877 = vmatprep.subr.mxu0 0.0
    %4878 = vmatpush1.msra.mxu0 0.0
    %4879 = vmatprep.subr.mxu0 0.0
    %4880 = vmatpush1.msra.mxu0 0.0
    %4881 = vmatprep.subr.mxu0 0.0
    %4882 = vmatpush1.msra.mxu0 0.0
    %4883 = vmatprep.subr.mxu0 0.0
    %4884 = vmatpush1.msra.mxu0 0.0
    %4885 = vmatprep.subr.mxu0 0.0
    %4886 = vmatpush1.msra.mxu0 0.0
    %4887 = vmatprep.subr.mxu0 0.0
    %4888 = vmatpush1.msra.mxu0 0.0
    %4889 = vmatprep.subr.mxu0 0.0
    %4890 = vmatpush1.msra.mxu0 0.0
    %4891 = vmatprep.subr.mxu0 0.0
    %4892 = vmatpush1.msra.mxu0 0.0
    %4893 = vmatprep.subr.mxu0 0.0
    %4894 = vmatpush1.msra.mxu0 0.0
    %4895 = vmatprep.subr.mxu0 0.0
    %4896 = vmatpush1.msra.mxu0 0.0
    %4897 = vmatprep.subr.mxu0 0.0
    %4898 = vmatpush1.msra.mxu0 0.0
    %4899 = vmatprep.mubr.f32.mxu0 0.0
    %4900 = vmatmul.mubr.f32.gmra.mrb[0].mxu0 %v4833
    %v4901 = vpop.f32.mrb[0].mxu0
    %v4902 = vadd.f32 0.0, %v4901
    %v4903 = vpop.f32.mrb[0].mxu0
    %4904 = vdwg.mxu0
    %v4906 = vsel %vm1208, %v4537, 0
    %4908 = vmatprep.subr.mxu0 0.0
    %4909 = vmatpush1.msra.mxu0 %v246
    %4910 = vmatprep.subr.mxu0 0.0
    %4911 = vmatpush1.msra.mxu0 0.0
    %4912 = vmatprep.subr.mxu0 0.0
    %4913 = vmatpush1.msra.mxu0 0.0
    %4914 = vmatprep.subr.mxu0 0.0
    %4915 = vmatpush1.msra.mxu0 0.0
    %4916 = vmatprep.subr.mxu0 0.0
    %4917 = vmatpush1.msra.mxu0 0.0
    %4918 = vmatprep.subr.mxu0 0.0
    %4919 = vmatpush1.msra.mxu0 0.0
    %4920 = vmatprep.subr.mxu0 0.0
    %4921 = vmatpush1.msra.mxu0 0.0
    %4922 = vmatprep.subr.mxu0 0.0
    %4923 = vmatpush1.msra.mxu0 0.0
    %4924 = vmatprep.subr.mxu0 0.0
    %4925 = vmatpush1.msra.mxu0 0.0
    %4926 = vmatprep.subr.mxu0 0.0
    %4927 = vmatpush1.msra.mxu0 0.0
    %4928 = vmatprep.subr.mxu0 0.0
    %4929 = vmatpush1.msra.mxu0 0.0
    %4930 = vmatprep.subr.mxu0 0.0
    %4931 = vmatpush1.msra.mxu0 0.0
    %4932 = vmatprep.subr.mxu0 0.0
    %4933 = vmatpush1.msra.mxu0 0.0
    %4934 = vmatprep.subr.mxu0 0.0
    %4935 = vmatpush1.msra.mxu0 0.0
    %4936 = vmatprep.subr.mxu0 0.0
    %4937 = vmatpush1.msra.mxu0 0.0
    %4938 = vmatprep.subr.mxu0 0.0
    %4939 = vmatpush1.msra.mxu0 0.0
    %4940 = vmatprep.subr.mxu0 0.0
    %4941 = vmatpush1.msra.mxu0 0.0
    %4942 = vmatprep.subr.mxu0 0.0
    %4943 = vmatpush1.msra.mxu0 0.0
    %4944 = vmatprep.subr.mxu0 0.0
    %4945 = vmatpush1.msra.mxu0 0.0
    %4946 = vmatprep.subr.mxu0 0.0
    %4947 = vmatpush1.msra.mxu0 0.0
    %4948 = vmatprep.subr.mxu0 0.0
    %4949 = vmatpush1.msra.mxu0 0.0
    %4950 = vmatprep.subr.mxu0 0.0
    %4951 = vmatpush1.msra.mxu0 0.0
    %4952 = vmatprep.subr.mxu0 0.0
    %4953 = vmatpush1.msra.mxu0 0.0
    %4954 = vmatprep.subr.mxu0 0.0
    %4955 = vmatpush1.msra.mxu0 0.0
    %4956 = vmatprep.subr.mxu0 0.0
    %4957 = vmatpush1.msra.mxu0 0.0
    %4958 = vmatprep.subr.mxu0 0.0
    %4959 = vmatpush1.msra.mxu0 0.0
    %4960 = vmatprep.subr.mxu0 0.0
    %4961 = vmatpush1.msra.mxu0 0.0
    %4962 = vmatprep.subr.mxu0 0.0
    %4963 = vmatpush1.msra.mxu0 0.0
    %4964 = vmatprep.subr.mxu0 0.0
    %4965 = vmatpush1.msra.mxu0 0.0
    %4966 = vmatprep.subr.mxu0 0.0
    %4967 = vmatpush1.msra.mxu0 0.0
    %4968 = vmatprep.subr.mxu0 0.0
    %4969 = vmatpush1.msra.mxu0 0.0
    %4970 = vmatprep.subr.mxu0 0.0
    %4971 = vmatpush1.msra.mxu0 0.0
    %4972 = vmatprep.mubr.f32.mxu0 0.0
    %4973 = vmatmul.mubr.f32.gmra.mrb[0].mxu0 %v4906
    %v4974 = vpop.f32.mrb[0].mxu0
    %v4975 = vadd.f32 0.0, %v4974
    %v4976 = vpop.f32.mrb[0].mxu0
    %4977 = vdwg.mxu0
    %v4979 = vsel %vm1208, %v4538, 0
    %4981 = vmatprep.subr.mxu0 0.0
    %4982 = vmatpush1.msra.mxu0 %v247
    %4983 = vmatprep.subr.mxu0 0.0
    %4984 = vmatpush1.msra.mxu0 0.0
    %4985 = vmatprep.subr.mxu0 0.0
    %4986 = vmatpush1.msra.mxu0 0.0
    %4987 = vmatprep.subr.mxu0 0.0
    %4988 = vmatpush1.msra.mxu0 0.0
    %4989 = vmatprep.subr.mxu0 0.0
    %4990 = vmatpush1.msra.mxu0 0.0
    %4991 = vmatprep.subr.mxu0 0.0
    %4992 = vmatpush1.msra.mxu0 0.0
    %4993 = vmatprep.subr.mxu0 0.0
    %4994 = vmatpush1.msra.mxu0 0.0
    %4995 = vmatprep.subr.mxu0 0.0
    %4996 = vmatpush1.msra.mxu0 0.0
    %4997 = vmatprep.subr.mxu0 0.0
    %4998 = vmatpush1.msra.mxu0 0.0
    %4999 = vmatprep.subr.mxu0 0.0
    %5000 = vmatpush1.msra.mxu0 0.0
    %5001 = vmatprep.subr.mxu0 0.0
    %5002 = vmatpush1.msra.mxu0 0.0
    %5003 = vmatprep.subr.mxu0 0.0
    %5004 = vmatpush1.msra.mxu0 0.0
    %5005 = vmatprep.subr.mxu0 0.0
    %5006 = vmatpush1.msra.mxu0 0.0
    %5007 = vmatprep.subr.mxu0 0.0
    %5008 = vmatpush1.msra.mxu0 0.0
    %5009 = vmatprep.subr.mxu0 0.0
    %5010 = vmatpush1.msra.mxu0 0.0
    %5011 = vmatprep.subr.mxu0 0.0
    %5012 = vmatpush1.msra.mxu0 0.0
    %5013 = vmatprep.subr.mxu0 0.0
    %5014 = vmatpush1.msra.mxu0 0.0
    %5015 = vmatprep.subr.mxu0 0.0
    %5016 = vmatpush1.msra.mxu0 0.0
    %5017 = vmatprep.subr.mxu0 0.0
    %5018 = vmatpush1.msra.mxu0 0.0
    %5019 = vmatprep.subr.mxu0 0.0
    %5020 = vmatpush1.msra.mxu0 0.0
    %5021 = vmatprep.subr.mxu0 0.0
    %5022 = vmatpush1.msra.mxu0 0.0
    %5023 = vmatprep.subr.mxu0 0.0
    %5024 = vmatpush1.msra.mxu0 0.0
    %5025 = vmatprep.subr.mxu0 0.0
    %5026 = vmatpush1.msra.mxu0 0.0
    %5027 = vmatprep.subr.mxu0 0.0
    %5028 = vmatpush1.msra.mxu0 0.0
    %5029 = vmatprep.subr.mxu0 0.0
    %5030 = vmatpush1.msra.mxu0 0.0
    %5031 = vmatprep.subr.mxu0 0.0
    %5032 = vmatpush1.msra.mxu0 0.0
    %5033 = vmatprep.subr.mxu0 0.0
    %5034 = vmatpush1.msra.mxu0 0.0
    %5035 = vmatprep.subr.mxu0 0.0
    %5036 = vmatpush1.msra.mxu0 0.0
    %5037 = vmatprep.subr.mxu0 0.0
    %5038 = vmatpush1.msra.mxu0 0.0
    %5039 = vmatprep.subr.mxu0 0.0
    %5040 = vmatpush1.msra.mxu0 0.0
    %5041 = vmatprep.subr.mxu0 0.0
    %5042 = vmatpush1.msra.mxu0 0.0
    %5043 = vmatprep.subr.mxu0 0.0
    %5044 = vmatpush1.msra.mxu0 0.0
    %5045 = vmatprep.mubr.f32.mxu0 0.0
    %5046 = vmatmul.mubr.f32.gmra.mrb[0].mxu0 %v4979
    %v5047 = vpop.f32.mrb[0].mxu0
    %v5048 = vadd.f32 0.0, %v5047
    %v5049 = vpop.f32.mrb[0].mxu0
    %5050 = vdwg.mxu0
    %v5052 = vsel %vm1208, %v4539, 0
    %5054 = vmatprep.subr.mxu0 0.0
    %5055 = vmatpush1.msra.mxu0 %v248
    %5056 = vmatprep.subr.mxu0 0.0
    %5057 = vmatpush1.msra.mxu0 0.0
    %5058 = vmatprep.subr.mxu0 0.0
    %5059 = vmatpush1.msra.mxu0 0.0
    %5060 = vmatprep.subr.mxu0 0.0
    %5061 = vmatpush1.msra.mxu0 0.0
    %5062 = vmatprep.subr.mxu0 0.0
    %5063 = vmatpush1.msra.mxu0 0.0
    %5064 = vmatprep.subr.mxu0 0.0
    %5065 = vmatpush1.msra.mxu0 0.0
    %5066 = vmatprep.subr.mxu0 0.0
    %5067 = vmatpush1.msra.mxu0 0.0
    %5068 = vmatprep.subr.mxu0 0.0
    %5069 = vmatpush1.msra.mxu0 0.0
    %5070 = vmatprep.subr.mxu0 0.0
    %5071 = vmatpush1.msra.mxu0 0.0
    %5072 = vmatprep.subr.mxu0 0.0
    %5073 = vmatpush1.msra.mxu0 0.0
    %5074 = vmatprep.subr.mxu0 0.0
    %5075 = vmatpush1.msra.mxu0 0.0
    %5076 = vmatprep.subr.mxu0 0.0
    %5077 = vmatpush1.msra.mxu0 0.0
    %5078 = vmatprep.subr.mxu0 0.0
    %5079 = vmatpush1.msra.mxu0 0.0
    %5080 = vmatprep.subr.mxu0 0.0
    %5081 = vmatpush1.msra.mxu0 0.0
    %5082 = vmatprep.subr.mxu0 0.0
    %5083 = vmatpush1.msra.mxu0 0.0
    %5084 = vmatprep.subr.mxu0 0.0
    %5085 = vmatpush1.msra.mxu0 0.0
    %5086 = vmatprep.subr.mxu0 0.0
    %5087 = vmatpush1.msra.mxu0 0.0
    %5088 = vmatprep.subr.mxu0 0.0
    %5089 = vmatpush1.msra.mxu0 0.0
    %5090 = vmatprep.subr.mxu0 0.0
    %5091 = vmatpush1.msra.mxu0 0.0
    %5092 = vmatprep.subr.mxu0 0.0
    %5093 = vmatpush1.msra.mxu0 0.0
    %5094 = vmatprep.subr.mxu0 0.0
    %5095 = vmatpush1.msra.mxu0 0.0
    %5096 = vmatprep.subr.mxu0 0.0
    %5097 = vmatpush1.msra.mxu0 0.0
    %5098 = vmatprep.subr.mxu0 0.0
    %5099 = vmatpush1.msra.mxu0 0.0
    %5100 = vmatprep.subr.mxu0 0.0
    %5101 = vmatpush1.msra.mxu0 0.0
    %5102 = vmatprep.subr.mxu0 0.0
    %5103 = vmatpush1.msra.mxu0 0.0
    %5104 = vmatprep.subr.mxu0 0.0
    %5105 = vmatpush1.msra.mxu0 0.0
    %5106 = vmatprep.subr.mxu0 0.0
    %5107 = vmatpush1.msra.mxu0 0.0
    %5108 = vmatprep.subr.mxu0 0.0
    %5109 = vmatpush1.msra.mxu0 0.0
    %5110 = vmatprep.subr.mxu0 0.0
    %5111 = vmatpush1.msra.mxu0 0.0
    %5112 = vmatprep.subr.mxu0 0.0
    %5113 = vmatpush1.msra.mxu0 0.0
    %5114 = vmatprep.subr.mxu0 0.0
    %5115 = vmatpush1.msra.mxu0 0.0
    %5116 = vmatprep.subr.mxu0 0.0
    %5117 = vmatpush1.msra.mxu0 0.0
    %5118 = vmatprep.mubr.f32.mxu0 0.0
    %5119 = vmatmul.mubr.f32.gmra.mrb[0].mxu0 %v5052
    %v5120 = vpop.f32.mrb[0].mxu0
    %v5121 = vadd.f32 0.0, %v5120
    %v5122 = vpop.f32.mrb[0].mxu0
    %5123 = vdwg.mxu0
    %5124 = vrot.lane.b32.xlu0 %v3753, 32
    %v5125 = vpop.permute.xlu0 %5124
    %v5126 = vsel %vm291, %v5125, 0
    %5128 = vmatprep.subr.mxu0 0.0
    %5129 = vmatpush1.msra.mxu0 %v273
    %5130 = vmatprep.subr.mxu0 0.0
    %5131 = vmatpush1.msra.mxu0 %v274
    %5132 = vmatprep.subr.mxu0 0.0
    %5133 = vmatpush1.msra.mxu0 %v275
    %5134 = vmatprep.subr.mxu0 0.0
    %5135 = vmatpush1.msra.mxu0 %v276
    %5136 = vmatprep.subr.mxu0 0.0
    %5137 = vmatpush1.msra.mxu0 0.0
    %5138 = vmatprep.subr.mxu0 0.0
    %5139 = vmatpush1.msra.mxu0 0.0
    %5140 = vmatprep.subr.mxu0 0.0
    %5141 = vmatpush1.msra.mxu0 0.0
    %5142 = vmatprep.subr.mxu0 0.0
    %5143 = vmatpush1.msra.mxu0 0.0
    %5144 = vmatprep.subr.mxu0 0.0
    %5145 = vmatpush1.msra.mxu0 0.0
    %5146 = vmatprep.subr.mxu0 0.0
    %5147 = vmatpush1.msra.mxu0 0.0
    %5148 = vmatprep.subr.mxu0 0.0
    %5149 = vmatpush1.msra.mxu0 0.0
    %5150 = vmatprep.subr.mxu0 0.0
    %5151 = vmatpush1.msra.mxu0 0.0
    %5152 = vmatprep.subr.mxu0 0.0
    %5153 = vmatpush1.msra.mxu0 0.0
    %5154 = vmatprep.subr.mxu0 0.0
    %5155 = vmatpush1.msra.mxu0 0.0
    %5156 = vmatprep.subr.mxu0 0.0
    %5157 = vmatpush1.msra.mxu0 0.0
    %5158 = vmatprep.subr.mxu0 0.0
    %5159 = vmatpush1.msra.mxu0 0.0
    %5160 = vmatprep.subr.mxu0 0.0
    %5161 = vmatpush1.msra.mxu0 0.0
    %5162 = vmatprep.subr.mxu0 0.0
    %5163 = vmatpush1.msra.mxu0 0.0
    %5164 = vmatprep.subr.mxu0 0.0
    %5165 = vmatpush1.msra.mxu0 0.0
    %5166 = vmatprep.subr.mxu0 0.0
    %5167 = vmatpush1.msra.mxu0 0.0
    %5168 = vmatprep.subr.mxu0 0.0
    %5169 = vmatpush1.msra.mxu0 0.0
    %5170 = vmatprep.subr.mxu0 0.0
    %5171 = vmatpush1.msra.mxu0 0.0
    %5172 = vmatprep.subr.mxu0 0.0
    %5173 = vmatpush1.msra.mxu0 0.0
    %5174 = vmatprep.subr.mxu0 0.0
    %5175 = vmatpush1.msra.mxu0 0.0
    %5176 = vmatprep.subr.mxu0 0.0
    %5177 = vmatpush1.msra.mxu0 0.0
    %5178 = vmatprep.subr.mxu0 0.0
    %5179 = vmatpush1.msra.mxu0 0.0
    %5180 = vmatprep.subr.mxu0 0.0
    %5181 = vmatpush1.msra.mxu0 0.0
    %5182 = vmatprep.subr.mxu0 0.0
    %5183 = vmatpush1.msra.mxu0 0.0
    %5184 = vmatprep.subr.mxu0 0.0
    %5185 = vmatpush1.msra.mxu0 0.0
    %5186 = vmatprep.subr.mxu0 0.0
    %5187 = vmatpush1.msra.mxu0 0.0
    %5188 = vmatprep.subr.mxu0 0.0
    %5189 = vmatpush1.msra.mxu0 0.0
    %5190 = vmatprep.subr.mxu0 0.0
    %5191 = vmatpush1.msra.mxu0 0.0
    %5192 = vmatprep.mubr.f32.mxu0 0.0
    %5193 = vmatmul.mubr.f32.gmra.mrb[0].mxu0 %v5126
    %v5194 = vpop.f32.mrb[0].mxu0
    %v5195 = vadd.f32 0.0, %v5194
    %v5196 = vpop.f32.mrb[0].mxu0
    %5197 = vdwg.mxu0
    %v5206 = vrot.slane %v4683, 7
    %v5207 = vsel %vm1876, %v5206, %v4610
    %v5208 = vrot.slane %v4756, 6
    %v5209 = vsel %vm1879, %v5208, %v5207
    %v5210 = vrot.slane %v4829, 5
    %v5211 = vsel %vm1882, %v5210, %v5209
    %v5212 = vrot.slane %v4902, 4
    %v5213 = vsel %vm1885, %v5212, %v5211
    %v5214 = vrot.slane %v4975, 3
    %v5215 = vsel %vm1888, %v5214, %v5213
    %v5216 = vrot.slane %v5048, 2
    %v5217 = vsel %vm1891, %v5216, %v5215
    %v5218 = vrot.slane %v5121, 1
    %v5219 = vsel %vm1894, %v5218, %v5217
    %v5220 = vsel %vm294, %v5219, 0
    %5222 = vmatprep.subr.mxu0 0.0
    %5223 = vmatpush1.msra.mxu0 %v265
    %5224 = vmatprep.subr.mxu0 0.0
    %5225 = vmatpush1.msra.mxu0 %v266
    %5226 = vmatprep.subr.mxu0 0.0
    %5227 = vmatpush1.msra.mxu0 %v267
    %5228 = vmatprep.subr.mxu0 0.0
    %5229 = vmatpush1.msra.mxu0 %v268
    %5230 = vmatprep.subr.mxu0 0.0
    %5231 = vmatpush1.msra.mxu0 %v269
    %5232 = vmatprep.subr.mxu0 0.0
    %5233 = vmatpush1.msra.mxu0 %v270
    %5234 = vmatprep.subr.mxu0 0.0
    %5235 = vmatpush1.msra.mxu0 %v271
    %5236 = vmatprep.subr.mxu0 0.0
    %5237 = vmatpush1.msra.mxu0 %v272
    %5238 = vmatprep.subr.mxu0 0.0
    %5239 = vmatpush1.msra.mxu0 0.0
    %5240 = vmatprep.subr.mxu0 0.0
    %5241 = vmatpush1.msra.mxu0 0.0
    %5242 = vmatprep.subr.mxu0 0.0
    %5243 = vmatpush1.msra.mxu0 0.0
    %5244 = vmatprep.subr.mxu0 0.0
    %5245 = vmatpush1.msra.mxu0 0.0
    %5246 = vmatprep.subr.mxu0 0.0
    %5247 = vmatpush1.msra.mxu0 0.0
    %5248 = vmatprep.subr.mxu0 0.0
    %5249 = vmatpush1.msra.mxu0 0.0
    %5250 = vmatprep.subr.mxu0 0.0
    %5251 = vmatpush1.msra.mxu0 0.0
    %5252 = vmatprep.subr.mxu0 0.0
    %5253 = vmatpush1.msra.mxu0 0.0
    %5254 = vmatprep.subr.mxu0 0.0
    %5255 = vmatpush1.msra.mxu0 0.0
    %5256 = vmatprep.subr.mxu0 0.0
    %5257 = vmatpush1.msra.mxu0 0.0
    %5258 = vmatprep.subr.mxu0 0.0
    %5259 = vmatpush1.msra.mxu0 0.0
    %5260 = vmatprep.subr.mxu0 0.0
    %5261 = vmatpush1.msra.mxu0 0.0
    %5262 = vmatprep.subr.mxu0 0.0
    %5263 = vmatpush1.msra.mxu0 0.0
    %5264 = vmatprep.subr.mxu0 0.0
    %5265 = vmatpush1.msra.mxu0 0.0
    %5266 = vmatprep.subr.mxu0 0.0
    %5267 = vmatpush1.msra.mxu0 0.0
    %5268 = vmatprep.subr.mxu0 0.0
    %5269 = vmatpush1.msra.mxu0 0.0
    %5270 = vmatprep.subr.mxu0 0.0
    %5271 = vmatpush1.msra.mxu0 0.0
    %5272 = vmatprep.subr.mxu0 0.0
    %5273 = vmatpush1.msra.mxu0 0.0
    %5274 = vmatprep.subr.mxu0 0.0
    %5275 = vmatpush1.msra.mxu0 0.0
    %5276 = vmatprep.subr.mxu0 0.0
    %5277 = vmatpush1.msra.mxu0 0.0
    %5278 = vmatprep.subr.mxu0 0.0
    %5279 = vmatpush1.msra.mxu0 0.0
    %5280 = vmatprep.subr.mxu0 0.0
    %5281 = vmatpush1.msra.mxu0 0.0
    %5282 = vmatprep.subr.mxu0 0.0
    %5283 = vmatpush1.msra.mxu0 0.0
    %5284 = vmatprep.subr.mxu0 0.0
    %5285 = vmatpush1.msra.mxu0 0.0
    %5286 = vmatprep.mubr.f32.mxu0 0.0
    %5287 = vmatmul.mubr.f32.gmra.mrb[0].mxu0 %v5220
    %v5288 = vpop.f32.mrb[0].mxu0
    %v5289 = vadd.f32 %v5195, %v5288
    %v5290 = vpop.f32.mrb[0].mxu0
    %5291 = vdwg.mxu0
    %v5292 = vadd.f32 %v5289, %v282
    %v5293 = vtanh.pop %v5292
    %s5294 = scalar_lea.vmem [#allocation15], 16
    %5295 = vst.msk [vmem:[%s5294] sm:$0xff] %vm291, %v5293
    %v5296 = vrot.slane %v4533, 7
    %v5297 = vsel %vm1876, %v5296, %v4532
    %v5298 = vrot.slane %v4534, 6
    %v5299 = vsel %vm1879, %v5298, %v5297
    %v5300 = vrot.slane %v4535, 5
    %v5301 = vsel %vm1882, %v5300, %v5299
    %v5302 = vrot.slane %v4536, 4
    %v5303 = vsel %vm1885, %v5302, %v5301
    %v5304 = vrot.slane %v4537, 3
    %v5305 = vsel %vm1888, %v5304, %v5303
    %v5306 = vrot.slane %v4538, 2
    %v5307 = vsel %vm1891, %v5306, %v5305
    %v5308 = vrot.slane %v4539, 1
    %v5309 = vsel %vm1894, %v5308, %v5307
    %s5311 = scalar_lea.vmem [#allocation16], 16
    %5312 = vst.msk [vmem:[%s5311] sm:$0xff] %vm1208, %v5309
    %5313 = vrot.lane.b32.xlu0 %v3753, 64
    %v5314 = vpop.permute.xlu0 %5313
    %v5316 = vsel %vm291, %v5293, %v5314
    %s5317 = scalar_lea.vmem [#allocation5], 24
    %v5318 = vld [vmem:[%s5317] sm:$0xff]
    %v5320 = vsel %vm294, %v5316, 0
    %5322 = vmatprep.subr.mxu0 0.0
    %5323 = vmatpush1.msra.mxu0 %v257
    %5324 = vmatprep.subr.mxu0 0.0
    %5325 = vmatpush1.msra.mxu0 %v258
    %5326 = vmatprep.subr.mxu0 0.0
    %5327 = vmatpush1.msra.mxu0 %v259
    %5328 = vmatprep.subr.mxu0 0.0
    %5329 = vmatpush1.msra.mxu0 %v260
    %5330 = vmatprep.subr.mxu0 0.0
    %5331 = vmatpush1.msra.mxu0 %v261
    %5332 = vmatprep.subr.mxu0 0.0
    %5333 = vmatpush1.msra.mxu0 %v262
    %5334 = vmatprep.subr.mxu0 0.0
    %5335 = vmatpush1.msra.mxu0 %v263
    %5336 = vmatprep.subr.mxu0 0.0
    %5337 = vmatpush1.msra.mxu0 %v264
    %5338 = vmatprep.subr.mxu0 0.0
    %5339 = vmatpush1.msra.mxu0 0.0
    %5340 = vmatprep.subr.mxu0 0.0
    %5341 = vmatpush1.msra.mxu0 0.0
    %5342 = vmatprep.subr.mxu0 0.0
    %5343 = vmatpush1.msra.mxu0 0.0
    %5344 = vmatprep.subr.mxu0 0.0
    %5345 = vmatpush1.msra.mxu0 0.0
    %5346 = vmatprep.subr.mxu0 0.0
    %5347 = vmatpush1.msra.mxu0 0.0
    %5348 = vmatprep.subr.mxu0 0.0
    %5349 = vmatpush1.msra.mxu0 0.0
    %5350 = vmatprep.subr.mxu0 0.0
    %5351 = vmatpush1.msra.mxu0 0.0
    %5352 = vmatprep.subr.mxu0 0.0
    %5353 = vmatpush1.msra.mxu0 0.0
    %5354 = vmatprep.subr.mxu0 0.0
    %5355 = vmatpush1.msra.mxu0 0.0
    %5356 = vmatprep.subr.mxu0 0.0
    %5357 = vmatpush1.msra.mxu0 0.0
    %5358 = vmatprep.subr.mxu0 0.0
    %5359 = vmatpush1.msra.mxu0 0.0
    %5360 = vmatprep.subr.mxu0 0.0
    %5361 = vmatpush1.msra.mxu0 0.0
    %5362 = vmatprep.subr.mxu0 0.0
    %5363 = vmatpush1.msra.mxu0 0.0
    %5364 = vmatprep.subr.mxu0 0.0
    %5365 = vmatpush1.msra.mxu0 0.0
    %5366 = vmatprep.subr.mxu0 0.0
    %5367 = vmatpush1.msra.mxu0 0.0
    %5368 = vmatprep.subr.mxu0 0.0
    %5369 = vmatpush1.msra.mxu0 0.0
    %5370 = vmatprep.subr.mxu0 0.0
    %5371 = vmatpush1.msra.mxu0 0.0
    %5372 = vmatprep.subr.mxu0 0.0
    %5373 = vmatpush1.msra.mxu0 0.0
    %5374 = vmatprep.subr.mxu0 0.0
    %5375 = vmatpush1.msra.mxu0 0.0
    %5376 = vmatprep.subr.mxu0 0.0
    %5377 = vmatpush1.msra.mxu0 0.0
    %5378 = vmatprep.subr.mxu0 0.0
    %5379 = vmatpush1.msra.mxu0 0.0
    %5380 = vmatprep.subr.mxu0 0.0
    %5381 = vmatpush1.msra.mxu0 0.0
    %5382 = vmatprep.subr.mxu0 0.0
    %5383 = vmatpush1.msra.mxu0 0.0
    %5384 = vmatprep.subr.mxu0 0.0
    %5385 = vmatpush1.msra.mxu0 0.0
    %5386 = vmatprep.mubr.f32.mxu0 0.0
    %5387 = vmatmul.mubr.f32.gmra.mrb[0].mxu0 %v5320
    %v5388 = vpop.f32.mrb[0].mxu0
    %v5389 = vadd.f32 0.0, %v5388
    %v5390 = vpop.f32.mrb[0].mxu0
    %5391 = vdwg.mxu0
    %v5392 = vadd.f32 %v5318, %v5389
    %v5393 = vxor.u32 %v5392, 2147483648
    %v5394 = vmul.f32 %v5393, 1.442695
    %v5395 = vpow.pop %v5394
    %v5396 = vadd.f32 %v5395, 1.0
    %v5397 = vrcp.pop %v5396
    %v5398 = vmul.f32 1.0, %v5397
    %v5399 = vtanh.pop %v5392
    %v5400 = vmul.f32 %v5398, %v3747
    %5402 = vrot.lane.b32.xlu0 %v5399, 64
    %v5403 = vpop.permute.xlu0 %5402
    %v5405 = vmul.f32 %v5398, %v5403
    %5407 = vrot.lane.b32.xlu0 %v5405, 32
    %v5408 = vpop.permute.xlu0 %5407
    %v5410 = vadd.f32 %v5400, %v5408
    %v5411 = vtanh.pop %v5410
    %5413 = vrot.lane.b32.xlu0 %v5411, 64
    %v5414 = vpop.permute.xlu0 %5413
    %v5416 = vmul.f32 %v5398, %v5414
    %v5418 = vcombine.high %v5416, %v5416
    %v5420 = vunpack.c.l.s4 1966171168
    %v5421 = vunpack.c.0.s8 %v5420
    %v5422 = vlaneseq
    %v5423 = vshrl.u32 %v5422, 7
    %v5424 = vsub.s32 %v5421, %v5423
    %v5425 = vrot.slane %v5416, %v5424
    %v5427 = vunpack.c.l.s4 1966171168
    %v5428 = vunpack.c.0.s8 %v5427
    %v5429 = vlaneseq
    %v5430 = vshrl.u32 %v5429, 7
    %v5431 = vsub.s32 %v5428, %v5430
    %v5432 = vrot.slane %v5418, %v5431
    %v5433 = vcombine.high %v5425, %v5425
    %v5434 = vcombine.high %v5432, %v5432
    %v5436 = vunpack.c.l.s4 1966171168
    %v5437 = vunpack.c.0.s8 %v5436
    %v5438 = vlaneseq
    %v5439 = vshrl.u32 %v5438, 7
    %v5440 = vsub.s32 %v5437, %v5439
    %v5441 = vrot.slane %v5425, %v5440
    %v5443 = vunpack.c.l.s4 1966171168
    %v5444 = vunpack.c.0.s8 %v5443
    %v5445 = vlaneseq
    %v5446 = vshrl.u32 %v5445, 7
    %v5447 = vsub.s32 %v5444, %v5446
    %v5448 = vrot.slane %v5432, %v5447
    %v5450 = vunpack.c.l.s4 1966171168
    %v5451 = vunpack.c.0.s8 %v5450
    %v5452 = vlaneseq
    %v5453 = vshrl.u32 %v5452, 7
    %v5454 = vsub.s32 %v5451, %v5453
    %v5455 = vrot.slane %v5433, %v5454
    %v5457 = vunpack.c.l.s4 1966171168
    %v5458 = vunpack.c.0.s8 %v5457
    %v5459 = vlaneseq
    %v5460 = vshrl.u32 %v5459, 7
    %v5461 = vsub.s32 %v5458, %v5460
    %v5462 = vrot.slane %v5434, %v5461
    %v5463 = vcombine.high %v5441, %v5441
    %v5464 = vcombine.high %v5448, %v5448
    %v5465 = vcombine.high %v5455, %v5455
    %v5466 = vcombine.high %v5462, %v5462
    %v5467 = vlaneseq
    %v5468 = vshrl.u32 %v5467, 7
    %v5469 = vsub.s32 0, %v5468
    %v5470 = vrot.slane %v5441, %v5469
    %5471 = vrot.lane.b32.xlu0 %v5470, 32
    %v5472 = vpop.permute.xlu0 %5471
    %v5473 = vsel %vm291, %v5472, 0
    %5475 = vmatprep.subr.mxu0 0.0
    %5476 = vmatpush1.xpose.msra.mxu0 %v456
    %5477 = vmatprep.subr.mxu0 0.0
    %5478 = vmatpush1.xpose.msra.mxu0 0.0
    %5479 = vmatprep.subr.mxu0 0.0
    %5480 = vmatpush1.xpose.msra.mxu0 0.0
    %5481 = vmatprep.subr.mxu0 0.0
    %5482 = vmatpush1.xpose.msra.mxu0 0.0
    %5483 = vmatprep.subr.mxu0 0.0
    %5484 = vmatpush1.xpose.msra.mxu0 0.0
    %5485 = vmatprep.subr.mxu0 0.0
    %5486 = vmatpush1.xpose.msra.mxu0 0.0
    %5487 = vmatprep.subr.mxu0 0.0
    %5488 = vmatpush1.xpose.msra.mxu0 0.0
    %5489 = vmatprep.subr.mxu0 0.0
    %5490 = vmatpush1.xpose.msra.mxu0 0.0
    %5491 = vmatprep.subr.mxu0 0.0
    %5492 = vmatpush1.xpose.msra.mxu0 0.0
    %5493 = vmatprep.subr.mxu0 0.0
    %5494 = vmatpush1.xpose.msra.mxu0 0.0
    %5495 = vmatprep.subr.mxu0 0.0
    %5496 = vmatpush1.xpose.msra.mxu0 0.0
    %5497 = vmatprep.subr.mxu0 0.0
    %5498 = vmatpush1.xpose.msra.mxu0 0.0
    %5499 = vmatprep.subr.mxu0 0.0
    %5500 = vmatpush1.xpose.msra.mxu0 0.0
    %5501 = vmatprep.subr.mxu0 0.0
    %5502 = vmatpush1.xpose.msra.mxu0 0.0
    %5503 = vmatprep.subr.mxu0 0.0
    %5504 = vmatpush1.xpose.msra.mxu0 0.0
    %5505 = vmatprep.subr.mxu0 0.0
    %5506 = vmatpush1.xpose.msra.mxu0 0.0
    %5507 = vmatprep.subr.mxu0 0.0
    %5508 = vmatpush1.xpose.msra.mxu0 0.0
    %5509 = vmatprep.subr.mxu0 0.0
    %5510 = vmatpush1.xpose.msra.mxu0 0.0
    %5511 = vmatprep.subr.mxu0 0.0
    %5512 = vmatpush1.xpose.msra.mxu0 0.0
    %5513 = vmatprep.subr.mxu0 0.0
    %5514 = vmatpush1.xpose.msra.mxu0 0.0
    %5515 = vmatprep.subr.mxu0 0.0
    %5516 = vmatpush1.xpose.msra.mxu0 0.0
    %5517 = vmatprep.subr.mxu0 0.0
    %5518 = vmatpush1.xpose.msra.mxu0 0.0
    %5519 = vmatprep.subr.mxu0 0.0
    %5520 = vmatpush1.xpose.msra.mxu0 0.0
    %5521 = vmatprep.subr.mxu0 0.0
    %5522 = vmatpush1.xpose.msra.mxu0 0.0
    %5523 = vmatprep.subr.mxu0 0.0
    %5524 = vmatpush1.xpose.msra.mxu0 0.0
    %5525 = vmatprep.subr.mxu0 0.0
    %5526 = vmatpush1.xpose.msra.mxu0 0.0
    %5527 = vmatprep.subr.mxu0 0.0
    %5528 = vmatpush1.xpose.msra.mxu0 0.0
    %5529 = vmatprep.subr.mxu0 0.0
    %5530 = vmatpush1.xpose.msra.mxu0 0.0
    %5531 = vmatprep.subr.mxu0 0.0
    %5532 = vmatpush1.xpose.msra.mxu0 0.0
    %5533 = vmatprep.subr.mxu0 0.0
    %5534 = vmatpush1.xpose.msra.mxu0 0.0
    %5535 = vmatprep.subr.mxu0 0.0
    %5536 = vmatpush1.xpose.msra.mxu0 0.0
    %5537 = vmatprep.subr.mxu0 0.0
    %5538 = vmatpush1.xpose.msra.mxu0 0.0
    %5539 = vmatprep.mubr.f32.mxu0 0.0
    %5540 = vmatmul.mubr.f32.gmra.mrb[0].mxu0 %v5473
    %v5541 = vpop.f32.mrb[0].mxu0
    %v5542 = vadd.f32 0.0, %v5541
    %v5543 = vpop.f32.mrb[0].mxu0
    %5544 = vdwg.mxu0
    %v5545 = vlaneseq
    %v5546 = vshrl.u32 %v5545, 7
    %v5547 = vsub.s32 0, %v5546
    %v5548 = vrot.slane %v5455, %v5547
    %5549 = vrot.lane.b32.xlu0 %v5548, 32
    %v5550 = vpop.permute.xlu0 %5549
    %v5551 = vsel %vm291, %v5550, 0
    %5553 = vmatprep.subr.mxu0 0.0
    %5554 = vmatpush1.xpose.msra.mxu0 %v537
    %5555 = vmatprep.subr.mxu0 0.0
    %5556 = vmatpush1.xpose.msra.mxu0 0.0
    %5557 = vmatprep.subr.mxu0 0.0
    %5558 = vmatpush1.xpose.msra.mxu0 0.0
    %5559 = vmatprep.subr.mxu0 0.0
    %5560 = vmatpush1.xpose.msra.mxu0 0.0
    %5561 = vmatprep.subr.mxu0 0.0
    %5562 = vmatpush1.xpose.msra.mxu0 0.0
    %5563 = vmatprep.subr.mxu0 0.0
    %5564 = vmatpush1.xpose.msra.mxu0 0.0
    %5565 = vmatprep.subr.mxu0 0.0
    %5566 = vmatpush1.xpose.msra.mxu0 0.0
    %5567 = vmatprep.subr.mxu0 0.0
    %5568 = vmatpush1.xpose.msra.mxu0 0.0
    %5569 = vmatprep.subr.mxu0 0.0
    %5570 = vmatpush1.xpose.msra.mxu0 0.0
    %5571 = vmatprep.subr.mxu0 0.0
    %5572 = vmatpush1.xpose.msra.mxu0 0.0
    %5573 = vmatprep.subr.mxu0 0.0
    %5574 = vmatpush1.xpose.msra.mxu0 0.0
    %5575 = vmatprep.subr.mxu0 0.0
    %5576 = vmatpush1.xpose.msra.mxu0 0.0
    %5577 = vmatprep.subr.mxu0 0.0
    %5578 = vmatpush1.xpose.msra.mxu0 0.0
    %5579 = vmatprep.subr.mxu0 0.0
    %5580 = vmatpush1.xpose.msra.mxu0 0.0
    %5581 = vmatprep.subr.mxu0 0.0
    %5582 = vmatpush1.xpose.msra.mxu0 0.0
    %5583 = vmatprep.subr.mxu0 0.0
    %5584 = vmatpush1.xpose.msra.mxu0 0.0
    %5585 = vmatprep.subr.mxu0 0.0
    %5586 = vmatpush1.xpose.msra.mxu0 0.0
    %5587 = vmatprep.subr.mxu0 0.0
    %5588 = vmatpush1.xpose.msra.mxu0 0.0
    %5589 = vmatprep.subr.mxu0 0.0
    %5590 = vmatpush1.xpose.msra.mxu0 0.0
    %5591 = vmatprep.subr.mxu0 0.0
    %5592 = vmatpush1.xpose.msra.mxu0 0.0
    %5593 = vmatprep.subr.mxu0 0.0
    %5594 = vmatpush1.xpose.msra.mxu0 0.0
    %5595 = vmatprep.subr.mxu0 0.0
    %5596 = vmatpush1.xpose.msra.mxu0 0.0
    %5597 = vmatprep.subr.mxu0 0.0
    %5598 = vmatpush1.xpose.msra.mxu0 0.0
    %5599 = vmatprep.subr.mxu0 0.0
    %5600 = vmatpush1.xpose.msra.mxu0 0.0
    %5601 = vmatprep.subr.mxu0 0.0
    %5602 = vmatpush1.xpose.msra.mxu0 0.0
    %5603 = vmatprep.subr.mxu0 0.0
    %5604 = vmatpush1.xpose.msra.mxu0 0.0
    %5605 = vmatprep.subr.mxu0 0.0
    %5606 = vmatpush1.xpose.msra.mxu0 0.0
    %5607 = vmatprep.subr.mxu0 0.0
    %5608 = vmatpush1.xpose.msra.mxu0 0.0
    %5609 = vmatprep.subr.mxu0 0.0
    %5610 = vmatpush1.xpose.msra.mxu0 0.0
    %5611 = vmatprep.subr.mxu0 0.0
    %5612 = vmatpush1.xpose.msra.mxu0 0.0
    %5613 = vmatprep.subr.mxu0 0.0
    %5614 = vmatpush1.xpose.msra.mxu0 0.0
    %5615 = vmatprep.subr.mxu0 0.0
    %5616 = vmatpush1.xpose.msra.mxu0 0.0
    %5617 = vmatprep.mubr.f32.mxu0 0.0
    %5618 = vmatmul.mubr.f32.gmra.mrb[0].mxu0 %v5551
    %v5619 = vpop.f32.mrb[0].mxu0
    %v5620 = vadd.f32 0.0, %v5619
    %v5621 = vpop.f32.mrb[0].mxu0
    %5622 = vdwg.mxu0
    %v5623 = vlaneseq
    %v5624 = vshrl.u32 %v5623, 7
    %v5625 = vsub.s32 0, %v5624
    %v5626 = vrot.slane %v5463, %v5625
    %5627 = vrot.lane.b32.xlu0 %v5626, 32
    %v5628 = vpop.permute.xlu0 %5627
    %v5629 = vsel %vm291, %v5628, 0
    %5631 = vmatprep.subr.mxu0 0.0
    %5632 = vmatpush1.xpose.msra.mxu0 %v618
    %5633 = vmatprep.subr.mxu0 0.0
    %5634 = vmatpush1.xpose.msra.mxu0 0.0
    %5635 = vmatprep.subr.mxu0 0.0
    %5636 = vmatpush1.xpose.msra.mxu0 0.0
    %5637 = vmatprep.subr.mxu0 0.0
    %5638 = vmatpush1.xpose.msra.mxu0 0.0
    %5639 = vmatprep.subr.mxu0 0.0
    %5640 = vmatpush1.xpose.msra.mxu0 0.0
    %5641 = vmatprep.subr.mxu0 0.0
    %5642 = vmatpush1.xpose.msra.mxu0 0.0
    %5643 = vmatprep.subr.mxu0 0.0
    %5644 = vmatpush1.xpose.msra.mxu0 0.0
    %5645 = vmatprep.subr.mxu0 0.0
    %5646 = vmatpush1.xpose.msra.mxu0 0.0
    %5647 = vmatprep.subr.mxu0 0.0
    %5648 = vmatpush1.xpose.msra.mxu0 0.0
    %5649 = vmatprep.subr.mxu0 0.0
    %5650 = vmatpush1.xpose.msra.mxu0 0.0
    %5651 = vmatprep.subr.mxu0 0.0
    %5652 = vmatpush1.xpose.msra.mxu0 0.0
    %5653 = vmatprep.subr.mxu0 0.0
    %5654 = vmatpush1.xpose.msra.mxu0 0.0
    %5655 = vmatprep.subr.mxu0 0.0
    %5656 = vmatpush1.xpose.msra.mxu0 0.0
    %5657 = vmatprep.subr.mxu0 0.0
    %5658 = vmatpush1.xpose.msra.mxu0 0.0
    %5659 = vmatprep.subr.mxu0 0.0
    %5660 = vmatpush1.xpose.msra.mxu0 0.0
    %5661 = vmatprep.subr.mxu0 0.0
    %5662 = vmatpush1.xpose.msra.mxu0 0.0
    %5663 = vmatprep.subr.mxu0 0.0
    %5664 = vmatpush1.xpose.msra.mxu0 0.0
    %5665 = vmatprep.subr.mxu0 0.0
    %5666 = vmatpush1.xpose.msra.mxu0 0.0
    %5667 = vmatprep.subr.mxu0 0.0
    %5668 = vmatpush1.xpose.msra.mxu0 0.0
    %5669 = vmatprep.subr.mxu0 0.0
    %5670 = vmatpush1.xpose.msra.mxu0 0.0
    %5671 = vmatprep.subr.mxu0 0.0
    %5672 = vmatpush1.xpose.msra.mxu0 0.0
    %5673 = vmatprep.subr.mxu0 0.0
    %5674 = vmatpush1.xpose.msra.mxu0 0.0
    %5675 = vmatprep.subr.mxu0 0.0
    %5676 = vmatpush1.xpose.msra.mxu0 0.0
    %5677 = vmatprep.subr.mxu0 0.0
    %5678 = vmatpush1.xpose.msra.mxu0 0.0
    %5679 = vmatprep.subr.mxu0 0.0
    %5680 = vmatpush1.xpose.msra.mxu0 0.0
    %5681 = vmatprep.subr.mxu0 0.0
    %5682 = vmatpush1.xpose.msra.mxu0 0.0
    %5683 = vmatprep.subr.mxu0 0.0
    %5684 = vmatpush1.xpose.msra.mxu0 0.0
    %5685 = vmatprep.subr.mxu0 0.0
    %5686 = vmatpush1.xpose.msra.mxu0 0.0
    %5687 = vmatprep.subr.mxu0 0.0
    %5688 = vmatpush1.xpose.msra.mxu0 0.0
    %5689 = vmatprep.subr.mxu0 0.0
    %5690 = vmatpush1.xpose.msra.mxu0 0.0
    %5691 = vmatprep.subr.mxu0 0.0
    %5692 = vmatpush1.xpose.msra.mxu0 0.0
    %5693 = vmatprep.subr.mxu0 0.0
    %5694 = vmatpush1.xpose.msra.mxu0 0.0
    %5695 = vmatprep.mubr.f32.mxu0 0.0
    %5696 = vmatmul.mubr.f32.gmra.mrb[0].mxu0 %v5629
    %v5697 = vpop.f32.mrb[0].mxu0
    %v5698 = vadd.f32 0.0, %v5697
    %v5699 = vpop.f32.mrb[0].mxu0
    %5700 = vdwg.mxu0
    %v5701 = vlaneseq
    %v5702 = vshrl.u32 %v5701, 7
    %v5703 = vsub.s32 0, %v5702
    %v5704 = vrot.slane %v5465, %v5703
    %5705 = vrot.lane.b32.xlu0 %v5704, 32
    %v5706 = vpop.permute.xlu0 %5705
    %v5707 = vsel %vm291, %v5706, 0
    %5709 = vmatprep.subr.mxu0 0.0
    %5710 = vmatpush1.xpose.msra.mxu0 %v699
    %5711 = vmatprep.subr.mxu0 0.0
    %5712 = vmatpush1.xpose.msra.mxu0 0.0
    %5713 = vmatprep.subr.mxu0 0.0
    %5714 = vmatpush1.xpose.msra.mxu0 0.0
    %5715 = vmatprep.subr.mxu0 0.0
    %5716 = vmatpush1.xpose.msra.mxu0 0.0
    %5717 = vmatprep.subr.mxu0 0.0
    %5718 = vmatpush1.xpose.msra.mxu0 0.0
    %5719 = vmatprep.subr.mxu0 0.0
    %5720 = vmatpush1.xpose.msra.mxu0 0.0
    %5721 = vmatprep.subr.mxu0 0.0
    %5722 = vmatpush1.xpose.msra.mxu0 0.0
    %5723 = vmatprep.subr.mxu0 0.0
    %5724 = vmatpush1.xpose.msra.mxu0 0.0
    %5725 = vmatprep.subr.mxu0 0.0
    %5726 = vmatpush1.xpose.msra.mxu0 0.0
    %5727 = vmatprep.subr.mxu0 0.0
    %5728 = vmatpush1.xpose.msra.mxu0 0.0
    %5729 = vmatprep.subr.mxu0 0.0
    %5730 = vmatpush1.xpose.msra.mxu0 0.0
    %5731 = vmatprep.subr.mxu0 0.0
    %5732 = vmatpush1.xpose.msra.mxu0 0.0
    %5733 = vmatprep.subr.mxu0 0.0
    %5734 = vmatpush1.xpose.msra.mxu0 0.0
    %5735 = vmatprep.subr.mxu0 0.0
    %5736 = vmatpush1.xpose.msra.mxu0 0.0
    %5737 = vmatprep.subr.mxu0 0.0
    %5738 = vmatpush1.xpose.msra.mxu0 0.0
    %5739 = vmatprep.subr.mxu0 0.0
    %5740 = vmatpush1.xpose.msra.mxu0 0.0
    %5741 = vmatprep.subr.mxu0 0.0
    %5742 = vmatpush1.xpose.msra.mxu0 0.0
    %5743 = vmatprep.subr.mxu0 0.0
    %5744 = vmatpush1.xpose.msra.mxu0 0.0
    %5745 = vmatprep.subr.mxu0 0.0
    %5746 = vmatpush1.xpose.msra.mxu0 0.0
    %5747 = vmatprep.subr.mxu0 0.0
    %5748 = vmatpush1.xpose.msra.mxu0 0.0
    %5749 = vmatprep.subr.mxu0 0.0
    %5750 = vmatpush1.xpose.msra.mxu0 0.0
    %5751 = vmatprep.subr.mxu0 0.0
    %5752 = vmatpush1.xpose.msra.mxu0 0.0
    %5753 = vmatprep.subr.mxu0 0.0
    %5754 = vmatpush1.xpose.msra.mxu0 0.0
    %5755 = vmatprep.subr.mxu0 0.0
    %5756 = vmatpush1.xpose.msra.mxu0 0.0
    %5757 = vmatprep.subr.mxu0 0.0
    %5758 = vmatpush1.xpose.msra.mxu0 0.0
    %5759 = vmatprep.subr.mxu0 0.0
    %5760 = vmatpush1.xpose.msra.mxu0 0.0
    %5761 = vmatprep.subr.mxu0 0.0
    %5762 = vmatpush1.xpose.msra.mxu0 0.0
    %5763 = vmatprep.subr.mxu0 0.0
    %5764 = vmatpush1.xpose.msra.mxu0 0.0
    %5765 = vmatprep.subr.mxu0 0.0
    %5766 = vmatpush1.xpose.msra.mxu0 0.0
    %5767 = vmatprep.subr.mxu0 0.0
    %5768 = vmatpush1.xpose.msra.mxu0 0.0
    %5769 = vmatprep.subr.mxu0 0.0
    %5770 = vmatpush1.xpose.msra.mxu0 0.0
    %5771 = vmatprep.subr.mxu0 0.0
    %5772 = vmatpush1.xpose.msra.mxu0 0.0
    %5773 = vmatprep.mubr.f32.mxu0 0.0
    %5774 = vmatmul.mubr.f32.gmra.mrb[0].mxu0 %v5707
    %v5775 = vpop.f32.mrb[0].mxu0
    %v5776 = vadd.f32 0.0, %v5775
    %v5777 = vpop.f32.mrb[0].mxu0
    %5778 = vdwg.mxu0
    %v5779 = vlaneseq
    %v5780 = vshrl.u32 %v5779, 7
    %v5781 = vsub.s32 0, %v5780
    %v5782 = vrot.slane %v5448, %v5781
    %5783 = vrot.lane.b32.xlu0 %v5782, 32
    %v5784 = vpop.permute.xlu0 %5783
    %v5785 = vsel %vm291, %v5784, 0
    %5787 = vmatprep.subr.mxu0 0.0
    %5788 = vmatpush1.xpose.msra.mxu0 %v780
    %5789 = vmatprep.subr.mxu0 0.0
    %5790 = vmatpush1.xpose.msra.mxu0 0.0
    %5791 = vmatprep.subr.mxu0 0.0
    %5792 = vmatpush1.xpose.msra.mxu0 0.0
    %5793 = vmatprep.subr.mxu0 0.0
    %5794 = vmatpush1.xpose.msra.mxu0 0.0
    %5795 = vmatprep.subr.mxu0 0.0
    %5796 = vmatpush1.xpose.msra.mxu0 0.0
    %5797 = vmatprep.subr.mxu0 0.0
    %5798 = vmatpush1.xpose.msra.mxu0 0.0
    %5799 = vmatprep.subr.mxu0 0.0
    %5800 = vmatpush1.xpose.msra.mxu0 0.0
    %5801 = vmatprep.subr.mxu0 0.0
    %5802 = vmatpush1.xpose.msra.mxu0 0.0
    %5803 = vmatprep.subr.mxu0 0.0
    %5804 = vmatpush1.xpose.msra.mxu0 0.0
    %5805 = vmatprep.subr.mxu0 0.0
    %5806 = vmatpush1.xpose.msra.mxu0 0.0
    %5807 = vmatprep.subr.mxu0 0.0
    %5808 = vmatpush1.xpose.msra.mxu0 0.0
    %5809 = vmatprep.subr.mxu0 0.0
    %5810 = vmatpush1.xpose.msra.mxu0 0.0
    %5811 = vmatprep.subr.mxu0 0.0
    %5812 = vmatpush1.xpose.msra.mxu0 0.0
    %5813 = vmatprep.subr.mxu0 0.0
    %5814 = vmatpush1.xpose.msra.mxu0 0.0
    %5815 = vmatprep.subr.mxu0 0.0
    %5816 = vmatpush1.xpose.msra.mxu0 0.0
    %5817 = vmatprep.subr.mxu0 0.0
    %5818 = vmatpush1.xpose.msra.mxu0 0.0
    %5819 = vmatprep.subr.mxu0 0.0
    %5820 = vmatpush1.xpose.msra.mxu0 0.0
    %5821 = vmatprep.subr.mxu0 0.0
    %5822 = vmatpush1.xpose.msra.mxu0 0.0
    %5823 = vmatprep.subr.mxu0 0.0
    %5824 = vmatpush1.xpose.msra.mxu0 0.0
    %5825 = vmatprep.subr.mxu0 0.0
    %5826 = vmatpush1.xpose.msra.mxu0 0.0
    %5827 = vmatprep.subr.mxu0 0.0
    %5828 = vmatpush1.xpose.msra.mxu0 0.0
    %5829 = vmatprep.subr.mxu0 0.0
    %5830 = vmatpush1.xpose.msra.mxu0 0.0
    %5831 = vmatprep.subr.mxu0 0.0
    %5832 = vmatpush1.xpose.msra.mxu0 0.0
    %5833 = vmatprep.subr.mxu0 0.0
    %5834 = vmatpush1.xpose.msra.mxu0 0.0
    %5835 = vmatprep.subr.mxu0 0.0
    %5836 = vmatpush1.xpose.msra.mxu0 0.0
    %5837 = vmatprep.subr.mxu0 0.0
    %5838 = vmatpush1.xpose.msra.mxu0 0.0
    %5839 = vmatprep.subr.mxu0 0.0
    %5840 = vmatpush1.xpose.msra.mxu0 0.0
    %5841 = vmatprep.subr.mxu0 0.0
    %5842 = vmatpush1.xpose.msra.mxu0 0.0
    %5843 = vmatprep.subr.mxu0 0.0
    %5844 = vmatpush1.xpose.msra.mxu0 0.0
    %5845 = vmatprep.subr.mxu0 0.0
    %5846 = vmatpush1.xpose.msra.mxu0 0.0
    %5847 = vmatprep.subr.mxu0 0.0
    %5848 = vmatpush1.xpose.msra.mxu0 0.0
    %5849 = vmatprep.subr.mxu0 0.0
    %5850 = vmatpush1.xpose.msra.mxu0 0.0
    %5851 = vmatprep.mubr.f32.mxu0 0.0
    %5852 = vmatmul.mubr.f32.gmra.mrb[0].mxu0 %v5785
    %v5853 = vpop.f32.mrb[0].mxu0
    %v5854 = vadd.f32 0.0, %v5853
    %v5855 = vpop.f32.mrb[0].mxu0
    %5856 = vdwg.mxu0
    %v5857 = vlaneseq
    %v5858 = vshrl.u32 %v5857, 7
    %v5859 = vsub.s32 0, %v5858
    %v5860 = vrot.slane %v5462, %v5859
    %5861 = vrot.lane.b32.xlu0 %v5860, 32
    %v5862 = vpop.permute.xlu0 %5861
    %v5863 = vsel %vm291, %v5862, 0
    %5865 = vmatprep.subr.mxu0 0.0
    %5866 = vmatpush1.xpose.msra.mxu0 %v861
    %5867 = vmatprep.subr.mxu0 0.0
    %5868 = vmatpush1.xpose.msra.mxu0 0.0
    %5869 = vmatprep.subr.mxu0 0.0
    %5870 = vmatpush1.xpose.msra.mxu0 0.0
    %5871 = vmatprep.subr.mxu0 0.0
    %5872 = vmatpush1.xpose.msra.mxu0 0.0
    %5873 = vmatprep.subr.mxu0 0.0
    %5874 = vmatpush1.xpose.msra.mxu0 0.0
    %5875 = vmatprep.subr.mxu0 0.0
    %5876 = vmatpush1.xpose.msra.mxu0 0.0
    %5877 = vmatprep.subr.mxu0 0.0
    %5878 = vmatpush1.xpose.msra.mxu0 0.0
    %5879 = vmatprep.subr.mxu0 0.0
    %5880 = vmatpush1.xpose.msra.mxu0 0.0
    %5881 = vmatprep.subr.mxu0 0.0
    %5882 = vmatpush1.xpose.msra.mxu0 0.0
    %5883 = vmatprep.subr.mxu0 0.0
    %5884 = vmatpush1.xpose.msra.mxu0 0.0
    %5885 = vmatprep.subr.mxu0 0.0
    %5886 = vmatpush1.xpose.msra.mxu0 0.0
    %5887 = vmatprep.subr.mxu0 0.0
    %5888 = vmatpush1.xpose.msra.mxu0 0.0
    %5889 = vmatprep.subr.mxu0 0.0
    %5890 = vmatpush1.xpose.msra.mxu0 0.0
    %5891 = vmatprep.subr.mxu0 0.0
    %5892 = vmatpush1.xpose.msra.mxu0 0.0
    %5893 = vmatprep.subr.mxu0 0.0
    %5894 = vmatpush1.xpose.msra.mxu0 0.0
    %5895 = vmatprep.subr.mxu0 0.0
    %5896 = vmatpush1.xpose.msra.mxu0 0.0
    %5897 = vmatprep.subr.mxu0 0.0
    %5898 = vmatpush1.xpose.msra.mxu0 0.0
    %5899 = vmatprep.subr.mxu0 0.0
    %5900 = vmatpush1.xpose.msra.mxu0 0.0
    %5901 = vmatprep.subr.mxu0 0.0
    %5902 = vmatpush1.xpose.msra.mxu0 0.0
    %5903 = vmatprep.subr.mxu0 0.0
    %5904 = vmatpush1.xpose.msra.mxu0 0.0
    %5905 = vmatprep.subr.mxu0 0.0
    %5906 = vmatpush1.xpose.msra.mxu0 0.0
    %5907 = vmatprep.subr.mxu0 0.0
    %5908 = vmatpush1.xpose.msra.mxu0 0.0
    %5909 = vmatprep.subr.mxu0 0.0
    %5910 = vmatpush1.xpose.msra.mxu0 0.0
    %5911 = vmatprep.subr.mxu0 0.0
    %5912 = vmatpush1.xpose.msra.mxu0 0.0
    %5913 = vmatprep.subr.mxu0 0.0
    %5914 = vmatpush1.xpose.msra.mxu0 0.0
    %5915 = vmatprep.subr.mxu0 0.0
    %5916 = vmatpush1.xpose.msra.mxu0 0.0
    %5917 = vmatprep.subr.mxu0 0.0
    %5918 = vmatpush1.xpose.msra.mxu0 0.0
    %5919 = vmatprep.subr.mxu0 0.0
    %5920 = vmatpush1.xpose.msra.mxu0 0.0
    %5921 = vmatprep.subr.mxu0 0.0
    %5922 = vmatpush1.xpose.msra.mxu0 0.0
    %5923 = vmatprep.subr.mxu0 0.0
    %5924 = vmatpush1.xpose.msra.mxu0 0.0
    %5925 = vmatprep.subr.mxu0 0.0
    %5926 = vmatpush1.xpose.msra.mxu0 0.0
    %5927 = vmatprep.subr.mxu0 0.0
    %5928 = vmatpush1.xpose.msra.mxu0 0.0
    %5929 = vmatprep.mubr.f32.mxu0 0.0
    %5930 = vmatmul.mubr.f32.gmra.mrb[0].mxu0 %v5863
    %v5931 = vpop.f32.mrb[0].mxu0
    %v5932 = vadd.f32 0.0, %v5931
    %v5933 = vpop.f32.mrb[0].mxu0
    %5934 = vdwg.mxu0
    %v5935 = vlaneseq
    %v5936 = vshrl.u32 %v5935, 7
    %v5937 = vsub.s32 0, %v5936
    %v5938 = vrot.slane %v5464, %v5937
    %5939 = vrot.lane.b32.xlu0 %v5938, 32
    %v5940 = vpop.permute.xlu0 %5939
    %v5941 = vsel %vm291, %v5940, 0
    %5943 = vmatprep.subr.mxu0 0.0
    %5944 = vmatpush1.xpose.msra.mxu0 %v942
    %5945 = vmatprep.subr.mxu0 0.0
    %5946 = vmatpush1.xpose.msra.mxu0 0.0
    %5947 = vmatprep.subr.mxu0 0.0
    %5948 = vmatpush1.xpose.msra.mxu0 0.0
    %5949 = vmatprep.subr.mxu0 0.0
    %5950 = vmatpush1.xpose.msra.mxu0 0.0
    %5951 = vmatprep.subr.mxu0 0.0
    %5952 = vmatpush1.xpose.msra.mxu0 0.0
    %5953 = vmatprep.subr.mxu0 0.0
    %5954 = vmatpush1.xpose.msra.mxu0 0.0
    %5955 = vmatprep.subr.mxu0 0.0
    %5956 = vmatpush1.xpose.msra.mxu0 0.0
    %5957 = vmatprep.subr.mxu0 0.0
    %5958 = vmatpush1.xpose.msra.mxu0 0.0
    %5959 = vmatprep.subr.mxu0 0.0
    %5960 = vmatpush1.xpose.msra.mxu0 0.0
    %5961 = vmatprep.subr.mxu0 0.0
    %5962 = vmatpush1.xpose.msra.mxu0 0.0
    %5963 = vmatprep.subr.mxu0 0.0
    %5964 = vmatpush1.xpose.msra.mxu0 0.0
    %5965 = vmatprep.subr.mxu0 0.0
    %5966 = vmatpush1.xpose.msra.mxu0 0.0
    %5967 = vmatprep.subr.mxu0 0.0
    %5968 = vmatpush1.xpose.msra.mxu0 0.0
    %5969 = vmatprep.subr.mxu0 0.0
    %5970 = vmatpush1.xpose.msra.mxu0 0.0
    %5971 = vmatprep.subr.mxu0 0.0
    %5972 = vmatpush1.xpose.msra.mxu0 0.0
    %5973 = vmatprep.subr.mxu0 0.0
    %5974 = vmatpush1.xpose.msra.mxu0 0.0
    %5975 = vmatprep.subr.mxu0 0.0
    %5976 = vmatpush1.xpose.msra.mxu0 0.0
    %5977 = vmatprep.subr.mxu0 0.0
    %5978 = vmatpush1.xpose.msra.mxu0 0.0
    %5979 = vmatprep.subr.mxu0 0.0
    %5980 = vmatpush1.xpose.msra.mxu0 0.0
    %5981 = vmatprep.subr.mxu0 0.0
    %5982 = vmatpush1.xpose.msra.mxu0 0.0
    %5983 = vmatprep.subr.mxu0 0.0
    %5984 = vmatpush1.xpose.msra.mxu0 0.0
    %5985 = vmatprep.subr.mxu0 0.0
    %5986 = vmatpush1.xpose.msra.mxu0 0.0
    %5987 = vmatprep.subr.mxu0 0.0
    %5988 = vmatpush1.xpose.msra.mxu0 0.0
    %5989 = vmatprep.subr.mxu0 0.0
    %5990 = vmatpush1.xpose.msra.mxu0 0.0
    %5991 = vmatprep.subr.mxu0 0.0
    %5992 = vmatpush1.xpose.msra.mxu0 0.0
    %5993 = vmatprep.subr.mxu0 0.0
    %5994 = vmatpush1.xpose.msra.mxu0 0.0
    %5995 = vmatprep.subr.mxu0 0.0
    %5996 = vmatpush1.xpose.msra.mxu0 0.0
    %5997 = vmatprep.subr.mxu0 0.0
    %5998 = vmatpush1.xpose.msra.mxu0 0.0
    %5999 = vmatprep.subr.mxu0 0.0
    %6000 = vmatpush1.xpose.msra.mxu0 0.0
    %6001 = vmatprep.subr.mxu0 0.0
    %6002 = vmatpush1.xpose.msra.mxu0 0.0
    %6003 = vmatprep.subr.mxu0 0.0
    %6004 = vmatpush1.xpose.msra.mxu0 0.0
    %6005 = vmatprep.subr.mxu0 0.0
    %6006 = vmatpush1.xpose.msra.mxu0 0.0
    %6007 = vmatprep.mubr.f32.mxu0 0.0
    %6008 = vmatmul.mubr.f32.gmra.mrb[0].mxu0 %v5941
    %v6009 = vpop.f32.mrb[0].mxu0
    %v6010 = vadd.f32 0.0, %v6009
    %v6011 = vpop.f32.mrb[0].mxu0
    %6012 = vdwg.mxu0
    %v6013 = vlaneseq
    %v6014 = vshrl.u32 %v6013, 7
    %v6015 = vsub.s32 0, %v6014
    %v6016 = vrot.slane %v5466, %v6015
    %6017 = vrot.lane.b32.xlu0 %v6016, 32
    %v6018 = vpop.permute.xlu0 %6017
    %v6019 = vsel %vm291, %v6018, 0
    %6021 = vmatprep.subr.mxu0 0.0
    %6022 = vmatpush1.xpose.msra.mxu0 %v1023
    %6023 = vmatprep.subr.mxu0 0.0
    %6024 = vmatpush1.xpose.msra.mxu0 0.0
    %6025 = vmatprep.subr.mxu0 0.0
    %6026 = vmatpush1.xpose.msra.mxu0 0.0
    %6027 = vmatprep.subr.mxu0 0.0
    %6028 = vmatpush1.xpose.msra.mxu0 0.0
    %6029 = vmatprep.subr.mxu0 0.0
    %6030 = vmatpush1.xpose.msra.mxu0 0.0
    %6031 = vmatprep.subr.mxu0 0.0
    %6032 = vmatpush1.xpose.msra.mxu0 0.0
    %6033 = vmatprep.subr.mxu0 0.0
    %6034 = vmatpush1.xpose.msra.mxu0 0.0
    %6035 = vmatprep.subr.mxu0 0.0
    %6036 = vmatpush1.xpose.msra.mxu0 0.0
    %6037 = vmatprep.subr.mxu0 0.0
    %6038 = vmatpush1.xpose.msra.mxu0 0.0
    %6039 = vmatprep.subr.mxu0 0.0
    %6040 = vmatpush1.xpose.msra.mxu0 0.0
    %6041 = vmatprep.subr.mxu0 0.0
    %6042 = vmatpush1.xpose.msra.mxu0 0.0
    %6043 = vmatprep.subr.mxu0 0.0
    %6044 = vmatpush1.xpose.msra.mxu0 0.0
    %6045 = vmatprep.subr.mxu0 0.0
    %6046 = vmatpush1.xpose.msra.mxu0 0.0
    %6047 = vmatprep.subr.mxu0 0.0
    %6048 = vmatpush1.xpose.msra.mxu0 0.0
    %6049 = vmatprep.subr.mxu0 0.0
    %6050 = vmatpush1.xpose.msra.mxu0 0.0
    %6051 = vmatprep.subr.mxu0 0.0
    %6052 = vmatpush1.xpose.msra.mxu0 0.0
    %6053 = vmatprep.subr.mxu0 0.0
    %6054 = vmatpush1.xpose.msra.mxu0 0.0
    %6055 = vmatprep.subr.mxu0 0.0
    %6056 = vmatpush1.xpose.msra.mxu0 0.0
    %6057 = vmatprep.subr.mxu0 0.0
    %6058 = vmatpush1.xpose.msra.mxu0 0.0
    %6059 = vmatprep.subr.mxu0 0.0
    %6060 = vmatpush1.xpose.msra.mxu0 0.0
    %6061 = vmatprep.subr.mxu0 0.0
    %6062 = vmatpush1.xpose.msra.mxu0 0.0
    %6063 = vmatprep.subr.mxu0 0.0
    %6064 = vmatpush1.xpose.msra.mxu0 0.0
    %6065 = vmatprep.subr.mxu0 0.0
    %6066 = vmatpush1.xpose.msra.mxu0 0.0
    %6067 = vmatprep.subr.mxu0 0.0
    %6068 = vmatpush1.xpose.msra.mxu0 0.0
    %6069 = vmatprep.subr.mxu0 0.0
    %6070 = vmatpush1.xpose.msra.mxu0 0.0
    %6071 = vmatprep.subr.mxu0 0.0
    %6072 = vmatpush1.xpose.msra.mxu0 0.0
    %6073 = vmatprep.subr.mxu0 0.0
    %6074 = vmatpush1.xpose.msra.mxu0 0.0
    %6075 = vmatprep.subr.mxu0 0.0
    %6076 = vmatpush1.xpose.msra.mxu0 0.0
    %6077 = vmatprep.subr.mxu0 0.0
    %6078 = vmatpush1.xpose.msra.mxu0 0.0
    %6079 = vmatprep.subr.mxu0 0.0
    %6080 = vmatpush1.xpose.msra.mxu0 0.0
    %6081 = vmatprep.subr.mxu0 0.0
    %6082 = vmatpush1.xpose.msra.mxu0 0.0
    %6083 = vmatprep.subr.mxu0 0.0
    %6084 = vmatpush1.xpose.msra.mxu0 0.0
    %6085 = vmatprep.mubr.f32.mxu0 0.0
    %6086 = vmatmul.mubr.f32.gmra.mrb[0].mxu0 %v6019
    %v6087 = vpop.f32.mrb[0].mxu0
    %v6088 = vadd.f32 0.0, %v6087
    %v6089 = vpop.f32.mrb[0].mxu0
    %6090 = vdwg.mxu0
    %v6091 = vsel %vm1095, %v5542, -inf
    %6092 = vmax.xlane.f32.xlu0 %v6091
    %v6093 = vpop.xlane.xlu0 %6092
    %v6094 = vsel %vm1095, %v5620, -inf
    %6095 = vmax.xlane.f32.xlu0 %v6094
    %v6096 = vpop.xlane.xlu0 %6095
    %v6097 = vsel %vm1095, %v5698, -inf
    %6098 = vmax.xlane.f32.xlu0 %v6097
    %v6099 = vpop.xlane.xlu0 %6098
    %v6100 = vsel %vm1095, %v5776, -inf
    %6101 = vmax.xlane.f32.xlu0 %v6100
    %v6102 = vpop.xlane.xlu0 %6101
    %v6103 = vsel %vm1095, %v5854, -inf
    %6104 = vmax.xlane.f32.xlu0 %v6103
    %v6105 = vpop.xlane.xlu0 %6104
    %v6106 = vsel %vm1095, %v5932, -inf
    %6107 = vmax.xlane.f32.xlu0 %v6106
    %v6108 = vpop.xlane.xlu0 %6107
    %v6109 = vsel %vm1095, %v6010, -inf
    %6110 = vmax.xlane.f32.xlu0 %v6109
    %v6111 = vpop.xlane.xlu0 %6110
    %v6112 = vsel %vm1095, %v6088, -inf
    %6113 = vmax.xlane.f32.xlu0 %v6112
    %v6114 = vpop.xlane.xlu0 %6113
    %v6115 = vsub.f32 %v5542, %v6093
    %v6116 = vsub.f32 %v5620, %v6096
    %v6117 = vsub.f32 %v5698, %v6099
    %v6118 = vsub.f32 %v5776, %v6102
    %v6119 = vsub.f32 %v5854, %v6105
    %v6120 = vsub.f32 %v5932, %v6108
    %v6121 = vsub.f32 %v6010, %v6111
    %v6122 = vsub.f32 %v6088, %v6114
    %v6123 = vmul.f32 %v6115, 1.442695
    %v6124 = vpow.pop %v6123
    %v6125 = vmul.f32 %v6116, 1.442695
    %v6126 = vpow.pop %v6125
    %v6127 = vmul.f32 %v6117, 1.442695
    %v6128 = vpow.pop %v6127
    %v6129 = vmul.f32 %v6118, 1.442695
    %v6130 = vpow.pop %v6129
    %v6131 = vmul.f32 %v6119, 1.442695
    %v6132 = vpow.pop %v6131
    %v6133 = vmul.f32 %v6120, 1.442695
    %v6134 = vpow.pop %v6133
    %v6135 = vmul.f32 %v6121, 1.442695
    %v6136 = vpow.pop %v6135
    %v6137 = vmul.f32 %v6122, 1.442695
    %v6138 = vpow.pop %v6137
    %v6139 = vsel %vm1095, %v6124, 0.0
    %6140 = vadd.xlane.f32.xlu0 %v6139
    %v6141 = vpop.xlane.xlu0 %6140
    %v6142 = vsel %vm1095, %v6126, 0.0
    %6143 = vadd.xlane.f32.xlu0 %v6142
    %v6144 = vpop.xlane.xlu0 %6143
    %v6145 = vsel %vm1095, %v6128, 0.0
    %6146 = vadd.xlane.f32.xlu0 %v6145
    %v6147 = vpop.xlane.xlu0 %6146
    %v6148 = vsel %vm1095, %v6130, 0.0
    %6149 = vadd.xlane.f32.xlu0 %v6148
    %v6150 = vpop.xlane.xlu0 %6149
    %v6151 = vsel %vm1095, %v6132, 0.0
    %6152 = vadd.xlane.f32.xlu0 %v6151
    %v6153 = vpop.xlane.xlu0 %6152
    %v6154 = vsel %vm1095, %v6134, 0.0
    %6155 = vadd.xlane.f32.xlu0 %v6154
    %v6156 = vpop.xlane.xlu0 %6155
    %v6157 = vsel %vm1095, %v6136, 0.0
    %6158 = vadd.xlane.f32.xlu0 %v6157
    %v6159 = vpop.xlane.xlu0 %6158
    %v6160 = vsel %vm1095, %v6138, 0.0
    %6161 = vadd.xlane.f32.xlu0 %v6160
    %v6162 = vpop.xlane.xlu0 %6161
    %v6163 = vrcp.pop %v6141
    %v6164 = vrcp.pop %v6144
    %v6165 = vrcp.pop %v6147
    %v6166 = vrcp.pop %v6150
    %v6167 = vrcp.pop %v6153
    %v6168 = vrcp.pop %v6156
    %v6169 = vrcp.pop %v6159
    %v6170 = vrcp.pop %v6162
    %v6171 = vmul.f32 %v6141, %v6163
    %v6172 = vmul.f32 %v6144, %v6164
    %v6173 = vmul.f32 %v6147, %v6165
    %v6174 = vmul.f32 %v6150, %v6166
    %v6175 = vmul.f32 %v6153, %v6167
    %v6176 = vmul.f32 %v6156, %v6168
    %v6177 = vmul.f32 %v6159, %v6169
    %v6178 = vmul.f32 %v6162, %v6170
    %v6179 = vsub.f32 2.0, %v6171
    %v6180 = vsub.f32 2.0, %v6172
    %v6181 = vsub.f32 2.0, %v6173
    %v6182 = vsub.f32 2.0, %v6174
    %v6183 = vsub.f32 2.0, %v6175
    %v6184 = vsub.f32 2.0, %v6176
    %v6185 = vsub.f32 2.0, %v6177
    %v6186 = vsub.f32 2.0, %v6178
    %v6187 = vmul.f32 %v6163, %v6179
    %v6188 = vmul.f32 %v6164, %v6180
    %v6189 = vmul.f32 %v6165, %v6181
    %v6190 = vmul.f32 %v6166, %v6182
    %v6191 = vmul.f32 %v6167, %v6183
    %v6192 = vmul.f32 %v6168, %v6184
    %v6193 = vmul.f32 %v6169, %v6185
    %v6194 = vmul.f32 %v6170, %v6186
    %v6195 = vmul.f32 %v6124, %v6187
    %v6196 = vmul.f32 %v6126, %v6188
    %v6197 = vmul.f32 %v6128, %v6189
    %v6198 = vmul.f32 %v6130, %v6190
    %v6199 = vmul.f32 %v6132, %v6191
    %v6200 = vmul.f32 %v6134, %v6192
    %v6201 = vmul.f32 %v6136, %v6193
    %v6202 = vmul.f32 %v6138, %v6194
    %v6204 = vsel %vm1208, %v6195, 0
    %6206 = vmatprep.subr.mxu0 0.0
    %6207 = vmatpush1.msra.mxu0 %v241
    %6208 = vmatprep.subr.mxu0 0.0
    %6209 = vmatpush1.msra.mxu0 0.0
    %6210 = vmatprep.subr.mxu0 0.0
    %6211 = vmatpush1.msra.mxu0 0.0
    %6212 = vmatprep.subr.mxu0 0.0
    %6213 = vmatpush1.msra.mxu0 0.0
    %6214 = vmatprep.subr.mxu0 0.0
    %6215 = vmatpush1.msra.mxu0 0.0
    %6216 = vmatprep.subr.mxu0 0.0
    %6217 = vmatpush1.msra.mxu0 0.0
    %6218 = vmatprep.subr.mxu0 0.0
    %6219 = vmatpush1.msra.mxu0 0.0
    %6220 = vmatprep.subr.mxu0 0.0
    %6221 = vmatpush1.msra.mxu0 0.0
    %6222 = vmatprep.subr.mxu0 0.0
    %6223 = vmatpush1.msra.mxu0 0.0
    %6224 = vmatprep.subr.mxu0 0.0
    %6225 = vmatpush1.msra.mxu0 0.0
    %6226 = vmatprep.subr.mxu0 0.0
    %6227 = vmatpush1.msra.mxu0 0.0
    %6228 = vmatprep.subr.mxu0 0.0
    %6229 = vmatpush1.msra.mxu0 0.0
    %6230 = vmatprep.subr.mxu0 0.0
    %6231 = vmatpush1.msra.mxu0 0.0
    %6232 = vmatprep.subr.mxu0 0.0
    %6233 = vmatpush1.msra.mxu0 0.0
    %6234 = vmatprep.subr.mxu0 0.0
    %6235 = vmatpush1.msra.mxu0 0.0
    %6236 = vmatprep.subr.mxu0 0.0
    %6237 = vmatpush1.msra.mxu0 0.0
    %6238 = vmatprep.subr.mxu0 0.0
    %6239 = vmatpush1.msra.mxu0 0.0
    %6240 = vmatprep.subr.mxu0 0.0
    %6241 = vmatpush1.msra.mxu0 0.0
    %6242 = vmatprep.subr.mxu0 0.0
    %6243 = vmatpush1.msra.mxu0 0.0
    %6244 = vmatprep.subr.mxu0 0.0
    %6245 = vmatpush1.msra.mxu0 0.0
    %6246 = vmatprep.subr.mxu0 0.0
    %6247 = vmatpush1.msra.mxu0 0.0
    %6248 = vmatprep.subr.mxu0 0.0
    %6249 = vmatpush1.msra.mxu0 0.0
    %6250 = vmatprep.subr.mxu0 0.0
    %6251 = vmatpush1.msra.mxu0 0.0
    %6252 = vmatprep.subr.mxu0 0.0
    %6253 = vmatpush1.msra.mxu0 0.0
    %6254 = vmatprep.subr.mxu0 0.0
    %6255 = vmatpush1.msra.mxu0 0.0
    %6256 = vmatprep.subr.mxu0 0.0
    %6257 = vmatpush1.msra.mxu0 0.0
    %6258 = vmatprep.subr.mxu0 0.0
    %6259 = vmatpush1.msra.mxu0 0.0
    %6260 = vmatprep.subr.mxu0 0.0
    %6261 = vmatpush1.msra.mxu0 0.0
    %6262 = vmatprep.subr.mxu0 0.0
    %6263 = vmatpush1.msra.mxu0 0.0
    %6264 = vmatprep.subr.mxu0 0.0
    %6265 = vmatpush1.msra.mxu0 0.0
    %6266 = vmatprep.subr.mxu0 0.0
    %6267 = vmatpush1.msra.mxu0 0.0
    %6268 = vmatprep.subr.mxu0 0.0
    %6269 = vmatpush1.msra.mxu0 0.0
    %6270 = vmatprep.mubr.f32.mxu0 0.0
    %6271 = vmatmul.mubr.f32.gmra.mrb[0].mxu0 %v6204
    %v6272 = vpop.f32.mrb[0].mxu0
    %v6273 = vadd.f32 0.0, %v6272
    %v6274 = vpop.f32.mrb[0].mxu0
    %6275 = vdwg.mxu0
    %v6277 = vsel %vm1208, %v6196, 0
    %6279 = vmatprep.subr.mxu0 0.0
    %6280 = vmatpush1.msra.mxu0 %v242
    %6281 = vmatprep.subr.mxu0 0.0
    %6282 = vmatpush1.msra.mxu0 0.0
    %6283 = vmatprep.subr.mxu0 0.0
    %6284 = vmatpush1.msra.mxu0 0.0
    %6285 = vmatprep.subr.mxu0 0.0
    %6286 = vmatpush1.msra.mxu0 0.0
    %6287 = vmatprep.subr.mxu0 0.0
    %6288 = vmatpush1.msra.mxu0 0.0
    %6289 = vmatprep.subr.mxu0 0.0
    %6290 = vmatpush1.msra.mxu0 0.0
    %6291 = vmatprep.subr.mxu0 0.0
    %6292 = vmatpush1.msra.mxu0 0.0
    %6293 = vmatprep.subr.mxu0 0.0
    %6294 = vmatpush1.msra.mxu0 0.0
    %6295 = vmatprep.subr.mxu0 0.0
    %6296 = vmatpush1.msra.mxu0 0.0
    %6297 = vmatprep.subr.mxu0 0.0
    %6298 = vmatpush1.msra.mxu0 0.0
    %6299 = vmatprep.subr.mxu0 0.0
    %6300 = vmatpush1.msra.mxu0 0.0
    %6301 = vmatprep.subr.mxu0 0.0
    %6302 = vmatpush1.msra.mxu0 0.0
    %6303 = vmatprep.subr.mxu0 0.0
    %6304 = vmatpush1.msra.mxu0 0.0
    %6305 = vmatprep.subr.mxu0 0.0
    %6306 = vmatpush1.msra.mxu0 0.0
    %6307 = vmatprep.subr.mxu0 0.0
    %6308 = vmatpush1.msra.mxu0 0.0
    %6309 = vmatprep.subr.mxu0 0.0
    %6310 = vmatpush1.msra.mxu0 0.0
    %6311 = vmatprep.subr.mxu0 0.0
    %6312 = vmatpush1.msra.mxu0 0.0
    %6313 = vmatprep.subr.mxu0 0.0
    %6314 = vmatpush1.msra.mxu0 0.0
    %6315 = vmatprep.subr.mxu0 0.0
    %6316 = vmatpush1.msra.mxu0 0.0
    %6317 = vmatprep.subr.mxu0 0.0
    %6318 = vmatpush1.msra.mxu0 0.0
    %6319 = vmatprep.subr.mxu0 0.0
    %6320 = vmatpush1.msra.mxu0 0.0
    %6321 = vmatprep.subr.mxu0 0.0
    %6322 = vmatpush1.msra.mxu0 0.0
    %6323 = vmatprep.subr.mxu0 0.0
    %6324 = vmatpush1.msra.mxu0 0.0
    %6325 = vmatprep.subr.mxu0 0.0
    %6326 = vmatpush1.msra.mxu0 0.0
    %6327 = vmatprep.subr.mxu0 0.0
    %6328 = vmatpush1.msra.mxu0 0.0
    %6329 = vmatprep.subr.mxu0 0.0
    %6330 = vmatpush1.msra.mxu0 0.0
    %6331 = vmatprep.subr.mxu0 0.0
    %6332 = vmatpush1.msra.mxu0 0.0
    %6333 = vmatprep.subr.mxu0 0.0
    %6334 = vmatpush1.msra.mxu0 0.0
    %6335 = vmatprep.subr.mxu0 0.0
    %6336 = vmatpush1.msra.mxu0 0.0
    %6337 = vmatprep.subr.mxu0 0.0
    %6338 = vmatpush1.msra.mxu0 0.0
    %6339 = vmatprep.subr.mxu0 0.0
    %6340 = vmatpush1.msra.mxu0 0.0
    %6341 = vmatprep.subr.mxu0 0.0
    %6342 = vmatpush1.msra.mxu0 0.0
    %6343 = vmatprep.mubr.f32.mxu0 0.0
    %6344 = vmatmul.mubr.f32.gmra.mrb[0].mxu0 %v6277
    %v6345 = vpop.f32.mrb[0].mxu0
    %v6346 = vadd.f32 0.0, %v6345
    %v6347 = vpop.f32.mrb[0].mxu0
    %6348 = vdwg.mxu0
    %v6350 = vsel %vm1208, %v6197, 0
    %6352 = vmatprep.subr.mxu0 0.0
    %6353 = vmatpush1.msra.mxu0 %v243
    %6354 = vmatprep.subr.mxu0 0.0
    %6355 = vmatpush1.msra.mxu0 0.0
    %6356 = vmatprep.subr.mxu0 0.0
    %6357 = vmatpush1.msra.mxu0 0.0
    %6358 = vmatprep.subr.mxu0 0.0
    %6359 = vmatpush1.msra.mxu0 0.0
    %6360 = vmatprep.subr.mxu0 0.0
    %6361 = vmatpush1.msra.mxu0 0.0
    %6362 = vmatprep.subr.mxu0 0.0
    %6363 = vmatpush1.msra.mxu0 0.0
    %6364 = vmatprep.subr.mxu0 0.0
    %6365 = vmatpush1.msra.mxu0 0.0
    %6366 = vmatprep.subr.mxu0 0.0
    %6367 = vmatpush1.msra.mxu0 0.0
    %6368 = vmatprep.subr.mxu0 0.0
    %6369 = vmatpush1.msra.mxu0 0.0
    %6370 = vmatprep.subr.mxu0 0.0
    %6371 = vmatpush1.msra.mxu0 0.0
    %6372 = vmatprep.subr.mxu0 0.0
    %6373 = vmatpush1.msra.mxu0 0.0
    %6374 = vmatprep.subr.mxu0 0.0
    %6375 = vmatpush1.msra.mxu0 0.0
    %6376 = vmatprep.subr.mxu0 0.0
    %6377 = vmatpush1.msra.mxu0 0.0
    %6378 = vmatprep.subr.mxu0 0.0
    %6379 = vmatpush1.msra.mxu0 0.0
    %6380 = vmatprep.subr.mxu0 0.0
    %6381 = vmatpush1.msra.mxu0 0.0
    %6382 = vmatprep.subr.mxu0 0.0
    %6383 = vmatpush1.msra.mxu0 0.0
    %6384 = vmatprep.subr.mxu0 0.0
    %6385 = vmatpush1.msra.mxu0 0.0
    %6386 = vmatprep.subr.mxu0 0.0
    %6387 = vmatpush1.msra.mxu0 0.0
    %6388 = vmatprep.subr.mxu0 0.0
    %6389 = vmatpush1.msra.mxu0 0.0
    %6390 = vmatprep.subr.mxu0 0.0
    %6391 = vmatpush1.msra.mxu0 0.0
    %6392 = vmatprep.subr.mxu0 0.0
    %6393 = vmatpush1.msra.mxu0 0.0
    %6394 = vmatprep.subr.mxu0 0.0
    %6395 = vmatpush1.msra.mxu0 0.0
    %6396 = vmatprep.subr.mxu0 0.0
    %6397 = vmatpush1.msra.mxu0 0.0
    %6398 = vmatprep.subr.mxu0 0.0
    %6399 = vmatpush1.msra.mxu0 0.0
    %6400 = vmatprep.subr.mxu0 0.0
    %6401 = vmatpush1.msra.mxu0 0.0
    %6402 = vmatprep.subr.mxu0 0.0
    %6403 = vmatpush1.msra.mxu0 0.0
    %6404 = vmatprep.subr.mxu0 0.0
    %6405 = vmatpush1.msra.mxu0 0.0
    %6406 = vmatprep.subr.mxu0 0.0
    %6407 = vmatpush1.msra.mxu0 0.0
    %6408 = vmatprep.subr.mxu0 0.0
    %6409 = vmatpush1.msra.mxu0 0.0
    %6410 = vmatprep.subr.mxu0 0.0
    %6411 = vmatpush1.msra.mxu0 0.0
    %6412 = vmatprep.subr.mxu0 0.0
    %6413 = vmatpush1.msra.mxu0 0.0
    %6414 = vmatprep.subr.mxu0 0.0
    %6415 = vmatpush1.msra.mxu0 0.0
    %6416 = vmatprep.mubr.f32.mxu0 0.0
    %6417 = vmatmul.mubr.f32.gmra.mrb[0].mxu0 %v6350
    %v6418 = vpop.f32.mrb[0].mxu0
    %v6419 = vadd.f32 0.0, %v6418
    %v6420 = vpop.f32.mrb[0].mxu0
    %6421 = vdwg.mxu0
    %v6423 = vsel %vm1208, %v6198, 0
    %6425 = vmatprep.subr.mxu0 0.0
    %6426 = vmatpush1.msra.mxu0 %v244
    %6427 = vmatprep.subr.mxu0 0.0
    %6428 = vmatpush1.msra.mxu0 0.0
    %6429 = vmatprep.subr.mxu0 0.0
    %6430 = vmatpush1.msra.mxu0 0.0
    %6431 = vmatprep.subr.mxu0 0.0
    %6432 = vmatpush1.msra.mxu0 0.0
    %6433 = vmatprep.subr.mxu0 0.0
    %6434 = vmatpush1.msra.mxu0 0.0
    %6435 = vmatprep.subr.mxu0 0.0
    %6436 = vmatpush1.msra.mxu0 0.0
    %6437 = vmatprep.subr.mxu0 0.0
    %6438 = vmatpush1.msra.mxu0 0.0
    %6439 = vmatprep.subr.mxu0 0.0
    %6440 = vmatpush1.msra.mxu0 0.0
    %6441 = vmatprep.subr.mxu0 0.0
    %6442 = vmatpush1.msra.mxu0 0.0
    %6443 = vmatprep.subr.mxu0 0.0
    %6444 = vmatpush1.msra.mxu0 0.0
    %6445 = vmatprep.subr.mxu0 0.0
    %6446 = vmatpush1.msra.mxu0 0.0
    %6447 = vmatprep.subr.mxu0 0.0
    %6448 = vmatpush1.msra.mxu0 0.0
    %6449 = vmatprep.subr.mxu0 0.0
    %6450 = vmatpush1.msra.mxu0 0.0
    %6451 = vmatprep.subr.mxu0 0.0
    %6452 = vmatpush1.msra.mxu0 0.0
    %6453 = vmatprep.subr.mxu0 0.0
    %6454 = vmatpush1.msra.mxu0 0.0
    %6455 = vmatprep.subr.mxu0 0.0
    %6456 = vmatpush1.msra.mxu0 0.0
    %6457 = vmatprep.subr.mxu0 0.0
    %6458 = vmatpush1.msra.mxu0 0.0
    %6459 = vmatprep.subr.mxu0 0.0
    %6460 = vmatpush1.msra.mxu0 0.0
    %6461 = vmatprep.subr.mxu0 0.0
    %6462 = vmatpush1.msra.mxu0 0.0
    %6463 = vmatprep.subr.mxu0 0.0
    %6464 = vmatpush1.msra.mxu0 0.0
    %6465 = vmatprep.subr.mxu0 0.0
    %6466 = vmatpush1.msra.mxu0 0.0
    %6467 = vmatprep.subr.mxu0 0.0
    %6468 = vmatpush1.msra.mxu0 0.0
    %6469 = vmatprep.subr.mxu0 0.0
    %6470 = vmatpush1.msra.mxu0 0.0
    %6471 = vmatprep.subr.mxu0 0.0
    %6472 = vmatpush1.msra.mxu0 0.0
    %6473 = vmatprep.subr.mxu0 0.0
    %6474 = vmatpush1.msra.mxu0 0.0
    %6475 = vmatprep.subr.mxu0 0.0
    %6476 = vmatpush1.msra.mxu0 0.0
    %6477 = vmatprep.subr.mxu0 0.0
    %6478 = vmatpush1.msra.mxu0 0.0
    %6479 = vmatprep.subr.mxu0 0.0
    %6480 = vmatpush1.msra.mxu0 0.0
    %6481 = vmatprep.subr.mxu0 0.0
    %6482 = vmatpush1.msra.mxu0 0.0
    %6483 = vmatprep.subr.mxu0 0.0
    %6484 = vmatpush1.msra.mxu0 0.0
    %6485 = vmatprep.subr.mxu0 0.0
    %6486 = vmatpush1.msra.mxu0 0.0
    %6487 = vmatprep.subr.mxu0 0.0
    %6488 = vmatpush1.msra.mxu0 0.0
    %6489 = vmatprep.mubr.f32.mxu0 0.0
    %6490 = vmatmul.mubr.f32.gmra.mrb[0].mxu0 %v6423
    %v6491 = vpop.f32.mrb[0].mxu0
    %v6492 = vadd.f32 0.0, %v6491
    %v6493 = vpop.f32.mrb[0].mxu0
    %6494 = vdwg.mxu0
    %v6496 = vsel %vm1208, %v6199, 0
    %6498 = vmatprep.subr.mxu0 0.0
    %6499 = vmatpush1.msra.mxu0 %v245
    %6500 = vmatprep.subr.mxu0 0.0
    %6501 = vmatpush1.msra.mxu0 0.0
    %6502 = vmatprep.subr.mxu0 0.0
    %6503 = vmatpush1.msra.mxu0 0.0
    %6504 = vmatprep.subr.mxu0 0.0
    %6505 = vmatpush1.msra.mxu0 0.0
    %6506 = vmatprep.subr.mxu0 0.0
    %6507 = vmatpush1.msra.mxu0 0.0
    %6508 = vmatprep.subr.mxu0 0.0
    %6509 = vmatpush1.msra.mxu0 0.0
    %6510 = vmatprep.subr.mxu0 0.0
    %6511 = vmatpush1.msra.mxu0 0.0
    %6512 = vmatprep.subr.mxu0 0.0
    %6513 = vmatpush1.msra.mxu0 0.0
    %6514 = vmatprep.subr.mxu0 0.0
    %6515 = vmatpush1.msra.mxu0 0.0
    %6516 = vmatprep.subr.mxu0 0.0
    %6517 = vmatpush1.msra.mxu0 0.0
    %6518 = vmatprep.subr.mxu0 0.0
    %6519 = vmatpush1.msra.mxu0 0.0
    %6520 = vmatprep.subr.mxu0 0.0
    %6521 = vmatpush1.msra.mxu0 0.0
    %6522 = vmatprep.subr.mxu0 0.0
    %6523 = vmatpush1.msra.mxu0 0.0
    %6524 = vmatprep.subr.mxu0 0.0
    %6525 = vmatpush1.msra.mxu0 0.0
    %6526 = vmatprep.subr.mxu0 0.0
    %6527 = vmatpush1.msra.mxu0 0.0
    %6528 = vmatprep.subr.mxu0 0.0
    %6529 = vmatpush1.msra.mxu0 0.0
    %6530 = vmatprep.subr.mxu0 0.0
    %6531 = vmatpush1.msra.mxu0 0.0
    %6532 = vmatprep.subr.mxu0 0.0
    %6533 = vmatpush1.msra.mxu0 0.0
    %6534 = vmatprep.subr.mxu0 0.0
    %6535 = vmatpush1.msra.mxu0 0.0
    %6536 = vmatprep.subr.mxu0 0.0
    %6537 = vmatpush1.msra.mxu0 0.0
    %6538 = vmatprep.subr.mxu0 0.0
    %6539 = vmatpush1.msra.mxu0 0.0
    %6540 = vmatprep.subr.mxu0 0.0
    %6541 = vmatpush1.msra.mxu0 0.0
    %6542 = vmatprep.subr.mxu0 0.0
    %6543 = vmatpush1.msra.mxu0 0.0
    %6544 = vmatprep.subr.mxu0 0.0
    %6545 = vmatpush1.msra.mxu0 0.0
    %6546 = vmatprep.subr.mxu0 0.0
    %6547 = vmatpush1.msra.mxu0 0.0
    %6548 = vmatprep.subr.mxu0 0.0
    %6549 = vmatpush1.msra.mxu0 0.0
    %6550 = vmatprep.subr.mxu0 0.0
    %6551 = vmatpush1.msra.mxu0 0.0
    %6552 = vmatprep.subr.mxu0 0.0
    %6553 = vmatpush1.msra.mxu0 0.0
    %6554 = vmatprep.subr.mxu0 0.0
    %6555 = vmatpush1.msra.mxu0 0.0
    %6556 = vmatprep.subr.mxu0 0.0
    %6557 = vmatpush1.msra.mxu0 0.0
    %6558 = vmatprep.subr.mxu0 0.0
    %6559 = vmatpush1.msra.mxu0 0.0
    %6560 = vmatprep.subr.mxu0 0.0
    %6561 = vmatpush1.msra.mxu0 0.0
    %6562 = vmatprep.mubr.f32.mxu0 0.0
    %6563 = vmatmul.mubr.f32.gmra.mrb[0].mxu0 %v6496
    %v6564 = vpop.f32.mrb[0].mxu0
    %v6565 = vadd.f32 0.0, %v6564
    %v6566 = vpop.f32.mrb[0].mxu0
    %6567 = vdwg.mxu0
    %v6569 = vsel %vm1208, %v6200, 0
    %6571 = vmatprep.subr.mxu0 0.0
    %6572 = vmatpush1.msra.mxu0 %v246
    %6573 = vmatprep.subr.mxu0 0.0
    %6574 = vmatpush1.msra.mxu0 0.0
    %6575 = vmatprep.subr.mxu0 0.0
    %6576 = vmatpush1.msra.mxu0 0.0
    %6577 = vmatprep.subr.mxu0 0.0
    %6578 = vmatpush1.msra.mxu0 0.0
    %6579 = vmatprep.subr.mxu0 0.0
    %6580 = vmatpush1.msra.mxu0 0.0
    %6581 = vmatprep.subr.mxu0 0.0
    %6582 = vmatpush1.msra.mxu0 0.0
    %6583 = vmatprep.subr.mxu0 0.0
    %6584 = vmatpush1.msra.mxu0 0.0
    %6585 = vmatprep.subr.mxu0 0.0
    %6586 = vmatpush1.msra.mxu0 0.0
    %6587 = vmatprep.subr.mxu0 0.0
    %6588 = vmatpush1.msra.mxu0 0.0
    %6589 = vmatprep.subr.mxu0 0.0
    %6590 = vmatpush1.msra.mxu0 0.0
    %6591 = vmatprep.subr.mxu0 0.0
    %6592 = vmatpush1.msra.mxu0 0.0
    %6593 = vmatprep.subr.mxu0 0.0
    %6594 = vmatpush1.msra.mxu0 0.0
    %6595 = vmatprep.subr.mxu0 0.0
    %6596 = vmatpush1.msra.mxu0 0.0
    %6597 = vmatprep.subr.mxu0 0.0
    %6598 = vmatpush1.msra.mxu0 0.0
    %6599 = vmatprep.subr.mxu0 0.0
    %6600 = vmatpush1.msra.mxu0 0.0
    %6601 = vmatprep.subr.mxu0 0.0
    %6602 = vmatpush1.msra.mxu0 0.0
    %6603 = vmatprep.subr.mxu0 0.0
    %6604 = vmatpush1.msra.mxu0 0.0
    %6605 = vmatprep.subr.mxu0 0.0
    %6606 = vmatpush1.msra.mxu0 0.0
    %6607 = vmatprep.subr.mxu0 0.0
    %6608 = vmatpush1.msra.mxu0 0.0
    %6609 = vmatprep.subr.mxu0 0.0
    %6610 = vmatpush1.msra.mxu0 0.0
    %6611 = vmatprep.subr.mxu0 0.0
    %6612 = vmatpush1.msra.mxu0 0.0
    %6613 = vmatprep.subr.mxu0 0.0
    %6614 = vmatpush1.msra.mxu0 0.0
    %6615 = vmatprep.subr.mxu0 0.0
    %6616 = vmatpush1.msra.mxu0 0.0
    %6617 = vmatprep.subr.mxu0 0.0
    %6618 = vmatpush1.msra.mxu0 0.0
    %6619 = vmatprep.subr.mxu0 0.0
    %6620 = vmatpush1.msra.mxu0 0.0
    %6621 = vmatprep.subr.mxu0 0.0
    %6622 = vmatpush1.msra.mxu0 0.0
    %6623 = vmatprep.subr.mxu0 0.0
    %6624 = vmatpush1.msra.mxu0 0.0
    %6625 = vmatprep.subr.mxu0 0.0
    %6626 = vmatpush1.msra.mxu0 0.0
    %6627 = vmatprep.subr.mxu0 0.0
    %6628 = vmatpush1.msra.mxu0 0.0
    %6629 = vmatprep.subr.mxu0 0.0
    %6630 = vmatpush1.msra.mxu0 0.0
    %6631 = vmatprep.subr.mxu0 0.0
    %6632 = vmatpush1.msra.mxu0 0.0
    %6633 = vmatprep.subr.mxu0 0.0
    %6634 = vmatpush1.msra.mxu0 0.0
    %6635 = vmatprep.mubr.f32.mxu0 0.0
    %6636 = vmatmul.mubr.f32.gmra.mrb[0].mxu0 %v6569
    %v6637 = vpop.f32.mrb[0].mxu0
    %v6638 = vadd.f32 0.0, %v6637
    %v6639 = vpop.f32.mrb[0].mxu0
    %6640 = vdwg.mxu0
    %v6642 = vsel %vm1208, %v6201, 0
    %6644 = vmatprep.subr.mxu0 0.0
    %6645 = vmatpush1.msra.mxu0 %v247
    %6646 = vmatprep.subr.mxu0 0.0
    %6647 = vmatpush1.msra.mxu0 0.0
    %6648 = vmatprep.subr.mxu0 0.0
    %6649 = vmatpush1.msra.mxu0 0.0
    %6650 = vmatprep.subr.mxu0 0.0
    %6651 = vmatpush1.msra.mxu0 0.0
    %6652 = vmatprep.subr.mxu0 0.0
    %6653 = vmatpush1.msra.mxu0 0.0
    %6654 = vmatprep.subr.mxu0 0.0
    %6655 = vmatpush1.msra.mxu0 0.0
    %6656 = vmatprep.subr.mxu0 0.0
    %6657 = vmatpush1.msra.mxu0 0.0
    %6658 = vmatprep.subr.mxu0 0.0
    %6659 = vmatpush1.msra.mxu0 0.0
    %6660 = vmatprep.subr.mxu0 0.0
    %6661 = vmatpush1.msra.mxu0 0.0
    %6662 = vmatprep.subr.mxu0 0.0
    %6663 = vmatpush1.msra.mxu0 0.0
    %6664 = vmatprep.subr.mxu0 0.0
    %6665 = vmatpush1.msra.mxu0 0.0
    %6666 = vmatprep.subr.mxu0 0.0
    %6667 = vmatpush1.msra.mxu0 0.0
    %6668 = vmatprep.subr.mxu0 0.0
    %6669 = vmatpush1.msra.mxu0 0.0
    %6670 = vmatprep.subr.mxu0 0.0
    %6671 = vmatpush1.msra.mxu0 0.0
    %6672 = vmatprep.subr.mxu0 0.0
    %6673 = vmatpush1.msra.mxu0 0.0
    %6674 = vmatprep.subr.mxu0 0.0
    %6675 = vmatpush1.msra.mxu0 0.0
    %6676 = vmatprep.subr.mxu0 0.0
    %6677 = vmatpush1.msra.mxu0 0.0
    %6678 = vmatprep.subr.mxu0 0.0
    %6679 = vmatpush1.msra.mxu0 0.0
    %6680 = vmatprep.subr.mxu0 0.0
    %6681 = vmatpush1.msra.mxu0 0.0
    %6682 = vmatprep.subr.mxu0 0.0
    %6683 = vmatpush1.msra.mxu0 0.0
    %6684 = vmatprep.subr.mxu0 0.0
    %6685 = vmatpush1.msra.mxu0 0.0
    %6686 = vmatprep.subr.mxu0 0.0
    %6687 = vmatpush1.msra.mxu0 0.0
    %6688 = vmatprep.subr.mxu0 0.0
    %6689 = vmatpush1.msra.mxu0 0.0
    %6690 = vmatprep.subr.mxu0 0.0
    %6691 = vmatpush1.msra.mxu0 0.0
    %6692 = vmatprep.subr.mxu0 0.0
    %6693 = vmatpush1.msra.mxu0 0.0
    %6694 = vmatprep.subr.mxu0 0.0
    %6695 = vmatpush1.msra.mxu0 0.0
    %6696 = vmatprep.subr.mxu0 0.0
    %6697 = vmatpush1.msra.mxu0 0.0
    %6698 = vmatprep.subr.mxu0 0.0
    %6699 = vmatpush1.msra.mxu0 0.0
    %6700 = vmatprep.subr.mxu0 0.0
    %6701 = vmatpush1.msra.mxu0 0.0
    %6702 = vmatprep.subr.mxu0 0.0
    %6703 = vmatpush1.msra.mxu0 0.0
    %6704 = vmatprep.subr.mxu0 0.0
    %6705 = vmatpush1.msra.mxu0 0.0
    %6706 = vmatprep.subr.mxu0 0.0
    %6707 = vmatpush1.msra.mxu0 0.0
    %6708 = vmatprep.mubr.f32.mxu0 0.0
    %6709 = vmatmul.mubr.f32.gmra.mrb[0].mxu0 %v6642
    %v6710 = vpop.f32.mrb[0].mxu0
    %v6711 = vadd.f32 0.0, %v6710
    %v6712 = vpop.f32.mrb[0].mxu0
    %6713 = vdwg.mxu0
    %v6715 = vsel %vm1208, %v6202, 0
    %6717 = vmatprep.subr.mxu0 0.0
    %6718 = vmatpush1.msra.mxu0 %v248
    %6719 = vmatprep.subr.mxu0 0.0
    %6720 = vmatpush1.msra.mxu0 0.0
    %6721 = vmatprep.subr.mxu0 0.0
    %6722 = vmatpush1.msra.mxu0 0.0
    %6723 = vmatprep.subr.mxu0 0.0
    %6724 = vmatpush1.msra.mxu0 0.0
    %6725 = vmatprep.subr.mxu0 0.0
    %6726 = vmatpush1.msra.mxu0 0.0
    %6727 = vmatprep.subr.mxu0 0.0
    %6728 = vmatpush1.msra.mxu0 0.0
    %6729 = vmatprep.subr.mxu0 0.0
    %6730 = vmatpush1.msra.mxu0 0.0
    %6731 = vmatprep.subr.mxu0 0.0
    %6732 = vmatpush1.msra.mxu0 0.0
    %6733 = vmatprep.subr.mxu0 0.0
    %6734 = vmatpush1.msra.mxu0 0.0
    %6735 = vmatprep.subr.mxu0 0.0
    %6736 = vmatpush1.msra.mxu0 0.0
    %6737 = vmatprep.subr.mxu0 0.0
    %6738 = vmatpush1.msra.mxu0 0.0
    %6739 = vmatprep.subr.mxu0 0.0
    %6740 = vmatpush1.msra.mxu0 0.0
    %6741 = vmatprep.subr.mxu0 0.0
    %6742 = vmatpush1.msra.mxu0 0.0
    %6743 = vmatprep.subr.mxu0 0.0
    %6744 = vmatpush1.msra.mxu0 0.0
    %6745 = vmatprep.subr.mxu0 0.0
    %6746 = vmatpush1.msra.mxu0 0.0
    %6747 = vmatprep.subr.mxu0 0.0
    %6748 = vmatpush1.msra.mxu0 0.0
    %6749 = vmatprep.subr.mxu0 0.0
    %6750 = vmatpush1.msra.mxu0 0.0
    %6751 = vmatprep.subr.mxu0 0.0
    %6752 = vmatpush1.msra.mxu0 0.0
    %6753 = vmatprep.subr.mxu0 0.0
    %6754 = vmatpush1.msra.mxu0 0.0
    %6755 = vmatprep.subr.mxu0 0.0
    %6756 = vmatpush1.msra.mxu0 0.0
    %6757 = vmatprep.subr.mxu0 0.0
    %6758 = vmatpush1.msra.mxu0 0.0
    %6759 = vmatprep.subr.mxu0 0.0
    %6760 = vmatpush1.msra.mxu0 0.0
    %6761 = vmatprep.subr.mxu0 0.0
    %6762 = vmatpush1.msra.mxu0 0.0
    %6763 = vmatprep.subr.mxu0 0.0
    %6764 = vmatpush1.msra.mxu0 0.0
    %6765 = vmatprep.subr.mxu0 0.0
    %6766 = vmatpush1.msra.mxu0 0.0
    %6767 = vmatprep.subr.mxu0 0.0
    %6768 = vmatpush1.msra.mxu0 0.0
    %6769 = vmatprep.subr.mxu0 0.0
    %6770 = vmatpush1.msra.mxu0 0.0
    %6771 = vmatprep.subr.mxu0 0.0
    %6772 = vmatpush1.msra.mxu0 0.0
    %6773 = vmatprep.subr.mxu0 0.0
    %6774 = vmatpush1.msra.mxu0 0.0
    %6775 = vmatprep.subr.mxu0 0.0
    %6776 = vmatpush1.msra.mxu0 0.0
    %6777 = vmatprep.subr.mxu0 0.0
    %6778 = vmatpush1.msra.mxu0 0.0
    %6779 = vmatprep.subr.mxu0 0.0
    %6780 = vmatpush1.msra.mxu0 0.0
    %6781 = vmatprep.mubr.f32.mxu0 0.0
    %6782 = vmatmul.mubr.f32.gmra.mrb[0].mxu0 %v6715
    %v6783 = vpop.f32.mrb[0].mxu0
    %v6784 = vadd.f32 0.0, %v6783
    %v6785 = vpop.f32.mrb[0].mxu0
    %6786 = vdwg.mxu0
    %6787 = vrot.lane.b32.xlu0 %v5416, 32
    %v6788 = vpop.permute.xlu0 %6787
    %v6789 = vsel %vm291, %v6788, 0
    %6791 = vmatprep.subr.mxu0 0.0
    %6792 = vmatpush1.msra.mxu0 %v273
    %6793 = vmatprep.subr.mxu0 0.0
    %6794 = vmatpush1.msra.mxu0 %v274
    %6795 = vmatprep.subr.mxu0 0.0
    %6796 = vmatpush1.msra.mxu0 %v275
    %6797 = vmatprep.subr.mxu0 0.0
    %6798 = vmatpush1.msra.mxu0 %v276
    %6799 = vmatprep.subr.mxu0 0.0
    %6800 = vmatpush1.msra.mxu0 0.0
    %6801 = vmatprep.subr.mxu0 0.0
    %6802 = vmatpush1.msra.mxu0 0.0
    %6803 = vmatprep.subr.mxu0 0.0
    %6804 = vmatpush1.msra.mxu0 0.0
    %6805 = vmatprep.subr.mxu0 0.0
    %6806 = vmatpush1.msra.mxu0 0.0
    %6807 = vmatprep.subr.mxu0 0.0
    %6808 = vmatpush1.msra.mxu0 0.0
    %6809 = vmatprep.subr.mxu0 0.0
    %6810 = vmatpush1.msra.mxu0 0.0
    %6811 = vmatprep.subr.mxu0 0.0
    %6812 = vmatpush1.msra.mxu0 0.0
    %6813 = vmatprep.subr.mxu0 0.0
    %6814 = vmatpush1.msra.mxu0 0.0
    %6815 = vmatprep.subr.mxu0 0.0
    %6816 = vmatpush1.msra.mxu0 0.0
    %6817 = vmatprep.subr.mxu0 0.0
    %6818 = vmatpush1.msra.mxu0 0.0
    %6819 = vmatprep.subr.mxu0 0.0
    %6820 = vmatpush1.msra.mxu0 0.0
    %6821 = vmatprep.subr.mxu0 0.0
    %6822 = vmatpush1.msra.mxu0 0.0
    %6823 = vmatprep.subr.mxu0 0.0
    %6824 = vmatpush1.msra.mxu0 0.0
    %6825 = vmatprep.subr.mxu0 0.0
    %6826 = vmatpush1.msra.mxu0 0.0
    %6827 = vmatprep.subr.mxu0 0.0
    %6828 = vmatpush1.msra.mxu0 0.0
    %6829 = vmatprep.subr.mxu0 0.0
    %6830 = vmatpush1.msra.mxu0 0.0
    %6831 = vmatprep.subr.mxu0 0.0
    %6832 = vmatpush1.msra.mxu0 0.0
    %6833 = vmatprep.subr.mxu0 0.0
    %6834 = vmatpush1.msra.mxu0 0.0
    %6835 = vmatprep.subr.mxu0 0.0
    %6836 = vmatpush1.msra.mxu0 0.0
    %6837 = vmatprep.subr.mxu0 0.0
    %6838 = vmatpush1.msra.mxu0 0.0
    %6839 = vmatprep.subr.mxu0 0.0
    %6840 = vmatpush1.msra.mxu0 0.0
    %6841 = vmatprep.subr.mxu0 0.0
    %6842 = vmatpush1.msra.mxu0 0.0
    %6843 = vmatprep.subr.mxu0 0.0
    %6844 = vmatpush1.msra.mxu0 0.0
    %6845 = vmatprep.subr.mxu0 0.0
    %6846 = vmatpush1.msra.mxu0 0.0
    %6847 = vmatprep.subr.mxu0 0.0
    %6848 = vmatpush1.msra.mxu0 0.0
    %6849 = vmatprep.subr.mxu0 0.0
    %6850 = vmatpush1.msra.mxu0 0.0
    %6851 = vmatprep.subr.mxu0 0.0
    %6852 = vmatpush1.msra.mxu0 0.0
    %6853 = vmatprep.subr.mxu0 0.0
    %6854 = vmatpush1.msra.mxu0 0.0
    %6855 = vmatprep.mubr.f32.mxu0 0.0
    %6856 = vmatmul.mubr.f32.gmra.mrb[0].mxu0 %v6789
    %v6857 = vpop.f32.mrb[0].mxu0
    %v6858 = vadd.f32 0.0, %v6857
    %v6859 = vpop.f32.mrb[0].mxu0
    %6860 = vdwg.mxu0
    %v6869 = vrot.slane %v6346, 7
    %v6870 = vsel %vm1876, %v6869, %v6273
    %v6871 = vrot.slane %v6419, 6
    %v6872 = vsel %vm1879, %v6871, %v6870
    %v6873 = vrot.slane %v6492, 5
    %v6874 = vsel %vm1882, %v6873, %v6872
    %v6875 = vrot.slane %v6565, 4
    %v6876 = vsel %vm1885, %v6875, %v6874
    %v6877 = vrot.slane %v6638, 3
    %v6878 = vsel %vm1888, %v6877, %v6876
    %v6879 = vrot.slane %v6711, 2
    %v6880 = vsel %vm1891, %v6879, %v6878
    %v6881 = vrot.slane %v6784, 1
    %v6882 = vsel %vm1894, %v6881, %v6880
    %v6883 = vsel %vm294, %v6882, 0
    %6885 = vmatprep.subr.mxu0 0.0
    %6886 = vmatpush1.msra.mxu0 %v265
    %6887 = vmatprep.subr.mxu0 0.0
    %6888 = vmatpush1.msra.mxu0 %v266
    %6889 = vmatprep.subr.mxu0 0.0
    %6890 = vmatpush1.msra.mxu0 %v267
    %6891 = vmatprep.subr.mxu0 0.0
    %6892 = vmatpush1.msra.mxu0 %v268
    %6893 = vmatprep.subr.mxu0 0.0
    %6894 = vmatpush1.msra.mxu0 %v269
    %6895 = vmatprep.subr.mxu0 0.0
    %6896 = vmatpush1.msra.mxu0 %v270
    %6897 = vmatprep.subr.mxu0 0.0
    %6898 = vmatpush1.msra.mxu0 %v271
    %6899 = vmatprep.subr.mxu0 0.0
    %6900 = vmatpush1.msra.mxu0 %v272
    %6901 = vmatprep.subr.mxu0 0.0
    %6902 = vmatpush1.msra.mxu0 0.0
    %6903 = vmatprep.subr.mxu0 0.0
    %6904 = vmatpush1.msra.mxu0 0.0
    %6905 = vmatprep.subr.mxu0 0.0
    %6906 = vmatpush1.msra.mxu0 0.0
    %6907 = vmatprep.subr.mxu0 0.0
    %6908 = vmatpush1.msra.mxu0 0.0
    %6909 = vmatprep.subr.mxu0 0.0
    %6910 = vmatpush1.msra.mxu0 0.0
    %6911 = vmatprep.subr.mxu0 0.0
    %6912 = vmatpush1.msra.mxu0 0.0
    %6913 = vmatprep.subr.mxu0 0.0
    %6914 = vmatpush1.msra.mxu0 0.0
    %6915 = vmatprep.subr.mxu0 0.0
    %6916 = vmatpush1.msra.mxu0 0.0
    %6917 = vmatprep.subr.mxu0 0.0
    %6918 = vmatpush1.msra.mxu0 0.0
    %6919 = vmatprep.subr.mxu0 0.0
    %6920 = vmatpush1.msra.mxu0 0.0
    %6921 = vmatprep.subr.mxu0 0.0
    %6922 = vmatpush1.msra.mxu0 0.0
    %6923 = vmatprep.subr.mxu0 0.0
    %6924 = vmatpush1.msra.mxu0 0.0
    %6925 = vmatprep.subr.mxu0 0.0
    %6926 = vmatpush1.msra.mxu0 0.0
    %6927 = vmatprep.subr.mxu0 0.0
    %6928 = vmatpush1.msra.mxu0 0.0
    %6929 = vmatprep.subr.mxu0 0.0
    %6930 = vmatpush1.msra.mxu0 0.0
    %6931 = vmatprep.subr.mxu0 0.0
    %6932 = vmatpush1.msra.mxu0 0.0
    %6933 = vmatprep.subr.mxu0 0.0
    %6934 = vmatpush1.msra.mxu0 0.0
    %6935 = vmatprep.subr.mxu0 0.0
    %6936 = vmatpush1.msra.mxu0 0.0
    %6937 = vmatprep.subr.mxu0 0.0
    %6938 = vmatpush1.msra.mxu0 0.0
    %6939 = vmatprep.subr.mxu0 0.0
    %6940 = vmatpush1.msra.mxu0 0.0
    %6941 = vmatprep.subr.mxu0 0.0
    %6942 = vmatpush1.msra.mxu0 0.0
    %6943 = vmatprep.subr.mxu0 0.0
    %6944 = vmatpush1.msra.mxu0 0.0
    %6945 = vmatprep.subr.mxu0 0.0
    %6946 = vmatpush1.msra.mxu0 0.0
    %6947 = vmatprep.subr.mxu0 0.0
    %6948 = vmatpush1.msra.mxu0 0.0
    %6949 = vmatprep.mubr.f32.mxu0 0.0
    %6950 = vmatmul.mubr.f32.gmra.mrb[0].mxu0 %v6883
    %v6951 = vpop.f32.mrb[0].mxu0
    %v6952 = vadd.f32 %v6858, %v6951
    %v6953 = vpop.f32.mrb[0].mxu0
    %6954 = vdwg.mxu0
    %v6955 = vadd.f32 %v6952, %v282
    %v6956 = vtanh.pop %v6955
    %s6957 = scalar_lea.vmem [#allocation15], 24
    %6958 = vst.msk [vmem:[%s6957] sm:$0xff] %vm291, %v6956
    %v6959 = vrot.slane %v6196, 7
    %v6960 = vsel %vm1876, %v6959, %v6195
    %v6961 = vrot.slane %v6197, 6
    %v6962 = vsel %vm1879, %v6961, %v6960
    %v6963 = vrot.slane %v6198, 5
    %v6964 = vsel %vm1882, %v6963, %v6962
    %v6965 = vrot.slane %v6199, 4
    %v6966 = vsel %vm1885, %v6965, %v6964
    %v6967 = vrot.slane %v6200, 3
    %v6968 = vsel %vm1888, %v6967, %v6966
    %v6969 = vrot.slane %v6201, 2
    %v6970 = vsel %vm1891, %v6969, %v6968
    %v6971 = vrot.slane %v6202, 1
    %v6972 = vsel %vm1894, %v6971, %v6970
    %s6974 = scalar_lea.vmem [#allocation16], 24
    %6975 = vst.msk [vmem:[%s6974] sm:$0xff] %vm1208, %v6972
    %6976 = vrot.lane.b32.xlu0 %v5416, 64
    %v6977 = vpop.permute.xlu0 %6976
    %v6979 = vsel %vm291, %v6956, %v6977
    %s6980 = scalar_lea.vmem [#allocation5], 32
    %v6981 = vld [vmem:[%s6980] sm:$0xff]
    %v6983 = vsel %vm294, %v6979, 0
    %6985 = vmatprep.subr.mxu0 0.0
    %6986 = vmatpush1.msra.mxu0 %v257
    %6987 = vmatprep.subr.mxu0 0.0
    %6988 = vmatpush1.msra.mxu0 %v258
    %6989 = vmatprep.subr.mxu0 0.0
    %6990 = vmatpush1.msra.mxu0 %v259
    %6991 = vmatprep.subr.mxu0 0.0
    %6992 = vmatpush1.msra.mxu0 %v260
    %6993 = vmatprep.subr.mxu0 0.0
    %6994 = vmatpush1.msra.mxu0 %v261
    %6995 = vmatprep.subr.mxu0 0.0
    %6996 = vmatpush1.msra.mxu0 %v262
    %6997 = vmatprep.subr.mxu0 0.0
    %6998 = vmatpush1.msra.mxu0 %v263
    %6999 = vmatprep.subr.mxu0 0.0
    %7000 = vmatpush1.msra.mxu0 %v264
    %7001 = vmatprep.subr.mxu0 0.0
    %7002 = vmatpush1.msra.mxu0 0.0
    %7003 = vmatprep.subr.mxu0 0.0
    %7004 = vmatpush1.msra.mxu0 0.0
    %7005 = vmatprep.subr.mxu0 0.0
    %7006 = vmatpush1.msra.mxu0 0.0
    %7007 = vmatprep.subr.mxu0 0.0
    %7008 = vmatpush1.msra.mxu0 0.0
    %7009 = vmatprep.subr.mxu0 0.0
    %7010 = vmatpush1.msra.mxu0 0.0
    %7011 = vmatprep.subr.mxu0 0.0
    %7012 = vmatpush1.msra.mxu0 0.0
    %7013 = vmatprep.subr.mxu0 0.0
    %7014 = vmatpush1.msra.mxu0 0.0
    %7015 = vmatprep.subr.mxu0 0.0
    %7016 = vmatpush1.msra.mxu0 0.0
    %7017 = vmatprep.subr.mxu0 0.0
    %7018 = vmatpush1.msra.mxu0 0.0
    %7019 = vmatprep.subr.mxu0 0.0
    %7020 = vmatpush1.msra.mxu0 0.0
    %7021 = vmatprep.subr.mxu0 0.0
    %7022 = vmatpush1.msra.mxu0 0.0
    %7023 = vmatprep.subr.mxu0 0.0
    %7024 = vmatpush1.msra.mxu0 0.0
    %7025 = vmatprep.subr.mxu0 0.0
    %7026 = vmatpush1.msra.mxu0 0.0
    %7027 = vmatprep.subr.mxu0 0.0
    %7028 = vmatpush1.msra.mxu0 0.0
    %7029 = vmatprep.subr.mxu0 0.0
    %7030 = vmatpush1.msra.mxu0 0.0
    %7031 = vmatprep.subr.mxu0 0.0
    %7032 = vmatpush1.msra.mxu0 0.0
    %7033 = vmatprep.subr.mxu0 0.0
    %7034 = vmatpush1.msra.mxu0 0.0
    %7035 = vmatprep.subr.mxu0 0.0
    %7036 = vmatpush1.msra.mxu0 0.0
    %7037 = vmatprep.subr.mxu0 0.0
    %7038 = vmatpush1.msra.mxu0 0.0
    %7039 = vmatprep.subr.mxu0 0.0
    %7040 = vmatpush1.msra.mxu0 0.0
    %7041 = vmatprep.subr.mxu0 0.0
    %7042 = vmatpush1.msra.mxu0 0.0
    %7043 = vmatprep.subr.mxu0 0.0
    %7044 = vmatpush1.msra.mxu0 0.0
    %7045 = vmatprep.subr.mxu0 0.0
    %7046 = vmatpush1.msra.mxu0 0.0
    %7047 = vmatprep.subr.mxu0 0.0
    %7048 = vmatpush1.msra.mxu0 0.0
    %7049 = vmatprep.mubr.f32.mxu0 0.0
    %7050 = vmatmul.mubr.f32.gmra.mrb[0].mxu0 %v6983
    %v7051 = vpop.f32.mrb[0].mxu0
    %v7052 = vadd.f32 0.0, %v7051
    %v7053 = vpop.f32.mrb[0].mxu0
    %7054 = vdwg.mxu0
    %v7055 = vadd.f32 %v6981, %v7052
    %v7056 = vxor.u32 %v7055, 2147483648
    %v7057 = vmul.f32 %v7056, 1.442695
    %v7058 = vpow.pop %v7057
    %v7059 = vadd.f32 %v7058, 1.0
    %v7060 = vrcp.pop %v7059
    %v7061 = vmul.f32 1.0, %v7060
    %v7062 = vtanh.pop %v7055
    %v7063 = vmul.f32 %v7061, %v5410
    %7065 = vrot.lane.b32.xlu0 %v7062, 64
    %v7066 = vpop.permute.xlu0 %7065
    %v7068 = vmul.f32 %v7061, %v7066
    %7070 = vrot.lane.b32.xlu0 %v7068, 32
    %v7071 = vpop.permute.xlu0 %7070
    %v7073 = vadd.f32 %v7063, %v7071
    %v7074 = vtanh.pop %v7073
    %7076 = vrot.lane.b32.xlu0 %v7074, 64
    %v7077 = vpop.permute.xlu0 %7076
    %v7079 = vmul.f32 %v7061, %v7077
    %v7081 = vcombine.high %v7079, %v7079
    %v7083 = vunpack.c.l.s4 1966171168
    %v7084 = vunpack.c.0.s8 %v7083
    %v7085 = vlaneseq
    %v7086 = vshrl.u32 %v7085, 7
    %v7087 = vsub.s32 %v7084, %v7086
    %v7088 = vrot.slane %v7079, %v7087
    %v7090 = vunpack.c.l.s4 1966171168
    %v7091 = vunpack.c.0.s8 %v7090
    %v7092 = vlaneseq
    %v7093 = vshrl.u32 %v7092, 7
    %v7094 = vsub.s32 %v7091, %v7093
    %v7095 = vrot.slane %v7081, %v7094
    %v7096 = vcombine.high %v7088, %v7088
    %v7097 = vcombine.high %v7095, %v7095
    %v7099 = vunpack.c.l.s4 1966171168
    %v7100 = vunpack.c.0.s8 %v7099
    %v7101 = vlaneseq
    %v7102 = vshrl.u32 %v7101, 7
    %v7103 = vsub.s32 %v7100, %v7102
    %v7104 = vrot.slane %v7088, %v7103
    %v7106 = vunpack.c.l.s4 1966171168
    %v7107 = vunpack.c.0.s8 %v7106
    %v7108 = vlaneseq
    %v7109 = vshrl.u32 %v7108, 7
    %v7110 = vsub.s32 %v7107, %v7109
    %v7111 = vrot.slane %v7095, %v7110
    %v7113 = vunpack.c.l.s4 1966171168
    %v7114 = vunpack.c.0.s8 %v7113
    %v7115 = vlaneseq
    %v7116 = vshrl.u32 %v7115, 7
    %v7117 = vsub.s32 %v7114, %v7116
    %v7118 = vrot.slane %v7096, %v7117
    %v7120 = vunpack.c.l.s4 1966171168
    %v7121 = vunpack.c.0.s8 %v7120
    %v7122 = vlaneseq
    %v7123 = vshrl.u32 %v7122, 7
    %v7124 = vsub.s32 %v7121, %v7123
    %v7125 = vrot.slane %v7097, %v7124
    %v7126 = vcombine.high %v7104, %v7104
    %v7127 = vcombine.high %v7111, %v7111
    %v7128 = vcombine.high %v7118, %v7118
    %v7129 = vcombine.high %v7125, %v7125
    %v7130 = vlaneseq
    %v7131 = vshrl.u32 %v7130, 7
    %v7132 = vsub.s32 0, %v7131
    %v7133 = vrot.slane %v7104, %v7132
    %7134 = vrot.lane.b32.xlu0 %v7133, 32
    %v7135 = vpop.permute.xlu0 %7134
    %v7136 = vsel %vm291, %v7135, 0
    %7138 = vmatprep.subr.mxu0 0.0
    %7139 = vmatpush1.xpose.msra.mxu0 %v456
    %7140 = vmatprep.subr.mxu0 0.0
    %7141 = vmatpush1.xpose.msra.mxu0 0.0
    %7142 = vmatprep.subr.mxu0 0.0
    %7143 = vmatpush1.xpose.msra.mxu0 0.0
    %7144 = vmatprep.subr.mxu0 0.0
    %7145 = vmatpush1.xpose.msra.mxu0 0.0
    %7146 = vmatprep.subr.mxu0 0.0
    %7147 = vmatpush1.xpose.msra.mxu0 0.0
    %7148 = vmatprep.subr.mxu0 0.0
    %7149 = vmatpush1.xpose.msra.mxu0 0.0
    %7150 = vmatprep.subr.mxu0 0.0
    %7151 = vmatpush1.xpose.msra.mxu0 0.0
    %7152 = vmatprep.subr.mxu0 0.0
    %7153 = vmatpush1.xpose.msra.mxu0 0.0
    %7154 = vmatprep.subr.mxu0 0.0
    %7155 = vmatpush1.xpose.msra.mxu0 0.0
    %7156 = vmatprep.subr.mxu0 0.0
    %7157 = vmatpush1.xpose.msra.mxu0 0.0
    %7158 = vmatprep.subr.mxu0 0.0
    %7159 = vmatpush1.xpose.msra.mxu0 0.0
    %7160 = vmatprep.subr.mxu0 0.0
    %7161 = vmatpush1.xpose.msra.mxu0 0.0
    %7162 = vmatprep.subr.mxu0 0.0
    %7163 = vmatpush1.xpose.msra.mxu0 0.0
    %7164 = vmatprep.subr.mxu0 0.0
    %7165 = vmatpush1.xpose.msra.mxu0 0.0
    %7166 = vmatprep.subr.mxu0 0.0
    %7167 = vmatpush1.xpose.msra.mxu0 0.0
    %7168 = vmatprep.subr.mxu0 0.0
    %7169 = vmatpush1.xpose.msra.mxu0 0.0
    %7170 = vmatprep.subr.mxu0 0.0
    %7171 = vmatpush1.xpose.msra.mxu0 0.0
    %7172 = vmatprep.subr.mxu0 0.0
    %7173 = vmatpush1.xpose.msra.mxu0 0.0
    %7174 = vmatprep.subr.mxu0 0.0
    %7175 = vmatpush1.xpose.msra.mxu0 0.0
    %7176 = vmatprep.subr.mxu0 0.0
    %7177 = vmatpush1.xpose.msra.mxu0 0.0
    %7178 = vmatprep.subr.mxu0 0.0
    %7179 = vmatpush1.xpose.msra.mxu0 0.0
    %7180 = vmatprep.subr.mxu0 0.0
    %7181 = vmatpush1.xpose.msra.mxu0 0.0
    %7182 = vmatprep.subr.mxu0 0.0
    %7183 = vmatpush1.xpose.msra.mxu0 0.0
    %7184 = vmatprep.subr.mxu0 0.0
    %7185 = vmatpush1.xpose.msra.mxu0 0.0
    %7186 = vmatprep.subr.mxu0 0.0
    %7187 = vmatpush1.xpose.msra.mxu0 0.0
    %7188 = vmatprep.subr.mxu0 0.0
    %7189 = vmatpush1.xpose.msra.mxu0 0.0
    %7190 = vmatprep.subr.mxu0 0.0
    %7191 = vmatpush1.xpose.msra.mxu0 0.0
    %7192 = vmatprep.subr.mxu0 0.0
    %7193 = vmatpush1.xpose.msra.mxu0 0.0
    %7194 = vmatprep.subr.mxu0 0.0
    %7195 = vmatpush1.xpose.msra.mxu0 0.0
    %7196 = vmatprep.subr.mxu0 0.0
    %7197 = vmatpush1.xpose.msra.mxu0 0.0
    %7198 = vmatprep.subr.mxu0 0.0
    %7199 = vmatpush1.xpose.msra.mxu0 0.0
    %7200 = vmatprep.subr.mxu0 0.0
    %7201 = vmatpush1.xpose.msra.mxu0 0.0
    %7202 = vmatprep.mubr.f32.mxu0 0.0
    %7203 = vmatmul.mubr.f32.gmra.mrb[0].mxu0 %v7136
    %v7204 = vpop.f32.mrb[0].mxu0
    %v7205 = vadd.f32 0.0, %v7204
    %v7206 = vpop.f32.mrb[0].mxu0
    %7207 = vdwg.mxu0
    %v7208 = vlaneseq
    %v7209 = vshrl.u32 %v7208, 7
    %v7210 = vsub.s32 0, %v7209
    %v7211 = vrot.slane %v7118, %v7210
    %7212 = vrot.lane.b32.xlu0 %v7211, 32
    %v7213 = vpop.permute.xlu0 %7212
    %v7214 = vsel %vm291, %v7213, 0
    %7216 = vmatprep.subr.mxu0 0.0
    %7217 = vmatpush1.xpose.msra.mxu0 %v537
    %7218 = vmatprep.subr.mxu0 0.0
    %7219 = vmatpush1.xpose.msra.mxu0 0.0
    %7220 = vmatprep.subr.mxu0 0.0
    %7221 = vmatpush1.xpose.msra.mxu0 0.0
    %7222 = vmatprep.subr.mxu0 0.0
    %7223 = vmatpush1.xpose.msra.mxu0 0.0
    %7224 = vmatprep.subr.mxu0 0.0
    %7225 = vmatpush1.xpose.msra.mxu0 0.0
    %7226 = vmatprep.subr.mxu0 0.0
    %7227 = vmatpush1.xpose.msra.mxu0 0.0
    %7228 = vmatprep.subr.mxu0 0.0
    %7229 = vmatpush1.xpose.msra.mxu0 0.0
    %7230 = vmatprep.subr.mxu0 0.0
    %7231 = vmatpush1.xpose.msra.mxu0 0.0
    %7232 = vmatprep.subr.mxu0 0.0
    %7233 = vmatpush1.xpose.msra.mxu0 0.0
    %7234 = vmatprep.subr.mxu0 0.0
    %7235 = vmatpush1.xpose.msra.mxu0 0.0
    %7236 = vmatprep.subr.mxu0 0.0
    %7237 = vmatpush1.xpose.msra.mxu0 0.0
    %7238 = vmatprep.subr.mxu0 0.0
    %7239 = vmatpush1.xpose.msra.mxu0 0.0
    %7240 = vmatprep.subr.mxu0 0.0
    %7241 = vmatpush1.xpose.msra.mxu0 0.0
    %7242 = vmatprep.subr.mxu0 0.0
    %7243 = vmatpush1.xpose.msra.mxu0 0.0
    %7244 = vmatprep.subr.mxu0 0.0
    %7245 = vmatpush1.xpose.msra.mxu0 0.0
    %7246 = vmatprep.subr.mxu0 0.0
    %7247 = vmatpush1.xpose.msra.mxu0 0.0
    %7248 = vmatprep.subr.mxu0 0.0
    %7249 = vmatpush1.xpose.msra.mxu0 0.0
    %7250 = vmatprep.subr.mxu0 0.0
    %7251 = vmatpush1.xpose.msra.mxu0 0.0
    %7252 = vmatprep.subr.mxu0 0.0
    %7253 = vmatpush1.xpose.msra.mxu0 0.0
    %7254 = vmatprep.subr.mxu0 0.0
    %7255 = vmatpush1.xpose.msra.mxu0 0.0
    %7256 = vmatprep.subr.mxu0 0.0
    %7257 = vmatpush1.xpose.msra.mxu0 0.0
    %7258 = vmatprep.subr.mxu0 0.0
    %7259 = vmatpush1.xpose.msra.mxu0 0.0
    %7260 = vmatprep.subr.mxu0 0.0
    %7261 = vmatpush1.xpose.msra.mxu0 0.0
    %7262 = vmatprep.subr.mxu0 0.0
    %7263 = vmatpush1.xpose.msra.mxu0 0.0
    %7264 = vmatprep.subr.mxu0 0.0
    %7265 = vmatpush1.xpose.msra.mxu0 0.0
    %7266 = vmatprep.subr.mxu0 0.0
    %7267 = vmatpush1.xpose.msra.mxu0 0.0
    %7268 = vmatprep.subr.mxu0 0.0
    %7269 = vmatpush1.xpose.msra.mxu0 0.0
    %7270 = vmatprep.subr.mxu0 0.0
    %7271 = vmatpush1.xpose.msra.mxu0 0.0
    %7272 = vmatprep.subr.mxu0 0.0
    %7273 = vmatpush1.xpose.msra.mxu0 0.0
    %7274 = vmatprep.subr.mxu0 0.0
    %7275 = vmatpush1.xpose.msra.mxu0 0.0
    %7276 = vmatprep.subr.mxu0 0.0
    %7277 = vmatpush1.xpose.msra.mxu0 0.0
    %7278 = vmatprep.subr.mxu0 0.0
    %7279 = vmatpush1.xpose.msra.mxu0 0.0
    %7280 = vmatprep.mubr.f32.mxu0 0.0
    %7281 = vmatmul.mubr.f32.gmra.mrb[0].mxu0 %v7214
    %v7282 = vpop.f32.mrb[0].mxu0
    %v7283 = vadd.f32 0.0, %v7282
    %v7284 = vpop.f32.mrb[0].mxu0
    %7285 = vdwg.mxu0
    %v7286 = vlaneseq
    %v7287 = vshrl.u32 %v7286, 7
    %v7288 = vsub.s32 0, %v7287
    %v7289 = vrot.slane %v7126, %v7288
    %7290 = vrot.lane.b32.xlu0 %v7289, 32
    %v7291 = vpop.permute.xlu0 %7290
    %v7292 = vsel %vm291, %v7291, 0
    %7294 = vmatprep.subr.mxu0 0.0
    %7295 = vmatpush1.xpose.msra.mxu0 %v618
    %7296 = vmatprep.subr.mxu0 0.0
    %7297 = vmatpush1.xpose.msra.mxu0 0.0
    %7298 = vmatprep.subr.mxu0 0.0
    %7299 = vmatpush1.xpose.msra.mxu0 0.0
    %7300 = vmatprep.subr.mxu0 0.0
    %7301 = vmatpush1.xpose.msra.mxu0 0.0
    %7302 = vmatprep.subr.mxu0 0.0
    %7303 = vmatpush1.xpose.msra.mxu0 0.0
    %7304 = vmatprep.subr.mxu0 0.0
    %7305 = vmatpush1.xpose.msra.mxu0 0.0
    %7306 = vmatprep.subr.mxu0 0.0
    %7307 = vmatpush1.xpose.msra.mxu0 0.0
    %7308 = vmatprep.subr.mxu0 0.0
    %7309 = vmatpush1.xpose.msra.mxu0 0.0
    %7310 = vmatprep.subr.mxu0 0.0
    %7311 = vmatpush1.xpose.msra.mxu0 0.0
    %7312 = vmatprep.subr.mxu0 0.0
    %7313 = vmatpush1.xpose.msra.mxu0 0.0
    %7314 = vmatprep.subr.mxu0 0.0
    %7315 = vmatpush1.xpose.msra.mxu0 0.0
    %7316 = vmatprep.subr.mxu0 0.0
    %7317 = vmatpush1.xpose.msra.mxu0 0.0
    %7318 = vmatprep.subr.mxu0 0.0
    %7319 = vmatpush1.xpose.msra.mxu0 0.0
    %7320 = vmatprep.subr.mxu0 0.0
    %7321 = vmatpush1.xpose.msra.mxu0 0.0
    %7322 = vmatprep.subr.mxu0 0.0
    %7323 = vmatpush1.xpose.msra.mxu0 0.0
    %7324 = vmatprep.subr.mxu0 0.0
    %7325 = vmatpush1.xpose.msra.mxu0 0.0
    %7326 = vmatprep.subr.mxu0 0.0
    %7327 = vmatpush1.xpose.msra.mxu0 0.0
    %7328 = vmatprep.subr.mxu0 0.0
    %7329 = vmatpush1.xpose.msra.mxu0 0.0
    %7330 = vmatprep.subr.mxu0 0.0
    %7331 = vmatpush1.xpose.msra.mxu0 0.0
    %7332 = vmatprep.subr.mxu0 0.0
    %7333 = vmatpush1.xpose.msra.mxu0 0.0
    %7334 = vmatprep.subr.mxu0 0.0
    %7335 = vmatpush1.xpose.msra.mxu0 0.0
    %7336 = vmatprep.subr.mxu0 0.0
    %7337 = vmatpush1.xpose.msra.mxu0 0.0
    %7338 = vmatprep.subr.mxu0 0.0
    %7339 = vmatpush1.xpose.msra.mxu0 0.0
    %7340 = vmatprep.subr.mxu0 0.0
    %7341 = vmatpush1.xpose.msra.mxu0 0.0
    %7342 = vmatprep.subr.mxu0 0.0
    %7343 = vmatpush1.xpose.msra.mxu0 0.0
    %7344 = vmatprep.subr.mxu0 0.0
    %7345 = vmatpush1.xpose.msra.mxu0 0.0
    %7346 = vmatprep.subr.mxu0 0.0
    %7347 = vmatpush1.xpose.msra.mxu0 0.0
    %7348 = vmatprep.subr.mxu0 0.0
    %7349 = vmatpush1.xpose.msra.mxu0 0.0
    %7350 = vmatprep.subr.mxu0 0.0
    %7351 = vmatpush1.xpose.msra.mxu0 0.0
    %7352 = vmatprep.subr.mxu0 0.0
    %7353 = vmatpush1.xpose.msra.mxu0 0.0
    %7354 = vmatprep.subr.mxu0 0.0
    %7355 = vmatpush1.xpose.msra.mxu0 0.0
    %7356 = vmatprep.subr.mxu0 0.0
    %7357 = vmatpush1.xpose.msra.mxu0 0.0
    %7358 = vmatprep.mubr.f32.mxu0 0.0
    %7359 = vmatmul.mubr.f32.gmra.mrb[0].mxu0 %v7292
    %v7360 = vpop.f32.mrb[0].mxu0
    %v7361 = vadd.f32 0.0, %v7360
    %v7362 = vpop.f32.mrb[0].mxu0
    %7363 = vdwg.mxu0
    %v7364 = vlaneseq
    %v7365 = vshrl.u32 %v7364, 7
    %v7366 = vsub.s32 0, %v7365
    %v7367 = vrot.slane %v7128, %v7366
    %7368 = vrot.lane.b32.xlu0 %v7367, 32
    %v7369 = vpop.permute.xlu0 %7368
    %v7370 = vsel %vm291, %v7369, 0
    %7372 = vmatprep.subr.mxu0 0.0
    %7373 = vmatpush1.xpose.msra.mxu0 %v699
    %7374 = vmatprep.subr.mxu0 0.0
    %7375 = vmatpush1.xpose.msra.mxu0 0.0
    %7376 = vmatprep.subr.mxu0 0.0
    %7377 = vmatpush1.xpose.msra.mxu0 0.0
    %7378 = vmatprep.subr.mxu0 0.0
    %7379 = vmatpush1.xpose.msra.mxu0 0.0
    %7380 = vmatprep.subr.mxu0 0.0
    %7381 = vmatpush1.xpose.msra.mxu0 0.0
    %7382 = vmatprep.subr.mxu0 0.0
    %7383 = vmatpush1.xpose.msra.mxu0 0.0
    %7384 = vmatprep.subr.mxu0 0.0
    %7385 = vmatpush1.xpose.msra.mxu0 0.0
    %7386 = vmatprep.subr.mxu0 0.0
    %7387 = vmatpush1.xpose.msra.mxu0 0.0
    %7388 = vmatprep.subr.mxu0 0.0
    %7389 = vmatpush1.xpose.msra.mxu0 0.0
    %7390 = vmatprep.subr.mxu0 0.0
    %7391 = vmatpush1.xpose.msra.mxu0 0.0
    %7392 = vmatprep.subr.mxu0 0.0
    %7393 = vmatpush1.xpose.msra.mxu0 0.0
    %7394 = vmatprep.subr.mxu0 0.0
    %7395 = vmatpush1.xpose.msra.mxu0 0.0
    %7396 = vmatprep.subr.mxu0 0.0
    %7397 = vmatpush1.xpose.msra.mxu0 0.0
    %7398 = vmatprep.subr.mxu0 0.0
    %7399 = vmatpush1.xpose.msra.mxu0 0.0
    %7400 = vmatprep.subr.mxu0 0.0
    %7401 = vmatpush1.xpose.msra.mxu0 0.0
    %7402 = vmatprep.subr.mxu0 0.0
    %7403 = vmatpush1.xpose.msra.mxu0 0.0
    %7404 = vmatprep.subr.mxu0 0.0
    %7405 = vmatpush1.xpose.msra.mxu0 0.0
    %7406 = vmatprep.subr.mxu0 0.0
    %7407 = vmatpush1.xpose.msra.mxu0 0.0
    %7408 = vmatprep.subr.mxu0 0.0
    %7409 = vmatpush1.xpose.msra.mxu0 0.0
    %7410 = vmatprep.subr.mxu0 0.0
    %7411 = vmatpush1.xpose.msra.mxu0 0.0
    %7412 = vmatprep.subr.mxu0 0.0
    %7413 = vmatpush1.xpose.msra.mxu0 0.0
    %7414 = vmatprep.subr.mxu0 0.0
    %7415 = vmatpush1.xpose.msra.mxu0 0.0
    %7416 = vmatprep.subr.mxu0 0.0
    %7417 = vmatpush1.xpose.msra.mxu0 0.0
    %7418 = vmatprep.subr.mxu0 0.0
    %7419 = vmatpush1.xpose.msra.mxu0 0.0
    %7420 = vmatprep.subr.mxu0 0.0
    %7421 = vmatpush1.xpose.msra.mxu0 0.0
    %7422 = vmatprep.subr.mxu0 0.0
    %7423 = vmatpush1.xpose.msra.mxu0 0.0
    %7424 = vmatprep.subr.mxu0 0.0
    %7425 = vmatpush1.xpose.msra.mxu0 0.0
    %7426 = vmatprep.subr.mxu0 0.0
    %7427 = vmatpush1.xpose.msra.mxu0 0.0
    %7428 = vmatprep.subr.mxu0 0.0
    %7429 = vmatpush1.xpose.msra.mxu0 0.0
    %7430 = vmatprep.subr.mxu0 0.0
    %7431 = vmatpush1.xpose.msra.mxu0 0.0
    %7432 = vmatprep.subr.mxu0 0.0
    %7433 = vmatpush1.xpose.msra.mxu0 0.0
    %7434 = vmatprep.subr.mxu0 0.0
    %7435 = vmatpush1.xpose.msra.mxu0 0.0
    %7436 = vmatprep.mubr.f32.mxu0 0.0
    %7437 = vmatmul.mubr.f32.gmra.mrb[0].mxu0 %v7370
    %v7438 = vpop.f32.mrb[0].mxu0
    %v7439 = vadd.f32 0.0, %v7438
    %v7440 = vpop.f32.mrb[0].mxu0
    %7441 = vdwg.mxu0
    %v7442 = vlaneseq
    %v7443 = vshrl.u32 %v7442, 7
    %v7444 = vsub.s32 0, %v7443
    %v7445 = vrot.slane %v7111, %v7444
    %7446 = vrot.lane.b32.xlu0 %v7445, 32
    %v7447 = vpop.permute.xlu0 %7446
    %v7448 = vsel %vm291, %v7447, 0
    %7450 = vmatprep.subr.mxu0 0.0
    %7451 = vmatpush1.xpose.msra.mxu0 %v780
    %7452 = vmatprep.subr.mxu0 0.0
    %7453 = vmatpush1.xpose.msra.mxu0 0.0
    %7454 = vmatprep.subr.mxu0 0.0
    %7455 = vmatpush1.xpose.msra.mxu0 0.0
    %7456 = vmatprep.subr.mxu0 0.0
    %7457 = vmatpush1.xpose.msra.mxu0 0.0
    %7458 = vmatprep.subr.mxu0 0.0
    %7459 = vmatpush1.xpose.msra.mxu0 0.0
    %7460 = vmatprep.subr.mxu0 0.0
    %7461 = vmatpush1.xpose.msra.mxu0 0.0
    %7462 = vmatprep.subr.mxu0 0.0
    %7463 = vmatpush1.xpose.msra.mxu0 0.0
    %7464 = vmatprep.subr.mxu0 0.0
    %7465 = vmatpush1.xpose.msra.mxu0 0.0
    %7466 = vmatprep.subr.mxu0 0.0
    %7467 = vmatpush1.xpose.msra.mxu0 0.0
    %7468 = vmatprep.subr.mxu0 0.0
    %7469 = vmatpush1.xpose.msra.mxu0 0.0
    %7470 = vmatprep.subr.mxu0 0.0
    %7471 = vmatpush1.xpose.msra.mxu0 0.0
    %7472 = vmatprep.subr.mxu0 0.0
    %7473 = vmatpush1.xpose.msra.mxu0 0.0
    %7474 = vmatprep.subr.mxu0 0.0
    %7475 = vmatpush1.xpose.msra.mxu0 0.0
    %7476 = vmatprep.subr.mxu0 0.0
    %7477 = vmatpush1.xpose.msra.mxu0 0.0
    %7478 = vmatprep.subr.mxu0 0.0
    %7479 = vmatpush1.xpose.msra.mxu0 0.0
    %7480 = vmatprep.subr.mxu0 0.0
    %7481 = vmatpush1.xpose.msra.mxu0 0.0
    %7482 = vmatprep.subr.mxu0 0.0
    %7483 = vmatpush1.xpose.msra.mxu0 0.0
    %7484 = vmatprep.subr.mxu0 0.0
    %7485 = vmatpush1.xpose.msra.mxu0 0.0
    %7486 = vmatprep.subr.mxu0 0.0
    %7487 = vmatpush1.xpose.msra.mxu0 0.0
    %7488 = vmatprep.subr.mxu0 0.0
    %7489 = vmatpush1.xpose.msra.mxu0 0.0
    %7490 = vmatprep.subr.mxu0 0.0
    %7491 = vmatpush1.xpose.msra.mxu0 0.0
    %7492 = vmatprep.subr.mxu0 0.0
    %7493 = vmatpush1.xpose.msra.mxu0 0.0
    %7494 = vmatprep.subr.mxu0 0.0
    %7495 = vmatpush1.xpose.msra.mxu0 0.0
    %7496 = vmatprep.subr.mxu0 0.0
    %7497 = vmatpush1.xpose.msra.mxu0 0.0
    %7498 = vmatprep.subr.mxu0 0.0
    %7499 = vmatpush1.xpose.msra.mxu0 0.0
    %7500 = vmatprep.subr.mxu0 0.0
    %7501 = vmatpush1.xpose.msra.mxu0 0.0
    %7502 = vmatprep.subr.mxu0 0.0
    %7503 = vmatpush1.xpose.msra.mxu0 0.0
    %7504 = vmatprep.subr.mxu0 0.0
    %7505 = vmatpush1.xpose.msra.mxu0 0.0
    %7506 = vmatprep.subr.mxu0 0.0
    %7507 = vmatpush1.xpose.msra.mxu0 0.0
    %7508 = vmatprep.subr.mxu0 0.0
    %7509 = vmatpush1.xpose.msra.mxu0 0.0
    %7510 = vmatprep.subr.mxu0 0.0
    %7511 = vmatpush1.xpose.msra.mxu0 0.0
    %7512 = vmatprep.subr.mxu0 0.0
    %7513 = vmatpush1.xpose.msra.mxu0 0.0
    %7514 = vmatprep.mubr.f32.mxu0 0.0
    %7515 = vmatmul.mubr.f32.gmra.mrb[0].mxu0 %v7448
    %v7516 = vpop.f32.mrb[0].mxu0
    %v7517 = vadd.f32 0.0, %v7516
    %v7518 = vpop.f32.mrb[0].mxu0
    %7519 = vdwg.mxu0
    %v7520 = vlaneseq
    %v7521 = vshrl.u32 %v7520, 7
    %v7522 = vsub.s32 0, %v7521
    %v7523 = vrot.slane %v7125, %v7522
    %7524 = vrot.lane.b32.xlu0 %v7523, 32
    %v7525 = vpop.permute.xlu0 %7524
    %v7526 = vsel %vm291, %v7525, 0
    %7528 = vmatprep.subr.mxu0 0.0
    %7529 = vmatpush1.xpose.msra.mxu0 %v861
    %7530 = vmatprep.subr.mxu0 0.0
    %7531 = vmatpush1.xpose.msra.mxu0 0.0
    %7532 = vmatprep.subr.mxu0 0.0
    %7533 = vmatpush1.xpose.msra.mxu0 0.0
    %7534 = vmatprep.subr.mxu0 0.0
    %7535 = vmatpush1.xpose.msra.mxu0 0.0
    %7536 = vmatprep.subr.mxu0 0.0
    %7537 = vmatpush1.xpose.msra.mxu0 0.0
    %7538 = vmatprep.subr.mxu0 0.0
    %7539 = vmatpush1.xpose.msra.mxu0 0.0
    %7540 = vmatprep.subr.mxu0 0.0
    %7541 = vmatpush1.xpose.msra.mxu0 0.0
    %7542 = vmatprep.subr.mxu0 0.0
    %7543 = vmatpush1.xpose.msra.mxu0 0.0
    %7544 = vmatprep.subr.mxu0 0.0
    %7545 = vmatpush1.xpose.msra.mxu0 0.0
    %7546 = vmatprep.subr.mxu0 0.0
    %7547 = vmatpush1.xpose.msra.mxu0 0.0
    %7548 = vmatprep.subr.mxu0 0.0
    %7549 = vmatpush1.xpose.msra.mxu0 0.0
    %7550 = vmatprep.subr.mxu0 0.0
    %7551 = vmatpush1.xpose.msra.mxu0 0.0
    %7552 = vmatprep.subr.mxu0 0.0
    %7553 = vmatpush1.xpose.msra.mxu0 0.0
    %7554 = vmatprep.subr.mxu0 0.0
    %7555 = vmatpush1.xpose.msra.mxu0 0.0
    %7556 = vmatprep.subr.mxu0 0.0
    %7557 = vmatpush1.xpose.msra.mxu0 0.0
    %7558 = vmatprep.subr.mxu0 0.0
    %7559 = vmatpush1.xpose.msra.mxu0 0.0
    %7560 = vmatprep.subr.mxu0 0.0
    %7561 = vmatpush1.xpose.msra.mxu0 0.0
    %7562 = vmatprep.subr.mxu0 0.0
    %7563 = vmatpush1.xpose.msra.mxu0 0.0
    %7564 = vmatprep.subr.mxu0 0.0
    %7565 = vmatpush1.xpose.msra.mxu0 0.0
    %7566 = vmatprep.subr.mxu0 0.0
    %7567 = vmatpush1.xpose.msra.mxu0 0.0
    %7568 = vmatprep.subr.mxu0 0.0
    %7569 = vmatpush1.xpose.msra.mxu0 0.0
    %7570 = vmatprep.subr.mxu0 0.0
    %7571 = vmatpush1.xpose.msra.mxu0 0.0
    %7572 = vmatprep.subr.mxu0 0.0
    %7573 = vmatpush1.xpose.msra.mxu0 0.0
    %7574 = vmatprep.subr.mxu0 0.0
    %7575 = vmatpush1.xpose.msra.mxu0 0.0
    %7576 = vmatprep.subr.mxu0 0.0
    %7577 = vmatpush1.xpose.msra.mxu0 0.0
    %7578 = vmatprep.subr.mxu0 0.0
    %7579 = vmatpush1.xpose.msra.mxu0 0.0
    %7580 = vmatprep.subr.mxu0 0.0
    %7581 = vmatpush1.xpose.msra.mxu0 0.0
    %7582 = vmatprep.subr.mxu0 0.0
    %7583 = vmatpush1.xpose.msra.mxu0 0.0
    %7584 = vmatprep.subr.mxu0 0.0
    %7585 = vmatpush1.xpose.msra.mxu0 0.0
    %7586 = vmatprep.subr.mxu0 0.0
    %7587 = vmatpush1.xpose.msra.mxu0 0.0
    %7588 = vmatprep.subr.mxu0 0.0
    %7589 = vmatpush1.xpose.msra.mxu0 0.0
    %7590 = vmatprep.subr.mxu0 0.0
    %7591 = vmatpush1.xpose.msra.mxu0 0.0
    %7592 = vmatprep.mubr.f32.mxu0 0.0
    %7593 = vmatmul.mubr.f32.gmra.mrb[0].mxu0 %v7526
    %v7594 = vpop.f32.mrb[0].mxu0
    %v7595 = vadd.f32 0.0, %v7594
    %v7596 = vpop.f32.mrb[0].mxu0
    %7597 = vdwg.mxu0
    %v7598 = vlaneseq
    %v7599 = vshrl.u32 %v7598, 7
    %v7600 = vsub.s32 0, %v7599
    %v7601 = vrot.slane %v7127, %v7600
    %7602 = vrot.lane.b32.xlu0 %v7601, 32
    %v7603 = vpop.permute.xlu0 %7602
    %v7604 = vsel %vm291, %v7603, 0
    %7606 = vmatprep.subr.mxu0 0.0
    %7607 = vmatpush1.xpose.msra.mxu0 %v942
    %7608 = vmatprep.subr.mxu0 0.0
    %7609 = vmatpush1.xpose.msra.mxu0 0.0
    %7610 = vmatprep.subr.mxu0 0.0
    %7611 = vmatpush1.xpose.msra.mxu0 0.0
    %7612 = vmatprep.subr.mxu0 0.0
    %7613 = vmatpush1.xpose.msra.mxu0 0.0
    %7614 = vmatprep.subr.mxu0 0.0
    %7615 = vmatpush1.xpose.msra.mxu0 0.0
    %7616 = vmatprep.subr.mxu0 0.0
    %7617 = vmatpush1.xpose.msra.mxu0 0.0
    %7618 = vmatprep.subr.mxu0 0.0
    %7619 = vmatpush1.xpose.msra.mxu0 0.0
    %7620 = vmatprep.subr.mxu0 0.0
    %7621 = vmatpush1.xpose.msra.mxu0 0.0
    %7622 = vmatprep.subr.mxu0 0.0
    %7623 = vmatpush1.xpose.msra.mxu0 0.0
    %7624 = vmatprep.subr.mxu0 0.0
    %7625 = vmatpush1.xpose.msra.mxu0 0.0
    %7626 = vmatprep.subr.mxu0 0.0
    %7627 = vmatpush1.xpose.msra.mxu0 0.0
    %7628 = vmatprep.subr.mxu0 0.0
    %7629 = vmatpush1.xpose.msra.mxu0 0.0
    %7630 = vmatprep.subr.mxu0 0.0
    %7631 = vmatpush1.xpose.msra.mxu0 0.0
    %7632 = vmatprep.subr.mxu0 0.0
    %7633 = vmatpush1.xpose.msra.mxu0 0.0
    %7634 = vmatprep.subr.mxu0 0.0
    %7635 = vmatpush1.xpose.msra.mxu0 0.0
    %7636 = vmatprep.subr.mxu0 0.0
    %7637 = vmatpush1.xpose.msra.mxu0 0.0
    %7638 = vmatprep.subr.mxu0 0.0
    %7639 = vmatpush1.xpose.msra.mxu0 0.0
    %7640 = vmatprep.subr.mxu0 0.0
    %7641 = vmatpush1.xpose.msra.mxu0 0.0
    %7642 = vmatprep.subr.mxu0 0.0
    %7643 = vmatpush1.xpose.msra.mxu0 0.0
    %7644 = vmatprep.subr.mxu0 0.0
    %7645 = vmatpush1.xpose.msra.mxu0 0.0
    %7646 = vmatprep.subr.mxu0 0.0
    %7647 = vmatpush1.xpose.msra.mxu0 0.0
    %7648 = vmatprep.subr.mxu0 0.0
    %7649 = vmatpush1.xpose.msra.mxu0 0.0
    %7650 = vmatprep.subr.mxu0 0.0
    %7651 = vmatpush1.xpose.msra.mxu0 0.0
    %7652 = vmatprep.subr.mxu0 0.0
    %7653 = vmatpush1.xpose.msra.mxu0 0.0
    %7654 = vmatprep.subr.mxu0 0.0
    %7655 = vmatpush1.xpose.msra.mxu0 0.0
    %7656 = vmatprep.subr.mxu0 0.0
    %7657 = vmatpush1.xpose.msra.mxu0 0.0
    %7658 = vmatprep.subr.mxu0 0.0
    %7659 = vmatpush1.xpose.msra.mxu0 0.0
    %7660 = vmatprep.subr.mxu0 0.0
    %7661 = vmatpush1.xpose.msra.mxu0 0.0
    %7662 = vmatprep.subr.mxu0 0.0
    %7663 = vmatpush1.xpose.msra.mxu0 0.0
    %7664 = vmatprep.subr.mxu0 0.0
    %7665 = vmatpush1.xpose.msra.mxu0 0.0
    %7666 = vmatprep.subr.mxu0 0.0
    %7667 = vmatpush1.xpose.msra.mxu0 0.0
    %7668 = vmatprep.subr.mxu0 0.0
    %7669 = vmatpush1.xpose.msra.mxu0 0.0
    %7670 = vmatprep.mubr.f32.mxu0 0.0
    %7671 = vmatmul.mubr.f32.gmra.mrb[0].mxu0 %v7604
    %v7672 = vpop.f32.mrb[0].mxu0
    %v7673 = vadd.f32 0.0, %v7672
    %v7674 = vpop.f32.mrb[0].mxu0
    %7675 = vdwg.mxu0
    %v7676 = vlaneseq
    %v7677 = vshrl.u32 %v7676, 7
    %v7678 = vsub.s32 0, %v7677
    %v7679 = vrot.slane %v7129, %v7678
    %7680 = vrot.lane.b32.xlu0 %v7679, 32
    %v7681 = vpop.permute.xlu0 %7680
    %v7682 = vsel %vm291, %v7681, 0
    %7684 = vmatprep.subr.mxu0 0.0
    %7685 = vmatpush1.xpose.msra.mxu0 %v1023
    %7686 = vmatprep.subr.mxu0 0.0
    %7687 = vmatpush1.xpose.msra.mxu0 0.0
    %7688 = vmatprep.subr.mxu0 0.0
    %7689 = vmatpush1.xpose.msra.mxu0 0.0
    %7690 = vmatprep.subr.mxu0 0.0
    %7691 = vmatpush1.xpose.msra.mxu0 0.0
    %7692 = vmatprep.subr.mxu0 0.0
    %7693 = vmatpush1.xpose.msra.mxu0 0.0
    %7694 = vmatprep.subr.mxu0 0.0
    %7695 = vmatpush1.xpose.msra.mxu0 0.0
    %7696 = vmatprep.subr.mxu0 0.0
    %7697 = vmatpush1.xpose.msra.mxu0 0.0
    %7698 = vmatprep.subr.mxu0 0.0
    %7699 = vmatpush1.xpose.msra.mxu0 0.0
    %7700 = vmatprep.subr.mxu0 0.0
    %7701 = vmatpush1.xpose.msra.mxu0 0.0
    %7702 = vmatprep.subr.mxu0 0.0
    %7703 = vmatpush1.xpose.msra.mxu0 0.0
    %7704 = vmatprep.subr.mxu0 0.0
    %7705 = vmatpush1.xpose.msra.mxu0 0.0
    %7706 = vmatprep.subr.mxu0 0.0
    %7707 = vmatpush1.xpose.msra.mxu0 0.0
    %7708 = vmatprep.subr.mxu0 0.0
    %7709 = vmatpush1.xpose.msra.mxu0 0.0
    %7710 = vmatprep.subr.mxu0 0.0
    %7711 = vmatpush1.xpose.msra.mxu0 0.0
    %7712 = vmatprep.subr.mxu0 0.0
    %7713 = vmatpush1.xpose.msra.mxu0 0.0
    %7714 = vmatprep.subr.mxu0 0.0
    %7715 = vmatpush1.xpose.msra.mxu0 0.0
    %7716 = vmatprep.subr.mxu0 0.0
    %7717 = vmatpush1.xpose.msra.mxu0 0.0
    %7718 = vmatprep.subr.mxu0 0.0
    %7719 = vmatpush1.xpose.msra.mxu0 0.0
    %7720 = vmatprep.subr.mxu0 0.0
    %7721 = vmatpush1.xpose.msra.mxu0 0.0
    %7722 = vmatprep.subr.mxu0 0.0
    %7723 = vmatpush1.xpose.msra.mxu0 0.0
    %7724 = vmatprep.subr.mxu0 0.0
    %7725 = vmatpush1.xpose.msra.mxu0 0.0
    %7726 = vmatprep.subr.mxu0 0.0
    %7727 = vmatpush1.xpose.msra.mxu0 0.0
    %7728 = vmatprep.subr.mxu0 0.0
    %7729 = vmatpush1.xpose.msra.mxu0 0.0
    %7730 = vmatprep.subr.mxu0 0.0
    %7731 = vmatpush1.xpose.msra.mxu0 0.0
    %7732 = vmatprep.subr.mxu0 0.0
    %7733 = vmatpush1.xpose.msra.mxu0 0.0
    %7734 = vmatprep.subr.mxu0 0.0
    %7735 = vmatpush1.xpose.msra.mxu0 0.0
    %7736 = vmatprep.subr.mxu0 0.0
    %7737 = vmatpush1.xpose.msra.mxu0 0.0
    %7738 = vmatprep.subr.mxu0 0.0
    %7739 = vmatpush1.xpose.msra.mxu0 0.0
    %7740 = vmatprep.subr.mxu0 0.0
    %7741 = vmatpush1.xpose.msra.mxu0 0.0
    %7742 = vmatprep.subr.mxu0 0.0
    %7743 = vmatpush1.xpose.msra.mxu0 0.0
    %7744 = vmatprep.subr.mxu0 0.0
    %7745 = vmatpush1.xpose.msra.mxu0 0.0
    %7746 = vmatprep.subr.mxu0 0.0
    %7747 = vmatpush1.xpose.msra.mxu0 0.0
    %7748 = vmatprep.mubr.f32.mxu0 0.0
    %7749 = vmatmul.mubr.f32.gmra.mrb[0].mxu0 %v7682
    %v7750 = vpop.f32.mrb[0].mxu0
    %v7751 = vadd.f32 0.0, %v7750
    %v7752 = vpop.f32.mrb[0].mxu0
    %7753 = vdwg.mxu0
    %v7754 = vsel %vm1095, %v7205, -inf
    %7755 = vmax.xlane.f32.xlu0 %v7754
    %v7756 = vpop.xlane.xlu0 %7755
    %v7757 = vsel %vm1095, %v7283, -inf
    %7758 = vmax.xlane.f32.xlu0 %v7757
    %v7759 = vpop.xlane.xlu0 %7758
    %v7760 = vsel %vm1095, %v7361, -inf
    %7761 = vmax.xlane.f32.xlu0 %v7760
    %v7762 = vpop.xlane.xlu0 %7761
    %v7763 = vsel %vm1095, %v7439, -inf
    %7764 = vmax.xlane.f32.xlu0 %v7763
    %v7765 = vpop.xlane.xlu0 %7764
    %v7766 = vsel %vm1095, %v7517, -inf
    %7767 = vmax.xlane.f32.xlu0 %v7766
    %v7768 = vpop.xlane.xlu0 %7767
    %v7769 = vsel %vm1095, %v7595, -inf
    %7770 = vmax.xlane.f32.xlu0 %v7769
    %v7771 = vpop.xlane.xlu0 %7770
    %v7772 = vsel %vm1095, %v7673, -inf
    %7773 = vmax.xlane.f32.xlu0 %v7772
    %v7774 = vpop.xlane.xlu0 %7773
    %v7775 = vsel %vm1095, %v7751, -inf
    %7776 = vmax.xlane.f32.xlu0 %v7775
    %v7777 = vpop.xlane.xlu0 %7776
    %v7778 = vsub.f32 %v7205, %v7756
    %v7779 = vsub.f32 %v7283, %v7759
    %v7780 = vsub.f32 %v7361, %v7762
    %v7781 = vsub.f32 %v7439, %v7765
    %v7782 = vsub.f32 %v7517, %v7768
    %v7783 = vsub.f32 %v7595, %v7771
    %v7784 = vsub.f32 %v7673, %v7774
    %v7785 = vsub.f32 %v7751, %v7777
    %v7786 = vmul.f32 %v7778, 1.442695
    %v7787 = vpow.pop %v7786
    %v7788 = vmul.f32 %v7779, 1.442695
    %v7789 = vpow.pop %v7788
    %v7790 = vmul.f32 %v7780, 1.442695
    %v7791 = vpow.pop %v7790
    %v7792 = vmul.f32 %v7781, 1.442695
    %v7793 = vpow.pop %v7792
    %v7794 = vmul.f32 %v7782, 1.442695
    %v7795 = vpow.pop %v7794
    %v7796 = vmul.f32 %v7783, 1.442695
    %v7797 = vpow.pop %v7796
    %v7798 = vmul.f32 %v7784, 1.442695
    %v7799 = vpow.pop %v7798
    %v7800 = vmul.f32 %v7785, 1.442695
    %v7801 = vpow.pop %v7800
    %v7802 = vsel %vm1095, %v7787, 0.0
    %7803 = vadd.xlane.f32.xlu0 %v7802
    %v7804 = vpop.xlane.xlu0 %7803
    %v7805 = vsel %vm1095, %v7789, 0.0
    %7806 = vadd.xlane.f32.xlu0 %v7805
    %v7807 = vpop.xlane.xlu0 %7806
    %v7808 = vsel %vm1095, %v7791, 0.0
    %7809 = vadd.xlane.f32.xlu0 %v7808
    %v7810 = vpop.xlane.xlu0 %7809
    %v7811 = vsel %vm1095, %v7793, 0.0
    %7812 = vadd.xlane.f32.xlu0 %v7811
    %v7813 = vpop.xlane.xlu0 %7812
    %v7814 = vsel %vm1095, %v7795, 0.0
    %7815 = vadd.xlane.f32.xlu0 %v7814
    %v7816 = vpop.xlane.xlu0 %7815
    %v7817 = vsel %vm1095, %v7797, 0.0
    %7818 = vadd.xlane.f32.xlu0 %v7817
    %v7819 = vpop.xlane.xlu0 %7818
    %v7820 = vsel %vm1095, %v7799, 0.0
    %7821 = vadd.xlane.f32.xlu0 %v7820
    %v7822 = vpop.xlane.xlu0 %7821
    %v7823 = vsel %vm1095, %v7801, 0.0
    %7824 = vadd.xlane.f32.xlu0 %v7823
    %v7825 = vpop.xlane.xlu0 %7824
    %v7826 = vrcp.pop %v7804
    %v7827 = vrcp.pop %v7807
    %v7828 = vrcp.pop %v7810
    %v7829 = vrcp.pop %v7813
    %v7830 = vrcp.pop %v7816
    %v7831 = vrcp.pop %v7819
    %v7832 = vrcp.pop %v7822
    %v7833 = vrcp.pop %v7825
    %v7834 = vmul.f32 %v7804, %v7826
    %v7835 = vmul.f32 %v7807, %v7827
    %v7836 = vmul.f32 %v7810, %v7828
    %v7837 = vmul.f32 %v7813, %v7829
    %v7838 = vmul.f32 %v7816, %v7830
    %v7839 = vmul.f32 %v7819, %v7831
    %v7840 = vmul.f32 %v7822, %v7832
    %v7841 = vmul.f32 %v7825, %v7833
    %v7842 = vsub.f32 2.0, %v7834
    %v7843 = vsub.f32 2.0, %v7835
    %v7844 = vsub.f32 2.0, %v7836
    %v7845 = vsub.f32 2.0, %v7837
    %v7846 = vsub.f32 2.0, %v7838
    %v7847 = vsub.f32 2.0, %v7839
    %v7848 = vsub.f32 2.0, %v7840
    %v7849 = vsub.f32 2.0, %v7841
    %v7850 = vmul.f32 %v7826, %v7842
    %v7851 = vmul.f32 %v7827, %v7843
    %v7852 = vmul.f32 %v7828, %v7844
    %v7853 = vmul.f32 %v7829, %v7845
    %v7854 = vmul.f32 %v7830, %v7846
    %v7855 = vmul.f32 %v7831, %v7847
    %v7856 = vmul.f32 %v7832, %v7848
    %v7857 = vmul.f32 %v7833, %v7849
    %v7858 = vmul.f32 %v7787, %v7850
    %v7859 = vmul.f32 %v7789, %v7851
    %v7860 = vmul.f32 %v7791, %v7852
    %v7861 = vmul.f32 %v7793, %v7853
    %v7862 = vmul.f32 %v7795, %v7854
    %v7863 = vmul.f32 %v7797, %v7855
    %v7864 = vmul.f32 %v7799, %v7856
    %v7865 = vmul.f32 %v7801, %v7857
    %v7867 = vsel %vm1208, %v7858, 0
    %7869 = vmatprep.subr.mxu0 0.0
    %7870 = vmatpush1.msra.mxu0 %v241
    %7871 = vmatprep.subr.mxu0 0.0
    %7872 = vmatpush1.msra.mxu0 0.0
    %7873 = vmatprep.subr.mxu0 0.0
    %7874 = vmatpush1.msra.mxu0 0.0
    %7875 = vmatprep.subr.mxu0 0.0
    %7876 = vmatpush1.msra.mxu0 0.0
    %7877 = vmatprep.subr.mxu0 0.0
    %7878 = vmatpush1.msra.mxu0 0.0
    %7879 = vmatprep.subr.mxu0 0.0
    %7880 = vmatpush1.msra.mxu0 0.0
    %7881 = vmatprep.subr.mxu0 0.0
    %7882 = vmatpush1.msra.mxu0 0.0
    %7883 = vmatprep.subr.mxu0 0.0
    %7884 = vmatpush1.msra.mxu0 0.0
    %7885 = vmatprep.subr.mxu0 0.0
    %7886 = vmatpush1.msra.mxu0 0.0
    %7887 = vmatprep.subr.mxu0 0.0
    %7888 = vmatpush1.msra.mxu0 0.0
    %7889 = vmatprep.subr.mxu0 0.0
    %7890 = vmatpush1.msra.mxu0 0.0
    %7891 = vmatprep.subr.mxu0 0.0
    %7892 = vmatpush1.msra.mxu0 0.0
    %7893 = vmatprep.subr.mxu0 0.0
    %7894 = vmatpush1.msra.mxu0 0.0
    %7895 = vmatprep.subr.mxu0 0.0
    %7896 = vmatpush1.msra.mxu0 0.0
    %7897 = vmatprep.subr.mxu0 0.0
    %7898 = vmatpush1.msra.mxu0 0.0
    %7899 = vmatprep.subr.mxu0 0.0
    %7900 = vmatpush1.msra.mxu0 0.0
    %7901 = vmatprep.subr.mxu0 0.0
    %7902 = vmatpush1.msra.mxu0 0.0
    %7903 = vmatprep.subr.mxu0 0.0
    %7904 = vmatpush1.msra.mxu0 0.0
    %7905 = vmatprep.subr.mxu0 0.0
    %7906 = vmatpush1.msra.mxu0 0.0
    %7907 = vmatprep.subr.mxu0 0.0
    %7908 = vmatpush1.msra.mxu0 0.0
    %7909 = vmatprep.subr.mxu0 0.0
    %7910 = vmatpush1.msra.mxu0 0.0
    %7911 = vmatprep.subr.mxu0 0.0
    %7912 = vmatpush1.msra.mxu0 0.0
    %7913 = vmatprep.subr.mxu0 0.0
    %7914 = vmatpush1.msra.mxu0 0.0
    %7915 = vmatprep.subr.mxu0 0.0
    %7916 = vmatpush1.msra.mxu0 0.0
    %7917 = vmatprep.subr.mxu0 0.0
    %7918 = vmatpush1.msra.mxu0 0.0
    %7919 = vmatprep.subr.mxu0 0.0
    %7920 = vmatpush1.msra.mxu0 0.0
    %7921 = vmatprep.subr.mxu0 0.0
    %7922 = vmatpush1.msra.mxu0 0.0
    %7923 = vmatprep.subr.mxu0 0.0
    %7924 = vmatpush1.msra.mxu0 0.0
    %7925 = vmatprep.subr.mxu0 0.0
    %7926 = vmatpush1.msra.mxu0 0.0
    %7927 = vmatprep.subr.mxu0 0.0
    %7928 = vmatpush1.msra.mxu0 0.0
    %7929 = vmatprep.subr.mxu0 0.0
    %7930 = vmatpush1.msra.mxu0 0.0
    %7931 = vmatprep.subr.mxu0 0.0
    %7932 = vmatpush1.msra.mxu0 0.0
    %7933 = vmatprep.mubr.f32.mxu0 0.0
    %7934 = vmatmul.mubr.f32.gmra.mrb[0].mxu0 %v7867
    %v7935 = vpop.f32.mrb[0].mxu0
    %v7936 = vadd.f32 0.0, %v7935
    %v7937 = vpop.f32.mrb[0].mxu0
    %7938 = vdwg.mxu0
    %v7940 = vsel %vm1208, %v7859, 0
    %7942 = vmatprep.subr.mxu0 0.0
    %7943 = vmatpush1.msra.mxu0 %v242
    %7944 = vmatprep.subr.mxu0 0.0
    %7945 = vmatpush1.msra.mxu0 0.0
    %7946 = vmatprep.subr.mxu0 0.0
    %7947 = vmatpush1.msra.mxu0 0.0
    %7948 = vmatprep.subr.mxu0 0.0
    %7949 = vmatpush1.msra.mxu0 0.0
    %7950 = vmatprep.subr.mxu0 0.0
    %7951 = vmatpush1.msra.mxu0 0.0
    %7952 = vmatprep.subr.mxu0 0.0
    %7953 = vmatpush1.msra.mxu0 0.0
    %7954 = vmatprep.subr.mxu0 0.0
    %7955 = vmatpush1.msra.mxu0 0.0
    %7956 = vmatprep.subr.mxu0 0.0
    %7957 = vmatpush1.msra.mxu0 0.0
    %7958 = vmatprep.subr.mxu0 0.0
    %7959 = vmatpush1.msra.mxu0 0.0
    %7960 = vmatprep.subr.mxu0 0.0
    %7961 = vmatpush1.msra.mxu0 0.0
    %7962 = vmatprep.subr.mxu0 0.0
    %7963 = vmatpush1.msra.mxu0 0.0
    %7964 = vmatprep.subr.mxu0 0.0
    %7965 = vmatpush1.msra.mxu0 0.0
    %7966 = vmatprep.subr.mxu0 0.0
    %7967 = vmatpush1.msra.mxu0 0.0
    %7968 = vmatprep.subr.mxu0 0.0
    %7969 = vmatpush1.msra.mxu0 0.0
    %7970 = vmatprep.subr.mxu0 0.0
    %7971 = vmatpush1.msra.mxu0 0.0
    %7972 = vmatprep.subr.mxu0 0.0
    %7973 = vmatpush1.msra.mxu0 0.0
    %7974 = vmatprep.subr.mxu0 0.0
    %7975 = vmatpush1.msra.mxu0 0.0
    %7976 = vmatprep.subr.mxu0 0.0
    %7977 = vmatpush1.msra.mxu0 0.0
    %7978 = vmatprep.subr.mxu0 0.0
    %7979 = vmatpush1.msra.mxu0 0.0
    %7980 = vmatprep.subr.mxu0 0.0
    %7981 = vmatpush1.msra.mxu0 0.0
    %7982 = vmatprep.subr.mxu0 0.0
    %7983 = vmatpush1.msra.mxu0 0.0
    %7984 = vmatprep.subr.mxu0 0.0
    %7985 = vmatpush1.msra.mxu0 0.0
    %7986 = vmatprep.subr.mxu0 0.0
    %7987 = vmatpush1.msra.mxu0 0.0
    %7988 = vmatprep.subr.mxu0 0.0
    %7989 = vmatpush1.msra.mxu0 0.0
    %7990 = vmatprep.subr.mxu0 0.0
    %7991 = vmatpush1.msra.mxu0 0.0
    %7992 = vmatprep.subr.mxu0 0.0
    %7993 = vmatpush1.msra.mxu0 0.0
    %7994 = vmatprep.subr.mxu0 0.0
    %7995 = vmatpush1.msra.mxu0 0.0
    %7996 = vmatprep.subr.mxu0 0.0
    %7997 = vmatpush1.msra.mxu0 0.0
    %7998 = vmatprep.subr.mxu0 0.0
    %7999 = vmatpush1.msra.mxu0 0.0
    %8000 = vmatprep.subr.mxu0 0.0
    %8001 = vmatpush1.msra.mxu0 0.0
    %8002 = vmatprep.subr.mxu0 0.0
    %8003 = vmatpush1.msra.mxu0 0.0
    %8004 = vmatprep.subr.mxu0 0.0
    %8005 = vmatpush1.msra.mxu0 0.0
    %8006 = vmatprep.mubr.f32.mxu0 0.0
    %8007 = vmatmul.mubr.f32.gmra.mrb[0].mxu0 %v7940
    %v8008 = vpop.f32.mrb[0].mxu0
    %v8009 = vadd.f32 0.0, %v8008
    %v8010 = vpop.f32.mrb[0].mxu0
    %8011 = vdwg.mxu0
    %v8013 = vsel %vm1208, %v7860, 0
    %8015 = vmatprep.subr.mxu0 0.0
    %8016 = vmatpush1.msra.mxu0 %v243
    %8017 = vmatprep.subr.mxu0 0.0
    %8018 = vmatpush1.msra.mxu0 0.0
    %8019 = vmatprep.subr.mxu0 0.0
    %8020 = vmatpush1.msra.mxu0 0.0
    %8021 = vmatprep.subr.mxu0 0.0
    %8022 = vmatpush1.msra.mxu0 0.0
    %8023 = vmatprep.subr.mxu0 0.0
    %8024 = vmatpush1.msra.mxu0 0.0
    %8025 = vmatprep.subr.mxu0 0.0
    %8026 = vmatpush1.msra.mxu0 0.0
    %8027 = vmatprep.subr.mxu0 0.0
    %8028 = vmatpush1.msra.mxu0 0.0
    %8029 = vmatprep.subr.mxu0 0.0
    %8030 = vmatpush1.msra.mxu0 0.0
    %8031 = vmatprep.subr.mxu0 0.0
    %8032 = vmatpush1.msra.mxu0 0.0
    %8033 = vmatprep.subr.mxu0 0.0
    %8034 = vmatpush1.msra.mxu0 0.0
    %8035 = vmatprep.subr.mxu0 0.0
    %8036 = vmatpush1.msra.mxu0 0.0
    %8037 = vmatprep.subr.mxu0 0.0
    %8038 = vmatpush1.msra.mxu0 0.0
    %8039 = vmatprep.subr.mxu0 0.0
    %8040 = vmatpush1.msra.mxu0 0.0
    %8041 = vmatprep.subr.mxu0 0.0
    %8042 = vmatpush1.msra.mxu0 0.0
    %8043 = vmatprep.subr.mxu0 0.0
    %8044 = vmatpush1.msra.mxu0 0.0
    %8045 = vmatprep.subr.mxu0 0.0
    %8046 = vmatpush1.msra.mxu0 0.0
    %8047 = vmatprep.subr.mxu0 0.0
    %8048 = vmatpush1.msra.mxu0 0.0
    %8049 = vmatprep.subr.mxu0 0.0
    %8050 = vmatpush1.msra.mxu0 0.0
    %8051 = vmatprep.subr.mxu0 0.0
    %8052 = vmatpush1.msra.mxu0 0.0
    %8053 = vmatprep.subr.mxu0 0.0
    %8054 = vmatpush1.msra.mxu0 0.0
    %8055 = vmatprep.subr.mxu0 0.0
    %8056 = vmatpush1.msra.mxu0 0.0
    %8057 = vmatprep.subr.mxu0 0.0
    %8058 = vmatpush1.msra.mxu0 0.0
    %8059 = vmatprep.subr.mxu0 0.0
    %8060 = vmatpush1.msra.mxu0 0.0
    %8061 = vmatprep.subr.mxu0 0.0
    %8062 = vmatpush1.msra.mxu0 0.0
    %8063 = vmatprep.subr.mxu0 0.0
    %8064 = vmatpush1.msra.mxu0 0.0
    %8065 = vmatprep.subr.mxu0 0.0
    %8066 = vmatpush1.msra.mxu0 0.0
    %8067 = vmatprep.subr.mxu0 0.0
    %8068 = vmatpush1.msra.mxu0 0.0
    %8069 = vmatprep.subr.mxu0 0.0
    %8070 = vmatpush1.msra.mxu0 0.0
    %8071 = vmatprep.subr.mxu0 0.0
    %8072 = vmatpush1.msra.mxu0 0.0
    %8073 = vmatprep.subr.mxu0 0.0
    %8074 = vmatpush1.msra.mxu0 0.0
    %8075 = vmatprep.subr.mxu0 0.0
    %8076 = vmatpush1.msra.mxu0 0.0
    %8077 = vmatprep.subr.mxu0 0.0
    %8078 = vmatpush1.msra.mxu0 0.0
    %8079 = vmatprep.mubr.f32.mxu0 0.0
    %8080 = vmatmul.mubr.f32.gmra.mrb[0].mxu0 %v8013
    %v8081 = vpop.f32.mrb[0].mxu0
    %v8082 = vadd.f32 0.0, %v8081
    %v8083 = vpop.f32.mrb[0].mxu0
    %8084 = vdwg.mxu0
    %v8086 = vsel %vm1208, %v7861, 0
    %8088 = vmatprep.subr.mxu0 0.0
    %8089 = vmatpush1.msra.mxu0 %v244
    %8090 = vmatprep.subr.mxu0 0.0
    %8091 = vmatpush1.msra.mxu0 0.0
    %8092 = vmatprep.subr.mxu0 0.0
    %8093 = vmatpush1.msra.mxu0 0.0
    %8094 = vmatprep.subr.mxu0 0.0
    %8095 = vmatpush1.msra.mxu0 0.0
    %8096 = vmatprep.subr.mxu0 0.0
    %8097 = vmatpush1.msra.mxu0 0.0
    %8098 = vmatprep.subr.mxu0 0.0
    %8099 = vmatpush1.msra.mxu0 0.0
    %8100 = vmatprep.subr.mxu0 0.0
    %8101 = vmatpush1.msra.mxu0 0.0
    %8102 = vmatprep.subr.mxu0 0.0
    %8103 = vmatpush1.msra.mxu0 0.0
    %8104 = vmatprep.subr.mxu0 0.0
    %8105 = vmatpush1.msra.mxu0 0.0
    %8106 = vmatprep.subr.mxu0 0.0
    %8107 = vmatpush1.msra.mxu0 0.0
    %8108 = vmatprep.subr.mxu0 0.0
    %8109 = vmatpush1.msra.mxu0 0.0
    %8110 = vmatprep.subr.mxu0 0.0
    %8111 = vmatpush1.msra.mxu0 0.0
    %8112 = vmatprep.subr.mxu0 0.0
    %8113 = vmatpush1.msra.mxu0 0.0
    %8114 = vmatprep.subr.mxu0 0.0
    %8115 = vmatpush1.msra.mxu0 0.0
    %8116 = vmatprep.subr.mxu0 0.0
    %8117 = vmatpush1.msra.mxu0 0.0
    %8118 = vmatprep.subr.mxu0 0.0
    %8119 = vmatpush1.msra.mxu0 0.0
    %8120 = vmatprep.subr.mxu0 0.0
    %8121 = vmatpush1.msra.mxu0 0.0
    %8122 = vmatprep.subr.mxu0 0.0
    %8123 = vmatpush1.msra.mxu0 0.0
    %8124 = vmatprep.subr.mxu0 0.0
    %8125 = vmatpush1.msra.mxu0 0.0
    %8126 = vmatprep.subr.mxu0 0.0
    %8127 = vmatpush1.msra.mxu0 0.0
    %8128 = vmatprep.subr.mxu0 0.0
    %8129 = vmatpush1.msra.mxu0 0.0
    %8130 = vmatprep.subr.mxu0 0.0
    %8131 = vmatpush1.msra.mxu0 0.0
    %8132 = vmatprep.subr.mxu0 0.0
    %8133 = vmatpush1.msra.mxu0 0.0
    %8134 = vmatprep.subr.mxu0 0.0
    %8135 = vmatpush1.msra.mxu0 0.0
    %8136 = vmatprep.subr.mxu0 0.0
    %8137 = vmatpush1.msra.mxu0 0.0
    %8138 = vmatprep.subr.mxu0 0.0
    %8139 = vmatpush1.msra.mxu0 0.0
    %8140 = vmatprep.subr.mxu0 0.0
    %8141 = vmatpush1.msra.mxu0 0.0
    %8142 = vmatprep.subr.mxu0 0.0
    %8143 = vmatpush1.msra.mxu0 0.0
    %8144 = vmatprep.subr.mxu0 0.0
    %8145 = vmatpush1.msra.mxu0 0.0
    %8146 = vmatprep.subr.mxu0 0.0
    %8147 = vmatpush1.msra.mxu0 0.0
    %8148 = vmatprep.subr.mxu0 0.0
    %8149 = vmatpush1.msra.mxu0 0.0
    %8150 = vmatprep.subr.mxu0 0.0
    %8151 = vmatpush1.msra.mxu0 0.0
    %8152 = vmatprep.mubr.f32.mxu0 0.0
    %8153 = vmatmul.mubr.f32.gmra.mrb[0].mxu0 %v8086
    %v8154 = vpop.f32.mrb[0].mxu0
    %v8155 = vadd.f32 0.0, %v8154
    %v8156 = vpop.f32.mrb[0].mxu0
    %8157 = vdwg.mxu0
    %v8159 = vsel %vm1208, %v7862, 0
    %8161 = vmatprep.subr.mxu0 0.0
    %8162 = vmatpush1.msra.mxu0 %v245
    %8163 = vmatprep.subr.mxu0 0.0
    %8164 = vmatpush1.msra.mxu0 0.0
    %8165 = vmatprep.subr.mxu0 0.0
    %8166 = vmatpush1.msra.mxu0 0.0
    %8167 = vmatprep.subr.mxu0 0.0
    %8168 = vmatpush1.msra.mxu0 0.0
    %8169 = vmatprep.subr.mxu0 0.0
    %8170 = vmatpush1.msra.mxu0 0.0
    %8171 = vmatprep.subr.mxu0 0.0
    %8172 = vmatpush1.msra.mxu0 0.0
    %8173 = vmatprep.subr.mxu0 0.0
    %8174 = vmatpush1.msra.mxu0 0.0
    %8175 = vmatprep.subr.mxu0 0.0
    %8176 = vmatpush1.msra.mxu0 0.0
    %8177 = vmatprep.subr.mxu0 0.0
    %8178 = vmatpush1.msra.mxu0 0.0
    %8179 = vmatprep.subr.mxu0 0.0
    %8180 = vmatpush1.msra.mxu0 0.0
    %8181 = vmatprep.subr.mxu0 0.0
    %8182 = vmatpush1.msra.mxu0 0.0
    %8183 = vmatprep.subr.mxu0 0.0
    %8184 = vmatpush1.msra.mxu0 0.0
    %8185 = vmatprep.subr.mxu0 0.0
    %8186 = vmatpush1.msra.mxu0 0.0
    %8187 = vmatprep.subr.mxu0 0.0
    %8188 = vmatpush1.msra.mxu0 0.0
    %8189 = vmatprep.subr.mxu0 0.0
    %8190 = vmatpush1.msra.mxu0 0.0
    %8191 = vmatprep.subr.mxu0 0.0
    %8192 = vmatpush1.msra.mxu0 0.0
    %8193 = vmatprep.subr.mxu0 0.0
    %8194 = vmatpush1.msra.mxu0 0.0
    %8195 = vmatprep.subr.mxu0 0.0
    %8196 = vmatpush1.msra.mxu0 0.0
    %8197 = vmatprep.subr.mxu0 0.0
    %8198 = vmatpush1.msra.mxu0 0.0
    %8199 = vmatprep.subr.mxu0 0.0
    %8200 = vmatpush1.msra.mxu0 0.0
    %8201 = vmatprep.subr.mxu0 0.0
    %8202 = vmatpush1.msra.mxu0 0.0
    %8203 = vmatprep.subr.mxu0 0.0
    %8204 = vmatpush1.msra.mxu0 0.0
    %8205 = vmatprep.subr.mxu0 0.0
    %8206 = vmatpush1.msra.mxu0 0.0
    %8207 = vmatprep.subr.mxu0 0.0
    %8208 = vmatpush1.msra.mxu0 0.0
    %8209 = vmatprep.subr.mxu0 0.0
    %8210 = vmatpush1.msra.mxu0 0.0
    %8211 = vmatprep.subr.mxu0 0.0
    %8212 = vmatpush1.msra.mxu0 0.0
    %8213 = vmatprep.subr.mxu0 0.0
    %8214 = vmatpush1.msra.mxu0 0.0
    %8215 = vmatprep.subr.mxu0 0.0
    %8216 = vmatpush1.msra.mxu0 0.0
    %8217 = vmatprep.subr.mxu0 0.0
    %8218 = vmatpush1.msra.mxu0 0.0
    %8219 = vmatprep.subr.mxu0 0.0
    %8220 = vmatpush1.msra.mxu0 0.0
    %8221 = vmatprep.subr.mxu0 0.0
    %8222 = vmatpush1.msra.mxu0 0.0
    %8223 = vmatprep.subr.mxu0 0.0
    %8224 = vmatpush1.msra.mxu0 0.0
    %8225 = vmatprep.mubr.f32.mxu0 0.0
    %8226 = vmatmul.mubr.f32.gmra.mrb[0].mxu0 %v8159
    %v8227 = vpop.f32.mrb[0].mxu0
    %v8228 = vadd.f32 0.0, %v8227
    %v8229 = vpop.f32.mrb[0].mxu0
    %8230 = vdwg.mxu0
    %v8232 = vsel %vm1208, %v7863, 0
    %8234 = vmatprep.subr.mxu0 0.0
    %8235 = vmatpush1.msra.mxu0 %v246
    %8236 = vmatprep.subr.mxu0 0.0
    %8237 = vmatpush1.msra.mxu0 0.0
    %8238 = vmatprep.subr.mxu0 0.0
    %8239 = vmatpush1.msra.mxu0 0.0
    %8240 = vmatprep.subr.mxu0 0.0
    %8241 = vmatpush1.msra.mxu0 0.0
    %8242 = vmatprep.subr.mxu0 0.0
    %8243 = vmatpush1.msra.mxu0 0.0
    %8244 = vmatprep.subr.mxu0 0.0
    %8245 = vmatpush1.msra.mxu0 0.0
    %8246 = vmatprep.subr.mxu0 0.0
    %8247 = vmatpush1.msra.mxu0 0.0
    %8248 = vmatprep.subr.mxu0 0.0
    %8249 = vmatpush1.msra.mxu0 0.0
    %8250 = vmatprep.subr.mxu0 0.0
    %8251 = vmatpush1.msra.mxu0 0.0
    %8252 = vmatprep.subr.mxu0 0.0
    %8253 = vmatpush1.msra.mxu0 0.0
    %8254 = vmatprep.subr.mxu0 0.0
    %8255 = vmatpush1.msra.mxu0 0.0
    %8256 = vmatprep.subr.mxu0 0.0
    %8257 = vmatpush1.msra.mxu0 0.0
    %8258 = vmatprep.subr.mxu0 0.0
    %8259 = vmatpush1.msra.mxu0 0.0
    %8260 = vmatprep.subr.mxu0 0.0
    %8261 = vmatpush1.msra.mxu0 0.0
    %8262 = vmatprep.subr.mxu0 0.0
    %8263 = vmatpush1.msra.mxu0 0.0
    %8264 = vmatprep.subr.mxu0 0.0
    %8265 = vmatpush1.msra.mxu0 0.0
    %8266 = vmatprep.subr.mxu0 0.0
    %8267 = vmatpush1.msra.mxu0 0.0
    %8268 = vmatprep.subr.mxu0 0.0
    %8269 = vmatpush1.msra.mxu0 0.0
    %8270 = vmatprep.subr.mxu0 0.0
    %8271 = vmatpush1.msra.mxu0 0.0
    %8272 = vmatprep.subr.mxu0 0.0
    %8273 = vmatpush1.msra.mxu0 0.0
    %8274 = vmatprep.subr.mxu0 0.0
    %8275 = vmatpush1.msra.mxu0 0.0
    %8276 = vmatprep.subr.mxu0 0.0
    %8277 = vmatpush1.msra.mxu0 0.0
    %8278 = vmatprep.subr.mxu0 0.0
    %8279 = vmatpush1.msra.mxu0 0.0
    %8280 = vmatprep.subr.mxu0 0.0
    %8281 = vmatpush1.msra.mxu0 0.0
    %8282 = vmatprep.subr.mxu0 0.0
    %8283 = vmatpush1.msra.mxu0 0.0
    %8284 = vmatprep.subr.mxu0 0.0
    %8285 = vmatpush1.msra.mxu0 0.0
    %8286 = vmatprep.subr.mxu0 0.0
    %8287 = vmatpush1.msra.mxu0 0.0
    %8288 = vmatprep.subr.mxu0 0.0
    %8289 = vmatpush1.msra.mxu0 0.0
    %8290 = vmatprep.subr.mxu0 0.0
    %8291 = vmatpush1.msra.mxu0 0.0
    %8292 = vmatprep.subr.mxu0 0.0
    %8293 = vmatpush1.msra.mxu0 0.0
    %8294 = vmatprep.subr.mxu0 0.0
    %8295 = vmatpush1.msra.mxu0 0.0
    %8296 = vmatprep.subr.mxu0 0.0
    %8297 = vmatpush1.msra.mxu0 0.0
    %8298 = vmatprep.mubr.f32.mxu0 0.0
    %8299 = vmatmul.mubr.f32.gmra.mrb[0].mxu0 %v8232
    %v8300 = vpop.f32.mrb[0].mxu0
    %v8301 = vadd.f32 0.0, %v8300
    %v8302 = vpop.f32.mrb[0].mxu0
    %8303 = vdwg.mxu0
    %v8305 = vsel %vm1208, %v7864, 0
    %8307 = vmatprep.subr.mxu0 0.0
    %8308 = vmatpush1.msra.mxu0 %v247
    %8309 = vmatprep.subr.mxu0 0.0
    %8310 = vmatpush1.msra.mxu0 0.0
    %8311 = vmatprep.subr.mxu0 0.0
    %8312 = vmatpush1.msra.mxu0 0.0
    %8313 = vmatprep.subr.mxu0 0.0
    %8314 = vmatpush1.msra.mxu0 0.0
    %8315 = vmatprep.subr.mxu0 0.0
    %8316 = vmatpush1.msra.mxu0 0.0
    %8317 = vmatprep.subr.mxu0 0.0
    %8318 = vmatpush1.msra.mxu0 0.0
    %8319 = vmatprep.subr.mxu0 0.0
    %8320 = vmatpush1.msra.mxu0 0.0
    %8321 = vmatprep.subr.mxu0 0.0
    %8322 = vmatpush1.msra.mxu0 0.0
    %8323 = vmatprep.subr.mxu0 0.0
    %8324 = vmatpush1.msra.mxu0 0.0
    %8325 = vmatprep.subr.mxu0 0.0
    %8326 = vmatpush1.msra.mxu0 0.0
    %8327 = vmatprep.subr.mxu0 0.0
    %8328 = vmatpush1.msra.mxu0 0.0
    %8329 = vmatprep.subr.mxu0 0.0
    %8330 = vmatpush1.msra.mxu0 0.0
    %8331 = vmatprep.subr.mxu0 0.0
    %8332 = vmatpush1.msra.mxu0 0.0
    %8333 = vmatprep.subr.mxu0 0.0
    %8334 = vmatpush1.msra.mxu0 0.0
    %8335 = vmatprep.subr.mxu0 0.0
    %8336 = vmatpush1.msra.mxu0 0.0
    %8337 = vmatprep.subr.mxu0 0.0
    %8338 = vmatpush1.msra.mxu0 0.0
    %8339 = vmatprep.subr.mxu0 0.0
    %8340 = vmatpush1.msra.mxu0 0.0
    %8341 = vmatprep.subr.mxu0 0.0
    %8342 = vmatpush1.msra.mxu0 0.0
    %8343 = vmatprep.subr.mxu0 0.0
    %8344 = vmatpush1.msra.mxu0 0.0
    %8345 = vmatprep.subr.mxu0 0.0
    %8346 = vmatpush1.msra.mxu0 0.0
    %8347 = vmatprep.subr.mxu0 0.0
    %8348 = vmatpush1.msra.mxu0 0.0
    %8349 = vmatprep.subr.mxu0 0.0
    %8350 = vmatpush1.msra.mxu0 0.0
    %8351 = vmatprep.subr.mxu0 0.0
    %8352 = vmatpush1.msra.mxu0 0.0
    %8353 = vmatprep.subr.mxu0 0.0
    %8354 = vmatpush1.msra.mxu0 0.0
    %8355 = vmatprep.subr.mxu0 0.0
    %8356 = vmatpush1.msra.mxu0 0.0
    %8357 = vmatprep.subr.mxu0 0.0
    %8358 = vmatpush1.msra.mxu0 0.0
    %8359 = vmatprep.subr.mxu0 0.0
    %8360 = vmatpush1.msra.mxu0 0.0
    %8361 = vmatprep.subr.mxu0 0.0
    %8362 = vmatpush1.msra.mxu0 0.0
    %8363 = vmatprep.subr.mxu0 0.0
    %8364 = vmatpush1.msra.mxu0 0.0
    %8365 = vmatprep.subr.mxu0 0.0
    %8366 = vmatpush1.msra.mxu0 0.0
    %8367 = vmatprep.subr.mxu0 0.0
    %8368 = vmatpush1.msra.mxu0 0.0
    %8369 = vmatprep.subr.mxu0 0.0
    %8370 = vmatpush1.msra.mxu0 0.0
    %8371 = vmatprep.mubr.f32.mxu0 0.0
    %8372 = vmatmul.mubr.f32.gmra.mrb[0].mxu0 %v8305
    %v8373 = vpop.f32.mrb[0].mxu0
    %v8374 = vadd.f32 0.0, %v8373
    %v8375 = vpop.f32.mrb[0].mxu0
    %8376 = vdwg.mxu0
    %v8378 = vsel %vm1208, %v7865, 0
    %8380 = vmatprep.subr.mxu0 0.0
    %8381 = vmatpush1.msra.mxu0 %v248
    %8382 = vmatprep.subr.mxu0 0.0
    %8383 = vmatpush1.msra.mxu0 0.0
    %8384 = vmatprep.subr.mxu0 0.0
    %8385 = vmatpush1.msra.mxu0 0.0
    %8386 = vmatprep.subr.mxu0 0.0
    %8387 = vmatpush1.msra.mxu0 0.0
    %8388 = vmatprep.subr.mxu0 0.0
    %8389 = vmatpush1.msra.mxu0 0.0
    %8390 = vmatprep.subr.mxu0 0.0
    %8391 = vmatpush1.msra.mxu0 0.0
    %8392 = vmatprep.subr.mxu0 0.0
    %8393 = vmatpush1.msra.mxu0 0.0
    %8394 = vmatprep.subr.mxu0 0.0
    %8395 = vmatpush1.msra.mxu0 0.0
    %8396 = vmatprep.subr.mxu0 0.0
    %8397 = vmatpush1.msra.mxu0 0.0
    %8398 = vmatprep.subr.mxu0 0.0
    %8399 = vmatpush1.msra.mxu0 0.0
    %8400 = vmatprep.subr.mxu0 0.0
    %8401 = vmatpush1.msra.mxu0 0.0
    %8402 = vmatprep.subr.mxu0 0.0
    %8403 = vmatpush1.msra.mxu0 0.0
    %8404 = vmatprep.subr.mxu0 0.0
    %8405 = vmatpush1.msra.mxu0 0.0
    %8406 = vmatprep.subr.mxu0 0.0
    %8407 = vmatpush1.msra.mxu0 0.0
    %8408 = vmatprep.subr.mxu0 0.0
    %8409 = vmatpush1.msra.mxu0 0.0
    %8410 = vmatprep.subr.mxu0 0.0
    %8411 = vmatpush1.msra.mxu0 0.0
    %8412 = vmatprep.subr.mxu0 0.0
    %8413 = vmatpush1.msra.mxu0 0.0
    %8414 = vmatprep.subr.mxu0 0.0
    %8415 = vmatpush1.msra.mxu0 0.0
    %8416 = vmatprep.subr.mxu0 0.0
    %8417 = vmatpush1.msra.mxu0 0.0
    %8418 = vmatprep.subr.mxu0 0.0
    %8419 = vmatpush1.msra.mxu0 0.0
    %8420 = vmatprep.subr.mxu0 0.0
    %8421 = vmatpush1.msra.mxu0 0.0
    %8422 = vmatprep.subr.mxu0 0.0
    %8423 = vmatpush1.msra.mxu0 0.0
    %8424 = vmatprep.subr.mxu0 0.0
    %8425 = vmatpush1.msra.mxu0 0.0
    %8426 = vmatprep.subr.mxu0 0.0
    %8427 = vmatpush1.msra.mxu0 0.0
    %8428 = vmatprep.subr.mxu0 0.0
    %8429 = vmatpush1.msra.mxu0 0.0
    %8430 = vmatprep.subr.mxu0 0.0
    %8431 = vmatpush1.msra.mxu0 0.0
    %8432 = vmatprep.subr.mxu0 0.0
    %8433 = vmatpush1.msra.mxu0 0.0
    %8434 = vmatprep.subr.mxu0 0.0
    %8435 = vmatpush1.msra.mxu0 0.0
    %8436 = vmatprep.subr.mxu0 0.0
    %8437 = vmatpush1.msra.mxu0 0.0
    %8438 = vmatprep.subr.mxu0 0.0
    %8439 = vmatpush1.msra.mxu0 0.0
    %8440 = vmatprep.subr.mxu0 0.0
    %8441 = vmatpush1.msra.mxu0 0.0
    %8442 = vmatprep.subr.mxu0 0.0
    %8443 = vmatpush1.msra.mxu0 0.0
    %8444 = vmatprep.mubr.f32.mxu0 0.0
    %8445 = vmatmul.mubr.f32.gmra.mrb[0].mxu0 %v8378
    %v8446 = vpop.f32.mrb[0].mxu0
    %v8447 = vadd.f32 0.0, %v8446
    %v8448 = vpop.f32.mrb[0].mxu0
    %8449 = vdwg.mxu0
    %8450 = vrot.lane.b32.xlu0 %v7079, 32
    %v8451 = vpop.permute.xlu0 %8450
    %v8452 = vsel %vm291, %v8451, 0
    %8454 = vmatprep.subr.mxu0 0.0
    %8455 = vmatpush1.msra.mxu0 %v273
    %8456 = vmatprep.subr.mxu0 0.0
    %8457 = vmatpush1.msra.mxu0 %v274
    %8458 = vmatprep.subr.mxu0 0.0
    %8459 = vmatpush1.msra.mxu0 %v275
    %8460 = vmatprep.subr.mxu0 0.0
    %8461 = vmatpush1.msra.mxu0 %v276
    %8462 = vmatprep.subr.mxu0 0.0
    %8463 = vmatpush1.msra.mxu0 0.0
    %8464 = vmatprep.subr.mxu0 0.0
    %8465 = vmatpush1.msra.mxu0 0.0
    %8466 = vmatprep.subr.mxu0 0.0
    %8467 = vmatpush1.msra.mxu0 0.0
    %8468 = vmatprep.subr.mxu0 0.0
    %8469 = vmatpush1.msra.mxu0 0.0
    %8470 = vmatprep.subr.mxu0 0.0
    %8471 = vmatpush1.msra.mxu0 0.0
    %8472 = vmatprep.subr.mxu0 0.0
    %8473 = vmatpush1.msra.mxu0 0.0
    %8474 = vmatprep.subr.mxu0 0.0
    %8475 = vmatpush1.msra.mxu0 0.0
    %8476 = vmatprep.subr.mxu0 0.0
    %8477 = vmatpush1.msra.mxu0 0.0
    %8478 = vmatprep.subr.mxu0 0.0
    %8479 = vmatpush1.msra.mxu0 0.0
    %8480 = vmatprep.subr.mxu0 0.0
    %8481 = vmatpush1.msra.mxu0 0.0
    %8482 = vmatprep.subr.mxu0 0.0
    %8483 = vmatpush1.msra.mxu0 0.0
    %8484 = vmatprep.subr.mxu0 0.0
    %8485 = vmatpush1.msra.mxu0 0.0
    %8486 = vmatprep.subr.mxu0 0.0
    %8487 = vmatpush1.msra.mxu0 0.0
    %8488 = vmatprep.subr.mxu0 0.0
    %8489 = vmatpush1.msra.mxu0 0.0
    %8490 = vmatprep.subr.mxu0 0.0
    %8491 = vmatpush1.msra.mxu0 0.0
    %8492 = vmatprep.subr.mxu0 0.0
    %8493 = vmatpush1.msra.mxu0 0.0
    %8494 = vmatprep.subr.mxu0 0.0
    %8495 = vmatpush1.msra.mxu0 0.0
    %8496 = vmatprep.subr.mxu0 0.0
    %8497 = vmatpush1.msra.mxu0 0.0
    %8498 = vmatprep.subr.mxu0 0.0
    %8499 = vmatpush1.msra.mxu0 0.0
    %8500 = vmatprep.subr.mxu0 0.0
    %8501 = vmatpush1.msra.mxu0 0.0
    %8502 = vmatprep.subr.mxu0 0.0
    %8503 = vmatpush1.msra.mxu0 0.0
    %8504 = vmatprep.subr.mxu0 0.0
    %8505 = vmatpush1.msra.mxu0 0.0
    %8506 = vmatprep.subr.mxu0 0.0
    %8507 = vmatpush1.msra.mxu0 0.0
    %8508 = vmatprep.subr.mxu0 0.0
    %8509 = vmatpush1.msra.mxu0 0.0
    %8510 = vmatprep.subr.mxu0 0.0
    %8511 = vmatpush1.msra.mxu0 0.0
    %8512 = vmatprep.subr.mxu0 0.0
    %8513 = vmatpush1.msra.mxu0 0.0
    %8514 = vmatprep.subr.mxu0 0.0
    %8515 = vmatpush1.msra.mxu0 0.0
    %8516 = vmatprep.subr.mxu0 0.0
    %8517 = vmatpush1.msra.mxu0 0.0
    %8518 = vmatprep.mubr.f32.mxu0 0.0
    %8519 = vmatmul.mubr.f32.gmra.mrb[0].mxu0 %v8452
    %v8520 = vpop.f32.mrb[0].mxu0
    %v8521 = vadd.f32 0.0, %v8520
    %v8522 = vpop.f32.mrb[0].mxu0
    %8523 = vdwg.mxu0
    %v8532 = vrot.slane %v8009, 7
    %v8533 = vsel %vm1876, %v8532, %v7936
    %v8534 = vrot.slane %v8082, 6
    %v8535 = vsel %vm1879, %v8534, %v8533
    %v8536 = vrot.slane %v8155, 5
    %v8537 = vsel %vm1882, %v8536, %v8535
    %v8538 = vrot.slane %v8228, 4
    %v8539 = vsel %vm1885, %v8538, %v8537
    %v8540 = vrot.slane %v8301, 3
    %v8541 = vsel %vm1888, %v8540, %v8539
    %v8542 = vrot.slane %v8374, 2
    %v8543 = vsel %vm1891, %v8542, %v8541
    %v8544 = vrot.slane %v8447, 1
    %v8545 = vsel %vm1894, %v8544, %v8543
    %v8546 = vsel %vm294, %v8545, 0
    %8548 = vmatprep.subr.mxu0 0.0
    %8549 = vmatpush1.msra.mxu0 %v265
    %8550 = vmatprep.subr.mxu0 0.0
    %8551 = vmatpush1.msra.mxu0 %v266
    %8552 = vmatprep.subr.mxu0 0.0
    %8553 = vmatpush1.msra.mxu0 %v267
    %8554 = vmatprep.subr.mxu0 0.0
    %8555 = vmatpush1.msra.mxu0 %v268
    %8556 = vmatprep.subr.mxu0 0.0
    %8557 = vmatpush1.msra.mxu0 %v269
    %8558 = vmatprep.subr.mxu0 0.0
    %8559 = vmatpush1.msra.mxu0 %v270
    %8560 = vmatprep.subr.mxu0 0.0
    %8561 = vmatpush1.msra.mxu0 %v271
    %8562 = vmatprep.subr.mxu0 0.0
    %8563 = vmatpush1.msra.mxu0 %v272
    %8564 = vmatprep.subr.mxu0 0.0
    %8565 = vmatpush1.msra.mxu0 0.0
    %8566 = vmatprep.subr.mxu0 0.0
    %8567 = vmatpush1.msra.mxu0 0.0
    %8568 = vmatprep.subr.mxu0 0.0
    %8569 = vmatpush1.msra.mxu0 0.0
    %8570 = vmatprep.subr.mxu0 0.0
    %8571 = vmatpush1.msra.mxu0 0.0
    %8572 = vmatprep.subr.mxu0 0.0
    %8573 = vmatpush1.msra.mxu0 0.0
    %8574 = vmatprep.subr.mxu0 0.0
    %8575 = vmatpush1.msra.mxu0 0.0
    %8576 = vmatprep.subr.mxu0 0.0
    %8577 = vmatpush1.msra.mxu0 0.0
    %8578 = vmatprep.subr.mxu0 0.0
    %8579 = vmatpush1.msra.mxu0 0.0
    %8580 = vmatprep.subr.mxu0 0.0
    %8581 = vmatpush1.msra.mxu0 0.0
    %8582 = vmatprep.subr.mxu0 0.0
    %8583 = vmatpush1.msra.mxu0 0.0
    %8584 = vmatprep.subr.mxu0 0.0
    %8585 = vmatpush1.msra.mxu0 0.0
    %8586 = vmatprep.subr.mxu0 0.0
    %8587 = vmatpush1.msra.mxu0 0.0
    %8588 = vmatprep.subr.mxu0 0.0
    %8589 = vmatpush1.msra.mxu0 0.0
    %8590 = vmatprep.subr.mxu0 0.0
    %8591 = vmatpush1.msra.mxu0 0.0
    %8592 = vmatprep.subr.mxu0 0.0
    %8593 = vmatpush1.msra.mxu0 0.0
    %8594 = vmatprep.subr.mxu0 0.0
    %8595 = vmatpush1.msra.mxu0 0.0
    %8596 = vmatprep.subr.mxu0 0.0
    %8597 = vmatpush1.msra.mxu0 0.0
    %8598 = vmatprep.subr.mxu0 0.0
    %8599 = vmatpush1.msra.mxu0 0.0
    %8600 = vmatprep.subr.mxu0 0.0
    %8601 = vmatpush1.msra.mxu0 0.0
    %8602 = vmatprep.subr.mxu0 0.0
    %8603 = vmatpush1.msra.mxu0 0.0
    %8604 = vmatprep.subr.mxu0 0.0
    %8605 = vmatpush1.msra.mxu0 0.0
    %8606 = vmatprep.subr.mxu0 0.0
    %8607 = vmatpush1.msra.mxu0 0.0
    %8608 = vmatprep.subr.mxu0 0.0
    %8609 = vmatpush1.msra.mxu0 0.0
    %8610 = vmatprep.subr.mxu0 0.0
    %8611 = vmatpush1.msra.mxu0 0.0
    %8612 = vmatprep.mubr.f32.mxu0 0.0
    %8613 = vmatmul.mubr.f32.gmra.mrb[0].mxu0 %v8546
    %v8614 = vpop.f32.mrb[0].mxu0
    %v8615 = vadd.f32 %v8521, %v8614
    %v8616 = vpop.f32.mrb[0].mxu0
    %8617 = vdwg.mxu0
    %v8618 = vadd.f32 %v8615, %v282
    %v8619 = vtanh.pop %v8618
    %s8620 = scalar_lea.vmem [#allocation15], 32
    %8621 = vst.msk [vmem:[%s8620] sm:$0xff] %vm291, %v8619
    %v8622 = vrot.slane %v7859, 7
    %v8623 = vsel %vm1876, %v8622, %v7858
    %v8624 = vrot.slane %v7860, 6
    %v8625 = vsel %vm1879, %v8624, %v8623
    %v8626 = vrot.slane %v7861, 5
    %v8627 = vsel %vm1882, %v8626, %v8625
    %v8628 = vrot.slane %v7862, 4
    %v8629 = vsel %vm1885, %v8628, %v8627
    %v8630 = vrot.slane %v7863, 3
    %v8631 = vsel %vm1888, %v8630, %v8629
    %v8632 = vrot.slane %v7864, 2
    %v8633 = vsel %vm1891, %v8632, %v8631
    %v8634 = vrot.slane %v7865, 1
    %v8635 = vsel %vm1894, %v8634, %v8633
    %s8637 = scalar_lea.vmem [#allocation16], 32
    %8638 = vst.msk [vmem:[%s8637] sm:$0xff] %vm1208, %v8635
    %8640 = vst.msk [vmem:[#allocation2] sm:$0xff] %vm291, %v8451
    %8642 = vrot.lane.b32.xlu0 %v7073, 96
    %v8643 = vpop.permute.xlu0 %8642
    %8645 = vst.msk [vmem:[#allocation3] sm:$0xff] %vm291, %v8643
    %8646 = vst.msk [vmem:[#allocation4] sm:$0xff] %vm291, %v8619
    // Predicated region
    $region70: #{tpu_custom_call.1} parent=1 // pred_check
      _
    $region71: #{tpu_custom_call.1} parent=1 // pred_check_branch
      %8648 = sbr.rel (0) target = $region73
    $region72: #{tpu_custom_call.1} parent=1 // pred_region
      %s8650 = ssub.s32 640, 640
      %8651 = vsyncadd [#allocation8], %s8650
      %s8652 = sshll.u32 [#allocation15], 4
      %s8653 = int_to_ptr.vmem [resolvable:$true] %s8652
      %8658 = dma.vmem_to_hbm [thread:$0]  %s8653, 640, %s11, [#allocation8], 128, 128, 8
    $region73: #{tpu_custom_call.1} parent=1 // pred_fallthru
      _
    // Predicated region
    $region74: #{tpu_custom_call.1} parent=1 // pred_check
      _
    $region75: #{tpu_custom_call.1} parent=1 // pred_check_branch
      %8660 = sbr.rel (0) target = $region77
    $region76: #{tpu_custom_call.1} parent=1 // pred_region
      %s8662 = ssub.s32 640, 640
      %8663 = vsyncadd [#allocation17], %s8662
      %s8664 = sshll.u32 [#allocation16], 4
      %s8665 = int_to_ptr.vmem [resolvable:$true] %s8664
      %8670 = dma.vmem_to_hbm [thread:$0]  %s8665, 640, %s12, [#allocation17], 128, 128, 8
    $region77: #{tpu_custom_call.1} parent=1 // pred_fallthru
      _
    // Predicated region
    $region78: #{tpu_custom_call.1} parent=1 // pred_check
      _
    $region79: #{tpu_custom_call.1} parent=1 // pred_check_branch
      %8672 = sbr.rel (0) target = $region81
    $region80: #{tpu_custom_call.1} parent=1 // pred_region
      %8673 = dma.done [#allocation8], 640
    $region81: #{tpu_custom_call.1} parent=1 // pred_fallthru
      _
    // Predicated region
    $region82: #{tpu_custom_call.1} parent=1 // pred_check
      _
    $region83: #{tpu_custom_call.1} parent=1 // pred_check_branch
      %8675 = sbr.rel (0) target = $region85
    $region84: #{tpu_custom_call.1} parent=1 // pred_region
      %8676 = dma.done [#allocation17], 640
    $region85: #{tpu_custom_call.1} parent=1 // pred_fallthru
      _
    %8677 = vsyncpa [#allocation7], 1
    %8678 = vsyncpa [#allocation10], 1
    %8679 = vsyncpa [#allocation13], 1
    %8680 = vsyncpa [#allocation8], 1
    %8681 = vsyncpa [#allocation17], 1

</llo_original>
